<compile_context>
chip_gen: v5e
topology: v5e:2x2
jax: 0.10.0
libtpu: 0.0.40
codegen_flags: <defaults>
</compile_context>

<pallas_src>
import numpy as np
import jax
import jax.numpy as jnp
from jax import lax
from jax.experimental import pallas as pl
from jax.experimental.pallas import tpu as pltpu

F32 = jnp.float32
BF16 = jnp.bfloat16


def bilinear_matrix(n_in, n_out):
    """Interpolation matrix M (n_out, n_in) for align_corners=True bilinear resize."""
    scale = 0.0 if n_out == 1 else (n_in - 1) / (n_out - 1)
    idx = np.arange(n_out)
    src = idx * scale
    i0 = np.clip(np.floor(src).astype(np.int64), 0, n_in - 1)
    i1 = np.minimum(i0 + 1, n_in - 1)
    frac = (src - i0).astype(np.float32)
    M = np.zeros((n_out, n_in), np.float32)
    M[idx, i0] += (1.0 - frac)
    M[idx, i1] += frac
    return M


def _row_plan(n_in, n_out):
    """Per output row: (i0, i1, w0, w1) static 2-tap blend, exactly one row of
    bilinear_matrix(n_in, n_out) (so the kernel matches the matrix reference)."""
    M = bilinear_matrix(n_in, n_out)
    plan = []
    for o in range(n_out):
        nz = np.nonzero(M[o])[0]
        if len(nz) == 1:
            plan.append((int(nz[0]), int(nz[0]), float(M[o, nz[0]]), 0.0))
        else:
            plan.append((int(nz[0]), int(nz[1]), float(M[o, nz[0]]), float(M[o, nz[1]])))
    return plan


def make_kernel(H, W, Cx, Ce, Cmid, Cout, PAD):
    H2, W2 = 2 * H, 2 * W
    P = H2 * W2
    L = PAD + P + PAD
    Cc = Cx + Ce
    rplan = _row_plan(H, H2)
    TAPS = [(ky, kx) for ky in range(3) for kx in range(3)]

    def kernel(x_ref, e_ref, uw_ref, cmask_ref, wa_ref, ba_ref,
               w1_ref, b1_ref, w2_ref, b2_ref, out_ref, bufc, bufm):
        # Re-zero only the lane-aligned pad margins (interior fully overwritten
        # below) so the batch grid axis stays safe as 'parallel'.
        bufc[:, 0:PAD] = jnp.zeros((Cc, PAD), BF16)
        bufc[:, PAD + P:L] = jnp.zeros((Cc, PAD), BF16)
        bufm[:, 0:PAD] = jnp.zeros((Cmid, PAD), BF16)
        bufm[:, PAD + P:L] = jnp.zeros((Cmid, PAD), BF16)

        def tap(buf, c0, c1, oy, ox):
            """Masked, lane-shifted bf16 read of channels [c0,c1) for tap (oy, ox)."""
            s = PAD + oy * W2 + ox                       # static Python int
            t = buf[c0:c1, s:s + P]                      # (c1-c0, P) bf16, lane-dense
            if ox != 0:
                t = t * cmask_ref[ox + 2:ox + 3, :]      # zero row wrap-around (bf16)
            return t

        # ---- 1. separable bilinear x2 upsample (align_corners=True) -----------------
        # W-interp: one bf16 MXU matmul with f32 accumulation.
        xw = jnp.dot(x_ref[0], uw_ref[...], preferred_element_type=F32)  # (Cx*H, W2)
        xw3 = xw.reshape(Cx, H, W2)                                       # split major dim
        # H-interp: static 2-tap blend per output row, written directly into the
        # flat lane-dense layout of bufc (no transpose / no lane-merging reshape).
        for y2 in range(H2):
            i0, i1, w0, w1 = rplan[y2]
            if w1 == 0.0:
                row = xw3[:, i0, :] if w0 == 1.0 else w0 * xw3[:, i0, :]
            else:
                row = w0 * xw3[:, i0, :] + w1 * xw3[:, i1, :]
            bufc[0:Cx, PAD + y2 * W2: PAD + (y2 + 1) * W2] = row.astype(BF16)

        # ---- 2. spatial attention: Conv2d(Cx,1,k=3,pad=2,dil=2) + sigmoid (VPU/EUP) -
        att_acc = jnp.zeros((Cx, P), F32)
        for ky, kx in TAPS:
            t = tap(bufc, 0, Cx, 2 * (ky - 1), 2 * (kx - 1))      # bf16 (Cx, P)
            att_acc = att_acc + wa_ref[ky * 3 + kx] * t           # (Cx,1) f32 * bf16 -> f32
        z = att_acc.sum(axis=0, keepdims=True) + ba_ref[...]      # (1, P) f32
        att = pl.reciprocal(1.0 + jnp.exp(-z), approx=True)       # sigmoid on the EUP

        # e * attn, stacked under xu -> physical concat([x_up, e*attn], channel)
        bufc[Cx:Cc, PAD:PAD + P] = (e_ref[0] * att).astype(BF16)  # (Ce, P)

        # ---- 3/4. dropout2d(identity) + conv1 (3x3, pad 1): 9 accumulated matmuls ---
        acc1 = jnp.zeros((Cmid, P), F32)
        for idx, (ky, kx) in enumerate(TAPS):
            acc1 = acc1 + jnp.dot(w1_ref[idx], tap(bufc, 0, Cc, ky - 1, kx - 1),
                                  preferred_element_type=F32)
        bufm[:, PAD:PAD + P] = (acc1 + b1_ref[...]).astype(BF16)  # (Cmid, P)

        # ---- 5. conv2 (3x3, pad 1): 9 accumulated matmuls ---------------------------
        acc2 = jnp.zeros((Cout, P), F32)
        for idx, (ky, kx) in enumerate(TAPS):
            acc2 = acc2 + jnp.dot(w2_ref[idx], tap(bufm, 0, Cmid, ky - 1, kx - 1),
                                  preferred_element_type=F32)
        out_ref[0] = acc2 + b2_ref[...]                            # lane-dense (Cout, P) f32

    return kernel


def att_decoder_block(x, e, params):
    """x: (N, Cx, H, W) NCHW; e: (N, Ce, 2H, 2W) NCHW; returns (N, Cout, 2H, 2W) NCHW."""
    N, Cx, H, W = x.shape
    H2, W2 = 2 * H, 2 * W
    P = H2 * W2
    Ce = e.shape[1]
    Cmid = params["w1"].shape[-1]
    Cout = params["w2"].shape[-1]
    Cc = Cx + Ce
    assert P % 128 == 0, "lane-dense layout needs H*W % 32 == 0"

    # lane-aligned zero margin, large enough for the dilated (pad 2) taps
    PAD = ((2 * W2 + 2 + 127) // 128) * 128
    L = PAD + P + PAD

    # bf16 MXU operands (all accumulation is f32 inside the kernel)
    x_in = x.astype(BF16).reshape(N, Cx * H, W)         # contiguous, rows = (c, h)
    e_in = e.astype(BF16).reshape(N, Ce, P)             # channel-first, pixels on lanes
    uwT = jnp.asarray(bilinear_matrix(W, W2).T).astype(BF16)        # (W, W2)

    # column-validity masks for lane-shifted conv taps, dx in {-2,-1,0,1,2}
    cols = np.arange(P) % W2
    cmask = jnp.asarray(np.stack(
        [((cols + d >= 0) & (cols + d < W2)).astype(np.float32)
         for d in (-2, -1, 0, 1, 2)])).astype(BF16)                  # (5, P), exact 0/1

    wa = params["wa"].reshape(9, Cx, 1).astype(F32)                       # attn conv, f32 (VPU)
    ba = params["ba"].reshape(1, 1).astype(F32)
    w1k = jnp.transpose(params["w1"], (0, 1, 3, 2)).reshape(9, Cmid, Cc).astype(BF16)
    b1 = params["b1"].reshape(Cmid, 1).astype(F32)
    w2k = jnp.transpose(params["w2"], (0, 1, 3, 2)).reshape(9, Cout, Cmid).astype(BF16)
    b2 = params["b2"].reshape(Cout, 1).astype(F32)

    kernel = make_kernel(H, W, Cx, Ce, Cmid, Cout, PAD)

    out_flat = pl.pallas_call(
        kernel,
        out_shape=jax.ShapeDtypeStruct((N, Cout, P), F32),
        grid=(N,),
        in_specs=[
            pl.BlockSpec((1, Cx * H, W), lambda n: (n, 0, 0)),     # x, per batch (bf16)
            pl.BlockSpec((1, Ce, P), lambda n: (n, 0, 0)),         # e, per batch (bf16)
            pl.BlockSpec((W, W2), lambda n: (0, 0)),               # W-interp factor (bf16)
            pl.BlockSpec((5, P), lambda n: (0, 0)),                # column masks (bf16)
            pl.BlockSpec((9, Cx, 1), lambda n: (0, 0, 0)),         # attn conv weight (f32)
            pl.BlockSpec((1, 1), lambda n: (0, 0)),                # attn conv bias (f32)
            pl.BlockSpec((9, Cmid, Cc), lambda n: (0, 0, 0)),      # conv1 weights per tap (bf16)
            pl.BlockSpec((Cmid, 1), lambda n: (0, 0)),             # conv1 bias (f32)
            pl.BlockSpec((9, Cout, Cmid), lambda n: (0, 0, 0)),    # conv2 weights per tap (bf16)
            pl.BlockSpec((Cout, 1), lambda n: (0, 0)),             # conv2 bias (f32)
        ],
        out_specs=pl.BlockSpec((1, Cout, P), lambda n: (n, 0, 0)),
        scratch_shapes=[
            pltpu.VMEM((Cc, L), BF16),     # [xu ; e*attn] flat, zero-margined (bf16)
            pltpu.VMEM((Cmid, L), BF16),   # conv1 output flat, zero-margined (bf16)
        ],
        compiler_params=pltpu.CompilerParams(
            dimension_semantics=("parallel",),
            vmem_limit_bytes=64 * 1024 * 1024),
    )(x_in, e_in, uwT, cmask, wa, ba, w1k, b1, w2k, b2)

    return out_flat.reshape(N, Cout, H2, W2)             # already NCHW, no transposes


# ----------------------------- pure-JAX references ----------------------------------
def _conv_nhwc(x, w_hwio, b, pad, dil=1):
    y = lax.conv_general_dilated(
        x, w_hwio, window_strides=(1, 1),
        padding=[(pad, pad), (pad, pad)],
        rhs_dilation=(dil, dil),
        dimension_numbers=("NHWC", "HWIO", "NHWC"),
        precision=lax.Precision.HIGHEST)
    return y + b


def reference_forward(x, e, params):
    """Full-f32 reference (exact module semantics, eval-mode dropout)."""
    N, Cx, H, W = x.shape
    H2, W2 = 2 * H, 2 * W
    uh = jnp.asarray(bilinear_matrix(H, H2))
    uw = jnp.asarray(bilinear_matrix(W, W2))
    x_nhwc = jnp.transpose(x, (0, 2, 3, 1))
    e_nhwc = jnp.transpose(e, (0, 2, 3, 1))
    xu = jnp.einsum("oh,nhwc->nowc", uh, x_nhwc, precision=lax.Precision.HIGHEST)
    xu = jnp.einsum("pw,nowc->nopc", uw, xu, precision=lax.Precision.HIGHEST)
    attn = jax.nn.sigmoid(_conv_nhwc(xu, params["wa"], params["ba"], pad=2, dil=2))
    e_att = e_nhwc * attn
    xcat = jnp.concatenate([xu, e_att], axis=-1)
    h1 = _conv_nhwc(xcat, params["w1"], params["b1"], pad=1)
    h2 = _conv_nhwc(h1, params["w2"], params["b2"], pad=1)
    return jnp.transpose(h2, (0, 3, 1, 2))


def reference_forward_mixed(x, e, params):
    """Precision-matched reference: bf16 operands / f32 accumulation at the same
    points as the kernel, so the comparison isolates structural correctness."""
    N, Cx, H, W = x.shape
    H2, W2 = 2 * H, 2 * W
    uh = jnp.asarray(bilinear_matrix(H, H2))                         # f32 (H2, H)
    uw = jnp.asarray(bilinear_matrix(W, W2)).astype(BF16)            # (W2, W)
    xw = jnp.einsum("pw,nchw->nchp", uw, x.astype(BF16),
                    preferred_element_type=F32)                      # (N,Cx,H,W2) f32
    xu = jnp.einsum("oh,nchp->ncop", uh, xw,
                    precision=lax.Precision.HIGHEST)                 # (N,Cx,H2,W2) f32
    xu_b = xu.astype(BF16)

    xu_nhwc = jnp.transpose(xu_b.astype(F32), (0, 2, 3, 1))
    attn = jax.nn.sigmoid(_conv_nhwc(xu_nhwc, params["wa"], params["ba"], pad=2, dil=2))
    e_att = e.astype(BF16).astype(F32) * jnp.transpose(attn, (0, 3, 1, 2))
    cat = jnp.concatenate([xu_b.astype(F32), e_att], axis=1).astype(BF16)

    cat_nhwc = jnp.transpose(cat, (0, 2, 3, 1))
    h1 = lax.conv_general_dilated(
        cat_nhwc, params["w1"].astype(BF16), (1, 1), [(1, 1), (1, 1)],
        dimension_numbers=("NHWC", "HWIO", "NHWC"),
        preferred_element_type=F32) + params["b1"]
    h1_b = h1.astype(BF16)
    h2 = lax.conv_general_dilated(
        h1_b, params["w2"].astype(BF16), (1, 1), [(1, 1), (1, 1)],
        dimension_numbers=("NHWC", "HWIO", "NHWC"),
        preferred_element_type=F32) + params["b2"]
    return jnp.transpose(h2, (0, 3, 1, 2))


if __name__ == "__main__":
    key = jax.random.PRNGKey(0)
    ks = jax.random.split(key, 8)

    # AttDecoderBlock(in_channels=Cx+Ce, channels=Cmid, out_channels=Cout, up_channels=Cx)
    N, Cx, Ce, H, W = 2, 4, 4, 16, 16
    Cmid, Cout = 8, 4
    H2, W2 = 2 * H, 2 * W

    x = jax.random.normal(ks[0], (N, Cx, H, W), F32)       # decoder feature
    e = jax.random.normal(ks[1], (N, Ce, H2, W2), F32)     # encoder skip feature

    params = {
        "wa": 0.3 * jax.random.normal(ks[2], (3, 3, Cx, 1), F32),
        "ba": 0.1 * jax.random.normal(ks[3], (1,), F32),
        "w1": 0.2 * jax.random.normal(ks[4], (3, 3, Cx + Ce, Cmid), F32),
        "b1": 0.1 * jax.random.normal(ks[5], (Cmid,), F32),
        "w2": 0.2 * jax.random.normal(ks[6], (3, 3, Cmid, Cout), F32),
        "b2": 0.1 * jax.random.normal(ks[7], (Cout,), F32),
    }

    out = jax.block_until_ready(att_decoder_block(x, e, params))
    assert out.shape == (N, Cout, H2, W2), out.shape

    ref_mixed = jax.block_until_ready(reference_forward_mixed(x, e, params))
    ref_f32 = jax.block_until_ready(reference_forward(x, e, params))

    err_mixed = float(jnp.max(jnp.abs(out - ref_mixed)))
    err_f32 = float(jnp.max(jnp.abs(out - ref_f32)))
    scale = float(jnp.max(jnp.abs(ref_f32)))
    # tight check vs the precision-matched reference (structural correctness)
    assert err_mixed < 6e-2, f"kernel vs precision-matched reference: max abs err = {err_mixed}"
    # loose sanity check vs the pure-f32 reference (bounds accumulated bf16 error)
    assert err_f32 < 0.04 * scale + 0.05, \
        f"kernel vs f32 reference: max abs err = {err_f32} (ref scale {scale})"
    print("KERNEL_OK")
</pallas_src>

<mosaic_0001>
module attributes {stable_mosaic.version = 11 : i64} {
  func.func @kernel(%arg0: i32, %arg1: memref<1x64x16xbf16, #tpu.memory_space<vmem>>, %arg2: memref<1x4x1024xbf16, #tpu.memory_space<vmem>>, %arg3: memref<16x32xbf16, #tpu.memory_space<vmem>>, %arg4: memref<5x1024xbf16, #tpu.memory_space<vmem>>, %arg5: memref<9x4x1xf32, #tpu.memory_space<vmem>>, %arg6: memref<1x1xf32, #tpu.memory_space<vmem>>, %arg7: memref<9x8x8xbf16, #tpu.memory_space<vmem>>, %arg8: memref<8x1xf32, #tpu.memory_space<vmem>>, %arg9: memref<9x4x8xbf16, #tpu.memory_space<vmem>>, %arg10: memref<4x1xf32, #tpu.memory_space<vmem>>, %arg11: memref<1x4x1024xf32, #tpu.memory_space<vmem>>, %arg12: memref<8x1280xbf16, #tpu.memory_space<vmem>>, %arg13: memref<8x1280xbf16, #tpu.memory_space<vmem>>) attributes {dimension_semantics = [#tpu.dimension_semantics<parallel>], iteration_bounds = array<i64: 2>, scalar_prefetch = 0 : i64, scratch_operands = 2 : i64, tpu.core_type = #tpu.core_type<tc>, window_params = [{transform_indices = @transform_0, window_bounds = array<i64: 1, 64, 16>}, {transform_indices = @transform_1, window_bounds = array<i64: 1, 4, 1024>}, {pipeline_mode = #tpu.pipeline_mode<synchronous>, transform_indices = @transform_2, window_bounds = array<i64: 16, 32>}, {pipeline_mode = #tpu.pipeline_mode<synchronous>, transform_indices = @transform_3, window_bounds = array<i64: 5, 1024>}, {pipeline_mode = #tpu.pipeline_mode<synchronous>, transform_indices = @transform_4, window_bounds = array<i64: 9, 4, 1>}, {pipeline_mode = #tpu.pipeline_mode<synchronous>, transform_indices = @transform_5, window_bounds = array<i64: 1, 1>}, {pipeline_mode = #tpu.pipeline_mode<synchronous>, transform_indices = @transform_6, window_bounds = array<i64: 9, 8, 8>}, {pipeline_mode = #tpu.pipeline_mode<synchronous>, transform_indices = @transform_7, window_bounds = array<i64: 8, 1>}, {pipeline_mode = #tpu.pipeline_mode<synchronous>, transform_indices = @transform_8, window_bounds = array<i64: 9, 4, 8>}, {pipeline_mode = #tpu.pipeline_mode<synchronous>, transform_indices = @transform_9, window_bounds = array<i64: 4, 1>}, {transform_indices = @transform_10, window_bounds = array<i64: 1, 4, 1024>}]} {
    %cst = arith.constant 0.000000e+00 : bf16
    %0 = vector.broadcast %cst : bf16 to vector<8x128xbf16>
    %c0 = arith.constant 0 : index
    %c0_0 = arith.constant 0 : index
    %1 = vector.load %arg12[%c0, %c0_0] : memref<8x1280xbf16, #tpu.memory_space<vmem>>, vector<8x128xbf16>
    tpu.vector_store %arg12[%c0, %c0_0], %0 {strides = array<i32>} : memref<8x1280xbf16, #tpu.memory_space<vmem>>, vector<8x128xbf16>,
    %cst_1 = arith.constant 0.000000e+00 : bf16
    %2 = vector.broadcast %cst_1 : bf16 to vector<8x128xbf16>
    %c0_2 = arith.constant 0 : index
    %c1152 = arith.constant 1152 : index
    %3 = vector.load %arg12[%c0_2, %c1152] : memref<8x1280xbf16, #tpu.memory_space<vmem>>, vector<8x128xbf16>
    tpu.vector_store %arg12[%c0_2, %c1152], %2 {strides = array<i32>} : memref<8x1280xbf16, #tpu.memory_space<vmem>>, vector<8x128xbf16>,
    %cst_3 = arith.constant 0.000000e+00 : bf16
    %4 = vector.broadcast %cst_3 : bf16 to vector<8x128xbf16>
    %c0_4 = arith.constant 0 : index
    %c0_5 = arith.constant 0 : index
    %5 = vector.load %arg13[%c0_4, %c0_5] : memref<8x1280xbf16, #tpu.memory_space<vmem>>, vector<8x128xbf16>
    tpu.vector_store %arg13[%c0_4, %c0_5], %4 {strides = array<i32>} : memref<8x1280xbf16, #tpu.memory_space<vmem>>, vector<8x128xbf16>,
    %cst_6 = arith.constant 0.000000e+00 : bf16
    %6 = vector.broadcast %cst_6 : bf16 to vector<8x128xbf16>
    %c0_7 = arith.constant 0 : index
    %c1152_8 = arith.constant 1152 : index
    %7 = vector.load %arg13[%c0_7, %c1152_8] : memref<8x1280xbf16, #tpu.memory_space<vmem>>, vector<8x128xbf16>
    tpu.vector_store %arg13[%c0_7, %c1152_8], %6 {strides = array<i32>} : memref<8x1280xbf16, #tpu.memory_space<vmem>>, vector<8x128xbf16>,
    %c0_9 = arith.constant 0 : index
    %c0_10 = arith.constant 0 : index
    %c0_11 = arith.constant 0 : index
    %8 = vector.load %arg1[%c0_9, %c0_10, %c0_11] : memref<1x64x16xbf16, #tpu.memory_space<vmem>>, vector<1x64x16xbf16>
    %9 = vector.shape_cast %8 : vector<1x64x16xbf16> to vector<64x16xbf16>
    %c0_12 = arith.constant 0 : index
    %c0_13 = arith.constant 0 : index
    %10 = vector.load %arg3[%c0_12, %c0_13] : memref<16x32xbf16, #tpu.memory_space<vmem>>, vector<16x32xbf16>
    %cst_14 = arith.constant dense<0.000000e+00> : vector<64x32xf32>
    %11 = tpu.matmul %9, %10, %cst_14 {dimension_numbers = #tpu.dot_dimension_numbers<[1], [0], [0], [1], [0, 0, 1, 1], [], []>} : vector<64x16xbf16>, vector<16x32xbf16>, vector<64x32xf32> -> vector<64x32xf32>
    %12 = vector.shape_cast %11 : vector<64x32xf32> to vector<4x16x32xf32>
    %13 = vector.extract_strided_slice %12 {offsets = [0, 0, 0], sizes = [4, 1, 32], strides = [1, 1, 1]} : vector<4x16x32xf32> to vector<4x1x32xf32>
    %14 = vector.shape_cast %13 : vector<4x1x32xf32> to vector<4x32xf32>
    %15 = arith.truncf %14 : vector<4x32xf32> to vector<4x32xbf16>
    %c0_15 = arith.constant 0 : index
    %c128 = arith.constant 128 : index
    %16 = vector.load %arg12[%c0_15, %c128] : memref<8x1280xbf16, #tpu.memory_space<vmem>>, vector<4x32xbf16>
    tpu.vector_store %arg12[%c0_15, %c128], %15 {strides = array<i32>} : memref<8x1280xbf16, #tpu.memory_space<vmem>>, vector<4x32xbf16>,
    %17 = vector.extract_strided_slice %12 {offsets = [0, 0, 0], sizes = [4, 1, 32], strides = [1, 1, 1]} : vector<4x16x32xf32> to vector<4x1x32xf32>
    %18 = vector.shape_cast %17 : vector<4x1x32xf32> to vector<4x32xf32>
    %cst_16 = arith.constant 5.161290e-01 : f32
    %19 = vector.broadcast %cst_16 : f32 to vector<4x32xf32>
    %20 = arith.mulf %19, %18 : vector<4x32xf32>
    %21 = vector.extract_strided_slice %12 {offsets = [0, 1, 0], sizes = [4, 1, 32], strides = [1, 1, 1]} : vector<4x16x32xf32> to vector<4x1x32xf32>
    %22 = vector.shape_cast %21 : vector<4x1x32xf32> to vector<4x32xf32>
    %cst_17 = arith.constant 0.483870953 : f32
    %23 = vector.broadcast %cst_17 : f32 to vector<4x32xf32>
    %24 = arith.mulf %23, %22 : vector<4x32xf32>
    %25 = arith.addf %20, %24 : vector<4x32xf32>
    %26 = arith.truncf %25 : vector<4x32xf32> to vector<4x32xbf16>
    %c0_18 = arith.constant 0 : index
    %c160 = arith.constant 160 : index
    %27 = vector.load %arg12[%c0_18, %c160] : memref<8x1280xbf16, #tpu.memory_space<vmem>>, vector<4x32xbf16>
    tpu.vector_store %arg12[%c0_18, %c160], %26 {strides = array<i32>} : memref<8x1280xbf16, #tpu.memory_space<vmem>>, vector<4x32xbf16>,
    %28 = vector.extract_strided_slice %12 {offsets = [0, 0, 0], sizes = [4, 1, 32], strides = [1, 1, 1]} : vector<4x16x32xf32> to vector<4x1x32xf32>
    %29 = vector.shape_cast %28 : vector<4x1x32xf32> to vector<4x32xf32>
    %cst_19 = arith.constant 0.0322580934 : f32
    %30 = vector.broadcast %cst_19 : f32 to vector<4x32xf32>
    %31 = arith.mulf %30, %29 : vector<4x32xf32>
    %32 = vector.extract_strided_slice %12 {offsets = [0, 1, 0], sizes = [4, 1, 32], strides = [1, 1, 1]} : vector<4x16x32xf32> to vector<4x1x32xf32>
    %33 = vector.shape_cast %32 : vector<4x1x32xf32> to vector<4x32xf32>
    %cst_20 = arith.constant 0.967741906 : f32
    %34 = vector.broadcast %cst_20 : f32 to vector<4x32xf32>
    %35 = arith.mulf %34, %33 : vector<4x32xf32>
    %36 = arith.addf %31, %35 : vector<4x32xf32>
    %37 = arith.truncf %36 : vector<4x32xf32> to vector<4x32xbf16>
    %c0_21 = arith.constant 0 : index
    %c192 = arith.constant 192 : index
    %38 = vector.load %arg12[%c0_21, %c192] : memref<8x1280xbf16, #tpu.memory_space<vmem>>, vector<4x32xbf16>
    tpu.vector_store %arg12[%c0_21, %c192], %37 {strides = array<i32>} : memref<8x1280xbf16, #tpu.memory_space<vmem>>, vector<4x32xbf16>,
    %39 = vector.extract_strided_slice %12 {offsets = [0, 1, 0], sizes = [4, 1, 32], strides = [1, 1, 1]} : vector<4x16x32xf32> to vector<4x1x32xf32>
    %40 = vector.shape_cast %39 : vector<4x1x32xf32> to vector<4x32xf32>
    %cst_22 = arith.constant 0.54838711 : f32
    %41 = vector.broadcast %cst_22 : f32 to vector<4x32xf32>
    %42 = arith.mulf %41, %40 : vector<4x32xf32>
    %43 = vector.extract_strided_slice %12 {offsets = [0, 2, 0], sizes = [4, 1, 32], strides = [1, 1, 1]} : vector<4x16x32xf32> to vector<4x1x32xf32>
    %44 = vector.shape_cast %43 : vector<4x1x32xf32> to vector<4x32xf32>
    %cst_23 = arith.constant 0.45161289 : f32
    %45 = vector.broadcast %cst_23 : f32 to vector<4x32xf32>
    %46 = arith.mulf %45, %44 : vector<4x32xf32>
    %47 = arith.addf %42, %46 : vector<4x32xf32>
    %48 = arith.truncf %47 : vector<4x32xf32> to vector<4x32xbf16>
    %c0_24 = arith.constant 0 : index
    %c224 = arith.constant 224 : index
    %49 = vector.load %arg12[%c0_24, %c224] : memref<8x1280xbf16, #tpu.memory_space<vmem>>, vector<4x32xbf16>
    tpu.vector_store %arg12[%c0_24, %c224], %48 {strides = array<i32>} : memref<8x1280xbf16, #tpu.memory_space<vmem>>, vector<4x32xbf16>,
    %50 = vector.extract_strided_slice %12 {offsets = [0, 1, 0], sizes = [4, 1, 32], strides = [1, 1, 1]} : vector<4x16x32xf32> to vector<4x1x32xf32>
    %51 = vector.shape_cast %50 : vector<4x1x32xf32> to vector<4x32xf32>
    %cst_25 = arith.constant 0.0645161271 : f32
    %52 = vector.broadcast %cst_25 : f32 to vector<4x32xf32>
    %53 = arith.mulf %52, %51 : vector<4x32xf32>
    %54 = vector.extract_strided_slice %12 {offsets = [0, 2, 0], sizes = [4, 1, 32], strides = [1, 1, 1]} : vector<4x16x32xf32> to vector<4x1x32xf32>
    %55 = vector.shape_cast %54 : vector<4x1x32xf32> to vector<4x32xf32>
    %cst_26 = arith.constant 0.935483872 : f32
    %56 = vector.broadcast %cst_26 : f32 to vector<4x32xf32>
    %57 = arith.mulf %56, %55 : vector<4x32xf32>
    %58 = arith.addf %53, %57 : vector<4x32xf32>
    %59 = arith.truncf %58 : vector<4x32xf32> to vector<4x32xbf16>
    %c0_27 = arith.constant 0 : index
    %c256 = arith.constant 256 : index
    %60 = vector.load %arg12[%c0_27, %c256] : memref<8x1280xbf16, #tpu.memory_space<vmem>>, vector<4x32xbf16>
    tpu.vector_store %arg12[%c0_27, %c256], %59 {strides = array<i32>} : memref<8x1280xbf16, #tpu.memory_space<vmem>>, vector<4x32xbf16>,
    %61 = vector.extract_strided_slice %12 {offsets = [0, 2, 0], sizes = [4, 1, 32], strides = [1, 1, 1]} : vector<4x16x32xf32> to vector<4x1x32xf32>
    %62 = vector.shape_cast %61 : vector<4x1x32xf32> to vector<4x32xf32>
    %cst_28 = arith.constant 0.580645204 : f32
    %63 = vector.broadcast %cst_28 : f32 to vector<4x32xf32>
    %64 = arith.mulf %63, %62 : vector<4x32xf32>
    %65 = vector.extract_strided_slice %12 {offsets = [0, 3, 0], sizes = [4, 1, 32], strides = [1, 1, 1]} : vector<4x16x32xf32> to vector<4x1x32xf32>
    %66 = vector.shape_cast %65 : vector<4x1x32xf32> to vector<4x32xf32>
    %cst_29 = arith.constant 0.419354826 : f32
    %67 = vector.broadcast %cst_29 : f32 to vector<4x32xf32>
    %68 = arith.mulf %67, %66 : vector<4x32xf32>
    %69 = arith.addf %64, %68 : vector<4x32xf32>
    %70 = arith.truncf %69 : vector<4x32xf32> to vector<4x32xbf16>
    %c0_30 = arith.constant 0 : index
    %c288 = arith.constant 288 : index
    %71 = vector.load %arg12[%c0_30, %c288] : memref<8x1280xbf16, #tpu.memory_space<vmem>>, vector<4x32xbf16>
    tpu.vector_store %arg12[%c0_30, %c288], %70 {strides = array<i32>} : memref<8x1280xbf16, #tpu.memory_space<vmem>>, vector<4x32xbf16>,
    %72 = vector.extract_strided_slice %12 {offsets = [0, 2, 0], sizes = [4, 1, 32], strides = [1, 1, 1]} : vector<4x16x32xf32> to vector<4x1x32xf32>
    %73 = vector.shape_cast %72 : vector<4x1x32xf32> to vector<4x32xf32>
    %cst_31 = arith.constant 0.0967742204 : f32
    %74 = vector.broadcast %cst_31 : f32 to vector<4x32xf32>
    %75 = arith.mulf %74, %73 : vector<4x32xf32>
    %76 = vector.extract_strided_slice %12 {offsets = [0, 3, 0], sizes = [4, 1, 32], strides = [1, 1, 1]} : vector<4x16x32xf32> to vector<4x1x32xf32>
    %77 = vector.shape_cast %76 : vector<4x1x32xf32> to vector<4x32xf32>
    %cst_32 = arith.constant 0.903225779 : f32
    %78 = vector.broadcast %cst_32 : f32 to vector<4x32xf32>
    %79 = arith.mulf %78, %77 : vector<4x32xf32>
    %80 = arith.addf %75, %79 : vector<4x32xf32>
    %81 = arith.truncf %80 : vector<4x32xf32> to vector<4x32xbf16>
    %c0_33 = arith.constant 0 : index
    %c320 = arith.constant 320 : index
    %82 = vector.load %arg12[%c0_33, %c320] : memref<8x1280xbf16, #tpu.memory_space<vmem>>, vector<4x32xbf16>
    tpu.vector_store %arg12[%c0_33, %c320], %81 {strides = array<i32>} : memref<8x1280xbf16, #tpu.memory_space<vmem>>, vector<4x32xbf16>,
    %83 = vector.extract_strided_slice %12 {offsets = [0, 3, 0], sizes = [4, 1, 32], strides = [1, 1, 1]} : vector<4x16x32xf32> to vector<4x1x32xf32>
    %84 = vector.shape_cast %83 : vector<4x1x32xf32> to vector<4x32xf32>
    %cst_34 = arith.constant 0.612903237 : f32
    %85 = vector.broadcast %cst_34 : f32 to vector<4x32xf32>
    %86 = arith.mulf %85, %84 : vector<4x32xf32>
    %87 = vector.extract_strided_slice %12 {offsets = [0, 4, 0], sizes = [4, 1, 32], strides = [1, 1, 1]} : vector<4x16x32xf32> to vector<4x1x32xf32>
    %88 = vector.shape_cast %87 : vector<4x1x32xf32> to vector<4x32xf32>
    %cst_35 = arith.constant 0.387096763 : f32
    %89 = vector.broadcast %cst_35 : f32 to vector<4x32xf32>
    %90 = arith.mulf %89, %88 : vector<4x32xf32>
    %91 = arith.addf %86, %90 : vector<4x32xf32>
    %92 = arith.truncf %91 : vector<4x32xf32> to vector<4x32xbf16>
    %c0_36 = arith.constant 0 : index
    %c352 = arith.constant 352 : index
    %93 = vector.load %arg12[%c0_36, %c352] : memref<8x1280xbf16, #tpu.memory_space<vmem>>, vector<4x32xbf16>
    tpu.vector_store %arg12[%c0_36, %c352], %92 {strides = array<i32>} : memref<8x1280xbf16, #tpu.memory_space<vmem>>, vector<4x32xbf16>,
    %94 = vector.extract_strided_slice %12 {offsets = [0, 3, 0], sizes = [4, 1, 32], strides = [1, 1, 1]} : vector<4x16x32xf32> to vector<4x1x32xf32>
    %95 = vector.shape_cast %94 : vector<4x1x32xf32> to vector<4x32xf32>
    %cst_37 = arith.constant 0.129032254 : f32
    %96 = vector.broadcast %cst_37 : f32 to vector<4x32xf32>
    %97 = arith.mulf %96, %95 : vector<4x32xf32>
    %98 = vector.extract_strided_slice %12 {offsets = [0, 4, 0], sizes = [4, 1, 32], strides = [1, 1, 1]} : vector<4x16x32xf32> to vector<4x1x32xf32>
    %99 = vector.shape_cast %98 : vector<4x1x32xf32> to vector<4x32xf32>
    %cst_38 = arith.constant 0.870967745 : f32
    %100 = vector.broadcast %cst_38 : f32 to vector<4x32xf32>
    %101 = arith.mulf %100, %99 : vector<4x32xf32>
    %102 = arith.addf %97, %101 : vector<4x32xf32>
    %103 = arith.truncf %102 : vector<4x32xf32> to vector<4x32xbf16>
    %c0_39 = arith.constant 0 : index
    %c384 = arith.constant 384 : index
    %104 = vector.load %arg12[%c0_39, %c384] : memref<8x1280xbf16, #tpu.memory_space<vmem>>, vector<4x32xbf16>
    tpu.vector_store %arg12[%c0_39, %c384], %103 {strides = array<i32>} : memref<8x1280xbf16, #tpu.memory_space<vmem>>, vector<4x32xbf16>,
    %105 = vector.extract_strided_slice %12 {offsets = [0, 4, 0], sizes = [4, 1, 32], strides = [1, 1, 1]} : vector<4x16x32xf32> to vector<4x1x32xf32>
    %106 = vector.shape_cast %105 : vector<4x1x32xf32> to vector<4x32xf32>
    %cst_40 = arith.constant 0.645161271 : f32
    %107 = vector.broadcast %cst_40 : f32 to vector<4x32xf32>
    %108 = arith.mulf %107, %106 : vector<4x32xf32>
    %109 = vector.extract_strided_slice %12 {offsets = [0, 5, 0], sizes = [4, 1, 32], strides = [1, 1, 1]} : vector<4x16x32xf32> to vector<4x1x32xf32>
    %110 = vector.shape_cast %109 : vector<4x1x32xf32> to vector<4x32xf32>
    %cst_41 = arith.constant 0.354838699 : f32
    %111 = vector.broadcast %cst_41 : f32 to vector<4x32xf32>
    %112 = arith.mulf %111, %110 : vector<4x32xf32>
    %113 = arith.addf %108, %112 : vector<4x32xf32>
    %114 = arith.truncf %113 : vector<4x32xf32> to vector<4x32xbf16>
    %c0_42 = arith.constant 0 : index
    %c416 = arith.constant 416 : index
    %115 = vector.load %arg12[%c0_42, %c416] : memref<8x1280xbf16, #tpu.memory_space<vmem>>, vector<4x32xbf16>
    tpu.vector_store %arg12[%c0_42, %c416], %114 {strides = array<i32>} : memref<8x1280xbf16, #tpu.memory_space<vmem>>, vector<4x32xbf16>,
    %116 = vector.extract_strided_slice %12 {offsets = [0, 4, 0], sizes = [4, 1, 32], strides = [1, 1, 1]} : vector<4x16x32xf32> to vector<4x1x32xf32>
    %117 = vector.shape_cast %116 : vector<4x1x32xf32> to vector<4x32xf32>
    %cst_43 = arith.constant 0.161290348 : f32
    %118 = vector.broadcast %cst_43 : f32 to vector<4x32xf32>
    %119 = arith.mulf %118, %117 : vector<4x32xf32>
    %120 = vector.extract_strided_slice %12 {offsets = [0, 5, 0], sizes = [4, 1, 32], strides = [1, 1, 1]} : vector<4x16x32xf32> to vector<4x1x32xf32>
    %121 = vector.shape_cast %120 : vector<4x1x32xf32> to vector<4x32xf32>
    %cst_44 = arith.constant 0.838709652 : f32
    %122 = vector.broadcast %cst_44 : f32 to vector<4x32xf32>
    %123 = arith.mulf %122, %121 : vector<4x32xf32>
    %124 = arith.addf %119, %123 : vector<4x32xf32>
    %125 = arith.truncf %124 : vector<4x32xf32> to vector<4x32xbf16>
    %c0_45 = arith.constant 0 : index
    %c448 = arith.constant 448 : index
    %126 = vector.load %arg12[%c0_45, %c448] : memref<8x1280xbf16, #tpu.memory_space<vmem>>, vector<4x32xbf16>
    tpu.vector_store %arg12[%c0_45, %c448], %125 {strides = array<i32>} : memref<8x1280xbf16, #tpu.memory_space<vmem>>, vector<4x32xbf16>,
    %127 = vector.extract_strided_slice %12 {offsets = [0, 5, 0], sizes = [4, 1, 32], strides = [1, 1, 1]} : vector<4x16x32xf32> to vector<4x1x32xf32>
    %128 = vector.shape_cast %127 : vector<4x1x32xf32> to vector<4x32xf32>
    %cst_46 = arith.constant 0.677419364 : f32
    %129 = vector.broadcast %cst_46 : f32 to vector<4x32xf32>
    %130 = arith.mulf %129, %128 : vector<4x32xf32>
    %131 = vector.extract_strided_slice %12 {offsets = [0, 6, 0], sizes = [4, 1, 32], strides = [1, 1, 1]} : vector<4x16x32xf32> to vector<4x1x32xf32>
    %132 = vector.shape_cast %131 : vector<4x1x32xf32> to vector<4x32xf32>
    %cst_47 = arith.constant 0.322580636 : f32
    %133 = vector.broadcast %cst_47 : f32 to vector<4x32xf32>
    %134 = arith.mulf %133, %132 : vector<4x32xf32>
    %135 = arith.addf %130, %134 : vector<4x32xf32>
    %136 = arith.truncf %135 : vector<4x32xf32> to vector<4x32xbf16>
    %c0_48 = arith.constant 0 : index
    %c480 = arith.constant 480 : index
    %137 = vector.load %arg12[%c0_48, %c480] : memref<8x1280xbf16, #tpu.memory_space<vmem>>, vector<4x32xbf16>
    tpu.vector_store %arg12[%c0_48, %c480], %136 {strides = array<i32>} : memref<8x1280xbf16, #tpu.memory_space<vmem>>, vector<4x32xbf16>,
    %138 = vector.extract_strided_slice %12 {offsets = [0, 5, 0], sizes = [4, 1, 32], strides = [1, 1, 1]} : vector<4x16x32xf32> to vector<4x1x32xf32>
    %139 = vector.shape_cast %138 : vector<4x1x32xf32> to vector<4x32xf32>
    %cst_49 = arith.constant 0.193548381 : f32
    %140 = vector.broadcast %cst_49 : f32 to vector<4x32xf32>
    %141 = arith.mulf %140, %139 : vector<4x32xf32>
    %142 = vector.extract_strided_slice %12 {offsets = [0, 6, 0], sizes = [4, 1, 32], strides = [1, 1, 1]} : vector<4x16x32xf32> to vector<4x1x32xf32>
    %143 = vector.shape_cast %142 : vector<4x1x32xf32> to vector<4x32xf32>
    %cst_50 = arith.constant 0.806451618 : f32
    %144 = vector.broadcast %cst_50 : f32 to vector<4x32xf32>
    %145 = arith.mulf %144, %143 : vector<4x32xf32>
    %146 = arith.addf %141, %145 : vector<4x32xf32>
    %147 = arith.truncf %146 : vector<4x32xf32> to vector<4x32xbf16>
    %c0_51 = arith.constant 0 : index
    %c512 = arith.constant 512 : index
    %148 = vector.load %arg12[%c0_51, %c512] : memref<8x1280xbf16, #tpu.memory_space<vmem>>, vector<4x32xbf16>
    tpu.vector_store %arg12[%c0_51, %c512], %147 {strides = array<i32>} : memref<8x1280xbf16, #tpu.memory_space<vmem>>, vector<4x32xbf16>,
    %149 = vector.extract_strided_slice %12 {offsets = [0, 6, 0], sizes = [4, 1, 32], strides = [1, 1, 1]} : vector<4x16x32xf32> to vector<4x1x32xf32>
    %150 = vector.shape_cast %149 : vector<4x1x32xf32> to vector<4x32xf32>
    %cst_52 = arith.constant 0.709677458 : f32
    %151 = vector.broadcast %cst_52 : f32 to vector<4x32xf32>
    %152 = arith.mulf %151, %150 : vector<4x32xf32>
    %153 = vector.extract_strided_slice %12 {offsets = [0, 7, 0], sizes = [4, 1, 32], strides = [1, 1, 1]} : vector<4x16x32xf32> to vector<4x1x32xf32>
    %154 = vector.shape_cast %153 : vector<4x1x32xf32> to vector<4x32xf32>
    %cst_53 = arith.constant 0.290322572 : f32
    %155 = vector.broadcast %cst_53 : f32 to vector<4x32xf32>
    %156 = arith.mulf %155, %154 : vector<4x32xf32>
    %157 = arith.addf %152, %156 : vector<4x32xf32>
    %158 = arith.truncf %157 : vector<4x32xf32> to vector<4x32xbf16>
    %c0_54 = arith.constant 0 : index
    %c544 = arith.constant 544 : index
    %159 = vector.load %arg12[%c0_54, %c544] : memref<8x1280xbf16, #tpu.memory_space<vmem>>, vector<4x32xbf16>
    tpu.vector_store %arg12[%c0_54, %c544], %158 {strides = array<i32>} : memref<8x1280xbf16, #tpu.memory_space<vmem>>, vector<4x32xbf16>,
    %160 = vector.extract_strided_slice %12 {offsets = [0, 6, 0], sizes = [4, 1, 32], strides = [1, 1, 1]} : vector<4x16x32xf32> to vector<4x1x32xf32>
    %161 = vector.shape_cast %160 : vector<4x1x32xf32> to vector<4x32xf32>
    %cst_55 = arith.constant 0.225806475 : f32
    %162 = vector.broadcast %cst_55 : f32 to vector<4x32xf32>
    %163 = arith.mulf %162, %161 : vector<4x32xf32>
    %164 = vector.extract_strided_slice %12 {offsets = [0, 7, 0], sizes = [4, 1, 32], strides = [1, 1, 1]} : vector<4x16x32xf32> to vector<4x1x32xf32>
    %165 = vector.shape_cast %164 : vector<4x1x32xf32> to vector<4x32xf32>
    %cst_56 = arith.constant 0.774193525 : f32
    %166 = vector.broadcast %cst_56 : f32 to vector<4x32xf32>
    %167 = arith.mulf %166, %165 : vector<4x32xf32>
    %168 = arith.addf %163, %167 : vector<4x32xf32>
    %169 = arith.truncf %168 : vector<4x32xf32> to vector<4x32xbf16>
    %c0_57 = arith.constant 0 : index
    %c576 = arith.constant 576 : index
    %170 = vector.load %arg12[%c0_57, %c576] : memref<8x1280xbf16, #tpu.memory_space<vmem>>, vector<4x32xbf16>
    tpu.vector_store %arg12[%c0_57, %c576], %169 {strides = array<i32>} : memref<8x1280xbf16, #tpu.memory_space<vmem>>, vector<4x32xbf16>,
    %171 = vector.extract_strided_slice %12 {offsets = [0, 7, 0], sizes = [4, 1, 32], strides = [1, 1, 1]} : vector<4x16x32xf32> to vector<4x1x32xf32>
    %172 = vector.shape_cast %171 : vector<4x1x32xf32> to vector<4x32xf32>
    %cst_58 = arith.constant 0.741935492 : f32
    %173 = vector.broadcast %cst_58 : f32 to vector<4x32xf32>
    %174 = arith.mulf %173, %172 : vector<4x32xf32>
    %175 = vector.extract_strided_slice %12 {offsets = [0, 8, 0], sizes = [4, 1, 32], strides = [1, 1, 1]} : vector<4x16x32xf32> to vector<4x1x32xf32>
    %176 = vector.shape_cast %175 : vector<4x1x32xf32> to vector<4x32xf32>
    %cst_59 = arith.constant 0.258064508 : f32
    %177 = vector.broadcast %cst_59 : f32 to vector<4x32xf32>
    %178 = arith.mulf %177, %176 : vector<4x32xf32>
    %179 = arith.addf %174, %178 : vector<4x32xf32>
    %180 = arith.truncf %179 : vector<4x32xf32> to vector<4x32xbf16>
    %c0_60 = arith.constant 0 : index
    %c608 = arith.constant 608 : index
    %181 = vector.load %arg12[%c0_60, %c608] : memref<8x1280xbf16, #tpu.memory_space<vmem>>, vector<4x32xbf16>
    tpu.vector_store %arg12[%c0_60, %c608], %180 {strides = array<i32>} : memref<8x1280xbf16, #tpu.memory_space<vmem>>, vector<4x32xbf16>,
    %182 = vector.extract_strided_slice %12 {offsets = [0, 7, 0], sizes = [4, 1, 32], strides = [1, 1, 1]} : vector<4x16x32xf32> to vector<4x1x32xf32>
    %183 = vector.shape_cast %182 : vector<4x1x32xf32> to vector<4x32xf32>
    %cst_61 = arith.constant 0.258064508 : f32
    %184 = vector.broadcast %cst_61 : f32 to vector<4x32xf32>
    %185 = arith.mulf %184, %183 : vector<4x32xf32>
    %186 = vector.extract_strided_slice %12 {offsets = [0, 8, 0], sizes = [4, 1, 32], strides = [1, 1, 1]} : vector<4x16x32xf32> to vector<4x1x32xf32>
    %187 = vector.shape_cast %186 : vector<4x1x32xf32> to vector<4x32xf32>
    %cst_62 = arith.constant 0.741935492 : f32
    %188 = vector.broadcast %cst_62 : f32 to vector<4x32xf32>
    %189 = arith.mulf %188, %187 : vector<4x32xf32>
    %190 = arith.addf %185, %189 : vector<4x32xf32>
    %191 = arith.truncf %190 : vector<4x32xf32> to vector<4x32xbf16>
    %c0_63 = arith.constant 0 : index
    %c640 = arith.constant 640 : index
    %192 = vector.load %arg12[%c0_63, %c640] : memref<8x1280xbf16, #tpu.memory_space<vmem>>, vector<4x32xbf16>
    tpu.vector_store %arg12[%c0_63, %c640], %191 {strides = array<i32>} : memref<8x1280xbf16, #tpu.memory_space<vmem>>, vector<4x32xbf16>,
    %193 = vector.extract_strided_slice %12 {offsets = [0, 8, 0], sizes = [4, 1, 32], strides = [1, 1, 1]} : vector<4x16x32xf32> to vector<4x1x32xf32>
    %194 = vector.shape_cast %193 : vector<4x1x32xf32> to vector<4x32xf32>
    %cst_64 = arith.constant 0.774193525 : f32
    %195 = vector.broadcast %cst_64 : f32 to vector<4x32xf32>
    %196 = arith.mulf %195, %194 : vector<4x32xf32>
    %197 = vector.extract_strided_slice %12 {offsets = [0, 9, 0], sizes = [4, 1, 32], strides = [1, 1, 1]} : vector<4x16x32xf32> to vector<4x1x32xf32>
    %198 = vector.shape_cast %197 : vector<4x1x32xf32> to vector<4x32xf32>
    %cst_65 = arith.constant 0.225806445 : f32
    %199 = vector.broadcast %cst_65 : f32 to vector<4x32xf32>
    %200 = arith.mulf %199, %198 : vector<4x32xf32>
    %201 = arith.addf %196, %200 : vector<4x32xf32>
    %202 = arith.truncf %201 : vector<4x32xf32> to vector<4x32xbf16>
    %c0_66 = arith.constant 0 : index
    %c672 = arith.constant 672 : index
    %203 = vector.load %arg12[%c0_66, %c672] : memref<8x1280xbf16, #tpu.memory_space<vmem>>, vector<4x32xbf16>
    tpu.vector_store %arg12[%c0_66, %c672], %202 {strides = array<i32>} : memref<8x1280xbf16, #tpu.memory_space<vmem>>, vector<4x32xbf16>,
    %204 = vector.extract_strided_slice %12 {offsets = [0, 8, 0], sizes = [4, 1, 32], strides = [1, 1, 1]} : vector<4x16x32xf32> to vector<4x1x32xf32>
    %205 = vector.shape_cast %204 : vector<4x1x32xf32> to vector<4x32xf32>
    %cst_67 = arith.constant 0.290322602 : f32
    %206 = vector.broadcast %cst_67 : f32 to vector<4x32xf32>
    %207 = arith.mulf %206, %205 : vector<4x32xf32>
    %208 = vector.extract_strided_slice %12 {offsets = [0, 9, 0], sizes = [4, 1, 32], strides = [1, 1, 1]} : vector<4x16x32xf32> to vector<4x1x32xf32>
    %209 = vector.shape_cast %208 : vector<4x1x32xf32> to vector<4x32xf32>
    %cst_68 = arith.constant 0.709677398 : f32
    %210 = vector.broadcast %cst_68 : f32 to vector<4x32xf32>
    %211 = arith.mulf %210, %209 : vector<4x32xf32>
    %212 = arith.addf %207, %211 : vector<4x32xf32>
    %213 = arith.truncf %212 : vector<4x32xf32> to vector<4x32xbf16>
    %c0_69 = arith.constant 0 : index
    %c704 = arith.constant 704 : index
    %214 = vector.load %arg12[%c0_69, %c704] : memref<8x1280xbf16, #tpu.memory_space<vmem>>, vector<4x32xbf16>
    tpu.vector_store %arg12[%c0_69, %c704], %213 {strides = array<i32>} : memref<8x1280xbf16, #tpu.memory_space<vmem>>, vector<4x32xbf16>,
    %215 = vector.extract_strided_slice %12 {offsets = [0, 9, 0], sizes = [4, 1, 32], strides = [1, 1, 1]} : vector<4x16x32xf32> to vector<4x1x32xf32>
    %216 = vector.shape_cast %215 : vector<4x1x32xf32> to vector<4x32xf32>
    %cst_70 = arith.constant 0.806451618 : f32
    %217 = vector.broadcast %cst_70 : f32 to vector<4x32xf32>
    %218 = arith.mulf %217, %216 : vector<4x32xf32>
    %219 = vector.extract_strided_slice %12 {offsets = [0, 10, 0], sizes = [4, 1, 32], strides = [1, 1, 1]} : vector<4x16x32xf32> to vector<4x1x32xf32>
    %220 = vector.shape_cast %219 : vector<4x1x32xf32> to vector<4x32xf32>
    %cst_71 = arith.constant 0.193548381 : f32
    %221 = vector.broadcast %cst_71 : f32 to vector<4x32xf32>
    %222 = arith.mulf %221, %220 : vector<4x32xf32>
    %223 = arith.addf %218, %222 : vector<4x32xf32>
    %224 = arith.truncf %223 : vector<4x32xf32> to vector<4x32xbf16>
    %c0_72 = arith.constant 0 : index
    %c736 = arith.constant 736 : index
    %225 = vector.load %arg12[%c0_72, %c736] : memref<8x1280xbf16, #tpu.memory_space<vmem>>, vector<4x32xbf16>
    tpu.vector_store %arg12[%c0_72, %c736], %224 {strides = array<i32>} : memref<8x1280xbf16, #tpu.memory_space<vmem>>, vector<4x32xbf16>,
    %226 = vector.extract_strided_slice %12 {offsets = [0, 9, 0], sizes = [4, 1, 32], strides = [1, 1, 1]} : vector<4x16x32xf32> to vector<4x1x32xf32>
    %227 = vector.shape_cast %226 : vector<4x1x32xf32> to vector<4x32xf32>
    %cst_73 = arith.constant 0.322580636 : f32
    %228 = vector.broadcast %cst_73 : f32 to vector<4x32xf32>
    %229 = arith.mulf %228, %227 : vector<4x32xf32>
    %230 = vector.extract_strided_slice %12 {offsets = [0, 10, 0], sizes = [4, 1, 32], strides = [1, 1, 1]} : vector<4x16x32xf32> to vector<4x1x32xf32>
    %231 = vector.shape_cast %230 : vector<4x1x32xf32> to vector<4x32xf32>
    %cst_74 = arith.constant 0.677419364 : f32
    %232 = vector.broadcast %cst_74 : f32 to vector<4x32xf32>
    %233 = arith.mulf %232, %231 : vector<4x32xf32>
    %234 = arith.addf %229, %233 : vector<4x32xf32>
    %235 = arith.truncf %234 : vector<4x32xf32> to vector<4x32xbf16>
    %c0_75 = arith.constant 0 : index
    %c768 = arith.constant 768 : index
    %236 = vector.load %arg12[%c0_75, %c768] : memref<8x1280xbf16, #tpu.memory_space<vmem>>, vector<4x32xbf16>
    tpu.vector_store %arg12[%c0_75, %c768], %235 {strides = array<i32>} : memref<8x1280xbf16, #tpu.memory_space<vmem>>, vector<4x32xbf16>,
    %237 = vector.extract_strided_slice %12 {offsets = [0, 10, 0], sizes = [4, 1, 32], strides = [1, 1, 1]} : vector<4x16x32xf32> to vector<4x1x32xf32>
    %238 = vector.shape_cast %237 : vector<4x1x32xf32> to vector<4x32xf32>
    %cst_76 = arith.constant 0.838709712 : f32
    %239 = vector.broadcast %cst_76 : f32 to vector<4x32xf32>
    %240 = arith.mulf %239, %238 : vector<4x32xf32>
    %241 = vector.extract_strided_slice %12 {offsets = [0, 11, 0], sizes = [4, 1, 32], strides = [1, 1, 1]} : vector<4x16x32xf32> to vector<4x1x32xf32>
    %242 = vector.shape_cast %241 : vector<4x1x32xf32> to vector<4x32xf32>
    %cst_77 = arith.constant 0.161290318 : f32
    %243 = vector.broadcast %cst_77 : f32 to vector<4x32xf32>
    %244 = arith.mulf %243, %242 : vector<4x32xf32>
    %245 = arith.addf %240, %244 : vector<4x32xf32>
    %246 = arith.truncf %245 : vector<4x32xf32> to vector<4x32xbf16>
    %c0_78 = arith.constant 0 : index
    %c800 = arith.constant 800 : index
    %247 = vector.load %arg12[%c0_78, %c800] : memref<8x1280xbf16, #tpu.memory_space<vmem>>, vector<4x32xbf16>
    tpu.vector_store %arg12[%c0_78, %c800], %246 {strides = array<i32>} : memref<8x1280xbf16, #tpu.memory_space<vmem>>, vector<4x32xbf16>,
    %248 = vector.extract_strided_slice %12 {offsets = [0, 10, 0], sizes = [4, 1, 32], strides = [1, 1, 1]} : vector<4x16x32xf32> to vector<4x1x32xf32>
    %249 = vector.shape_cast %248 : vector<4x1x32xf32> to vector<4x32xf32>
    %cst_79 = arith.constant 0.354838729 : f32
    %250 = vector.broadcast %cst_79 : f32 to vector<4x32xf32>
    %251 = arith.mulf %250, %249 : vector<4x32xf32>
    %252 = vector.extract_strided_slice %12 {offsets = [0, 11, 0], sizes = [4, 1, 32], strides = [1, 1, 1]} : vector<4x16x32xf32> to vector<4x1x32xf32>
    %253 = vector.shape_cast %252 : vector<4x1x32xf32> to vector<4x32xf32>
    %cst_80 = arith.constant 0.645161271 : f32
    %254 = vector.broadcast %cst_80 : f32 to vector<4x32xf32>
    %255 = arith.mulf %254, %253 : vector<4x32xf32>
    %256 = arith.addf %251, %255 : vector<4x32xf32>
    %257 = arith.truncf %256 : vector<4x32xf32> to vector<4x32xbf16>
    %c0_81 = arith.constant 0 : index
    %c832 = arith.constant 832 : index
    %258 = vector.load %arg12[%c0_81, %c832] : memref<8x1280xbf16, #tpu.memory_space<vmem>>, vector<4x32xbf16>
    tpu.vector_store %arg12[%c0_81, %c832], %257 {strides = array<i32>} : memref<8x1280xbf16, #tpu.memory_space<vmem>>, vector<4x32xbf16>,
    %259 = vector.extract_strided_slice %12 {offsets = [0, 11, 0], sizes = [4, 1, 32], strides = [1, 1, 1]} : vector<4x16x32xf32> to vector<4x1x32xf32>
    %260 = vector.shape_cast %259 : vector<4x1x32xf32> to vector<4x32xf32>
    %cst_82 = arith.constant 0.870967745 : f32
    %261 = vector.broadcast %cst_82 : f32 to vector<4x32xf32>
    %262 = arith.mulf %261, %260 : vector<4x32xf32>
    %263 = vector.extract_strided_slice %12 {offsets = [0, 12, 0], sizes = [4, 1, 32], strides = [1, 1, 1]} : vector<4x16x32xf32> to vector<4x1x32xf32>
    %264 = vector.shape_cast %263 : vector<4x1x32xf32> to vector<4x32xf32>
    %cst_83 = arith.constant 0.129032254 : f32
    %265 = vector.broadcast %cst_83 : f32 to vector<4x32xf32>
    %266 = arith.mulf %265, %264 : vector<4x32xf32>
    %267 = arith.addf %262, %266 : vector<4x32xf32>
    %268 = arith.truncf %267 : vector<4x32xf32> to vector<4x32xbf16>
    %c0_84 = arith.constant 0 : index
    %c864 = arith.constant 864 : index
    %269 = vector.load %arg12[%c0_84, %c864] : memref<8x1280xbf16, #tpu.memory_space<vmem>>, vector<4x32xbf16>
    tpu.vector_store %arg12[%c0_84, %c864], %268 {strides = array<i32>} : memref<8x1280xbf16, #tpu.memory_space<vmem>>, vector<4x32xbf16>,
    %270 = vector.extract_strided_slice %12 {offsets = [0, 11, 0], sizes = [4, 1, 32], strides = [1, 1, 1]} : vector<4x16x32xf32> to vector<4x1x32xf32>
    %271 = vector.shape_cast %270 : vector<4x1x32xf32> to vector<4x32xf32>
    %cst_85 = arith.constant 0.387096763 : f32
    %272 = vector.broadcast %cst_85 : f32 to vector<4x32xf32>
    %273 = arith.mulf %272, %271 : vector<4x32xf32>
    %274 = vector.extract_strided_slice %12 {offsets = [0, 12, 0], sizes = [4, 1, 32], strides = [1, 1, 1]} : vector<4x16x32xf32> to vector<4x1x32xf32>
    %275 = vector.shape_cast %274 : vector<4x1x32xf32> to vector<4x32xf32>
    %cst_86 = arith.constant 0.612903237 : f32
    %276 = vector.broadcast %cst_86 : f32 to vector<4x32xf32>
    %277 = arith.mulf %276, %275 : vector<4x32xf32>
    %278 = arith.addf %273, %277 : vector<4x32xf32>
    %279 = arith.truncf %278 : vector<4x32xf32> to vector<4x32xbf16>
    %c0_87 = arith.constant 0 : index
    %c896 = arith.constant 896 : index
    %280 = vector.load %arg12[%c0_87, %c896] : memref<8x1280xbf16, #tpu.memory_space<vmem>>, vector<4x32xbf16>
    tpu.vector_store %arg12[%c0_87, %c896], %279 {strides = array<i32>} : memref<8x1280xbf16, #tpu.memory_space<vmem>>, vector<4x32xbf16>,
    %281 = vector.extract_strided_slice %12 {offsets = [0, 12, 0], sizes = [4, 1, 32], strides = [1, 1, 1]} : vector<4x16x32xf32> to vector<4x1x32xf32>
    %282 = vector.shape_cast %281 : vector<4x1x32xf32> to vector<4x32xf32>
    %cst_88 = arith.constant 0.903225779 : f32
    %283 = vector.broadcast %cst_88 : f32 to vector<4x32xf32>
    %284 = arith.mulf %283, %282 : vector<4x32xf32>
    %285 = vector.extract_strided_slice %12 {offsets = [0, 13, 0], sizes = [4, 1, 32], strides = [1, 1, 1]} : vector<4x16x32xf32> to vector<4x1x32xf32>
    %286 = vector.shape_cast %285 : vector<4x1x32xf32> to vector<4x32xf32>
    %cst_89 = arith.constant 0.0967741906 : f32
    %287 = vector.broadcast %cst_89 : f32 to vector<4x32xf32>
    %288 = arith.mulf %287, %286 : vector<4x32xf32>
    %289 = arith.addf %284, %288 : vector<4x32xf32>
    %290 = arith.truncf %289 : vector<4x32xf32> to vector<4x32xbf16>
    %c0_90 = arith.constant 0 : index
    %c928 = arith.constant 928 : index
    %291 = vector.load %arg12[%c0_90, %c928] : memref<8x1280xbf16, #tpu.memory_space<vmem>>, vector<4x32xbf16>
    tpu.vector_store %arg12[%c0_90, %c928], %290 {strides = array<i32>} : memref<8x1280xbf16, #tpu.memory_space<vmem>>, vector<4x32xbf16>,
    %292 = vector.extract_strided_slice %12 {offsets = [0, 12, 0], sizes = [4, 1, 32], strides = [1, 1, 1]} : vector<4x16x32xf32> to vector<4x1x32xf32>
    %293 = vector.shape_cast %292 : vector<4x1x32xf32> to vector<4x32xf32>
    %cst_91 = arith.constant 0.419354856 : f32
    %294 = vector.broadcast %cst_91 : f32 to vector<4x32xf32>
    %295 = arith.mulf %294, %293 : vector<4x32xf32>
    %296 = vector.extract_strided_slice %12 {offsets = [0, 13, 0], sizes = [4, 1, 32], strides = [1, 1, 1]} : vector<4x16x32xf32> to vector<4x1x32xf32>
    %297 = vector.shape_cast %296 : vector<4x1x32xf32> to vector<4x32xf32>
    %cst_92 = arith.constant 0.580645144 : f32
    %298 = vector.broadcast %cst_92 : f32 to vector<4x32xf32>
    %299 = arith.mulf %298, %297 : vector<4x32xf32>
    %300 = arith.addf %295, %299 : vector<4x32xf32>
    %301 = arith.truncf %300 : vector<4x32xf32> to vector<4x32xbf16>
    %c0_93 = arith.constant 0 : index
    %c960 = arith.constant 960 : index
    %302 = vector.load %arg12[%c0_93, %c960] : memref<8x1280xbf16, #tpu.memory_space<vmem>>, vector<4x32xbf16>
    tpu.vector_store %arg12[%c0_93, %c960], %301 {strides = array<i32>} : memref<8x1280xbf16, #tpu.memory_space<vmem>>, vector<4x32xbf16>,
    %303 = vector.extract_strided_slice %12 {offsets = [0, 13, 0], sizes = [4, 1, 32], strides = [1, 1, 1]} : vector<4x16x32xf32> to vector<4x1x32xf32>
    %304 = vector.shape_cast %303 : vector<4x1x32xf32> to vector<4x32xf32>
    %cst_94 = arith.constant 0.935483872 : f32
    %305 = vector.broadcast %cst_94 : f32 to vector<4x32xf32>
    %306 = arith.mulf %305, %304 : vector<4x32xf32>
    %307 = vector.extract_strided_slice %12 {offsets = [0, 14, 0], sizes = [4, 1, 32], strides = [1, 1, 1]} : vector<4x16x32xf32> to vector<4x1x32xf32>
    %308 = vector.shape_cast %307 : vector<4x1x32xf32> to vector<4x32xf32>
    %cst_95 = arith.constant 0.0645161271 : f32
    %309 = vector.broadcast %cst_95 : f32 to vector<4x32xf32>
    %310 = arith.mulf %309, %308 : vector<4x32xf32>
    %311 = arith.addf %306, %310 : vector<4x32xf32>
    %312 = arith.truncf %311 : vector<4x32xf32> to vector<4x32xbf16>
    %c0_96 = arith.constant 0 : index
    %c992 = arith.constant 992 : index
    %313 = vector.load %arg12[%c0_96, %c992] : memref<8x1280xbf16, #tpu.memory_space<vmem>>, vector<4x32xbf16>
    tpu.vector_store %arg12[%c0_96, %c992], %312 {strides = array<i32>} : memref<8x1280xbf16, #tpu.memory_space<vmem>>, vector<4x32xbf16>,
    %314 = vector.extract_strided_slice %12 {offsets = [0, 13, 0], sizes = [4, 1, 32], strides = [1, 1, 1]} : vector<4x16x32xf32> to vector<4x1x32xf32>
    %315 = vector.shape_cast %314 : vector<4x1x32xf32> to vector<4x32xf32>
    %cst_97 = arith.constant 0.45161289 : f32
    %316 = vector.broadcast %cst_97 : f32 to vector<4x32xf32>
    %317 = arith.mulf %316, %315 : vector<4x32xf32>
    %318 = vector.extract_strided_slice %12 {offsets = [0, 14, 0], sizes = [4, 1, 32], strides = [1, 1, 1]} : vector<4x16x32xf32> to vector<4x1x32xf32>
    %319 = vector.shape_cast %318 : vector<4x1x32xf32> to vector<4x32xf32>
    %cst_98 = arith.constant 0.54838711 : f32
    %320 = vector.broadcast %cst_98 : f32 to vector<4x32xf32>
    %321 = arith.mulf %320, %319 : vector<4x32xf32>
    %322 = arith.addf %317, %321 : vector<4x32xf32>
    %323 = arith.truncf %322 : vector<4x32xf32> to vector<4x32xbf16>
    %c0_99 = arith.constant 0 : index
    %c1024 = arith.constant 1024 : index
    %324 = vector.load %arg12[%c0_99, %c1024] : memref<8x1280xbf16, #tpu.memory_space<vmem>>, vector<4x32xbf16>
    tpu.vector_store %arg12[%c0_99, %c1024], %323 {strides = array<i32>} : memref<8x1280xbf16, #tpu.memory_space<vmem>>, vector<4x32xbf16>,
    %325 = vector.extract_strided_slice %12 {offsets = [0, 14, 0], sizes = [4, 1, 32], strides = [1, 1, 1]} : vector<4x16x32xf32> to vector<4x1x32xf32>
    %326 = vector.shape_cast %325 : vector<4x1x32xf32> to vector<4x32xf32>
    %cst_100 = arith.constant 0.967741966 : f32
    %327 = vector.broadcast %cst_100 : f32 to vector<4x32xf32>
    %328 = arith.mulf %327, %326 : vector<4x32xf32>
    %329 = vector.extract_strided_slice %12 {offsets = [0, 15, 0], sizes = [4, 1, 32], strides = [1, 1, 1]} : vector<4x16x32xf32> to vector<4x1x32xf32>
    %330 = vector.shape_cast %329 : vector<4x1x32xf32> to vector<4x32xf32>
    %cst_101 = arith.constant 0.0322580636 : f32
    %331 = vector.broadcast %cst_101 : f32 to vector<4x32xf32>
    %332 = arith.mulf %331, %330 : vector<4x32xf32>
    %333 = arith.addf %328, %332 : vector<4x32xf32>
    %334 = arith.truncf %333 : vector<4x32xf32> to vector<4x32xbf16>
    %c0_102 = arith.constant 0 : index
    %c1056 = arith.constant 1056 : index
    %335 = vector.load %arg12[%c0_102, %c1056] : memref<8x1280xbf16, #tpu.memory_space<vmem>>, vector<4x32xbf16>
    tpu.vector_store %arg12[%c0_102, %c1056], %334 {strides = array<i32>} : memref<8x1280xbf16, #tpu.memory_space<vmem>>, vector<4x32xbf16>,
    %336 = vector.extract_strided_slice %12 {offsets = [0, 14, 0], sizes = [4, 1, 32], strides = [1, 1, 1]} : vector<4x16x32xf32> to vector<4x1x32xf32>
    %337 = vector.shape_cast %336 : vector<4x1x32xf32> to vector<4x32xf32>
    %cst_103 = arith.constant 0.483870983 : f32
    %338 = vector.broadcast %cst_103 : f32 to vector<4x32xf32>
    %339 = arith.mulf %338, %337 : vector<4x32xf32>
    %340 = vector.extract_strided_slice %12 {offsets = [0, 15, 0], sizes = [4, 1, 32], strides = [1, 1, 1]} : vector<4x16x32xf32> to vector<4x1x32xf32>
    %341 = vector.shape_cast %340 : vector<4x1x32xf32> to vector<4x32xf32>
    %cst_104 = arith.constant 5.161290e-01 : f32
    %342 = vector.broadcast %cst_104 : f32 to vector<4x32xf32>
    %343 = arith.mulf %342, %341 : vector<4x32xf32>
    %344 = arith.addf %339, %343 : vector<4x32xf32>
    %345 = arith.truncf %344 : vector<4x32xf32> to vector<4x32xbf16>
    %c0_105 = arith.constant 0 : index
    %c1088 = arith.constant 1088 : index
    %346 = vector.load %arg12[%c0_105, %c1088] : memref<8x1280xbf16, #tpu.memory_space<vmem>>, vector<4x32xbf16>
    tpu.vector_store %arg12[%c0_105, %c1088], %345 {strides = array<i32>} : memref<8x1280xbf16, #tpu.memory_space<vmem>>, vector<4x32xbf16>,
    %347 = vector.extract_strided_slice %12 {offsets = [0, 15, 0], sizes = [4, 1, 32], strides = [1, 1, 1]} : vector<4x16x32xf32> to vector<4x1x32xf32>
    %348 = vector.shape_cast %347 : vector<4x1x32xf32> to vector<4x32xf32>
    %349 = arith.truncf %348 : vector<4x32xf32> to vector<4x32xbf16>
    %c0_106 = arith.constant 0 : index
    %c1120 = arith.constant 1120 : index
    %350 = vector.load %arg12[%c0_106, %c1120] : memref<8x1280xbf16, #tpu.memory_space<vmem>>, vector<4x32xbf16>
    tpu.vector_store %arg12[%c0_106, %c1120], %349 {strides = array<i32>} : memref<8x1280xbf16, #tpu.memory_space<vmem>>, vector<4x32xbf16>,
    %cst_107 = arith.constant 0.000000e+00 : f32
    %351 = vector.broadcast %cst_107 : f32 to vector<4x1024xf32>
    %c0_108 = arith.constant 0 : index
    %c62 = arith.constant 62 : index
    %352 = vector.load %arg12[%c0_108, %c62] : memref<8x1280xbf16, #tpu.memory_space<vmem>>, vector<4x1024xbf16>
    %c0_109 = arith.constant 0 : index
    %c0_110 = arith.constant 0 : index
    %353 = vector.load %arg4[%c0_109, %c0_110] : memref<5x1024xbf16, #tpu.memory_space<vmem>>, vector<1x1024xbf16>
    %354 = vector.broadcast %353 : vector<1x1024xbf16> to vector<4x1024xbf16>
    %355 = arith.mulf %352, %354 : vector<4x1024xbf16>
    %c0_111 = arith.constant 0 : index
    %c0_112 = arith.constant 0 : index
    %c0_113 = arith.constant 0 : index
    %356 = vector.load %arg5[%c0_111, %c0_112, %c0_113] : memref<9x4x1xf32, #tpu.memory_space<vmem>>, vector<1x4x1xf32>
    %357 = vector.shape_cast %356 : vector<1x4x1xf32> to vector<4x1xf32>
    %358 = arith.extf %355 : vector<4x1024xbf16> to vector<4x1024xf32>
    %359 = vector.broadcast %357 : vector<4x1xf32> to vector<4x1024xf32>
    %360 = arith.mulf %359, %358 : vector<4x1024xf32>
    %361 = arith.addf %351, %360 : vector<4x1024xf32>
    %c0_114 = arith.constant 0 : index
    %c64 = arith.constant 64 : index
    %362 = vector.load %arg12[%c0_114, %c64] : memref<8x1280xbf16, #tpu.memory_space<vmem>>, vector<4x1024xbf16>
    %c1 = arith.constant 1 : index
    %c0_115 = arith.constant 0 : index
    %c0_116 = arith.constant 0 : index
    %363 = vector.load %arg5[%c1, %c0_115, %c0_116] : memref<9x4x1xf32, #tpu.memory_space<vmem>>, vector<1x4x1xf32>
    %364 = vector.shape_cast %363 : vector<1x4x1xf32> to vector<4x1xf32>
    %365 = arith.extf %362 : vector<4x1024xbf16> to vector<4x1024xf32>
    %366 = vector.broadcast %364 : vector<4x1xf32> to vector<4x1024xf32>
    %367 = arith.mulf %366, %365 : vector<4x1024xf32>
    %368 = arith.addf %361, %367 : vector<4x1024xf32>
    %c0_117 = arith.constant 0 : index
    %c66 = arith.constant 66 : index
    %369 = vector.load %arg12[%c0_117, %c66] : memref<8x1280xbf16, #tpu.memory_space<vmem>>, vector<4x1024xbf16>
    %c4 = arith.constant 4 : index
    %c0_118 = arith.constant 0 : index
    %370 = vector.load %arg4[%c4, %c0_118] : memref<5x1024xbf16, #tpu.memory_space<vmem>>, vector<1x1024xbf16>
    %371 = vector.broadcast %370 : vector<1x1024xbf16> to vector<4x1024xbf16>
    %372 = arith.mulf %369, %371 : vector<4x1024xbf16>
    %c2 = arith.constant 2 : index
    %c0_119 = arith.constant 0 : index
    %c0_120 = arith.constant 0 : index
    %373 = vector.load %arg5[%c2, %c0_119, %c0_120] : memref<9x4x1xf32, #tpu.memory_space<vmem>>, vector<1x4x1xf32>
    %374 = vector.shape_cast %373 : vector<1x4x1xf32> to vector<4x1xf32>
    %375 = arith.extf %372 : vector<4x1024xbf16> to vector<4x1024xf32>
    %376 = vector.broadcast %374 : vector<4x1xf32> to vector<4x1024xf32>
    %377 = arith.mulf %376, %375 : vector<4x1024xf32>
    %378 = arith.addf %368, %377 : vector<4x1024xf32>
    %c0_121 = arith.constant 0 : index
    %c126 = arith.constant 126 : index
    %379 = vector.load %arg12[%c0_121, %c126] : memref<8x1280xbf16, #tpu.memory_space<vmem>>, vector<4x1024xbf16>
    %c0_122 = arith.constant 0 : index
    %c0_123 = arith.constant 0 : index
    %380 = vector.load %arg4[%c0_122, %c0_123] : memref<5x1024xbf16, #tpu.memory_space<vmem>>, vector<1x1024xbf16>
    %381 = vector.broadcast %380 : vector<1x1024xbf16> to vector<4x1024xbf16>
    %382 = arith.mulf %379, %381 : vector<4x1024xbf16>
    %c3 = arith.constant 3 : index
    %c0_124 = arith.constant 0 : index
    %c0_125 = arith.constant 0 : index
    %383 = vector.load %arg5[%c3, %c0_124, %c0_125] : memref<9x4x1xf32, #tpu.memory_space<vmem>>, vector<1x4x1xf32>
    %384 = vector.shape_cast %383 : vector<1x4x1xf32> to vector<4x1xf32>
    %385 = arith.extf %382 : vector<4x1024xbf16> to vector<4x1024xf32>
    %386 = vector.broadcast %384 : vector<4x1xf32> to vector<4x1024xf32>
    %387 = arith.mulf %386, %385 : vector<4x1024xf32>
    %388 = arith.addf %378, %387 : vector<4x1024xf32>
    %c0_126 = arith.constant 0 : index
    %c128_127 = arith.constant 128 : index
    %389 = vector.load %arg12[%c0_126, %c128_127] : memref<8x1280xbf16, #tpu.memory_space<vmem>>, vector<4x1024xbf16>
    %c4_128 = arith.constant 4 : index
    %c0_129 = arith.constant 0 : index
    %c0_130 = arith.constant 0 : index
    %390 = vector.load %arg5[%c4_128, %c0_129, %c0_130] : memref<9x4x1xf32, #tpu.memory_space<vmem>>, vector<1x4x1xf32>
    %391 = vector.shape_cast %390 : vector<1x4x1xf32> to vector<4x1xf32>
    %392 = arith.extf %389 : vector<4x1024xbf16> to vector<4x1024xf32>
    %393 = vector.broadcast %391 : vector<4x1xf32> to vector<4x1024xf32>
    %394 = arith.mulf %393, %392 : vector<4x1024xf32>
    %395 = arith.addf %388, %394 : vector<4x1024xf32>
    %c0_131 = arith.constant 0 : index
    %c130 = arith.constant 130 : index
    %396 = vector.load %arg12[%c0_131, %c130] : memref<8x1280xbf16, #tpu.memory_space<vmem>>, vector<4x1024xbf16>
    %c4_132 = arith.constant 4 : index
    %c0_133 = arith.constant 0 : index
    %397 = vector.load %arg4[%c4_132, %c0_133] : memref<5x1024xbf16, #tpu.memory_space<vmem>>, vector<1x1024xbf16>
    %398 = vector.broadcast %397 : vector<1x1024xbf16> to vector<4x1024xbf16>
    %399 = arith.mulf %396, %398 : vector<4x1024xbf16>
    %c5 = arith.constant 5 : index
    %c0_134 = arith.constant 0 : index
    %c0_135 = arith.constant 0 : index
    %400 = vector.load %arg5[%c5, %c0_134, %c0_135] : memref<9x4x1xf32, #tpu.memory_space<vmem>>, vector<1x4x1xf32>
    %401 = vector.shape_cast %400 : vector<1x4x1xf32> to vector<4x1xf32>
    %402 = arith.extf %399 : vector<4x1024xbf16> to vector<4x1024xf32>
    %403 = vector.broadcast %401 : vector<4x1xf32> to vector<4x1024xf32>
    %404 = arith.mulf %403, %402 : vector<4x1024xf32>
    %405 = arith.addf %395, %404 : vector<4x1024xf32>
    %c0_136 = arith.constant 0 : index
    %c190 = arith.constant 190 : index
    %406 = vector.load %arg12[%c0_136, %c190] : memref<8x1280xbf16, #tpu.memory_space<vmem>>, vector<4x1024xbf16>
    %c0_137 = arith.constant 0 : index
    %c0_138 = arith.constant 0 : index
    %407 = vector.load %arg4[%c0_137, %c0_138] : memref<5x1024xbf16, #tpu.memory_space<vmem>>, vector<1x1024xbf16>
    %408 = vector.broadcast %407 : vector<1x1024xbf16> to vector<4x1024xbf16>
    %409 = arith.mulf %406, %408 : vector<4x1024xbf16>
    %c6 = arith.constant 6 : index
    %c0_139 = arith.constant 0 : index
    %c0_140 = arith.constant 0 : index
    %410 = vector.load %arg5[%c6, %c0_139, %c0_140] : memref<9x4x1xf32, #tpu.memory_space<vmem>>, vector<1x4x1xf32>
    %411 = vector.shape_cast %410 : vector<1x4x1xf32> to vector<4x1xf32>
    %412 = arith.extf %409 : vector<4x1024xbf16> to vector<4x1024xf32>
    %413 = vector.broadcast %411 : vector<4x1xf32> to vector<4x1024xf32>
    %414 = arith.mulf %413, %412 : vector<4x1024xf32>
    %415 = arith.addf %405, %414 : vector<4x1024xf32>
    %c0_141 = arith.constant 0 : index
    %c192_142 = arith.constant 192 : index
    %416 = vector.load %arg12[%c0_141, %c192_142] : memref<8x1280xbf16, #tpu.memory_space<vmem>>, vector<4x1024xbf16>
    %c7 = arith.constant 7 : index
    %c0_143 = arith.constant 0 : index
    %c0_144 = arith.constant 0 : index
    %417 = vector.load %arg5[%c7, %c0_143, %c0_144] : memref<9x4x1xf32, #tpu.memory_space<vmem>>, vector<1x4x1xf32>
    %418 = vector.shape_cast %417 : vector<1x4x1xf32> to vector<4x1xf32>
    %419 = arith.extf %416 : vector<4x1024xbf16> to vector<4x1024xf32>
    %420 = vector.broadcast %418 : vector<4x1xf32> to vector<4x1024xf32>
    %421 = arith.mulf %420, %419 : vector<4x1024xf32>
    %422 = arith.addf %415, %421 : vector<4x1024xf32>
    %c0_145 = arith.constant 0 : index
    %c194 = arith.constant 194 : index
    %423 = vector.load %arg12[%c0_145, %c194] : memref<8x1280xbf16, #tpu.memory_space<vmem>>, vector<4x1024xbf16>
    %c4_146 = arith.constant 4 : index
    %c0_147 = arith.constant 0 : index
    %424 = vector.load %arg4[%c4_146, %c0_147] : memref<5x1024xbf16, #tpu.memory_space<vmem>>, vector<1x1024xbf16>
    %425 = vector.broadcast %424 : vector<1x1024xbf16> to vector<4x1024xbf16>
    %426 = arith.mulf %423, %425 : vector<4x1024xbf16>
    %c8 = arith.constant 8 : index
    %c0_148 = arith.constant 0 : index
    %c0_149 = arith.constant 0 : index
    %427 = vector.load %arg5[%c8, %c0_148, %c0_149] : memref<9x4x1xf32, #tpu.memory_space<vmem>>, vector<1x4x1xf32>
    %428 = vector.shape_cast %427 : vector<1x4x1xf32> to vector<4x1xf32>
    %429 = arith.extf %426 : vector<4x1024xbf16> to vector<4x1024xf32>
    %430 = vector.broadcast %428 : vector<4x1xf32> to vector<4x1024xf32>
    %431 = arith.mulf %430, %429 : vector<4x1024xf32>
    %432 = arith.addf %422, %431 : vector<4x1024xf32>
    %cst_150 = arith.constant dense<0.000000e+00> : vector<1024xf32>
    %433 = vector.multi_reduction <add>, %432, %cst_150 [0] : vector<4x1024xf32> to vector<1024xf32>
    %434 = vector.shape_cast %433 : vector<1024xf32> to vector<1x1024xf32>
    %c0_151 = arith.constant 0 : index
    %c0_152 = arith.constant 0 : index
    %435 = vector.load %arg6[%c0_151, %c0_152] : memref<1x1xf32, #tpu.memory_space<vmem>>, vector<1x1xf32>
    %436 = vector.broadcast %435 : vector<1x1xf32> to vector<1x1024xf32>
    %437 = arith.addf %434, %436 : vector<1x1024xf32>
    %cst_153 = arith.constant 0.000000e+00 : f32
    %438 = vector.broadcast %cst_153 : f32 to vector<1x1024xf32>
    %439 = arith.subf %438, %437 : vector<1x1024xf32>
    %440 = math.exp %439 : vector<1x1024xf32>
    %cst_154 = arith.constant 1.000000e+00 : f32
    %441 = vector.broadcast %cst_154 : f32 to vector<1x1024xf32>
    %442 = arith.addf %441, %440 : vector<1x1024xf32>
    %443 = tpu.reciprocal %442 {approx = true} : vector<1x1024xf32> -> vector<1x1024xf32>
    %c0_155 = arith.constant 0 : index
    %c0_156 = arith.constant 0 : index
    %c0_157 = arith.constant 0 : index
    %444 = vector.load %arg2[%c0_155, %c0_156, %c0_157] : memref<1x4x1024xbf16, #tpu.memory_space<vmem>>, vector<1x4x1024xbf16>
    %445 = vector.shape_cast %444 : vector<1x4x1024xbf16> to vector<4x1024xbf16>
    %446 = arith.extf %445 : vector<4x1024xbf16> to vector<4x1024xf32>
    %447 = vector.broadcast %443 : vector<1x1024xf32> to vector<4x1024xf32>
    %448 = arith.mulf %446, %447 : vector<4x1024xf32>
    %449 = arith.truncf %448 : vector<4x1024xf32> to vector<4x1024xbf16>
    %c4_158 = arith.constant 4 : index
    %c128_159 = arith.constant 128 : index
    %450 = vector.load %arg12[%c4_158, %c128_159] : memref<8x1280xbf16, #tpu.memory_space<vmem>>, vector<4x1024xbf16>
    tpu.vector_store %arg12[%c4_158, %c128_159], %449 {strides = array<i32>} : memref<8x1280xbf16, #tpu.memory_space<vmem>>, vector<4x1024xbf16>,
    %cst_160 = arith.constant 0.000000e+00 : f32
    %451 = vector.broadcast %cst_160 : f32 to vector<8x1024xf32>
    %c0_161 = arith.constant 0 : index
    %c0_162 = arith.constant 0 : index
    %c0_163 = arith.constant 0 : index
    %452 = vector.load %arg7[%c0_161, %c0_162, %c0_163] : memref<9x8x8xbf16, #tpu.memory_space<vmem>>, vector<1x8x8xbf16>
    %453 = vector.shape_cast %452 : vector<1x8x8xbf16> to vector<8x8xbf16>
    %c0_164 = arith.constant 0 : index
    %c95 = arith.constant 95 : index
    %454 = vector.load %arg12[%c0_164, %c95] : memref<8x1280xbf16, #tpu.memory_space<vmem>>, vector<8x1024xbf16>
    %c1_165 = arith.constant 1 : index
    %c0_166 = arith.constant 0 : index
    %455 = vector.load %arg4[%c1_165, %c0_166] : memref<5x1024xbf16, #tpu.memory_space<vmem>>, vector<1x1024xbf16>
    %456 = vector.broadcast %455 : vector<1x1024xbf16> to vector<8x1024xbf16>
    %457 = arith.mulf %454, %456 : vector<8x1024xbf16>
    %cst_167 = arith.constant dense<0.000000e+00> : vector<8x1024xf32>
    %458 = tpu.matmul %453, %457, %cst_167 {dimension_numbers = #tpu.dot_dimension_numbers<[1], [0], [0], [1], [0, 0, 1, 1], [], []>} : vector<8x8xbf16>, vector<8x1024xbf16>, vector<8x1024xf32> -> vector<8x1024xf32>
    %459 = arith.addf %451, %458 : vector<8x1024xf32>
    %c1_168 = arith.constant 1 : index
    %c0_169 = arith.constant 0 : index
    %c0_170 = arith.constant 0 : index
    %460 = vector.load %arg7[%c1_168, %c0_169, %c0_170] : memref<9x8x8xbf16, #tpu.memory_space<vmem>>, vector<1x8x8xbf16>
    %461 = vector.shape_cast %460 : vector<1x8x8xbf16> to vector<8x8xbf16>
    %c0_171 = arith.constant 0 : index
    %c96 = arith.constant 96 : index
    %462 = vector.load %arg12[%c0_171, %c96] : memref<8x1280xbf16, #tpu.memory_space<vmem>>, vector<8x1024xbf16>
    %cst_172 = arith.constant dense<0.000000e+00> : vector<8x1024xf32>
    %463 = tpu.matmul %461, %462, %cst_172 {dimension_numbers = #tpu.dot_dimension_numbers<[1], [0], [0], [1], [0, 0, 1, 1], [], []>} : vector<8x8xbf16>, vector<8x1024xbf16>, vector<8x1024xf32> -> vector<8x1024xf32>
    %464 = arith.addf %459, %463 : vector<8x1024xf32>
    %c2_173 = arith.constant 2 : index
    %c0_174 = arith.constant 0 : index
    %c0_175 = arith.constant 0 : index
    %465 = vector.load %arg7[%c2_173, %c0_174, %c0_175] : memref<9x8x8xbf16, #tpu.memory_space<vmem>>, vector<1x8x8xbf16>
    %466 = vector.shape_cast %465 : vector<1x8x8xbf16> to vector<8x8xbf16>
    %c0_176 = arith.constant 0 : index
    %c97 = arith.constant 97 : index
    %467 = vector.load %arg12[%c0_176, %c97] : memref<8x1280xbf16, #tpu.memory_space<vmem>>, vector<8x1024xbf16>
    %c3_177 = arith.constant 3 : index
    %c0_178 = arith.constant 0 : index
    %468 = vector.load %arg4[%c3_177, %c0_178] : memref<5x1024xbf16, #tpu.memory_space<vmem>>, vector<1x1024xbf16>
    %469 = vector.broadcast %468 : vector<1x1024xbf16> to vector<8x1024xbf16>
    %470 = arith.mulf %467, %469 : vector<8x1024xbf16>
    %cst_179 = arith.constant dense<0.000000e+00> : vector<8x1024xf32>
    %471 = tpu.matmul %466, %470, %cst_179 {dimension_numbers = #tpu.dot_dimension_numbers<[1], [0], [0], [1], [0, 0, 1, 1], [], []>} : vector<8x8xbf16>, vector<8x1024xbf16>, vector<8x1024xf32> -> vector<8x1024xf32>
    %472 = arith.addf %464, %471 : vector<8x1024xf32>
    %c3_180 = arith.constant 3 : index
    %c0_181 = arith.constant 0 : index
    %c0_182 = arith.constant 0 : index
    %473 = vector.load %arg7[%c3_180, %c0_181, %c0_182] : memref<9x8x8xbf16, #tpu.memory_space<vmem>>, vector<1x8x8xbf16>
    %474 = vector.shape_cast %473 : vector<1x8x8xbf16> to vector<8x8xbf16>
    %c0_183 = arith.constant 0 : index
    %c127 = arith.constant 127 : index
    %475 = vector.load %arg12[%c0_183, %c127] : memref<8x1280xbf16, #tpu.memory_space<vmem>>, vector<8x1024xbf16>
    %c1_184 = arith.constant 1 : index
    %c0_185 = arith.constant 0 : index
    %476 = vector.load %arg4[%c1_184, %c0_185] : memref<5x1024xbf16, #tpu.memory_space<vmem>>, vector<1x1024xbf16>
    %477 = vector.broadcast %476 : vector<1x1024xbf16> to vector<8x1024xbf16>
    %478 = arith.mulf %475, %477 : vector<8x1024xbf16>
    %cst_186 = arith.constant dense<0.000000e+00> : vector<8x1024xf32>
    %479 = tpu.matmul %474, %478, %cst_186 {dimension_numbers = #tpu.dot_dimension_numbers<[1], [0], [0], [1], [0, 0, 1, 1], [], []>} : vector<8x8xbf16>, vector<8x1024xbf16>, vector<8x1024xf32> -> vector<8x1024xf32>
    %480 = arith.addf %472, %479 : vector<8x1024xf32>
    %c4_187 = arith.constant 4 : index
    %c0_188 = arith.constant 0 : index
    %c0_189 = arith.constant 0 : index
    %481 = vector.load %arg7[%c4_187, %c0_188, %c0_189] : memref<9x8x8xbf16, #tpu.memory_space<vmem>>, vector<1x8x8xbf16>
    %482 = vector.shape_cast %481 : vector<1x8x8xbf16> to vector<8x8xbf16>
    %c0_190 = arith.constant 0 : index
    %c128_191 = arith.constant 128 : index
    %483 = vector.load %arg12[%c0_190, %c128_191] : memref<8x1280xbf16, #tpu.memory_space<vmem>>, vector<8x1024xbf16>
    %cst_192 = arith.constant dense<0.000000e+00> : vector<8x1024xf32>
    %484 = tpu.matmul %482, %483, %cst_192 {dimension_numbers = #tpu.dot_dimension_numbers<[1], [0], [0], [1], [0, 0, 1, 1], [], []>} : vector<8x8xbf16>, vector<8x1024xbf16>, vector<8x1024xf32> -> vector<8x1024xf32>
    %485 = arith.addf %480, %484 : vector<8x1024xf32>
    %c5_193 = arith.constant 5 : index
    %c0_194 = arith.constant 0 : index
    %c0_195 = arith.constant 0 : index
    %486 = vector.load %arg7[%c5_193, %c0_194, %c0_195] : memref<9x8x8xbf16, #tpu.memory_space<vmem>>, vector<1x8x8xbf16>
    %487 = vector.shape_cast %486 : vector<1x8x8xbf16> to vector<8x8xbf16>
    %c0_196 = arith.constant 0 : index
    %c129 = arith.constant 129 : index
    %488 = vector.load %arg12[%c0_196, %c129] : memref<8x1280xbf16, #tpu.memory_space<vmem>>, vector<8x1024xbf16>
    %c3_197 = arith.constant 3 : index
    %c0_198 = arith.constant 0 : index
    %489 = vector.load %arg4[%c3_197, %c0_198] : memref<5x1024xbf16, #tpu.memory_space<vmem>>, vector<1x1024xbf16>
    %490 = vector.broadcast %489 : vector<1x1024xbf16> to vector<8x1024xbf16>
    %491 = arith.mulf %488, %490 : vector<8x1024xbf16>
    %cst_199 = arith.constant dense<0.000000e+00> : vector<8x1024xf32>
    %492 = tpu.matmul %487, %491, %cst_199 {dimension_numbers = #tpu.dot_dimension_numbers<[1], [0], [0], [1], [0, 0, 1, 1], [], []>} : vector<8x8xbf16>, vector<8x1024xbf16>, vector<8x1024xf32> -> vector<8x1024xf32>
    %493 = arith.addf %485, %492 : vector<8x1024xf32>
    %c6_200 = arith.constant 6 : index
    %c0_201 = arith.constant 0 : index
    %c0_202 = arith.constant 0 : index
    %494 = vector.load %arg7[%c6_200, %c0_201, %c0_202] : memref<9x8x8xbf16, #tpu.memory_space<vmem>>, vector<1x8x8xbf16>
    %495 = vector.shape_cast %494 : vector<1x8x8xbf16> to vector<8x8xbf16>
    %c0_203 = arith.constant 0 : index
    %c159 = arith.constant 159 : index
    %496 = vector.load %arg12[%c0_203, %c159] : memref<8x1280xbf16, #tpu.memory_space<vmem>>, vector<8x1024xbf16>
    %c1_204 = arith.constant 1 : index
    %c0_205 = arith.constant 0 : index
    %497 = vector.load %arg4[%c1_204, %c0_205] : memref<5x1024xbf16, #tpu.memory_space<vmem>>, vector<1x1024xbf16>
    %498 = vector.broadcast %497 : vector<1x1024xbf16> to vector<8x1024xbf16>
    %499 = arith.mulf %496, %498 : vector<8x1024xbf16>
    %cst_206 = arith.constant dense<0.000000e+00> : vector<8x1024xf32>
    %500 = tpu.matmul %495, %499, %cst_206 {dimension_numbers = #tpu.dot_dimension_numbers<[1], [0], [0], [1], [0, 0, 1, 1], [], []>} : vector<8x8xbf16>, vector<8x1024xbf16>, vector<8x1024xf32> -> vector<8x1024xf32>
    %501 = arith.addf %493, %500 : vector<8x1024xf32>
    %c7_207 = arith.constant 7 : index
    %c0_208 = arith.constant 0 : index
    %c0_209 = arith.constant 0 : index
    %502 = vector.load %arg7[%c7_207, %c0_208, %c0_209] : memref<9x8x8xbf16, #tpu.memory_space<vmem>>, vector<1x8x8xbf16>
    %503 = vector.shape_cast %502 : vector<1x8x8xbf16> to vector<8x8xbf16>
    %c0_210 = arith.constant 0 : index
    %c160_211 = arith.constant 160 : index
    %504 = vector.load %arg12[%c0_210, %c160_211] : memref<8x1280xbf16, #tpu.memory_space<vmem>>, vector<8x1024xbf16>
    %cst_212 = arith.constant dense<0.000000e+00> : vector<8x1024xf32>
    %505 = tpu.matmul %503, %504, %cst_212 {dimension_numbers = #tpu.dot_dimension_numbers<[1], [0], [0], [1], [0, 0, 1, 1], [], []>} : vector<8x8xbf16>, vector<8x1024xbf16>, vector<8x1024xf32> -> vector<8x1024xf32>
    %506 = arith.addf %501, %505 : vector<8x1024xf32>
    %c8_213 = arith.constant 8 : index
    %c0_214 = arith.constant 0 : index
    %c0_215 = arith.constant 0 : index
    %507 = vector.load %arg7[%c8_213, %c0_214, %c0_215] : memref<9x8x8xbf16, #tpu.memory_space<vmem>>, vector<1x8x8xbf16>
    %508 = vector.shape_cast %507 : vector<1x8x8xbf16> to vector<8x8xbf16>
    %c0_216 = arith.constant 0 : index
    %c161 = arith.constant 161 : index
    %509 = vector.load %arg12[%c0_216, %c161] : memref<8x1280xbf16, #tpu.memory_space<vmem>>, vector<8x1024xbf16>
    %c3_217 = arith.constant 3 : index
    %c0_218 = arith.constant 0 : index
    %510 = vector.load %arg4[%c3_217, %c0_218] : memref<5x1024xbf16, #tpu.memory_space<vmem>>, vector<1x1024xbf16>
    %511 = vector.broadcast %510 : vector<1x1024xbf16> to vector<8x1024xbf16>
    %512 = arith.mulf %509, %511 : vector<8x1024xbf16>
    %cst_219 = arith.constant dense<0.000000e+00> : vector<8x1024xf32>
    %513 = tpu.matmul %508, %512, %cst_219 {dimension_numbers = #tpu.dot_dimension_numbers<[1], [0], [0], [1], [0, 0, 1, 1], [], []>} : vector<8x8xbf16>, vector<8x1024xbf16>, vector<8x1024xf32> -> vector<8x1024xf32>
    %514 = arith.addf %506, %513 : vector<8x1024xf32>
    %c0_220 = arith.constant 0 : index
    %c0_221 = arith.constant 0 : index
    %515 = vector.load %arg8[%c0_220, %c0_221] : memref<8x1xf32, #tpu.memory_space<vmem>>, vector<8x1xf32>
    %516 = vector.broadcast %515 : vector<8x1xf32> to vector<8x1024xf32>
    %517 = arith.addf %514, %516 : vector<8x1024xf32>
    %518 = arith.truncf %517 : vector<8x1024xf32> to vector<8x1024xbf16>
    %c0_222 = arith.constant 0 : index
    %c128_223 = arith.constant 128 : index
    %519 = vector.load %arg13[%c0_222, %c128_223] : memref<8x1280xbf16, #tpu.memory_space<vmem>>, vector<8x1024xbf16>
    tpu.vector_store %arg13[%c0_222, %c128_223], %518 {strides = array<i32>} : memref<8x1280xbf16, #tpu.memory_space<vmem>>, vector<8x1024xbf16>,
    %cst_224 = arith.constant 0.000000e+00 : f32
    %520 = vector.broadcast %cst_224 : f32 to vector<4x1024xf32>
    %c0_225 = arith.constant 0 : index
    %c0_226 = arith.constant 0 : index
    %c0_227 = arith.constant 0 : index
    %521 = vector.load %arg9[%c0_225, %c0_226, %c0_227] : memref<9x4x8xbf16, #tpu.memory_space<vmem>>, vector<1x4x8xbf16>
    %522 = vector.shape_cast %521 : vector<1x4x8xbf16> to vector<4x8xbf16>
    %c0_228 = arith.constant 0 : index
    %c95_229 = arith.constant 95 : index
    %523 = vector.load %arg13[%c0_228, %c95_229] : memref<8x1280xbf16, #tpu.memory_space<vmem>>, vector<8x1024xbf16>
    %c1_230 = arith.constant 1 : index
    %c0_231 = arith.constant 0 : index
    %524 = vector.load %arg4[%c1_230, %c0_231] : memref<5x1024xbf16, #tpu.memory_space<vmem>>, vector<1x1024xbf16>
    %525 = vector.broadcast %524 : vector<1x1024xbf16> to vector<8x1024xbf16>
    %526 = arith.mulf %523, %525 : vector<8x1024xbf16>
    %cst_232 = arith.constant dense<0.000000e+00> : vector<4x1024xf32>
    %527 = tpu.matmul %522, %526, %cst_232 {dimension_numbers = #tpu.dot_dimension_numbers<[1], [0], [0], [1], [0, 0, 1, 1], [], []>} : vector<4x8xbf16>, vector<8x1024xbf16>, vector<4x1024xf32> -> vector<4x1024xf32>
    %528 = arith.addf %520, %527 : vector<4x1024xf32>
    %c1_233 = arith.constant 1 : index
    %c0_234 = arith.constant 0 : index
    %c0_235 = arith.constant 0 : index
    %529 = vector.load %arg9[%c1_233, %c0_234, %c0_235] : memref<9x4x8xbf16, #tpu.memory_space<vmem>>, vector<1x4x8xbf16>
    %530 = vector.shape_cast %529 : vector<1x4x8xbf16> to vector<4x8xbf16>
    %c0_236 = arith.constant 0 : index
    %c96_237 = arith.constant 96 : index
    %531 = vector.load %arg13[%c0_236, %c96_237] : memref<8x1280xbf16, #tpu.memory_space<vmem>>, vector<8x1024xbf16>
    %cst_238 = arith.constant dense<0.000000e+00> : vector<4x1024xf32>
    %532 = tpu.matmul %530, %531, %cst_238 {dimension_numbers = #tpu.dot_dimension_numbers<[1], [0], [0], [1], [0, 0, 1, 1], [], []>} : vector<4x8xbf16>, vector<8x1024xbf16>, vector<4x1024xf32> -> vector<4x1024xf32>
    %533 = arith.addf %528, %532 : vector<4x1024xf32>
    %c2_239 = arith.constant 2 : index
    %c0_240 = arith.constant 0 : index
    %c0_241 = arith.constant 0 : index
    %534 = vector.load %arg9[%c2_239, %c0_240, %c0_241] : memref<9x4x8xbf16, #tpu.memory_space<vmem>>, vector<1x4x8xbf16>
    %535 = vector.shape_cast %534 : vector<1x4x8xbf16> to vector<4x8xbf16>
    %c0_242 = arith.constant 0 : index
    %c97_243 = arith.constant 97 : index
    %536 = vector.load %arg13[%c0_242, %c97_243] : memref<8x1280xbf16, #tpu.memory_space<vmem>>, vector<8x1024xbf16>
    %c3_244 = arith.constant 3 : index
    %c0_245 = arith.constant 0 : index
    %537 = vector.load %arg4[%c3_244, %c0_245] : memref<5x1024xbf16, #tpu.memory_space<vmem>>, vector<1x1024xbf16>
    %538 = vector.broadcast %537 : vector<1x1024xbf16> to vector<8x1024xbf16>
    %539 = arith.mulf %536, %538 : vector<8x1024xbf16>
    %cst_246 = arith.constant dense<0.000000e+00> : vector<4x1024xf32>
    %540 = tpu.matmul %535, %539, %cst_246 {dimension_numbers = #tpu.dot_dimension_numbers<[1], [0], [0], [1], [0, 0, 1, 1], [], []>} : vector<4x8xbf16>, vector<8x1024xbf16>, vector<4x1024xf32> -> vector<4x1024xf32>
    %541 = arith.addf %533, %540 : vector<4x1024xf32>
    %c3_247 = arith.constant 3 : index
    %c0_248 = arith.constant 0 : index
    %c0_249 = arith.constant 0 : index
    %542 = vector.load %arg9[%c3_247, %c0_248, %c0_249] : memref<9x4x8xbf16, #tpu.memory_space<vmem>>, vector<1x4x8xbf16>
    %543 = vector.shape_cast %542 : vector<1x4x8xbf16> to vector<4x8xbf16>
    %c0_250 = arith.constant 0 : index
    %c127_251 = arith.constant 127 : index
    %544 = vector.load %arg13[%c0_250, %c127_251] : memref<8x1280xbf16, #tpu.memory_space<vmem>>, vector<8x1024xbf16>
    %c1_252 = arith.constant 1 : index
    %c0_253 = arith.constant 0 : index
    %545 = vector.load %arg4[%c1_252, %c0_253] : memref<5x1024xbf16, #tpu.memory_space<vmem>>, vector<1x1024xbf16>
    %546 = vector.broadcast %545 : vector<1x1024xbf16> to vector<8x1024xbf16>
    %547 = arith.mulf %544, %546 : vector<8x1024xbf16>
    %cst_254 = arith.constant dense<0.000000e+00> : vector<4x1024xf32>
    %548 = tpu.matmul %543, %547, %cst_254 {dimension_numbers = #tpu.dot_dimension_numbers<[1], [0], [0], [1], [0, 0, 1, 1], [], []>} : vector<4x8xbf16>, vector<8x1024xbf16>, vector<4x1024xf32> -> vector<4x1024xf32>
    %549 = arith.addf %541, %548 : vector<4x1024xf32>
    %c4_255 = arith.constant 4 : index
    %c0_256 = arith.constant 0 : index
    %c0_257 = arith.constant 0 : index
    %550 = vector.load %arg9[%c4_255, %c0_256, %c0_257] : memref<9x4x8xbf16, #tpu.memory_space<vmem>>, vector<1x4x8xbf16>
    %551 = vector.shape_cast %550 : vector<1x4x8xbf16> to vector<4x8xbf16>
    %c0_258 = arith.constant 0 : index
    %c128_259 = arith.constant 128 : index
    %552 = vector.load %arg13[%c0_258, %c128_259] : memref<8x1280xbf16, #tpu.memory_space<vmem>>, vector<8x1024xbf16>
    %cst_260 = arith.constant dense<0.000000e+00> : vector<4x1024xf32>
    %553 = tpu.matmul %551, %552, %cst_260 {dimension_numbers = #tpu.dot_dimension_numbers<[1], [0], [0], [1], [0, 0, 1, 1], [], []>} : vector<4x8xbf16>, vector<8x1024xbf16>, vector<4x1024xf32> -> vector<4x1024xf32>
    %554 = arith.addf %549, %553 : vector<4x1024xf32>
    %c5_261 = arith.constant 5 : index
    %c0_262 = arith.constant 0 : index
    %c0_263 = arith.constant 0 : index
    %555 = vector.load %arg9[%c5_261, %c0_262, %c0_263] : memref<9x4x8xbf16, #tpu.memory_space<vmem>>, vector<1x4x8xbf16>
    %556 = vector.shape_cast %555 : vector<1x4x8xbf16> to vector<4x8xbf16>
    %c0_264 = arith.constant 0 : index
    %c129_265 = arith.constant 129 : index
    %557 = vector.load %arg13[%c0_264, %c129_265] : memref<8x1280xbf16, #tpu.memory_space<vmem>>, vector<8x1024xbf16>
    %c3_266 = arith.constant 3 : index
    %c0_267 = arith.constant 0 : index
    %558 = vector.load %arg4[%c3_266, %c0_267] : memref<5x1024xbf16, #tpu.memory_space<vmem>>, vector<1x1024xbf16>
    %559 = vector.broadcast %558 : vector<1x1024xbf16> to vector<8x1024xbf16>
    %560 = arith.mulf %557, %559 : vector<8x1024xbf16>
    %cst_268 = arith.constant dense<0.000000e+00> : vector<4x1024xf32>
    %561 = tpu.matmul %556, %560, %cst_268 {dimension_numbers = #tpu.dot_dimension_numbers<[1], [0], [0], [1], [0, 0, 1, 1], [], []>} : vector<4x8xbf16>, vector<8x1024xbf16>, vector<4x1024xf32> -> vector<4x1024xf32>
    %562 = arith.addf %554, %561 : vector<4x1024xf32>
    %c6_269 = arith.constant 6 : index
    %c0_270 = arith.constant 0 : index
    %c0_271 = arith.constant 0 : index
    %563 = vector.load %arg9[%c6_269, %c0_270, %c0_271] : memref<9x4x8xbf16, #tpu.memory_space<vmem>>, vector<1x4x8xbf16>
    %564 = vector.shape_cast %563 : vector<1x4x8xbf16> to vector<4x8xbf16>
    %c0_272 = arith.constant 0 : index
    %c159_273 = arith.constant 159 : index
    %565 = vector.load %arg13[%c0_272, %c159_273] : memref<8x1280xbf16, #tpu.memory_space<vmem>>, vector<8x1024xbf16>
    %c1_274 = arith.constant 1 : index
    %c0_275 = arith.constant 0 : index
    %566 = vector.load %arg4[%c1_274, %c0_275] : memref<5x1024xbf16, #tpu.memory_space<vmem>>, vector<1x1024xbf16>
    %567 = vector.broadcast %566 : vector<1x1024xbf16> to vector<8x1024xbf16>
    %568 = arith.mulf %565, %567 : vector<8x1024xbf16>
    %cst_276 = arith.constant dense<0.000000e+00> : vector<4x1024xf32>
    %569 = tpu.matmul %564, %568, %cst_276 {dimension_numbers = #tpu.dot_dimension_numbers<[1], [0], [0], [1], [0, 0, 1, 1], [], []>} : vector<4x8xbf16>, vector<8x1024xbf16>, vector<4x1024xf32> -> vector<4x1024xf32>
    %570 = arith.addf %562, %569 : vector<4x1024xf32>
    %c7_277 = arith.constant 7 : index
    %c0_278 = arith.constant 0 : index
    %c0_279 = arith.constant 0 : index
    %571 = vector.load %arg9[%c7_277, %c0_278, %c0_279] : memref<9x4x8xbf16, #tpu.memory_space<vmem>>, vector<1x4x8xbf16>
    %572 = vector.shape_cast %571 : vector<1x4x8xbf16> to vector<4x8xbf16>
    %c0_280 = arith.constant 0 : index
    %c160_281 = arith.constant 160 : index
    %573 = vector.load %arg13[%c0_280, %c160_281] : memref<8x1280xbf16, #tpu.memory_space<vmem>>, vector<8x1024xbf16>
    %cst_282 = arith.constant dense<0.000000e+00> : vector<4x1024xf32>
    %574 = tpu.matmul %572, %573, %cst_282 {dimension_numbers = #tpu.dot_dimension_numbers<[1], [0], [0], [1], [0, 0, 1, 1], [], []>} : vector<4x8xbf16>, vector<8x1024xbf16>, vector<4x1024xf32> -> vector<4x1024xf32>
    %575 = arith.addf %570, %574 : vector<4x1024xf32>
    %c8_283 = arith.constant 8 : index
    %c0_284 = arith.constant 0 : index
    %c0_285 = arith.constant 0 : index
    %576 = vector.load %arg9[%c8_283, %c0_284, %c0_285] : memref<9x4x8xbf16, #tpu.memory_space<vmem>>, vector<1x4x8xbf16>
    %577 = vector.shape_cast %576 : vector<1x4x8xbf16> to vector<4x8xbf16>
    %c0_286 = arith.constant 0 : index
    %c161_287 = arith.constant 161 : index
    %578 = vector.load %arg13[%c0_286, %c161_287] : memref<8x1280xbf16, #tpu.memory_space<vmem>>, vector<8x1024xbf16>
    %c3_288 = arith.constant 3 : index
    %c0_289 = arith.constant 0 : index
    %579 = vector.load %arg4[%c3_288, %c0_289] : memref<5x1024xbf16, #tpu.memory_space<vmem>>, vector<1x1024xbf16>
    %580 = vector.broadcast %579 : vector<1x1024xbf16> to vector<8x1024xbf16>
    %581 = arith.mulf %578, %580 : vector<8x1024xbf16>
    %cst_290 = arith.constant dense<0.000000e+00> : vector<4x1024xf32>
    %582 = tpu.matmul %577, %581, %cst_290 {dimension_numbers = #tpu.dot_dimension_numbers<[1], [0], [0], [1], [0, 0, 1, 1], [], []>} : vector<4x8xbf16>, vector<8x1024xbf16>, vector<4x1024xf32> -> vector<4x1024xf32>
    %583 = arith.addf %575, %582 : vector<4x1024xf32>
    %c0_291 = arith.constant 0 : index
    %c0_292 = arith.constant 0 : index
    %584 = vector.load %arg10[%c0_291, %c0_292] : memref<4x1xf32, #tpu.memory_space<vmem>>, vector<4x1xf32>
    %585 = vector.broadcast %584 : vector<4x1xf32> to vector<4x1024xf32>
    %586 = arith.addf %583, %585 : vector<4x1024xf32>
    %c0_293 = arith.constant 0 : index
    %c0_294 = arith.constant 0 : index
    %c0_295 = arith.constant 0 : index
    %587 = vector.load %arg11[%c0_293, %c0_294, %c0_295] : memref<1x4x1024xf32, #tpu.memory_space<vmem>>, vector<1x4x1024xf32>
    %588 = vector.shape_cast %587 : vector<1x4x1024xf32> to vector<4x1024xf32>
    %589 = vector.shape_cast %586 : vector<4x1024xf32> to vector<1x4x1024xf32>
    tpu.vector_store %arg11[%c0_293, %c0_294, %c0_295], %589 {strides = array<i32>} : memref<1x4x1024xf32, #tpu.memory_space<vmem>>, vector<1x4x1024xf32>,
    return
  }
  func.func @transform_0(%arg0: i32) -> (i32, i32, i32) {
    %c0_i32 = arith.constant 0 : i32
    %c0_i32_0 = arith.constant 0 : i32
    %c0_i32_1 = arith.constant 0 : i32
    return %arg0, %c0_i32, %c0_i32_0 : i32, i32, i32
  }
  func.func @transform_1(%arg0: i32) -> (i32, i32, i32) {
    %c0_i32 = arith.constant 0 : i32
    %c0_i32_0 = arith.constant 0 : i32
    %c0_i32_1 = arith.constant 0 : i32
    return %arg0, %c0_i32, %c0_i32_0 : i32, i32, i32
  }
  func.func @transform_2(%arg0: i32) -> (i32, i32) {
    %c0_i32 = arith.constant 0 : i32
    %c0_i32_0 = arith.constant 0 : i32
    %c0_i32_1 = arith.constant 0 : i32
    return %c0_i32, %c0_i32_0 : i32, i32
  }
  func.func @transform_3(%arg0: i32) -> (i32, i32) {
    %c0_i32 = arith.constant 0 : i32
    %c0_i32_0 = arith.constant 0 : i32
    %c0_i32_1 = arith.constant 0 : i32
    return %c0_i32, %c0_i32_0 : i32, i32
  }
  func.func @transform_4(%arg0: i32) -> (i32, i32, i32) {
    %c0_i32 = arith.constant 0 : i32
    %c0_i32_0 = arith.constant 0 : i32
    %c0_i32_1 = arith.constant 0 : i32
    %c0_i32_2 = arith.constant 0 : i32
    return %c0_i32, %c0_i32_0, %c0_i32_1 : i32, i32, i32
  }
  func.func @transform_5(%arg0: i32) -> (i32, i32) {
    %c0_i32 = arith.constant 0 : i32
    %c0_i32_0 = arith.constant 0 : i32
    %c0_i32_1 = arith.constant 0 : i32
    return %c0_i32, %c0_i32_0 : i32, i32
  }
  func.func @transform_6(%arg0: i32) -> (i32, i32, i32) {
    %c0_i32 = arith.constant 0 : i32
    %c0_i32_0 = arith.constant 0 : i32
    %c0_i32_1 = arith.constant 0 : i32
    %c0_i32_2 = arith.constant 0 : i32
    return %c0_i32, %c0_i32_0, %c0_i32_1 : i32, i32, i32
  }
  func.func @transform_7(%arg0: i32) -> (i32, i32) {
    %c0_i32 = arith.constant 0 : i32
    %c0_i32_0 = arith.constant 0 : i32
    %c0_i32_1 = arith.constant 0 : i32
    return %c0_i32, %c0_i32_0 : i32, i32
  }
  func.func @transform_8(%arg0: i32) -> (i32, i32, i32) {
    %c0_i32 = arith.constant 0 : i32
    %c0_i32_0 = arith.constant 0 : i32
    %c0_i32_1 = arith.constant 0 : i32
    %c0_i32_2 = arith.constant 0 : i32
    return %c0_i32, %c0_i32_0, %c0_i32_1 : i32, i32, i32
  }
  func.func @transform_9(%arg0: i32) -> (i32, i32) {
    %c0_i32 = arith.constant 0 : i32
    %c0_i32_0 = arith.constant 0 : i32
    %c0_i32_1 = arith.constant 0 : i32
    return %c0_i32, %c0_i32_0 : i32, i32
  }
  func.func @transform_10(%arg0: i32) -> (i32, i32, i32) {
    %c0_i32 = arith.constant 0 : i32
    %c0_i32_0 = arith.constant 0 : i32
    %c0_i32_1 = arith.constant 0 : i32
    return %arg0, %c0_i32, %c0_i32_0 : i32, i32, i32
  }
}

</mosaic_0001>

<llo_original>
// kernel: tpu_custom_call.1
$region0: #{tpu_custom_call.1}
  #allocation0 [shape = 'u32[]', space=smem, size = 0x4, offset = 0x4, fixed_abs, tag = 'smem constant byte address 0x4 - core index']
  #allocation1 [shape = 'u32[72,128]{1,0:T(1,128)}', space=vmem, size = 0x9000, scoped, tag = 'internal scratch']
  #allocation2 [shape = 'bf16[8,1280]{1,0:T(8,128)(2,1)}', space=vmem, size = 0x5000, scoped, tag = 'scratch operand']
  #allocation3 [shape = 'bf16[8,1280]{1,0:T(8,128)(2,1)}', space=vmem, size = 0x5000, scoped, tag = 'scratch operand']
  #allocation4 [shape = 'f32[1,1]{1,0:T(1,128)S(1)}', space=vmem, size = 0x200, scoped, tag = 'scoped memory for tpu_custom_call.1']
  %s0 = inlined_call_operand.vmem [shape: bf16[2,64,16], index: 0, kind: input, shape index: {}]
  %s1 = inlined_call_operand.vmem [shape: bf16[2,4,1024], index: 1, kind: input, shape index: {}]
  %s2 = inlined_call_operand.vmem [shape: bf16[16,32], index: 2, kind: input, shape index: {}]
  %s3 = inlined_call_operand.vmem [shape: bf16[5,1024], index: 3, kind: input, shape index: {}]
  %s4 = inlined_call_operand.vmem [shape: f32[9,4,1], index: 4, kind: input, shape index: {}]
  %s5 = inlined_call_operand.<no memory space> [shape: f32[1,1], index: 5, kind: input, shape index: {}]
  %s6 = inlined_call_operand.vmem [shape: bf16[9,8,8], index: 6, kind: input, shape index: {}]
  %s7 = inlined_call_operand.vmem [shape: f32[8,1], index: 7, kind: input, shape index: {}]
  %s8 = inlined_call_operand.vmem [shape: bf16[9,4,8], index: 8, kind: input, shape index: {}]
  %s9 = inlined_call_operand.vmem [shape: f32[4,1], index: 9, kind: input, shape index: {}]
  %s10 = inlined_call_operand.hbm [shape: f32[2,4,1024], index: 10, kind: output, shape index: {}]
  %s11 = sld [smem:[#allocation0]]
  $region73: #{tpu_custom_call.1} parent=0
    _
  %s13 = ssub.s32 1, %s11
  %s14 = scalar_select 0, %s13, %s11
  %v15 = vstv %s5
  %16 = vst [vmem:[#allocation4] sm:$0x1] %v15
  $region1: #{tpu_custom_call.1} parent=0
    #allocation5 [shape = 'u8[32768]{0}', space=vmem, size = 0x8000, scoped, tag = 'output window, operand 0']
    #allocation6 [shape = 's32[2]{0}', space=sflag, size = 0x8, scoped, tag = 'scoped memory for tpu_custom_call.1']
    %17 = vsyncpa [#allocation6], 0
    %s18 = scalar_lea.sflag [#allocation6], 1
    %19 = vsyncpa %s18, 0
    loop: start=0, step=1, limit=4
    $region2: #{tpu_custom_call.1} parent=1 // loop_pre_header
      _
    $region3: #{tpu_custom_call.1} parent=1 // loop_header
      %s21 = sphi 0, %s25
      %p22 = scmp.ge.s32.totalorder %s21, 4
      %s31 = sphi 0, %s33
      %s34 = sphi 0, %s31
      %s35 = sphi 0, %s34
      %s51 = sphi 0, %s35
      %s57 = sphi 0, %s59
      %s60 = sphi 0, %s57
      %s61 = sphi 0, %s60
      %s77 = sphi 0, %s61
      %s81 = sphi 0, %s81
      %s83 = sphi 0, %s81
      %s84 = sphi 0, %s83
      %s98 = sphi 0, %s84
      %s102 = sphi 0, %s102
      %s104 = sphi 0, %s102
      %s105 = sphi 0, %s104
      %s119 = sphi 0, %s105
      %s123 = sphi 0, %s123
      %s125 = sphi 0, %s123
      %s126 = sphi 0, %s125
      %s140 = sphi 0, %s126
      %s144 = sphi 0, %s144
      %s146 = sphi 0, %s144
      %s147 = sphi 0, %s146
      %s161 = sphi 0, %s147
      %s165 = sphi 0, %s165
      %s167 = sphi 0, %s165
      %s168 = sphi 0, %s167
      %s182 = sphi 0, %s168
      %s186 = sphi 0, %s186
      %s188 = sphi 0, %s186
      %s189 = sphi 0, %s188
      %s203 = sphi 0, %s189
      %s207 = sphi 0, %s207
      %s209 = sphi 0, %s207
      %s210 = sphi 0, %s209
      %s224 = sphi 0, %s210
      %s228 = sphi 0, %s228
      %s230 = sphi 0, %s228
      %s231 = sphi 0, %s230
      %s245 = sphi 0, %s231
      %s251 = sphi 0, %s253
      %s254 = sphi 0, %s251
      %s255 = sphi 0, %s254
      %s271 = sphi 0, %s255
    $region4: #{tpu_custom_call.1} parent=1 // loop_header_branch
      %24 = sbr.rel (%p22) target = $region8
    $region5: #{tpu_custom_call.1} parent=1 // loop_body
      %s26 = ssub.s32 %s21, 1
      %s27 = ssub.s32 %s21, 2
      %s28 = sadd.s32 %s21, 1
      %s29 = ssub.s32 %s21, %s28
      %p30 = scmp.eq.s32.totalorder %s29, 0
      %s32 = sadd.s32 %s31, 1
      %s33 = scalar_select %p30, %s31, %s32
      %p36 = pneg %p30
      %p37 = scmp.eq.s32.totalorder %s21, 1
      %p38 = por %p36, %p37
      %p39 = scmp.ne.s32.totalorder %s31, %s34
      %p40 = scmp.eq.s32.totalorder %s21, 0
      %p41 = por %p39, %p40
      %p42 = scmp.ne.s32.totalorder %s31, %s34
      %p43 = scmp.eq.s32.totalorder %s26, 1
      %p44 = por %p42, %p43
      %p45 = scmp.ne.s32.totalorder %s34, %s35
      %p46 = scmp.eq.s32.totalorder %s26, 0
      %p47 = por %p45, %p46
      %p48 = scmp.ne.s32.totalorder %s34, %s35
      %p49 = scmp.eq.s32.totalorder %s27, 1
      %p50 = por %p48, %p49
      %p52 = scmp.ne.s32.totalorder %s35, %s51
      %p53 = scmp.eq.s32.totalorder %s27, 0
      %p54 = por %p52, %p53
      %s55 = ssub.s32 %s21, %s28
      %p56 = scmp.eq.s32.totalorder %s55, 0
      %s58 = sadd.s32 %s57, 1
      %s59 = scalar_select %p56, %s57, %s58
      %p62 = pneg %p56
      %p63 = scmp.eq.s32.totalorder %s21, 1
      %p64 = por %p62, %p63
      %p65 = scmp.ne.s32.totalorder %s57, %s60
      %p66 = scmp.eq.s32.totalorder %s21, 0
      %p67 = por %p65, %p66
      %p68 = scmp.ne.s32.totalorder %s57, %s60
      %p69 = scmp.eq.s32.totalorder %s26, 1
      %p70 = por %p68, %p69
      %p71 = scmp.ne.s32.totalorder %s60, %s61
      %p72 = scmp.eq.s32.totalorder %s26, 0
      %p73 = por %p71, %p72
      %p74 = scmp.ne.s32.totalorder %s60, %s61
      %p75 = scmp.eq.s32.totalorder %s27, 1
      %p76 = por %p74, %p75
      %p78 = scmp.ne.s32.totalorder %s61, %s77
      %p79 = scmp.eq.s32.totalorder %s27, 0
      %p80 = por %p78, %p79
      %s82 = sadd.s32 %s81, 1
      %p85 = scmp.eq.s32.totalorder %s21, 1
      %p86 = scmp.ne.s32.totalorder %s81, %s83
      %p87 = scmp.eq.s32.totalorder %s21, 0
      %p88 = por %p86, %p87
      %p89 = scmp.ne.s32.totalorder %s81, %s83
      %p90 = scmp.eq.s32.totalorder %s26, 1
      %p91 = por %p89, %p90
      %p92 = scmp.ne.s32.totalorder %s83, %s84
      %p93 = scmp.eq.s32.totalorder %s26, 0
      %p94 = por %p92, %p93
      %p95 = scmp.ne.s32.totalorder %s83, %s84
      %p96 = scmp.eq.s32.totalorder %s27, 1
      %p97 = por %p95, %p96
      %p99 = scmp.ne.s32.totalorder %s84, %s98
      %p100 = scmp.eq.s32.totalorder %s27, 0
      %p101 = por %p99, %p100
      %s103 = sadd.s32 %s102, 1
      %p106 = scmp.eq.s32.totalorder %s21, 1
      %p107 = scmp.ne.s32.totalorder %s102, %s104
      %p108 = scmp.eq.s32.totalorder %s21, 0
      %p109 = por %p107, %p108
      %p110 = scmp.ne.s32.totalorder %s102, %s104
      %p111 = scmp.eq.s32.totalorder %s26, 1
      %p112 = por %p110, %p111
      %p113 = scmp.ne.s32.totalorder %s104, %s105
      %p114 = scmp.eq.s32.totalorder %s26, 0
      %p115 = por %p113, %p114
      %p116 = scmp.ne.s32.totalorder %s104, %s105
      %p117 = scmp.eq.s32.totalorder %s27, 1
      %p118 = por %p116, %p117
      %p120 = scmp.ne.s32.totalorder %s105, %s119
      %p121 = scmp.eq.s32.totalorder %s27, 0
      %p122 = por %p120, %p121
      %s124 = sadd.s32 %s123, 1
      %p127 = scmp.eq.s32.totalorder %s21, 1
      %p128 = scmp.ne.s32.totalorder %s123, %s125
      %p129 = scmp.eq.s32.totalorder %s21, 0
      %p130 = por %p128, %p129
      %p131 = scmp.ne.s32.totalorder %s123, %s125
      %p132 = scmp.eq.s32.totalorder %s26, 1
      %p133 = por %p131, %p132
      %p134 = scmp.ne.s32.totalorder %s125, %s126
      %p135 = scmp.eq.s32.totalorder %s26, 0
      %p136 = por %p134, %p135
      %p137 = scmp.ne.s32.totalorder %s125, %s126
      %p138 = scmp.eq.s32.totalorder %s27, 1
      %p139 = por %p137, %p138
      %p141 = scmp.ne.s32.totalorder %s126, %s140
      %p142 = scmp.eq.s32.totalorder %s27, 0
      %p143 = por %p141, %p142
      %s145 = sadd.s32 %s144, 1
      %p148 = scmp.eq.s32.totalorder %s21, 1
      %p149 = scmp.ne.s32.totalorder %s144, %s146
      %p150 = scmp.eq.s32.totalorder %s21, 0
      %p151 = por %p149, %p150
      %p152 = scmp.ne.s32.totalorder %s144, %s146
      %p153 = scmp.eq.s32.totalorder %s26, 1
      %p154 = por %p152, %p153
      %p155 = scmp.ne.s32.totalorder %s146, %s147
      %p156 = scmp.eq.s32.totalorder %s26, 0
      %p157 = por %p155, %p156
      %p158 = scmp.ne.s32.totalorder %s146, %s147
      %p159 = scmp.eq.s32.totalorder %s27, 1
      %p160 = por %p158, %p159
      %p162 = scmp.ne.s32.totalorder %s147, %s161
      %p163 = scmp.eq.s32.totalorder %s27, 0
      %p164 = por %p162, %p163
      %s166 = sadd.s32 %s165, 1
      %p169 = scmp.eq.s32.totalorder %s21, 1
      %p170 = scmp.ne.s32.totalorder %s165, %s167
      %p171 = scmp.eq.s32.totalorder %s21, 0
      %p172 = por %p170, %p171
      %p173 = scmp.ne.s32.totalorder %s165, %s167
      %p174 = scmp.eq.s32.totalorder %s26, 1
      %p175 = por %p173, %p174
      %p176 = scmp.ne.s32.totalorder %s167, %s168
      %p177 = scmp.eq.s32.totalorder %s26, 0
      %p178 = por %p176, %p177
      %p179 = scmp.ne.s32.totalorder %s167, %s168
      %p180 = scmp.eq.s32.totalorder %s27, 1
      %p181 = por %p179, %p180
      %p183 = scmp.ne.s32.totalorder %s168, %s182
      %p184 = scmp.eq.s32.totalorder %s27, 0
      %p185 = por %p183, %p184
      %s187 = sadd.s32 %s186, 1
      %p190 = scmp.eq.s32.totalorder %s21, 1
      %p191 = scmp.ne.s32.totalorder %s186, %s188
      %p192 = scmp.eq.s32.totalorder %s21, 0
      %p193 = por %p191, %p192
      %p194 = scmp.ne.s32.totalorder %s186, %s188
      %p195 = scmp.eq.s32.totalorder %s26, 1
      %p196 = por %p194, %p195
      %p197 = scmp.ne.s32.totalorder %s188, %s189
      %p198 = scmp.eq.s32.totalorder %s26, 0
      %p199 = por %p197, %p198
      %p200 = scmp.ne.s32.totalorder %s188, %s189
      %p201 = scmp.eq.s32.totalorder %s27, 1
      %p202 = por %p200, %p201
      %p204 = scmp.ne.s32.totalorder %s189, %s203
      %p205 = scmp.eq.s32.totalorder %s27, 0
      %p206 = por %p204, %p205
      %s208 = sadd.s32 %s207, 1
      %p211 = scmp.eq.s32.totalorder %s21, 1
      %p212 = scmp.ne.s32.totalorder %s207, %s209
      %p213 = scmp.eq.s32.totalorder %s21, 0
      %p214 = por %p212, %p213
      %p215 = scmp.ne.s32.totalorder %s207, %s209
      %p216 = scmp.eq.s32.totalorder %s26, 1
      %p217 = por %p215, %p216
      %p218 = scmp.ne.s32.totalorder %s209, %s210
      %p219 = scmp.eq.s32.totalorder %s26, 0
      %p220 = por %p218, %p219
      %p221 = scmp.ne.s32.totalorder %s209, %s210
      %p222 = scmp.eq.s32.totalorder %s27, 1
      %p223 = por %p221, %p222
      %p225 = scmp.ne.s32.totalorder %s210, %s224
      %p226 = scmp.eq.s32.totalorder %s27, 0
      %p227 = por %p225, %p226
      %s229 = sadd.s32 %s228, 1
      %p232 = scmp.eq.s32.totalorder %s21, 1
      %p233 = scmp.ne.s32.totalorder %s228, %s230
      %p234 = scmp.eq.s32.totalorder %s21, 0
      %p235 = por %p233, %p234
      %p236 = scmp.ne.s32.totalorder %s228, %s230
      %p237 = scmp.eq.s32.totalorder %s26, 1
      %p238 = por %p236, %p237
      %p239 = scmp.ne.s32.totalorder %s230, %s231
      %p240 = scmp.eq.s32.totalorder %s26, 0
      %p241 = por %p239, %p240
      %p242 = scmp.ne.s32.totalorder %s230, %s231
      %p243 = scmp.eq.s32.totalorder %s27, 1
      %p244 = por %p242, %p243
      %p246 = scmp.ne.s32.totalorder %s231, %s245
      %p247 = scmp.eq.s32.totalorder %s27, 0
      %p248 = por %p246, %p247
      %s249 = ssub.s32 %s21, %s28
      %p250 = scmp.eq.s32.totalorder %s249, 0
      %s252 = sadd.s32 %s251, 1
      %s253 = scalar_select %p250, %s251, %s252
      %p256 = pneg %p250
      %p257 = scmp.eq.s32.totalorder %s21, 1
      %p258 = por %p256, %p257
      %p259 = scmp.ne.s32.totalorder %s251, %s254
      %p260 = scmp.eq.s32.totalorder %s21, 0
      %p261 = por %p259, %p260
      %p262 = scmp.ne.s32.totalorder %s251, %s254
      %p263 = scmp.eq.s32.totalorder %s26, 1
      %p264 = por %p262, %p263
      %p265 = scmp.ne.s32.totalorder %s254, %s255
      %p266 = scmp.eq.s32.totalorder %s26, 0
      %p267 = por %p265, %p266
      %p268 = scmp.ne.s32.totalorder %s254, %s255
      %p269 = scmp.eq.s32.totalorder %s27, 1
      %p270 = por %p268, %p269
      %p272 = scmp.ne.s32.totalorder %s255, %s271
      %p273 = scmp.eq.s32.totalorder %s27, 0
      %p274 = por %p272, %p273
      %p275 = scmp.le.s32.totalorder 1, %s21
      %p276 = scmp.lt.s32.totalorder %s21, 3
      %p277 = pnand %p275, %p276
      %p278 = pneg %p277
      // Predicated region
      $region9: #{tpu_custom_call.1} parent=5 // pred_check
        _
      $region10: #{tpu_custom_call.1} parent=5 // pred_check_branch
        %280 = sbr.rel (%p277) target = $region12
      $region11: #{tpu_custom_call.1} parent=5 // pred_region
        %s281 = ssub.s32 %s21, 1
        // Predicated region
        $region13: #{tpu_custom_call.1} parent=11 // pred_check
          %p282 = pneg %p94
        $region14: #{tpu_custom_call.1} parent=11 // pred_check_branch
          %284 = sbr.rel (%p282) target = $region16
        $region15: #{tpu_custom_call.1} parent=11 // pred_region
          _
        $region16: #{tpu_custom_call.1} parent=11 // pred_fallthru
          _
        // Predicated region
        $region17: #{tpu_custom_call.1} parent=11 // pred_check
          %p285 = pneg %p115
        $region18: #{tpu_custom_call.1} parent=11 // pred_check_branch
          %287 = sbr.rel (%p285) target = $region20
        $region19: #{tpu_custom_call.1} parent=11 // pred_region
          _
        $region20: #{tpu_custom_call.1} parent=11 // pred_fallthru
          _
        // Predicated region
        $region21: #{tpu_custom_call.1} parent=11 // pred_check
          %p288 = pneg %p136
        $region22: #{tpu_custom_call.1} parent=11 // pred_check_branch
          %290 = sbr.rel (%p288) target = $region24
        $region23: #{tpu_custom_call.1} parent=11 // pred_region
          _
        $region24: #{tpu_custom_call.1} parent=11 // pred_fallthru
          _
        // Predicated region
        $region25: #{tpu_custom_call.1} parent=11 // pred_check
          %p291 = pneg %p157
        $region26: #{tpu_custom_call.1} parent=11 // pred_check_branch
          %293 = sbr.rel (%p291) target = $region28
        $region27: #{tpu_custom_call.1} parent=11 // pred_region
          _
        $region28: #{tpu_custom_call.1} parent=11 // pred_fallthru
          _
        // Predicated region
        $region29: #{tpu_custom_call.1} parent=11 // pred_check
          %p294 = pneg %p178
        $region30: #{tpu_custom_call.1} parent=11 // pred_check_branch
          %296 = sbr.rel (%p294) target = $region32
        $region31: #{tpu_custom_call.1} parent=11 // pred_region
          _
        $region32: #{tpu_custom_call.1} parent=11 // pred_fallthru
          _
        // Predicated region
        $region33: #{tpu_custom_call.1} parent=11 // pred_check
          %p297 = pneg %p199
        $region34: #{tpu_custom_call.1} parent=11 // pred_check_branch
          %299 = sbr.rel (%p297) target = $region36
        $region35: #{tpu_custom_call.1} parent=11 // pred_region
          _
        $region36: #{tpu_custom_call.1} parent=11 // pred_fallthru
          _
        // Predicated region
        $region37: #{tpu_custom_call.1} parent=11 // pred_check
          %p300 = pneg %p220
        $region38: #{tpu_custom_call.1} parent=11 // pred_check_branch
          %302 = sbr.rel (%p300) target = $region40
        $region39: #{tpu_custom_call.1} parent=11 // pred_region
          _
        $region40: #{tpu_custom_call.1} parent=11 // pred_fallthru
          _
        // Predicated region
        $region41: #{tpu_custom_call.1} parent=11 // pred_check
          %p303 = pneg %p241
        $region42: #{tpu_custom_call.1} parent=11 // pred_check_branch
          %305 = sbr.rel (%p303) target = $region44
        $region43: #{tpu_custom_call.1} parent=11 // pred_region
          _
        $region44: #{tpu_custom_call.1} parent=11 // pred_fallthru
          _
      $region12: #{tpu_custom_call.1} parent=5 // pred_fallthru
        _
      %p306 = scmp.lt.s32.totalorder %s21, 2
      // Predicated region
      $region45: #{tpu_custom_call.1} parent=5 // pred_check
        %p307 = pneg %p306
      $region46: #{tpu_custom_call.1} parent=5 // pred_check_branch
        %309 = sbr.rel (%p307) target = $region48
      $region47: #{tpu_custom_call.1} parent=5 // pred_region
        // Predicated region
        $region49: #{tpu_custom_call.1} parent=47 // pred_check
          %p310 = pneg %p41
        $region50: #{tpu_custom_call.1} parent=47 // pred_check_branch
          %312 = sbr.rel (%p310) target = $region52
        $region51: #{tpu_custom_call.1} parent=47 // pred_region
          %p313 = scmp.lt.s32.totalorder %s21, 1
          %s314 = scalar_select %p313, %s21, 1
          %s315 = smul.addr %s314, 8
          %s316 = smul.addr %s315, 4
          %s317 = scalar_lea.vmem %s0, %s316
        $region52: #{tpu_custom_call.1} parent=47 // pred_fallthru
          _
        // Predicated region
        $region53: #{tpu_custom_call.1} parent=47 // pred_check
          %p318 = pneg %p67
        $region54: #{tpu_custom_call.1} parent=47 // pred_check_branch
          %320 = sbr.rel (%p318) target = $region56
        $region55: #{tpu_custom_call.1} parent=47 // pred_region
          %p321 = scmp.lt.s32.totalorder %s21, 1
          %s322 = scalar_select %p321, %s21, 1
          %s323 = smul.addr %s322, 8
          %s324 = smul.addr %s323, 2
          %s325 = scalar_lea.vmem %s1, %s324
        $region56: #{tpu_custom_call.1} parent=47 // pred_fallthru
          _
      $region48: #{tpu_custom_call.1} parent=5 // pred_fallthru
        _
      %p326 = scmp.le.s32.totalorder 1, %s21
      %p327 = scmp.lt.s32.totalorder %s21, 3
      %p328 = pnand %p326, %p327
      %p329 = pneg %p328
      // Predicated region
      $region57: #{tpu_custom_call.1} parent=5 // pred_check
        _
      $region58: #{tpu_custom_call.1} parent=5 // pred_check_branch
        %331 = sbr.rel (%p328) target = $region60
      $region59: #{tpu_custom_call.1} parent=5 // pred_region
        %s332 = ssub.s32 %s21, 1
        %p333 = scmp.lt.s32.totalorder %s26, 1
        %s334 = scalar_select %p333, %s26, 1
        %s335 = smul.addr %s334, 8
        %s336 = smul.addr %s335, 4
        %s337 = scalar_lea.vmem %s0, %s336
        %p338 = pneg %p47
        %p339 = pneg %p44
        %p340 = scmp.lt.s32.totalorder %s26, 1
        %s341 = scalar_select %p340, %s26, 1
        %s342 = smul.addr %s341, 8
        %s343 = smul.addr %s342, 2
        %s344 = scalar_lea.vmem %s1, %s343
        %p345 = pneg %p73
        %p346 = pneg %p70
        %p347 = pneg %p94
        %p348 = pneg %p91
        %p349 = pneg %p115
        %p350 = pneg %p112
        %p351 = pneg %p136
        %p352 = pneg %p133
        %p353 = pneg %p157
        %p354 = pneg %p154
        %p355 = pneg %p178
        %p356 = pneg %p175
        %p357 = pneg %p199
        %p358 = pneg %p196
        %p359 = pneg %p220
        %p360 = pneg %p217
        %p361 = pneg %p241
        %p362 = pneg %p238
        %p363 = pneg %p267
        %p364 = pneg %p264
        %s365 = sand.u32 %s254, 1
        %s366 = scalar_lea.sflag [#allocation6], %s365
        %s367 = sand.u32 %s254, 1
        %s368 = smul.addr %s367, 32
        %s369 = scalar_lea.vmem [#allocation5], %s368
        %p370 = scmp.lt.s32.totalorder %s26, 1
        %s371 = scalar_select %p370, %s26, 1
        %s372 = smul.addr %s371, 8
        %s373 = smul.addr %s372, 4
        %s374 = scalar_lea.vmem %s0, %s373
        %p375 = scmp.lt.s32.totalorder %s26, 1
        %s376 = scalar_select %p375, %s26, 1
        %s377 = smul.addr %s376, 8
        %s378 = smul.addr %s377, 2
        %s379 = scalar_lea.vmem %s1, %s378
        %381 = vst [vmem:[#allocation2] sm:$0xf] 0
        %382 = vst [vmem:[#allocation2 + $0x24] sm:$0xf] 0
        %383 = vst [vmem:[#allocation3] sm:$0xf] 0
        %384 = vst [vmem:[#allocation3 + $0x24] sm:$0xf] 0
        %v385 = vld [vmem:[%s374] sm:$0xf]
        %v386 = vld [vmem:[%s374 + $0x4] sm:$0xf]
        %v387 = vld [vmem:[%s374 + $0x8] sm:$0xf]
        %v388 = vld [vmem:[%s374 + $0xc] sm:$0xf]
        %v389 = vld [vmem:[%s374 + $0x10] sm:$0xf]
        %v390 = vld [vmem:[%s374 + $0x14] sm:$0xf]
        %v391 = vld [vmem:[%s374 + $0x18] sm:$0xf]
        %v392 = vld [vmem:[%s374 + $0x1c] sm:$0xf]
        %v393 = vld [vmem:[%s2] sm:$0xf]
        %v394 = vld [vmem:[%s2 + $0x4] sm:$0xf]
        %v403 = vunpack.c.l.b16 %v385
        %v404 = vunpack.c.l.b16 %v386
        %v405 = vunpack.c.l.b16 %v387
        %v406 = vunpack.c.l.b16 %v388
        %v407 = vunpack.c.l.b16 %v389
        %v408 = vunpack.c.l.b16 %v390
        %v409 = vunpack.c.l.b16 %v391
        %v410 = vunpack.c.l.b16 %v392
        %v411 = vpack.c.b16 %v404, %v403
        %v412 = vpack.c.b16 %v406, %v405
        %v413 = vpack.c.b16 %v408, %v407
        %v414 = vpack.c.b16 %v410, %v409
        %v417 = vunpack.c.l.b16 %v393
        %v418 = vunpack.c.l.b16 %v394
        %v419 = vpack.c.b16 %v418, %v417
        %vm421 = vcmask 130048
        %v423 = vsel %vm421, %v411, 0
        %v426 = vsel %vm421, %v412, 0
        %v429 = vsel %vm421, %v413, 0
        %v432 = vsel %vm421, %v414, 0
        %434 = vmatpush.bf16.msra.mxu0 0
        %435 = vmatpush.bf16.msra.mxu0 0
        %436 = vmatpush.bf16.msra.mxu0 0
        %437 = vmatpush.bf16.msra.mxu0 0
        %438 = vmatpush.bf16.msra.mxu0 0
        %439 = vmatpush.bf16.msra.mxu0 0
        %440 = vmatpush.bf16.msra.mxu0 0
        %441 = vmatpush.bf16.msra.mxu0 %v419
        %442 = vmatmul.bf16.gmra.mxu0 %v423
        %v443 = vpop.f32.mrf.mxu0
        %v444 = vadd.f32 0.0, %v443
        %v445 = vpop.f32.mrf.mxu0
        %v446 = vadd.f32 0.0, %v445
        %447 = vmatmul.bf16.gmra.mxu0 %v426
        %v448 = vpop.f32.mrf.mxu0
        %v449 = vadd.f32 0.0, %v448
        %v450 = vpop.f32.mrf.mxu0
        %v451 = vadd.f32 0.0, %v450
        %452 = vmatmul.bf16.gmra.mxu0 %v429
        %v453 = vpop.f32.mrf.mxu0
        %v454 = vadd.f32 0.0, %v453
        %v455 = vpop.f32.mrf.mxu0
        %v456 = vadd.f32 0.0, %v455
        %457 = vmatmul.bf16.gmra.mxu0 %v432
        %v458 = vpop.f32.mrf.mxu0
        %v459 = vadd.f32 0.0, %v458
        %v460 = vpop.f32.mrf.mxu0
        %v461 = vadd.f32 0.0, %v460
        %462 = vdwg.mxu0
        %v463 = vpack.c.bf16 %v444, %v444
        %v464 = vpack.c.bf16 %v449, %v449
        %v465 = vpack.c.bf16 %v454, %v454
        %v466 = vpack.c.bf16 %v459, %v459
        %v471 = vunpack.c.l.b16 %v463
        %v472 = vunpack.c.l.b16 %v464
        %v473 = vunpack.c.l.b16 %v465
        %v474 = vunpack.c.l.b16 %v466
        %v475 = vrot.slane %v472, 7
        %vm476 = vcmask 1041409
        %v477 = vsel %vm476, %v475, %v471
        %v478 = vrot.slane %v473, 6
        %vm479 = vcmask 1042434
        %v480 = vsel %vm479, %v478, %v477
        %v481 = vrot.slane %v474, 5
        %vm482 = vcmask 1043459
        %v483 = vsel %vm482, %v481, %v480
        %v484 = vpack.c.b16 %v483, %v483
        %vm486 = vcmask 254976
        %487 = vst.msk [vmem:[#allocation2 + $0x4] sm:$0x3] %vm486, %v484
        %v488 = vmul.f32 %v444, 0.516129
        %v489 = vmul.f32 %v449, 0.516129
        %v490 = vmul.f32 %v454, 0.516129
        %v491 = vmul.f32 %v459, 0.516129
        %v492 = vmul.f32 %v444, 0.48387095
        %v493 = vmul.f32 %v449, 0.48387095
        %v494 = vmul.f32 %v454, 0.48387095
        %v495 = vmul.f32 %v459, 0.48387095
        %v500 = vrot.slane %v492, 1
        %v501 = vrot.slane %v493, 1
        %v502 = vrot.slane %v494, 1
        %v503 = vrot.slane %v495, 1
        %v508 = vadd.f32 %v488, %v500
        %v509 = vadd.f32 %v489, %v501
        %v510 = vadd.f32 %v490, %v502
        %v511 = vadd.f32 %v491, %v503
        %v512 = vpack.c.bf16 %v508, %v508
        %v513 = vpack.c.bf16 %v509, %v509
        %v514 = vpack.c.bf16 %v510, %v510
        %v515 = vpack.c.bf16 %v511, %v511
        %v520 = vunpack.c.l.b16 %v512
        %v521 = vunpack.c.l.b16 %v513
        %v522 = vunpack.c.l.b16 %v514
        %v523 = vunpack.c.l.b16 %v515
        %v524 = vrot.slane %v521, 7
        %v525 = vsel %vm476, %v524, %v520
        %v526 = vrot.slane %v522, 6
        %v527 = vsel %vm479, %v526, %v525
        %v528 = vrot.slane %v523, 5
        %v529 = vsel %vm482, %v528, %v527
        %v530 = vpack.c.b16 %v529, %v529
        %531 = vrot.lane.b32.xlu0 %v530, 32
        %v532 = vpop.permute.xlu0 %531
        %vm534 = vcmask 517376
        %535 = vst.msk [vmem:[#allocation2 + $0x4] sm:$0x3] %vm534, %v532
        %v536 = vmul.f32 %v444, 0.032258093
        %v537 = vmul.f32 %v449, 0.032258093
        %v538 = vmul.f32 %v454, 0.032258093
        %v539 = vmul.f32 %v459, 0.032258093
        %v540 = vmul.f32 %v444, 0.9677419
        %v541 = vmul.f32 %v449, 0.9677419
        %v542 = vmul.f32 %v454, 0.9677419
        %v543 = vmul.f32 %v459, 0.9677419
        %v548 = vrot.slane %v540, 1
        %v549 = vrot.slane %v541, 1
        %v550 = vrot.slane %v542, 1
        %v551 = vrot.slane %v543, 1
        %v556 = vadd.f32 %v536, %v548
        %v557 = vadd.f32 %v537, %v549
        %v558 = vadd.f32 %v538, %v550
        %v559 = vadd.f32 %v539, %v551
        %v560 = vpack.c.bf16 %v556, %v556
        %v561 = vpack.c.bf16 %v557, %v557
        %v562 = vpack.c.bf16 %v558, %v558
        %v563 = vpack.c.bf16 %v559, %v559
        %v568 = vunpack.c.l.b16 %v560
        %v569 = vunpack.c.l.b16 %v561
        %v570 = vunpack.c.l.b16 %v562
        %v571 = vunpack.c.l.b16 %v563
        %v572 = vrot.slane %v569, 7
        %v573 = vsel %vm476, %v572, %v568
        %v574 = vrot.slane %v570, 6
        %v575 = vsel %vm479, %v574, %v573
        %v576 = vrot.slane %v571, 5
        %v577 = vsel %vm482, %v576, %v575
        %v578 = vpack.c.b16 %v577, %v577
        %579 = vrot.lane.b32.xlu0 %v578, 64
        %v580 = vpop.permute.xlu0 %579
        %vm582 = vcmask 779776
        %583 = vst.msk [vmem:[#allocation2 + $0x4] sm:$0x3] %vm582, %v580
        %v584 = vmul.f32 %v444, 0.5483871
        %v585 = vmul.f32 %v449, 0.5483871
        %v586 = vmul.f32 %v454, 0.5483871
        %v587 = vmul.f32 %v459, 0.5483871
        %v588 = vmul.f32 %v444, 0.4516129
        %v589 = vmul.f32 %v449, 0.4516129
        %v590 = vmul.f32 %v454, 0.4516129
        %v591 = vmul.f32 %v459, 0.4516129
        %v596 = vrot.slane %v588, 1
        %v597 = vrot.slane %v589, 1
        %v598 = vrot.slane %v590, 1
        %v599 = vrot.slane %v591, 1
        %v604 = vadd.f32 %v584, %v596
        %v605 = vadd.f32 %v585, %v597
        %v606 = vadd.f32 %v586, %v598
        %v607 = vadd.f32 %v587, %v599
        %v608 = vpack.c.bf16 %v604, %v604
        %v609 = vpack.c.bf16 %v605, %v605
        %v610 = vpack.c.bf16 %v606, %v606
        %v611 = vpack.c.bf16 %v607, %v607
        %v616 = vunpack.c.l.b16 %v608
        %v617 = vunpack.c.l.b16 %v609
        %v618 = vunpack.c.l.b16 %v610
        %v619 = vunpack.c.l.b16 %v611
        %v620 = vrot.slane %v616, 1
        %v621 = vsel %vm476, %v617, %v620
        %v622 = vrot.slane %v618, 7
        %v623 = vsel %vm479, %v622, %v621
        %v624 = vrot.slane %v619, 6
        %v625 = vsel %vm482, %v624, %v623
        %v626 = vpack.c.b16 %v625, %v625
        %627 = vrot.lane.b32.xlu0 %v626, 96
        %v628 = vpop.permute.xlu0 %627
        %vm630 = vcmask 1042176
        %631 = vst.msk [vmem:[#allocation2 + $0x4] sm:$0x3] %vm630, %v628
        %v632 = vmul.f32 %v444, 0.06451613
        %v633 = vmul.f32 %v449, 0.06451613
        %v634 = vmul.f32 %v454, 0.06451613
        %v635 = vmul.f32 %v459, 0.06451613
        %v636 = vmul.f32 %v444, 0.9354839
        %v637 = vmul.f32 %v449, 0.9354839
        %v638 = vmul.f32 %v454, 0.9354839
        %v639 = vmul.f32 %v459, 0.9354839
        %v644 = vrot.slane %v636, 1
        %v645 = vrot.slane %v637, 1
        %v646 = vrot.slane %v638, 1
        %v647 = vrot.slane %v639, 1
        %v652 = vadd.f32 %v632, %v644
        %v653 = vadd.f32 %v633, %v645
        %v654 = vadd.f32 %v634, %v646
        %v655 = vadd.f32 %v635, %v647
        %v656 = vpack.c.bf16 %v652, %v652
        %v657 = vpack.c.bf16 %v653, %v653
        %v658 = vpack.c.bf16 %v654, %v654
        %v659 = vpack.c.bf16 %v655, %v655
        %v664 = vunpack.c.l.b16 %v656
        %v665 = vunpack.c.l.b16 %v657
        %v666 = vunpack.c.l.b16 %v658
        %v667 = vunpack.c.l.b16 %v659
        %v668 = vrot.slane %v664, 1
        %v669 = vsel %vm476, %v665, %v668
        %v670 = vrot.slane %v666, 7
        %v671 = vsel %vm479, %v670, %v669
        %v672 = vrot.slane %v667, 6
        %v673 = vsel %vm482, %v672, %v671
        %v674 = vpack.c.b16 %v673, %v673
        %676 = vst.msk [vmem:[#allocation2 + $0x8] sm:$0x3] %vm486, %v674
        %v677 = vmul.f32 %v444, 0.5806452
        %v678 = vmul.f32 %v449, 0.5806452
        %v679 = vmul.f32 %v454, 0.5806452
        %v680 = vmul.f32 %v459, 0.5806452
        %v681 = vmul.f32 %v444, 0.41935483
        %v682 = vmul.f32 %v449, 0.41935483
        %v683 = vmul.f32 %v454, 0.41935483
        %v684 = vmul.f32 %v459, 0.41935483
        %v689 = vrot.slane %v681, 1
        %v690 = vrot.slane %v682, 1
        %v691 = vrot.slane %v683, 1
        %v692 = vrot.slane %v684, 1
        %v697 = vadd.f32 %v677, %v689
        %v698 = vadd.f32 %v678, %v690
        %v699 = vadd.f32 %v679, %v691
        %v700 = vadd.f32 %v680, %v692
        %v701 = vpack.c.bf16 %v697, %v697
        %v702 = vpack.c.bf16 %v698, %v698
        %v703 = vpack.c.bf16 %v699, %v699
        %v704 = vpack.c.bf16 %v700, %v700
        %v709 = vunpack.c.l.b16 %v701
        %v710 = vunpack.c.l.b16 %v702
        %v711 = vunpack.c.l.b16 %v703
        %v712 = vunpack.c.l.b16 %v704
        %v713 = vrot.slane %v709, 2
        %v714 = vrot.slane %v710, 1
        %v715 = vsel %vm476, %v714, %v713
        %v716 = vsel %vm479, %v711, %v715
        %v717 = vrot.slane %v712, 7
        %v718 = vsel %vm482, %v717, %v716
        %v719 = vpack.c.b16 %v718, %v718
        %720 = vrot.lane.b32.xlu0 %v719, 32
        %v721 = vpop.permute.xlu0 %720
        %723 = vst.msk [vmem:[#allocation2 + $0x8] sm:$0x3] %vm534, %v721
        %v724 = vmul.f32 %v444, 0.09677422
        %v725 = vmul.f32 %v449, 0.09677422
        %v726 = vmul.f32 %v454, 0.09677422
        %v727 = vmul.f32 %v459, 0.09677422
        %v728 = vmul.f32 %v444, 0.9032258
        %v729 = vmul.f32 %v449, 0.9032258
        %v730 = vmul.f32 %v454, 0.9032258
        %v731 = vmul.f32 %v459, 0.9032258
        %v736 = vrot.slane %v728, 1
        %v737 = vrot.slane %v729, 1
        %v738 = vrot.slane %v730, 1
        %v739 = vrot.slane %v731, 1
        %v744 = vadd.f32 %v724, %v736
        %v745 = vadd.f32 %v725, %v737
        %v746 = vadd.f32 %v726, %v738
        %v747 = vadd.f32 %v727, %v739
        %v748 = vpack.c.bf16 %v744, %v744
        %v749 = vpack.c.bf16 %v745, %v745
        %v750 = vpack.c.bf16 %v746, %v746
        %v751 = vpack.c.bf16 %v747, %v747
        %v756 = vunpack.c.l.b16 %v748
        %v757 = vunpack.c.l.b16 %v749
        %v758 = vunpack.c.l.b16 %v750
        %v759 = vunpack.c.l.b16 %v751
        %v760 = vrot.slane %v756, 2
        %v761 = vrot.slane %v757, 1
        %v762 = vsel %vm476, %v761, %v760
        %v763 = vsel %vm479, %v758, %v762
        %v764 = vrot.slane %v759, 7
        %v765 = vsel %vm482, %v764, %v763
        %v766 = vpack.c.b16 %v765, %v765
        %767 = vrot.lane.b32.xlu0 %v766, 64
        %v768 = vpop.permute.xlu0 %767
        %770 = vst.msk [vmem:[#allocation2 + $0x8] sm:$0x3] %vm582, %v768
        %v771 = vmul.f32 %v444, 0.61290324
        %v772 = vmul.f32 %v449, 0.61290324
        %v773 = vmul.f32 %v454, 0.61290324
        %v774 = vmul.f32 %v459, 0.61290324
        %v775 = vmul.f32 %v444, 0.38709676
        %v776 = vmul.f32 %v449, 0.38709676
        %v777 = vmul.f32 %v454, 0.38709676
        %v778 = vmul.f32 %v459, 0.38709676
        %v783 = vrot.slane %v775, 1
        %v784 = vrot.slane %v776, 1
        %v785 = vrot.slane %v777, 1
        %v786 = vrot.slane %v778, 1
        %v791 = vadd.f32 %v771, %v783
        %v792 = vadd.f32 %v772, %v784
        %v793 = vadd.f32 %v773, %v785
        %v794 = vadd.f32 %v774, %v786
        %v795 = vpack.c.bf16 %v791, %v791
        %v796 = vpack.c.bf16 %v792, %v792
        %v797 = vpack.c.bf16 %v793, %v793
        %v798 = vpack.c.bf16 %v794, %v794
        %v803 = vunpack.c.l.b16 %v795
        %v804 = vunpack.c.l.b16 %v796
        %v805 = vunpack.c.l.b16 %v797
        %v806 = vunpack.c.l.b16 %v798
        %v807 = vrot.slane %v803, 3
        %v808 = vrot.slane %v804, 2
        %v809 = vsel %vm476, %v808, %v807
        %v810 = vrot.slane %v805, 1
        %v811 = vsel %vm479, %v810, %v809
        %v812 = vsel %vm482, %v806, %v811
        %v813 = vpack.c.b16 %v812, %v812
        %814 = vrot.lane.b32.xlu0 %v813, 96
        %v815 = vpop.permute.xlu0 %814
        %817 = vst.msk [vmem:[#allocation2 + $0x8] sm:$0x3] %vm630, %v815
        %v818 = vmul.f32 %v444, 0.12903225
        %v819 = vmul.f32 %v449, 0.12903225
        %v820 = vmul.f32 %v454, 0.12903225
        %v821 = vmul.f32 %v459, 0.12903225
        %v822 = vmul.f32 %v444, 0.87096775
        %v823 = vmul.f32 %v449, 0.87096775
        %v824 = vmul.f32 %v454, 0.87096775
        %v825 = vmul.f32 %v459, 0.87096775
        %v830 = vrot.slane %v822, 1
        %v831 = vrot.slane %v823, 1
        %v832 = vrot.slane %v824, 1
        %v833 = vrot.slane %v825, 1
        %v838 = vadd.f32 %v818, %v830
        %v839 = vadd.f32 %v819, %v831
        %v840 = vadd.f32 %v820, %v832
        %v841 = vadd.f32 %v821, %v833
        %v842 = vpack.c.bf16 %v838, %v838
        %v843 = vpack.c.bf16 %v839, %v839
        %v844 = vpack.c.bf16 %v840, %v840
        %v845 = vpack.c.bf16 %v841, %v841
        %v850 = vunpack.c.l.b16 %v842
        %v851 = vunpack.c.l.b16 %v843
        %v852 = vunpack.c.l.b16 %v844
        %v853 = vunpack.c.l.b16 %v845
        %v854 = vrot.slane %v850, 3
        %v855 = vrot.slane %v851, 2
        %v856 = vsel %vm476, %v855, %v854
        %v857 = vrot.slane %v852, 1
        %v858 = vsel %vm479, %v857, %v856
        %v859 = vsel %vm482, %v853, %v858
        %v860 = vpack.c.b16 %v859, %v859
        %862 = vst.msk [vmem:[#allocation2 + $0xc] sm:$0x3] %vm486, %v860
        %v863 = vmul.f32 %v444, 0.6451613
        %v864 = vmul.f32 %v449, 0.6451613
        %v865 = vmul.f32 %v454, 0.6451613
        %v866 = vmul.f32 %v459, 0.6451613
        %v867 = vmul.f32 %v444, 0.3548387
        %v868 = vmul.f32 %v449, 0.3548387
        %v869 = vmul.f32 %v454, 0.3548387
        %v870 = vmul.f32 %v459, 0.3548387
        %v875 = vrot.slane %v867, 1
        %v876 = vrot.slane %v868, 1
        %v877 = vrot.slane %v869, 1
        %v878 = vrot.slane %v870, 1
        %v883 = vadd.f32 %v863, %v875
        %v884 = vadd.f32 %v864, %v876
        %v885 = vadd.f32 %v865, %v877
        %v886 = vadd.f32 %v866, %v878
        %v887 = vpack.c.bf16 %v883, %v883
        %v888 = vpack.c.bf16 %v884, %v884
        %v889 = vpack.c.bf16 %v885, %v885
        %v890 = vpack.c.bf16 %v886, %v886
        %v895 = vunpack.c.l.b16 %v887
        %v896 = vunpack.c.l.b16 %v888
        %v897 = vunpack.c.l.b16 %v889
        %v898 = vunpack.c.l.b16 %v890
        %v899 = vrot.slane %v895, 4
        %v900 = vrot.slane %v896, 3
        %v901 = vsel %vm476, %v900, %v899
        %v902 = vrot.slane %v897, 2
        %v903 = vsel %vm479, %v902, %v901
        %v904 = vrot.slane %v898, 1
        %v905 = vsel %vm482, %v904, %v903
        %v906 = vpack.c.b16 %v905, %v905
        %907 = vrot.lane.b32.xlu0 %v906, 32
        %v908 = vpop.permute.xlu0 %907
        %910 = vst.msk [vmem:[#allocation2 + $0xc] sm:$0x3] %vm534, %v908
        %v911 = vmul.f32 %v444, 0.16129035
        %v912 = vmul.f32 %v449, 0.16129035
        %v913 = vmul.f32 %v454, 0.16129035
        %v914 = vmul.f32 %v459, 0.16129035
        %v915 = vmul.f32 %v444, 0.83870965
        %v916 = vmul.f32 %v449, 0.83870965
        %v917 = vmul.f32 %v454, 0.83870965
        %v918 = vmul.f32 %v459, 0.83870965
        %v923 = vrot.slane %v915, 1
        %v924 = vrot.slane %v916, 1
        %v925 = vrot.slane %v917, 1
        %v926 = vrot.slane %v918, 1
        %v931 = vadd.f32 %v911, %v923
        %v932 = vadd.f32 %v912, %v924
        %v933 = vadd.f32 %v913, %v925
        %v934 = vadd.f32 %v914, %v926
        %v935 = vpack.c.bf16 %v931, %v931
        %v936 = vpack.c.bf16 %v932, %v932
        %v937 = vpack.c.bf16 %v933, %v933
        %v938 = vpack.c.bf16 %v934, %v934
        %v943 = vunpack.c.l.b16 %v935
        %v944 = vunpack.c.l.b16 %v936
        %v945 = vunpack.c.l.b16 %v937
        %v946 = vunpack.c.l.b16 %v938
        %v947 = vrot.slane %v943, 4
        %v948 = vrot.slane %v944, 3
        %v949 = vsel %vm476, %v948, %v947
        %v950 = vrot.slane %v945, 2
        %v951 = vsel %vm479, %v950, %v949
        %v952 = vrot.slane %v946, 1
        %v953 = vsel %vm482, %v952, %v951
        %v954 = vpack.c.b16 %v953, %v953
        %955 = vrot.lane.b32.xlu0 %v954, 64
        %v956 = vpop.permute.xlu0 %955
        %958 = vst.msk [vmem:[#allocation2 + $0xc] sm:$0x3] %vm582, %v956
        %v959 = vmul.f32 %v444, 0.67741936
        %v960 = vmul.f32 %v449, 0.67741936
        %v961 = vmul.f32 %v454, 0.67741936
        %v962 = vmul.f32 %v459, 0.67741936
        %v963 = vmul.f32 %v444, 0.32258064
        %v964 = vmul.f32 %v449, 0.32258064
        %v965 = vmul.f32 %v454, 0.32258064
        %v966 = vmul.f32 %v459, 0.32258064
        %v971 = vrot.slane %v963, 1
        %v972 = vrot.slane %v964, 1
        %v973 = vrot.slane %v965, 1
        %v974 = vrot.slane %v966, 1
        %v979 = vadd.f32 %v959, %v971
        %v980 = vadd.f32 %v960, %v972
        %v981 = vadd.f32 %v961, %v973
        %v982 = vadd.f32 %v962, %v974
        %v983 = vpack.c.bf16 %v979, %v979
        %v984 = vpack.c.bf16 %v980, %v980
        %v985 = vpack.c.bf16 %v981, %v981
        %v986 = vpack.c.bf16 %v982, %v982
        %v991 = vunpack.c.l.b16 %v983
        %v992 = vunpack.c.l.b16 %v984
        %v993 = vunpack.c.l.b16 %v985
        %v994 = vunpack.c.l.b16 %v986
        %v995 = vrot.slane %v991, 5
        %v996 = vrot.slane %v992, 4
        %v997 = vsel %vm476, %v996, %v995
        %v998 = vrot.slane %v993, 3
        %v999 = vsel %vm479, %v998, %v997
        %v1000 = vrot.slane %v994, 2
        %v1001 = vsel %vm482, %v1000, %v999
        %v1002 = vpack.c.b16 %v1001, %v1001
        %1003 = vrot.lane.b32.xlu0 %v1002, 96
        %v1004 = vpop.permute.xlu0 %1003
        %1006 = vst.msk [vmem:[#allocation2 + $0xc] sm:$0x3] %vm630, %v1004
        %v1007 = vmul.f32 %v444, 0.19354838
        %v1008 = vmul.f32 %v449, 0.19354838
        %v1009 = vmul.f32 %v454, 0.19354838
        %v1010 = vmul.f32 %v459, 0.19354838
        %v1011 = vmul.f32 %v444, 0.8064516
        %v1012 = vmul.f32 %v449, 0.8064516
        %v1013 = vmul.f32 %v454, 0.8064516
        %v1014 = vmul.f32 %v459, 0.8064516
        %v1019 = vrot.slane %v1011, 1
        %v1020 = vrot.slane %v1012, 1
        %v1021 = vrot.slane %v1013, 1
        %v1022 = vrot.slane %v1014, 1
        %v1027 = vadd.f32 %v1007, %v1019
        %v1028 = vadd.f32 %v1008, %v1020
        %v1029 = vadd.f32 %v1009, %v1021
        %v1030 = vadd.f32 %v1010, %v1022
        %v1031 = vpack.c.bf16 %v1027, %v1027
        %v1032 = vpack.c.bf16 %v1028, %v1028
        %v1033 = vpack.c.bf16 %v1029, %v1029
        %v1034 = vpack.c.bf16 %v1030, %v1030
        %v1039 = vunpack.c.l.b16 %v1031
        %v1040 = vunpack.c.l.b16 %v1032
        %v1041 = vunpack.c.l.b16 %v1033
        %v1042 = vunpack.c.l.b16 %v1034
        %v1043 = vrot.slane %v1039, 5
        %v1044 = vrot.slane %v1040, 4
        %v1045 = vsel %vm476, %v1044, %v1043
        %v1046 = vrot.slane %v1041, 3
        %v1047 = vsel %vm479, %v1046, %v1045
        %v1048 = vrot.slane %v1042, 2
        %v1049 = vsel %vm482, %v1048, %v1047
        %v1050 = vpack.c.b16 %v1049, %v1049
        %1052 = vst.msk [vmem:[#allocation2 + $0x10] sm:$0x3] %vm486, %v1050
        %v1053 = vmul.f32 %v444, 0.70967746
        %v1054 = vmul.f32 %v449, 0.70967746
        %v1055 = vmul.f32 %v454, 0.70967746
        %v1056 = vmul.f32 %v459, 0.70967746
        %v1057 = vmul.f32 %v444, 0.29032257
        %v1058 = vmul.f32 %v449, 0.29032257
        %v1059 = vmul.f32 %v454, 0.29032257
        %v1060 = vmul.f32 %v459, 0.29032257
        %v1065 = vrot.slane %v1057, 1
        %v1066 = vrot.slane %v1058, 1
        %v1067 = vrot.slane %v1059, 1
        %v1068 = vrot.slane %v1060, 1
        %v1073 = vadd.f32 %v1053, %v1065
        %v1074 = vadd.f32 %v1054, %v1066
        %v1075 = vadd.f32 %v1055, %v1067
        %v1076 = vadd.f32 %v1056, %v1068
        %v1077 = vpack.c.bf16 %v1073, %v1073
        %v1078 = vpack.c.bf16 %v1074, %v1074
        %v1079 = vpack.c.bf16 %v1075, %v1075
        %v1080 = vpack.c.bf16 %v1076, %v1076
        %v1085 = vunpack.c.l.b16 %v1077
        %v1086 = vunpack.c.l.b16 %v1078
        %v1087 = vunpack.c.l.b16 %v1079
        %v1088 = vunpack.c.l.b16 %v1080
        %v1089 = vrot.slane %v1085, 6
        %v1090 = vrot.slane %v1086, 5
        %v1091 = vsel %vm476, %v1090, %v1089
        %v1092 = vrot.slane %v1087, 4
        %v1093 = vsel %vm479, %v1092, %v1091
        %v1094 = vrot.slane %v1088, 3
        %v1095 = vsel %vm482, %v1094, %v1093
        %v1096 = vpack.c.b16 %v1095, %v1095
        %1097 = vrot.lane.b32.xlu0 %v1096, 32
        %v1098 = vpop.permute.xlu0 %1097
        %1100 = vst.msk [vmem:[#allocation2 + $0x10] sm:$0x3] %vm534, %v1098
        %v1101 = vmul.f32 %v444, 0.22580647
        %v1102 = vmul.f32 %v449, 0.22580647
        %v1103 = vmul.f32 %v454, 0.22580647
        %v1104 = vmul.f32 %v459, 0.22580647
        %v1105 = vmul.f32 %v444, 0.7741935
        %v1106 = vmul.f32 %v449, 0.7741935
        %v1107 = vmul.f32 %v454, 0.7741935
        %v1108 = vmul.f32 %v459, 0.7741935
        %v1113 = vrot.slane %v1105, 1
        %v1114 = vrot.slane %v1106, 1
        %v1115 = vrot.slane %v1107, 1
        %v1116 = vrot.slane %v1108, 1
        %v1121 = vadd.f32 %v1101, %v1113
        %v1122 = vadd.f32 %v1102, %v1114
        %v1123 = vadd.f32 %v1103, %v1115
        %v1124 = vadd.f32 %v1104, %v1116
        %v1125 = vpack.c.bf16 %v1121, %v1121
        %v1126 = vpack.c.bf16 %v1122, %v1122
        %v1127 = vpack.c.bf16 %v1123, %v1123
        %v1128 = vpack.c.bf16 %v1124, %v1124
        %v1133 = vunpack.c.l.b16 %v1125
        %v1134 = vunpack.c.l.b16 %v1126
        %v1135 = vunpack.c.l.b16 %v1127
        %v1136 = vunpack.c.l.b16 %v1128
        %v1137 = vrot.slane %v1133, 6
        %v1138 = vrot.slane %v1134, 5
        %v1139 = vsel %vm476, %v1138, %v1137
        %v1140 = vrot.slane %v1135, 4
        %v1141 = vsel %vm479, %v1140, %v1139
        %v1142 = vrot.slane %v1136, 3
        %v1143 = vsel %vm482, %v1142, %v1141
        %v1144 = vpack.c.b16 %v1143, %v1143
        %1145 = vrot.lane.b32.xlu0 %v1144, 64
        %v1146 = vpop.permute.xlu0 %1145
        %1148 = vst.msk [vmem:[#allocation2 + $0x10] sm:$0x3] %vm582, %v1146
        %v1149 = vmul.f32 %v444, 0.7419355
        %v1150 = vmul.f32 %v449, 0.7419355
        %v1151 = vmul.f32 %v454, 0.7419355
        %v1152 = vmul.f32 %v459, 0.7419355
        %v1153 = vmul.f32 %v446, 0.2580645
        %v1154 = vmul.f32 %v451, 0.2580645
        %v1155 = vmul.f32 %v456, 0.2580645
        %v1156 = vmul.f32 %v461, 0.2580645
        %v1161 = vrot.slane %v1153, 1
        %v1162 = vrot.slane %v1154, 1
        %v1163 = vrot.slane %v1155, 1
        %v1164 = vrot.slane %v1156, 1
        %v1169 = vadd.f32 %v1149, %v1161
        %v1170 = vadd.f32 %v1150, %v1162
        %v1171 = vadd.f32 %v1151, %v1163
        %v1172 = vadd.f32 %v1152, %v1164
        %v1173 = vpack.c.bf16 %v1169, %v1169
        %v1174 = vpack.c.bf16 %v1170, %v1170
        %v1175 = vpack.c.bf16 %v1171, %v1171
        %v1176 = vpack.c.bf16 %v1172, %v1172
        %v1181 = vunpack.c.l.b16 %v1173
        %v1182 = vunpack.c.l.b16 %v1174
        %v1183 = vunpack.c.l.b16 %v1175
        %v1184 = vunpack.c.l.b16 %v1176
        %v1185 = vrot.slane %v1181, 7
        %v1186 = vrot.slane %v1182, 6
        %v1187 = vsel %vm476, %v1186, %v1185
        %v1188 = vrot.slane %v1183, 5
        %v1189 = vsel %vm479, %v1188, %v1187
        %v1190 = vrot.slane %v1184, 4
        %v1191 = vsel %vm482, %v1190, %v1189
        %v1192 = vpack.c.b16 %v1191, %v1191
        %1193 = vrot.lane.b32.xlu0 %v1192, 96
        %v1194 = vpop.permute.xlu0 %1193
        %1196 = vst.msk [vmem:[#allocation2 + $0x10] sm:$0x3] %vm630, %v1194
        %v1197 = vmul.f32 %v444, 0.2580645
        %v1198 = vmul.f32 %v449, 0.2580645
        %v1199 = vmul.f32 %v454, 0.2580645
        %v1200 = vmul.f32 %v459, 0.2580645
        %v1201 = vmul.f32 %v446, 0.7419355
        %v1202 = vmul.f32 %v451, 0.7419355
        %v1203 = vmul.f32 %v456, 0.7419355
        %v1204 = vmul.f32 %v461, 0.7419355
        %v1209 = vrot.slane %v1201, 1
        %v1210 = vrot.slane %v1202, 1
        %v1211 = vrot.slane %v1203, 1
        %v1212 = vrot.slane %v1204, 1
        %v1217 = vadd.f32 %v1197, %v1209
        %v1218 = vadd.f32 %v1198, %v1210
        %v1219 = vadd.f32 %v1199, %v1211
        %v1220 = vadd.f32 %v1200, %v1212
        %v1221 = vpack.c.bf16 %v1217, %v1217
        %v1222 = vpack.c.bf16 %v1218, %v1218
        %v1223 = vpack.c.bf16 %v1219, %v1219
        %v1224 = vpack.c.bf16 %v1220, %v1220
        %v1229 = vunpack.c.l.b16 %v1221
        %v1230 = vunpack.c.l.b16 %v1222
        %v1231 = vunpack.c.l.b16 %v1223
        %v1232 = vunpack.c.l.b16 %v1224
        %v1233 = vrot.slane %v1229, 7
        %v1234 = vrot.slane %v1230, 6
        %v1235 = vsel %vm476, %v1234, %v1233
        %v1236 = vrot.slane %v1231, 5
        %v1237 = vsel %vm479, %v1236, %v1235
        %v1238 = vrot.slane %v1232, 4
        %v1239 = vsel %vm482, %v1238, %v1237
        %v1240 = vpack.c.b16 %v1239, %v1239
        %1242 = vst.msk [vmem:[#allocation2 + $0x14] sm:$0x3] %vm486, %v1240
        %v1243 = vmul.f32 %v446, 0.7741935
        %v1244 = vmul.f32 %v451, 0.7741935
        %v1245 = vmul.f32 %v456, 0.7741935
        %v1246 = vmul.f32 %v461, 0.7741935
        %v1247 = vmul.f32 %v446, 0.22580644
        %v1248 = vmul.f32 %v451, 0.22580644
        %v1249 = vmul.f32 %v456, 0.22580644
        %v1250 = vmul.f32 %v461, 0.22580644
        %v1255 = vrot.slane %v1247, 1
        %v1256 = vrot.slane %v1248, 1
        %v1257 = vrot.slane %v1249, 1
        %v1258 = vrot.slane %v1250, 1
        %v1263 = vadd.f32 %v1243, %v1255
        %v1264 = vadd.f32 %v1244, %v1256
        %v1265 = vadd.f32 %v1245, %v1257
        %v1266 = vadd.f32 %v1246, %v1258
        %v1267 = vpack.c.bf16 %v1263, %v1263
        %v1268 = vpack.c.bf16 %v1264, %v1264
        %v1269 = vpack.c.bf16 %v1265, %v1265
        %v1270 = vpack.c.bf16 %v1266, %v1266
        %v1275 = vunpack.c.l.b16 %v1267
        %v1276 = vunpack.c.l.b16 %v1268
        %v1277 = vunpack.c.l.b16 %v1269
        %v1278 = vunpack.c.l.b16 %v1270
        %v1279 = vrot.slane %v1276, 7
        %v1280 = vsel %vm476, %v1279, %v1275
        %v1281 = vrot.slane %v1277, 6
        %v1282 = vsel %vm479, %v1281, %v1280
        %v1283 = vrot.slane %v1278, 5
        %v1284 = vsel %vm482, %v1283, %v1282
        %v1285 = vpack.c.b16 %v1284, %v1284
        %1286 = vrot.lane.b32.xlu0 %v1285, 32
        %v1287 = vpop.permute.xlu0 %1286
        %1289 = vst.msk [vmem:[#allocation2 + $0x14] sm:$0x3] %vm534, %v1287
        %v1290 = vmul.f32 %v446, 0.2903226
        %v1291 = vmul.f32 %v451, 0.2903226
        %v1292 = vmul.f32 %v456, 0.2903226
        %v1293 = vmul.f32 %v461, 0.2903226
        %v1294 = vmul.f32 %v446, 0.7096774
        %v1295 = vmul.f32 %v451, 0.7096774
        %v1296 = vmul.f32 %v456, 0.7096774
        %v1297 = vmul.f32 %v461, 0.7096774
        %v1302 = vrot.slane %v1294, 1
        %v1303 = vrot.slane %v1295, 1
        %v1304 = vrot.slane %v1296, 1
        %v1305 = vrot.slane %v1297, 1
        %v1310 = vadd.f32 %v1290, %v1302
        %v1311 = vadd.f32 %v1291, %v1303
        %v1312 = vadd.f32 %v1292, %v1304
        %v1313 = vadd.f32 %v1293, %v1305
        %v1314 = vpack.c.bf16 %v1310, %v1310
        %v1315 = vpack.c.bf16 %v1311, %v1311
        %v1316 = vpack.c.bf16 %v1312, %v1312
        %v1317 = vpack.c.bf16 %v1313, %v1313
        %v1322 = vunpack.c.l.b16 %v1314
        %v1323 = vunpack.c.l.b16 %v1315
        %v1324 = vunpack.c.l.b16 %v1316
        %v1325 = vunpack.c.l.b16 %v1317
        %v1326 = vrot.slane %v1323, 7
        %v1327 = vsel %vm476, %v1326, %v1322
        %v1328 = vrot.slane %v1324, 6
        %v1329 = vsel %vm479, %v1328, %v1327
        %v1330 = vrot.slane %v1325, 5
        %v1331 = vsel %vm482, %v1330, %v1329
        %v1332 = vpack.c.b16 %v1331, %v1331
        %1333 = vrot.lane.b32.xlu0 %v1332, 64
        %v1334 = vpop.permute.xlu0 %1333
        %1336 = vst.msk [vmem:[#allocation2 + $0x14] sm:$0x3] %vm582, %v1334
        %v1337 = vmul.f32 %v446, 0.8064516
        %v1338 = vmul.f32 %v451, 0.8064516
        %v1339 = vmul.f32 %v456, 0.8064516
        %v1340 = vmul.f32 %v461, 0.8064516
        %v1341 = vmul.f32 %v446, 0.19354838
        %v1342 = vmul.f32 %v451, 0.19354838
        %v1343 = vmul.f32 %v456, 0.19354838
        %v1344 = vmul.f32 %v461, 0.19354838
        %v1349 = vrot.slane %v1341, 1
        %v1350 = vrot.slane %v1342, 1
        %v1351 = vrot.slane %v1343, 1
        %v1352 = vrot.slane %v1344, 1
        %v1357 = vadd.f32 %v1337, %v1349
        %v1358 = vadd.f32 %v1338, %v1350
        %v1359 = vadd.f32 %v1339, %v1351
        %v1360 = vadd.f32 %v1340, %v1352
        %v1361 = vpack.c.bf16 %v1357, %v1357
        %v1362 = vpack.c.bf16 %v1358, %v1358
        %v1363 = vpack.c.bf16 %v1359, %v1359
        %v1364 = vpack.c.bf16 %v1360, %v1360
        %v1369 = vunpack.c.l.b16 %v1361
        %v1370 = vunpack.c.l.b16 %v1362
        %v1371 = vunpack.c.l.b16 %v1363
        %v1372 = vunpack.c.l.b16 %v1364
        %v1373 = vrot.slane %v1369, 1
        %v1374 = vsel %vm476, %v1370, %v1373
        %v1375 = vrot.slane %v1371, 7
        %v1376 = vsel %vm479, %v1375, %v1374
        %v1377 = vrot.slane %v1372, 6
        %v1378 = vsel %vm482, %v1377, %v1376
        %v1379 = vpack.c.b16 %v1378, %v1378
        %1380 = vrot.lane.b32.xlu0 %v1379, 96
        %v1381 = vpop.permute.xlu0 %1380
        %1383 = vst.msk [vmem:[#allocation2 + $0x14] sm:$0x3] %vm630, %v1381
        %v1384 = vmul.f32 %v446, 0.32258064
        %v1385 = vmul.f32 %v451, 0.32258064
        %v1386 = vmul.f32 %v456, 0.32258064
        %v1387 = vmul.f32 %v461, 0.32258064
        %v1388 = vmul.f32 %v446, 0.67741936
        %v1389 = vmul.f32 %v451, 0.67741936
        %v1390 = vmul.f32 %v456, 0.67741936
        %v1391 = vmul.f32 %v461, 0.67741936
        %v1396 = vrot.slane %v1388, 1
        %v1397 = vrot.slane %v1389, 1
        %v1398 = vrot.slane %v1390, 1
        %v1399 = vrot.slane %v1391, 1
        %v1404 = vadd.f32 %v1384, %v1396
        %v1405 = vadd.f32 %v1385, %v1397
        %v1406 = vadd.f32 %v1386, %v1398
        %v1407 = vadd.f32 %v1387, %v1399
        %v1408 = vpack.c.bf16 %v1404, %v1404
        %v1409 = vpack.c.bf16 %v1405, %v1405
        %v1410 = vpack.c.bf16 %v1406, %v1406
        %v1411 = vpack.c.bf16 %v1407, %v1407
        %v1416 = vunpack.c.l.b16 %v1408
        %v1417 = vunpack.c.l.b16 %v1409
        %v1418 = vunpack.c.l.b16 %v1410
        %v1419 = vunpack.c.l.b16 %v1411
        %v1420 = vrot.slane %v1416, 1
        %v1421 = vsel %vm476, %v1417, %v1420
        %v1422 = vrot.slane %v1418, 7
        %v1423 = vsel %vm479, %v1422, %v1421
        %v1424 = vrot.slane %v1419, 6
        %v1425 = vsel %vm482, %v1424, %v1423
        %v1426 = vpack.c.b16 %v1425, %v1425
        %1428 = vst.msk [vmem:[#allocation2 + $0x18] sm:$0x3] %vm486, %v1426
        %v1429 = vmul.f32 %v446, 0.8387097
        %v1430 = vmul.f32 %v451, 0.8387097
        %v1431 = vmul.f32 %v456, 0.8387097
        %v1432 = vmul.f32 %v461, 0.8387097
        %v1433 = vmul.f32 %v446, 0.16129032
        %v1434 = vmul.f32 %v451, 0.16129032
        %v1435 = vmul.f32 %v456, 0.16129032
        %v1436 = vmul.f32 %v461, 0.16129032
        %v1441 = vrot.slane %v1433, 1
        %v1442 = vrot.slane %v1434, 1
        %v1443 = vrot.slane %v1435, 1
        %v1444 = vrot.slane %v1436, 1
        %v1449 = vadd.f32 %v1429, %v1441
        %v1450 = vadd.f32 %v1430, %v1442
        %v1451 = vadd.f32 %v1431, %v1443
        %v1452 = vadd.f32 %v1432, %v1444
        %v1453 = vpack.c.bf16 %v1449, %v1449
        %v1454 = vpack.c.bf16 %v1450, %v1450
        %v1455 = vpack.c.bf16 %v1451, %v1451
        %v1456 = vpack.c.bf16 %v1452, %v1452
        %v1461 = vunpack.c.l.b16 %v1453
        %v1462 = vunpack.c.l.b16 %v1454
        %v1463 = vunpack.c.l.b16 %v1455
        %v1464 = vunpack.c.l.b16 %v1456
        %v1465 = vrot.slane %v1461, 2
        %v1466 = vrot.slane %v1462, 1
        %v1467 = vsel %vm476, %v1466, %v1465
        %v1468 = vsel %vm479, %v1463, %v1467
        %v1469 = vrot.slane %v1464, 7
        %v1470 = vsel %vm482, %v1469, %v1468
        %v1471 = vpack.c.b16 %v1470, %v1470
        %1472 = vrot.lane.b32.xlu0 %v1471, 32
        %v1473 = vpop.permute.xlu0 %1472
        %1475 = vst.msk [vmem:[#allocation2 + $0x18] sm:$0x3] %vm534, %v1473
        %v1476 = vmul.f32 %v446, 0.35483873
        %v1477 = vmul.f32 %v451, 0.35483873
        %v1478 = vmul.f32 %v456, 0.35483873
        %v1479 = vmul.f32 %v461, 0.35483873
        %v1480 = vmul.f32 %v446, 0.6451613
        %v1481 = vmul.f32 %v451, 0.6451613
        %v1482 = vmul.f32 %v456, 0.6451613
        %v1483 = vmul.f32 %v461, 0.6451613
        %v1488 = vrot.slane %v1480, 1
        %v1489 = vrot.slane %v1481, 1
        %v1490 = vrot.slane %v1482, 1
        %v1491 = vrot.slane %v1483, 1
        %v1496 = vadd.f32 %v1476, %v1488
        %v1497 = vadd.f32 %v1477, %v1489
        %v1498 = vadd.f32 %v1478, %v1490
        %v1499 = vadd.f32 %v1479, %v1491
        %v1500 = vpack.c.bf16 %v1496, %v1496
        %v1501 = vpack.c.bf16 %v1497, %v1497
        %v1502 = vpack.c.bf16 %v1498, %v1498
        %v1503 = vpack.c.bf16 %v1499, %v1499
        %v1508 = vunpack.c.l.b16 %v1500
        %v1509 = vunpack.c.l.b16 %v1501
        %v1510 = vunpack.c.l.b16 %v1502
        %v1511 = vunpack.c.l.b16 %v1503
        %v1512 = vrot.slane %v1508, 2
        %v1513 = vrot.slane %v1509, 1
        %v1514 = vsel %vm476, %v1513, %v1512
        %v1515 = vsel %vm479, %v1510, %v1514
        %v1516 = vrot.slane %v1511, 7
        %v1517 = vsel %vm482, %v1516, %v1515
        %v1518 = vpack.c.b16 %v1517, %v1517
        %1519 = vrot.lane.b32.xlu0 %v1518, 64
        %v1520 = vpop.permute.xlu0 %1519
        %1522 = vst.msk [vmem:[#allocation2 + $0x18] sm:$0x3] %vm582, %v1520
        %v1523 = vmul.f32 %v446, 0.87096775
        %v1524 = vmul.f32 %v451, 0.87096775
        %v1525 = vmul.f32 %v456, 0.87096775
        %v1526 = vmul.f32 %v461, 0.87096775
        %v1527 = vmul.f32 %v446, 0.12903225
        %v1528 = vmul.f32 %v451, 0.12903225
        %v1529 = vmul.f32 %v456, 0.12903225
        %v1530 = vmul.f32 %v461, 0.12903225
        %v1535 = vrot.slane %v1527, 1
        %v1536 = vrot.slane %v1528, 1
        %v1537 = vrot.slane %v1529, 1
        %v1538 = vrot.slane %v1530, 1
        %v1543 = vadd.f32 %v1523, %v1535
        %v1544 = vadd.f32 %v1524, %v1536
        %v1545 = vadd.f32 %v1525, %v1537
        %v1546 = vadd.f32 %v1526, %v1538
        %v1547 = vpack.c.bf16 %v1543, %v1543
        %v1548 = vpack.c.bf16 %v1544, %v1544
        %v1549 = vpack.c.bf16 %v1545, %v1545
        %v1550 = vpack.c.bf16 %v1546, %v1546
        %v1555 = vunpack.c.l.b16 %v1547
        %v1556 = vunpack.c.l.b16 %v1548
        %v1557 = vunpack.c.l.b16 %v1549
        %v1558 = vunpack.c.l.b16 %v1550
        %v1559 = vrot.slane %v1555, 3
        %v1560 = vrot.slane %v1556, 2
        %v1561 = vsel %vm476, %v1560, %v1559
        %v1562 = vrot.slane %v1557, 1
        %v1563 = vsel %vm479, %v1562, %v1561
        %v1564 = vsel %vm482, %v1558, %v1563
        %v1565 = vpack.c.b16 %v1564, %v1564
        %1566 = vrot.lane.b32.xlu0 %v1565, 96
        %v1567 = vpop.permute.xlu0 %1566
        %1569 = vst.msk [vmem:[#allocation2 + $0x18] sm:$0x3] %vm630, %v1567
        %v1570 = vmul.f32 %v446, 0.38709676
        %v1571 = vmul.f32 %v451, 0.38709676
        %v1572 = vmul.f32 %v456, 0.38709676
        %v1573 = vmul.f32 %v461, 0.38709676
        %v1574 = vmul.f32 %v446, 0.61290324
        %v1575 = vmul.f32 %v451, 0.61290324
        %v1576 = vmul.f32 %v456, 0.61290324
        %v1577 = vmul.f32 %v461, 0.61290324
        %v1582 = vrot.slane %v1574, 1
        %v1583 = vrot.slane %v1575, 1
        %v1584 = vrot.slane %v1576, 1
        %v1585 = vrot.slane %v1577, 1
        %v1590 = vadd.f32 %v1570, %v1582
        %v1591 = vadd.f32 %v1571, %v1583
        %v1592 = vadd.f32 %v1572, %v1584
        %v1593 = vadd.f32 %v1573, %v1585
        %v1594 = vpack.c.bf16 %v1590, %v1590
        %v1595 = vpack.c.bf16 %v1591, %v1591
        %v1596 = vpack.c.bf16 %v1592, %v1592
        %v1597 = vpack.c.bf16 %v1593, %v1593
        %v1602 = vunpack.c.l.b16 %v1594
        %v1603 = vunpack.c.l.b16 %v1595
        %v1604 = vunpack.c.l.b16 %v1596
        %v1605 = vunpack.c.l.b16 %v1597
        %v1606 = vrot.slane %v1602, 3
        %v1607 = vrot.slane %v1603, 2
        %v1608 = vsel %vm476, %v1607, %v1606
        %v1609 = vrot.slane %v1604, 1
        %v1610 = vsel %vm479, %v1609, %v1608
        %v1611 = vsel %vm482, %v1605, %v1610
        %v1612 = vpack.c.b16 %v1611, %v1611
        %1614 = vst.msk [vmem:[#allocation2 + $0x1c] sm:$0x3] %vm486, %v1612
        %v1615 = vmul.f32 %v446, 0.9032258
        %v1616 = vmul.f32 %v451, 0.9032258
        %v1617 = vmul.f32 %v456, 0.9032258
        %v1618 = vmul.f32 %v461, 0.9032258
        %v1619 = vmul.f32 %v446, 0.09677419
        %v1620 = vmul.f32 %v451, 0.09677419
        %v1621 = vmul.f32 %v456, 0.09677419
        %v1622 = vmul.f32 %v461, 0.09677419
        %v1627 = vrot.slane %v1619, 1
        %v1628 = vrot.slane %v1620, 1
        %v1629 = vrot.slane %v1621, 1
        %v1630 = vrot.slane %v1622, 1
        %v1635 = vadd.f32 %v1615, %v1627
        %v1636 = vadd.f32 %v1616, %v1628
        %v1637 = vadd.f32 %v1617, %v1629
        %v1638 = vadd.f32 %v1618, %v1630
        %v1639 = vpack.c.bf16 %v1635, %v1635
        %v1640 = vpack.c.bf16 %v1636, %v1636
        %v1641 = vpack.c.bf16 %v1637, %v1637
        %v1642 = vpack.c.bf16 %v1638, %v1638
        %v1647 = vunpack.c.l.b16 %v1639
        %v1648 = vunpack.c.l.b16 %v1640
        %v1649 = vunpack.c.l.b16 %v1641
        %v1650 = vunpack.c.l.b16 %v1642
        %v1651 = vrot.slane %v1647, 4
        %v1652 = vrot.slane %v1648, 3
        %v1653 = vsel %vm476, %v1652, %v1651
        %v1654 = vrot.slane %v1649, 2
        %v1655 = vsel %vm479, %v1654, %v1653
        %v1656 = vrot.slane %v1650, 1
        %v1657 = vsel %vm482, %v1656, %v1655
        %v1658 = vpack.c.b16 %v1657, %v1657
        %1659 = vrot.lane.b32.xlu0 %v1658, 32
        %v1660 = vpop.permute.xlu0 %1659
        %1662 = vst.msk [vmem:[#allocation2 + $0x1c] sm:$0x3] %vm534, %v1660
        %v1663 = vmul.f32 %v446, 0.41935486
        %v1664 = vmul.f32 %v451, 0.41935486
        %v1665 = vmul.f32 %v456, 0.41935486
        %v1666 = vmul.f32 %v461, 0.41935486
        %v1667 = vmul.f32 %v446, 0.58064514
        %v1668 = vmul.f32 %v451, 0.58064514
        %v1669 = vmul.f32 %v456, 0.58064514
        %v1670 = vmul.f32 %v461, 0.58064514
        %v1675 = vrot.slane %v1667, 1
        %v1676 = vrot.slane %v1668, 1
        %v1677 = vrot.slane %v1669, 1
        %v1678 = vrot.slane %v1670, 1
        %v1683 = vadd.f32 %v1663, %v1675
        %v1684 = vadd.f32 %v1664, %v1676
        %v1685 = vadd.f32 %v1665, %v1677
        %v1686 = vadd.f32 %v1666, %v1678
        %v1687 = vpack.c.bf16 %v1683, %v1683
        %v1688 = vpack.c.bf16 %v1684, %v1684
        %v1689 = vpack.c.bf16 %v1685, %v1685
        %v1690 = vpack.c.bf16 %v1686, %v1686
        %v1695 = vunpack.c.l.b16 %v1687
        %v1696 = vunpack.c.l.b16 %v1688
        %v1697 = vunpack.c.l.b16 %v1689
        %v1698 = vunpack.c.l.b16 %v1690
        %v1699 = vrot.slane %v1695, 4
        %v1700 = vrot.slane %v1696, 3
        %v1701 = vsel %vm476, %v1700, %v1699
        %v1702 = vrot.slane %v1697, 2
        %v1703 = vsel %vm479, %v1702, %v1701
        %v1704 = vrot.slane %v1698, 1
        %v1705 = vsel %vm482, %v1704, %v1703
        %v1706 = vpack.c.b16 %v1705, %v1705
        %1707 = vrot.lane.b32.xlu0 %v1706, 64
        %v1708 = vpop.permute.xlu0 %1707
        %1710 = vst.msk [vmem:[#allocation2 + $0x1c] sm:$0x3] %vm582, %v1708
        %v1711 = vmul.f32 %v446, 0.9354839
        %v1712 = vmul.f32 %v451, 0.9354839
        %v1713 = vmul.f32 %v456, 0.9354839
        %v1714 = vmul.f32 %v461, 0.9354839
        %v1715 = vmul.f32 %v446, 0.06451613
        %v1716 = vmul.f32 %v451, 0.06451613
        %v1717 = vmul.f32 %v456, 0.06451613
        %v1718 = vmul.f32 %v461, 0.06451613
        %v1723 = vrot.slane %v1715, 1
        %v1724 = vrot.slane %v1716, 1
        %v1725 = vrot.slane %v1717, 1
        %v1726 = vrot.slane %v1718, 1
        %v1731 = vadd.f32 %v1711, %v1723
        %v1732 = vadd.f32 %v1712, %v1724
        %v1733 = vadd.f32 %v1713, %v1725
        %v1734 = vadd.f32 %v1714, %v1726
        %v1735 = vpack.c.bf16 %v1731, %v1731
        %v1736 = vpack.c.bf16 %v1732, %v1732
        %v1737 = vpack.c.bf16 %v1733, %v1733
        %v1738 = vpack.c.bf16 %v1734, %v1734
        %v1743 = vunpack.c.l.b16 %v1735
        %v1744 = vunpack.c.l.b16 %v1736
        %v1745 = vunpack.c.l.b16 %v1737
        %v1746 = vunpack.c.l.b16 %v1738
        %v1747 = vrot.slane %v1743, 5
        %v1748 = vrot.slane %v1744, 4
        %v1749 = vsel %vm476, %v1748, %v1747
        %v1750 = vrot.slane %v1745, 3
        %v1751 = vsel %vm479, %v1750, %v1749
        %v1752 = vrot.slane %v1746, 2
        %v1753 = vsel %vm482, %v1752, %v1751
        %v1754 = vpack.c.b16 %v1753, %v1753
        %1755 = vrot.lane.b32.xlu0 %v1754, 96
        %v1756 = vpop.permute.xlu0 %1755
        %1758 = vst.msk [vmem:[#allocation2 + $0x1c] sm:$0x3] %vm630, %v1756
        %v1759 = vmul.f32 %v446, 0.4516129
        %v1760 = vmul.f32 %v451, 0.4516129
        %v1761 = vmul.f32 %v456, 0.4516129
        %v1762 = vmul.f32 %v461, 0.4516129
        %v1763 = vmul.f32 %v446, 0.5483871
        %v1764 = vmul.f32 %v451, 0.5483871
        %v1765 = vmul.f32 %v456, 0.5483871
        %v1766 = vmul.f32 %v461, 0.5483871
        %v1771 = vrot.slane %v1763, 1
        %v1772 = vrot.slane %v1764, 1
        %v1773 = vrot.slane %v1765, 1
        %v1774 = vrot.slane %v1766, 1
        %v1779 = vadd.f32 %v1759, %v1771
        %v1780 = vadd.f32 %v1760, %v1772
        %v1781 = vadd.f32 %v1761, %v1773
        %v1782 = vadd.f32 %v1762, %v1774
        %v1783 = vpack.c.bf16 %v1779, %v1779
        %v1784 = vpack.c.bf16 %v1780, %v1780
        %v1785 = vpack.c.bf16 %v1781, %v1781
        %v1786 = vpack.c.bf16 %v1782, %v1782
        %v1791 = vunpack.c.l.b16 %v1783
        %v1792 = vunpack.c.l.b16 %v1784
        %v1793 = vunpack.c.l.b16 %v1785
        %v1794 = vunpack.c.l.b16 %v1786
        %v1795 = vrot.slane %v1791, 5
        %v1796 = vrot.slane %v1792, 4
        %v1797 = vsel %vm476, %v1796, %v1795
        %v1798 = vrot.slane %v1793, 3
        %v1799 = vsel %vm479, %v1798, %v1797
        %v1800 = vrot.slane %v1794, 2
        %v1801 = vsel %vm482, %v1800, %v1799
        %v1802 = vpack.c.b16 %v1801, %v1801
        %1804 = vst.msk [vmem:[#allocation2 + $0x20] sm:$0x3] %vm486, %v1802
        %v1805 = vmul.f32 %v446, 0.96774197
        %v1806 = vmul.f32 %v451, 0.96774197
        %v1807 = vmul.f32 %v456, 0.96774197
        %v1808 = vmul.f32 %v461, 0.96774197
        %v1809 = vmul.f32 %v446, 0.032258064
        %v1810 = vmul.f32 %v451, 0.032258064
        %v1811 = vmul.f32 %v456, 0.032258064
        %v1812 = vmul.f32 %v461, 0.032258064
        %v1817 = vrot.slane %v1809, 1
        %v1818 = vrot.slane %v1810, 1
        %v1819 = vrot.slane %v1811, 1
        %v1820 = vrot.slane %v1812, 1
        %v1825 = vadd.f32 %v1805, %v1817
        %v1826 = vadd.f32 %v1806, %v1818
        %v1827 = vadd.f32 %v1807, %v1819
        %v1828 = vadd.f32 %v1808, %v1820
        %v1829 = vpack.c.bf16 %v1825, %v1825
        %v1830 = vpack.c.bf16 %v1826, %v1826
        %v1831 = vpack.c.bf16 %v1827, %v1827
        %v1832 = vpack.c.bf16 %v1828, %v1828
        %v1837 = vunpack.c.l.b16 %v1829
        %v1838 = vunpack.c.l.b16 %v1830
        %v1839 = vunpack.c.l.b16 %v1831
        %v1840 = vunpack.c.l.b16 %v1832
        %v1841 = vrot.slane %v1837, 6
        %v1842 = vrot.slane %v1838, 5
        %v1843 = vsel %vm476, %v1842, %v1841
        %v1844 = vrot.slane %v1839, 4
        %v1845 = vsel %vm479, %v1844, %v1843
        %v1846 = vrot.slane %v1840, 3
        %v1847 = vsel %vm482, %v1846, %v1845
        %v1848 = vpack.c.b16 %v1847, %v1847
        %1849 = vrot.lane.b32.xlu0 %v1848, 32
        %v1850 = vpop.permute.xlu0 %1849
        %1852 = vst.msk [vmem:[#allocation2 + $0x20] sm:$0x3] %vm534, %v1850
        %v1853 = vmul.f32 %v446, 0.48387098
        %v1854 = vmul.f32 %v451, 0.48387098
        %v1855 = vmul.f32 %v456, 0.48387098
        %v1856 = vmul.f32 %v461, 0.48387098
        %v1857 = vmul.f32 %v446, 0.516129
        %v1858 = vmul.f32 %v451, 0.516129
        %v1859 = vmul.f32 %v456, 0.516129
        %v1860 = vmul.f32 %v461, 0.516129
        %v1865 = vrot.slane %v1857, 1
        %v1866 = vrot.slane %v1858, 1
        %v1867 = vrot.slane %v1859, 1
        %v1868 = vrot.slane %v1860, 1
        %v1873 = vadd.f32 %v1853, %v1865
        %v1874 = vadd.f32 %v1854, %v1866
        %v1875 = vadd.f32 %v1855, %v1867
        %v1876 = vadd.f32 %v1856, %v1868
        %v1877 = vpack.c.bf16 %v1873, %v1873
        %v1878 = vpack.c.bf16 %v1874, %v1874
        %v1879 = vpack.c.bf16 %v1875, %v1875
        %v1880 = vpack.c.bf16 %v1876, %v1876
        %v1885 = vunpack.c.l.b16 %v1877
        %v1886 = vunpack.c.l.b16 %v1878
        %v1887 = vunpack.c.l.b16 %v1879
        %v1888 = vunpack.c.l.b16 %v1880
        %v1889 = vrot.slane %v1885, 6
        %v1890 = vrot.slane %v1886, 5
        %v1891 = vsel %vm476, %v1890, %v1889
        %v1892 = vrot.slane %v1887, 4
        %v1893 = vsel %vm479, %v1892, %v1891
        %v1894 = vrot.slane %v1888, 3
        %v1895 = vsel %vm482, %v1894, %v1893
        %v1896 = vpack.c.b16 %v1895, %v1895
        %1897 = vrot.lane.b32.xlu0 %v1896, 64
        %v1898 = vpop.permute.xlu0 %1897
        %1900 = vst.msk [vmem:[#allocation2 + $0x20] sm:$0x3] %vm582, %v1898
        %v1901 = vpack.c.bf16 %v446, %v446
        %v1902 = vpack.c.bf16 %v451, %v451
        %v1903 = vpack.c.bf16 %v456, %v456
        %v1904 = vpack.c.bf16 %v461, %v461
        %v1909 = vunpack.c.l.b16 %v1901
        %v1910 = vunpack.c.l.b16 %v1902
        %v1911 = vunpack.c.l.b16 %v1903
        %v1912 = vunpack.c.l.b16 %v1904
        %v1913 = vrot.slane %v1909, 7
        %v1914 = vrot.slane %v1910, 6
        %v1915 = vsel %vm476, %v1914, %v1913
        %v1916 = vrot.slane %v1911, 5
        %v1917 = vsel %vm479, %v1916, %v1915
        %v1918 = vrot.slane %v1912, 4
        %v1919 = vsel %vm482, %v1918, %v1917
        %v1920 = vpack.c.b16 %v1919, %v1919
        %1921 = vrot.lane.b32.xlu0 %v1920, 96
        %v1922 = vpop.permute.xlu0 %1921
        %1924 = vst.msk [vmem:[#allocation2 + $0x20] sm:$0x3] %vm630, %v1922
        %v1925 = vld [vmem:[#allocation2] sm:$0x33]
        %v1926 = vld [vmem:[#allocation2 + $0x8] sm:$0x33]
        %v1927 = vld [vmem:[#allocation2 + $0x10] sm:$0x33]
        %v1928 = vld [vmem:[#allocation2 + $0x18] sm:$0x33]
        %v1929 = vld [vmem:[#allocation2 + $0x20] sm:$0x3]
        %v1930 = vld [vmem:[%s3] sm:$0x11]
        %v1931 = vld [vmem:[%s3 + $0x8] sm:$0x11]
        %v1932 = vld [vmem:[%s3 + $0x10] sm:$0x11]
        %v1933 = vld [vmem:[%s3 + $0x18] sm:$0x11]
        %v1938 = vunpack.c.l.b16 %v1930
        %v1939 = vunpack.c.h.b16 %v1930
        %v1940 = vunpack.c.l.b16 %v1931
        %v1941 = vunpack.c.h.b16 %v1931
        %v1942 = vunpack.c.l.b16 %v1932
        %v1943 = vunpack.c.h.b16 %v1932
        %v1944 = vunpack.c.l.b16 %v1933
        %v1945 = vunpack.c.h.b16 %v1933
        %v1946 = vpack.c.b16 %v1938, %v1938
        %v1947 = vpack.c.b16 %v1939, %v1939
        %v1948 = vpack.c.b16 %v1940, %v1940
        %v1949 = vpack.c.b16 %v1941, %v1941
        %v1950 = vpack.c.b16 %v1942, %v1942
        %v1951 = vpack.c.b16 %v1943, %v1943
        %v1952 = vpack.c.b16 %v1944, %v1944
        %v1953 = vpack.c.b16 %v1945, %v1945
        %v1955 = vpack.i.b16 %v1946, %v1946
        %v1957 = vperm.slane %v1955, 0
        %v1959 = vpack.i.b16 %v1947, %v1947
        %v1961 = vperm.slane %v1959, 0
        %v1963 = vpack.i.b16 %v1948, %v1948
        %v1965 = vperm.slane %v1963, 0
        %v1967 = vpack.i.b16 %v1949, %v1949
        %v1969 = vperm.slane %v1967, 0
        %v1971 = vpack.i.b16 %v1950, %v1950
        %v1973 = vperm.slane %v1971, 0
        %v1975 = vpack.i.b16 %v1951, %v1951
        %v1977 = vperm.slane %v1975, 0
        %v1979 = vpack.i.b16 %v1952, %v1952
        %v1981 = vperm.slane %v1979, 0
        %v1983 = vpack.i.b16 %v1953, %v1953
        %v1985 = vperm.slane %v1983, 0
        %v1986 = vunpack.c.l.bf16 %v1925
        %v1987 = vunpack.c.h.bf16 %v1925
        %v1988 = vunpack.c.l.bf16 %v1926
        %v1989 = vunpack.c.h.bf16 %v1926
        %v1990 = vunpack.c.l.bf16 %v1927
        %v1991 = vunpack.c.h.bf16 %v1927
        %v1992 = vunpack.c.l.bf16 %v1928
        %v1993 = vunpack.c.h.bf16 %v1928
        %v1994 = vunpack.c.l.bf16 %v1929
        %v1995 = vunpack.c.l.bf16 %v1957
        %v1996 = vunpack.c.l.bf16 %v1961
        %v1997 = vunpack.c.l.bf16 %v1965
        %v1998 = vunpack.c.l.bf16 %v1969
        %v1999 = vunpack.c.l.bf16 %v1973
        %v2000 = vunpack.c.l.bf16 %v1977
        %v2001 = vunpack.c.l.bf16 %v1981
        %v2002 = vunpack.c.l.bf16 %v1985
        %2011 = vrot.lane.b32.xlu0 %v1995, 62
        %v2012 = vpop.permute.xlu0 %2011
        %2013 = vrot.lane.b32.xlu0 %v1996, 62
        %v2014 = vpop.permute.xlu0 %2013
        %2015 = vrot.lane.b32.xlu0 %v1997, 62
        %v2016 = vpop.permute.xlu0 %2015
        %2017 = vrot.lane.b32.xlu0 %v1998, 62
        %v2018 = vpop.permute.xlu0 %2017
        %2019 = vrot.lane.b32.xlu0 %v1999, 62
        %v2020 = vpop.permute.xlu0 %2019
        %2021 = vrot.lane.b32.xlu0 %v2000, 62
        %v2022 = vpop.permute.xlu0 %2021
        %2023 = vrot.lane.b32.xlu0 %v2001, 62
        %v2024 = vpop.permute.xlu0 %2023
        %2025 = vrot.lane.b32.xlu0 %v2002, 62
        %v2026 = vpop.permute.xlu0 %2025
        %vm2027 = vcmask 506880
        %v2028 = vsel %vm2027, %v2012, %v2014
        %v2029 = vsel %vm2027, %v2014, %v2016
        %v2030 = vsel %vm2027, %v2016, %v2018
        %v2031 = vsel %vm2027, %v2018, %v2020
        %v2032 = vsel %vm2027, %v2020, %v2022
        %v2033 = vsel %vm2027, %v2022, %v2024
        %v2034 = vsel %vm2027, %v2024, %v2026
        %v2044 = vmul.f32 %v1986, %v2012
        %v2045 = vmul.f32 %v1987, %v2028
        %v2046 = vmul.f32 %v1988, %v2029
        %v2047 = vmul.f32 %v1989, %v2030
        %v2048 = vmul.f32 %v1990, %v2031
        %v2049 = vmul.f32 %v1991, %v2032
        %v2050 = vmul.f32 %v1992, %v2033
        %v2051 = vmul.f32 %v1993, %v2034
        %v2052 = vmul.f32 %v1994, %v2026
        %v2053 = vpack.c.bf16 %v2045, %v2044
        %v2054 = vpack.c.bf16 %v2047, %v2046
        %v2055 = vpack.c.bf16 %v2049, %v2048
        %v2056 = vpack.c.bf16 %v2051, %v2050
        %v2057 = vpack.c.bf16 %v2052, %v2052
        %v2058 = vld [vmem:[%s4] sm:$0xf]
        %v2059 = vunpack.c.l.bf16 %v2053
        %v2060 = vunpack.c.h.bf16 %v2053
        %v2061 = vunpack.c.l.bf16 %v2054
        %v2062 = vunpack.c.h.bf16 %v2054
        %v2063 = vunpack.c.l.bf16 %v2055
        %v2064 = vunpack.c.h.bf16 %v2055
        %v2065 = vunpack.c.l.bf16 %v2056
        %v2066 = vunpack.c.h.bf16 %v2056
        %v2067 = vunpack.c.l.bf16 %v2057
        %2069 = vset.pattern.permute.xlu0 0
        %2070 = vperm.xlu0 %2069, %v2058
        %v2071 = vpop.permute.xlu0 %2070
        %v2073 = vmul.f32 %v2071, %v2059
        %v2074 = vmul.f32 %v2071, %v2060
        %v2075 = vmul.f32 %v2071, %v2061
        %v2076 = vmul.f32 %v2071, %v2062
        %v2077 = vmul.f32 %v2071, %v2063
        %v2078 = vmul.f32 %v2071, %v2064
        %v2079 = vmul.f32 %v2071, %v2065
        %v2080 = vmul.f32 %v2071, %v2066
        %v2081 = vmul.f32 %v2071, %v2067
        %v2082 = vadd.f32 %v2073, 0.0
        %v2083 = vadd.f32 %v2074, 0.0
        %v2084 = vadd.f32 %v2075, 0.0
        %v2085 = vadd.f32 %v2076, 0.0
        %v2086 = vadd.f32 %v2077, 0.0
        %v2087 = vadd.f32 %v2078, 0.0
        %v2088 = vadd.f32 %v2079, 0.0
        %v2089 = vadd.f32 %v2080, 0.0
        %v2090 = vadd.f32 %v2081, 0.0
        %s2091 = scalar_lea.vmem %s4, 4
        %v2092 = vld [vmem:[%s2091] sm:$0xf]
        %2094 = vset.pattern.permute.xlu0 0
        %2095 = vperm.xlu0 %2094, %v2092
        %v2096 = vpop.permute.xlu0 %2095
        %v2098 = vmul.f32 %v2096, %v1986
        %v2099 = vmul.f32 %v2096, %v1987
        %v2100 = vmul.f32 %v2096, %v1988
        %v2101 = vmul.f32 %v2096, %v1989
        %v2102 = vmul.f32 %v2096, %v1990
        %v2103 = vmul.f32 %v2096, %v1991
        %v2104 = vmul.f32 %v2096, %v1992
        %v2105 = vmul.f32 %v2096, %v1993
        %v2106 = vmul.f32 %v2096, %v1994
        %2116 = vrot.lane.b32.xlu0 %v2098, 126
        %v2117 = vpop.permute.xlu0 %2116
        %2118 = vrot.lane.b32.xlu0 %v2099, 126
        %v2119 = vpop.permute.xlu0 %2118
        %2120 = vrot.lane.b32.xlu0 %v2100, 126
        %v2121 = vpop.permute.xlu0 %2120
        %2122 = vrot.lane.b32.xlu0 %v2101, 126
        %v2123 = vpop.permute.xlu0 %2122
        %2124 = vrot.lane.b32.xlu0 %v2102, 126
        %v2125 = vpop.permute.xlu0 %2124
        %2126 = vrot.lane.b32.xlu0 %v2103, 126
        %v2127 = vpop.permute.xlu0 %2126
        %2128 = vrot.lane.b32.xlu0 %v2104, 126
        %v2129 = vpop.permute.xlu0 %2128
        %2130 = vrot.lane.b32.xlu0 %v2105, 126
        %v2131 = vpop.permute.xlu0 %2130
        %2132 = vrot.lane.b32.xlu0 %v2106, 126
        %v2133 = vpop.permute.xlu0 %2132
        %vm2134 = vcmask 1031168
        %v2135 = vsel %vm2134, %v2117, %v2119
        %v2136 = vsel %vm2134, %v2119, %v2121
        %v2137 = vsel %vm2134, %v2121, %v2123
        %v2138 = vsel %vm2134, %v2123, %v2125
        %v2139 = vsel %vm2134, %v2125, %v2127
        %v2140 = vsel %vm2134, %v2127, %v2129
        %v2141 = vsel %vm2134, %v2129, %v2131
        %v2142 = vsel %vm2134, %v2131, %v2133
        %v2152 = vadd.f32 %v2082, %v2135
        %v2153 = vadd.f32 %v2083, %v2136
        %v2154 = vadd.f32 %v2084, %v2137
        %v2155 = vadd.f32 %v2085, %v2138
        %v2156 = vadd.f32 %v2086, %v2139
        %v2157 = vadd.f32 %v2087, %v2140
        %v2158 = vadd.f32 %v2088, %v2141
        %v2159 = vadd.f32 %v2089, %v2142
        %v2160 = vadd.f32 %v2090, %v2133
        %v2161 = vld [vmem:[%s3] sm:$0x44]
        %v2162 = vld [vmem:[%s3 + $0x8] sm:$0x44]
        %v2163 = vld [vmem:[%s3 + $0x10] sm:$0x44]
        %v2164 = vld [vmem:[%s3 + $0x18] sm:$0x44]
        %v2169 = vunpack.c.l.b16 %v2161
        %v2170 = vunpack.c.h.b16 %v2161
        %v2171 = vunpack.c.l.b16 %v2162
        %v2172 = vunpack.c.h.b16 %v2162
        %v2173 = vunpack.c.l.b16 %v2163
        %v2174 = vunpack.c.h.b16 %v2163
        %v2175 = vunpack.c.l.b16 %v2164
        %v2176 = vunpack.c.h.b16 %v2164
        %v2177 = vpack.c.b16 %v2169, %v2169
        %v2178 = vpack.c.b16 %v2170, %v2170
        %v2179 = vpack.c.b16 %v2171, %v2171
        %v2180 = vpack.c.b16 %v2172, %v2172
        %v2181 = vpack.c.b16 %v2173, %v2173
        %v2182 = vpack.c.b16 %v2174, %v2174
        %v2183 = vpack.c.b16 %v2175, %v2175
        %v2184 = vpack.c.b16 %v2176, %v2176
        %v2186 = vpack.i.b16 %v2177, %v2177
        %v2188 = vperm.slane %v2186, 2
        %v2190 = vpack.i.b16 %v2178, %v2178
        %v2192 = vperm.slane %v2190, 2
        %v2194 = vpack.i.b16 %v2179, %v2179
        %v2196 = vperm.slane %v2194, 2
        %v2198 = vpack.i.b16 %v2180, %v2180
        %v2200 = vperm.slane %v2198, 2
        %v2202 = vpack.i.b16 %v2181, %v2181
        %v2204 = vperm.slane %v2202, 2
        %v2206 = vpack.i.b16 %v2182, %v2182
        %v2208 = vperm.slane %v2206, 2
        %v2210 = vpack.i.b16 %v2183, %v2183
        %v2212 = vperm.slane %v2210, 2
        %v2214 = vpack.i.b16 %v2184, %v2184
        %v2216 = vperm.slane %v2214, 2
        %v2217 = vunpack.c.l.bf16 %v2188
        %v2218 = vunpack.c.l.bf16 %v2192
        %v2219 = vunpack.c.l.bf16 %v2196
        %v2220 = vunpack.c.l.bf16 %v2200
        %v2221 = vunpack.c.l.bf16 %v2204
        %v2222 = vunpack.c.l.bf16 %v2208
        %v2223 = vunpack.c.l.bf16 %v2212
        %v2224 = vunpack.c.l.bf16 %v2216
        %2233 = vrot.lane.b32.xlu0 %v2217, 66
        %v2234 = vpop.permute.xlu0 %2233
        %2235 = vrot.lane.b32.xlu0 %v2218, 66
        %v2236 = vpop.permute.xlu0 %2235
        %2237 = vrot.lane.b32.xlu0 %v2219, 66
        %v2238 = vpop.permute.xlu0 %2237
        %2239 = vrot.lane.b32.xlu0 %v2220, 66
        %v2240 = vpop.permute.xlu0 %2239
        %2241 = vrot.lane.b32.xlu0 %v2221, 66
        %v2242 = vpop.permute.xlu0 %2241
        %2243 = vrot.lane.b32.xlu0 %v2222, 66
        %v2244 = vpop.permute.xlu0 %2243
        %2245 = vrot.lane.b32.xlu0 %v2223, 66
        %v2246 = vpop.permute.xlu0 %2245
        %2247 = vrot.lane.b32.xlu0 %v2224, 66
        %v2248 = vpop.permute.xlu0 %2247
        %vm2249 = vcmask 539648
        %v2250 = vsel %vm2249, %v2234, %v2236
        %v2251 = vsel %vm2249, %v2236, %v2238
        %v2252 = vsel %vm2249, %v2238, %v2240
        %v2253 = vsel %vm2249, %v2240, %v2242
        %v2254 = vsel %vm2249, %v2242, %v2244
        %v2255 = vsel %vm2249, %v2244, %v2246
        %v2256 = vsel %vm2249, %v2246, %v2248
        %v2266 = vmul.f32 %v1986, %v2234
        %v2267 = vmul.f32 %v1987, %v2250
        %v2268 = vmul.f32 %v1988, %v2251
        %v2269 = vmul.f32 %v1989, %v2252
        %v2270 = vmul.f32 %v1990, %v2253
        %v2271 = vmul.f32 %v1991, %v2254
        %v2272 = vmul.f32 %v1992, %v2255
        %v2273 = vmul.f32 %v1993, %v2256
        %v2274 = vmul.f32 %v1994, %v2248
        %v2275 = vpack.c.bf16 %v2267, %v2266
        %v2276 = vpack.c.bf16 %v2269, %v2268
        %v2277 = vpack.c.bf16 %v2271, %v2270
        %v2278 = vpack.c.bf16 %v2273, %v2272
        %v2279 = vpack.c.bf16 %v2274, %v2274
        %s2280 = scalar_lea.vmem %s4, 8
        %v2281 = vld [vmem:[%s2280] sm:$0xf]
        %v2282 = vunpack.c.l.bf16 %v2275
        %v2283 = vunpack.c.h.bf16 %v2275
        %v2284 = vunpack.c.l.bf16 %v2276
        %v2285 = vunpack.c.h.bf16 %v2276
        %v2286 = vunpack.c.l.bf16 %v2277
        %v2287 = vunpack.c.h.bf16 %v2277
        %v2288 = vunpack.c.l.bf16 %v2278
        %v2289 = vunpack.c.h.bf16 %v2278
        %v2290 = vunpack.c.l.bf16 %v2279
        %2292 = vset.pattern.permute.xlu0 0
        %2293 = vperm.xlu0 %2292, %v2281
        %v2294 = vpop.permute.xlu0 %2293
        %v2296 = vmul.f32 %v2294, %v2282
        %v2297 = vmul.f32 %v2294, %v2283
        %v2298 = vmul.f32 %v2294, %v2284
        %v2299 = vmul.f32 %v2294, %v2285
        %v2300 = vmul.f32 %v2294, %v2286
        %v2301 = vmul.f32 %v2294, %v2287
        %v2302 = vmul.f32 %v2294, %v2288
        %v2303 = vmul.f32 %v2294, %v2289
        %v2304 = vmul.f32 %v2294, %v2290
        %2314 = vrot.lane.b32.xlu0 %v2296, 124
        %v2315 = vpop.permute.xlu0 %2314
        %2316 = vrot.lane.b32.xlu0 %v2297, 124
        %v2317 = vpop.permute.xlu0 %2316
        %2318 = vrot.lane.b32.xlu0 %v2298, 124
        %v2319 = vpop.permute.xlu0 %2318
        %2320 = vrot.lane.b32.xlu0 %v2299, 124
        %v2321 = vpop.permute.xlu0 %2320
        %2322 = vrot.lane.b32.xlu0 %v2300, 124
        %v2323 = vpop.permute.xlu0 %2322
        %2324 = vrot.lane.b32.xlu0 %v2301, 124
        %v2325 = vpop.permute.xlu0 %2324
        %2326 = vrot.lane.b32.xlu0 %v2302, 124
        %v2327 = vpop.permute.xlu0 %2326
        %2328 = vrot.lane.b32.xlu0 %v2303, 124
        %v2329 = vpop.permute.xlu0 %2328
        %2330 = vrot.lane.b32.xlu0 %v2304, 124
        %v2331 = vpop.permute.xlu0 %2330
        %vm2332 = vcmask 1014784
        %v2333 = vsel %vm2332, %v2315, %v2317
        %v2334 = vsel %vm2332, %v2317, %v2319
        %v2335 = vsel %vm2332, %v2319, %v2321
        %v2336 = vsel %vm2332, %v2321, %v2323
        %v2337 = vsel %vm2332, %v2323, %v2325
        %v2338 = vsel %vm2332, %v2325, %v2327
        %v2339 = vsel %vm2332, %v2327, %v2329
        %v2340 = vsel %vm2332, %v2329, %v2331
        %v2350 = vadd.f32 %v2152, %v2333
        %v2351 = vadd.f32 %v2153, %v2334
        %v2352 = vadd.f32 %v2154, %v2335
        %v2353 = vadd.f32 %v2155, %v2336
        %v2354 = vadd.f32 %v2156, %v2337
        %v2355 = vadd.f32 %v2157, %v2338
        %v2356 = vadd.f32 %v2158, %v2339
        %v2357 = vadd.f32 %v2159, %v2340
        %v2358 = vadd.f32 %v2160, %v2331
        %2359 = vrot.lane.b32.xlu0 %v1995, 126
        %v2360 = vpop.permute.xlu0 %2359
        %2361 = vrot.lane.b32.xlu0 %v1996, 126
        %v2362 = vpop.permute.xlu0 %2361
        %2363 = vrot.lane.b32.xlu0 %v1997, 126
        %v2364 = vpop.permute.xlu0 %2363
        %2365 = vrot.lane.b32.xlu0 %v1998, 126
        %v2366 = vpop.permute.xlu0 %2365
        %2367 = vrot.lane.b32.xlu0 %v1999, 126
        %v2368 = vpop.permute.xlu0 %2367
        %2369 = vrot.lane.b32.xlu0 %v2000, 126
        %v2370 = vpop.permute.xlu0 %2369
        %2371 = vrot.lane.b32.xlu0 %v2001, 126
        %v2372 = vpop.permute.xlu0 %2371
        %2373 = vrot.lane.b32.xlu0 %v2002, 126
        %v2374 = vpop.permute.xlu0 %2373
        %v2375 = vsel %vm2134, %v2360, %v2362
        %v2376 = vsel %vm2134, %v2362, %v2364
        %v2377 = vsel %vm2134, %v2364, %v2366
        %v2378 = vsel %vm2134, %v2366, %v2368
        %v2379 = vsel %vm2134, %v2368, %v2370
        %v2380 = vsel %vm2134, %v2370, %v2372
        %v2381 = vsel %vm2134, %v2372, %v2374
        %v2391 = vmul.f32 %v1986, %v2360
        %v2392 = vmul.f32 %v1987, %v2375
        %v2393 = vmul.f32 %v1988, %v2376
        %v2394 = vmul.f32 %v1989, %v2377
        %v2395 = vmul.f32 %v1990, %v2378
        %v2396 = vmul.f32 %v1991, %v2379
        %v2397 = vmul.f32 %v1992, %v2380
        %v2398 = vmul.f32 %v1993, %v2381
        %v2399 = vmul.f32 %v1994, %v2374
        %v2400 = vpack.c.bf16 %v2392, %v2391
        %v2401 = vpack.c.bf16 %v2394, %v2393
        %v2402 = vpack.c.bf16 %v2396, %v2395
        %v2403 = vpack.c.bf16 %v2398, %v2397
        %v2404 = vpack.c.bf16 %v2399, %v2399
        %s2405 = scalar_lea.vmem %s4, 12
        %v2406 = vld [vmem:[%s2405] sm:$0xf]
        %v2407 = vunpack.c.l.bf16 %v2400
        %v2408 = vunpack.c.h.bf16 %v2400
        %v2409 = vunpack.c.l.bf16 %v2401
        %v2410 = vunpack.c.h.bf16 %v2401
        %v2411 = vunpack.c.l.bf16 %v2402
        %v2412 = vunpack.c.h.bf16 %v2402
        %v2413 = vunpack.c.l.bf16 %v2403
        %v2414 = vunpack.c.h.bf16 %v2403
        %v2415 = vunpack.c.l.bf16 %v2404
        %2417 = vset.pattern.permute.xlu0 0
        %2418 = vperm.xlu0 %2417, %v2406
        %v2419 = vpop.permute.xlu0 %2418
        %v2421 = vmul.f32 %v2419, %v2407
        %v2422 = vmul.f32 %v2419, %v2408
        %v2423 = vmul.f32 %v2419, %v2409
        %v2424 = vmul.f32 %v2419, %v2410
        %v2425 = vmul.f32 %v2419, %v2411
        %v2426 = vmul.f32 %v2419, %v2412
        %v2427 = vmul.f32 %v2419, %v2413
        %v2428 = vmul.f32 %v2419, %v2414
        %v2429 = vmul.f32 %v2419, %v2415
        %2439 = vrot.lane.b32.xlu0 %v2421, 64
        %v2440 = vpop.permute.xlu0 %2439
        %2441 = vrot.lane.b32.xlu0 %v2422, 64
        %v2442 = vpop.permute.xlu0 %2441
        %2443 = vrot.lane.b32.xlu0 %v2423, 64
        %v2444 = vpop.permute.xlu0 %2443
        %2445 = vrot.lane.b32.xlu0 %v2424, 64
        %v2446 = vpop.permute.xlu0 %2445
        %2447 = vrot.lane.b32.xlu0 %v2425, 64
        %v2448 = vpop.permute.xlu0 %2447
        %2449 = vrot.lane.b32.xlu0 %v2426, 64
        %v2450 = vpop.permute.xlu0 %2449
        %2451 = vrot.lane.b32.xlu0 %v2427, 64
        %v2452 = vpop.permute.xlu0 %2451
        %2453 = vrot.lane.b32.xlu0 %v2428, 64
        %v2454 = vpop.permute.xlu0 %2453
        %2455 = vrot.lane.b32.xlu0 %v2429, 64
        %v2456 = vpop.permute.xlu0 %2455
        %vm2457 = vcmask 523264
        %v2458 = vsel %vm2457, %v2440, %v2442
        %v2459 = vsel %vm2457, %v2442, %v2444
        %v2460 = vsel %vm2457, %v2444, %v2446
        %v2461 = vsel %vm2457, %v2446, %v2448
        %v2462 = vsel %vm2457, %v2448, %v2450
        %v2463 = vsel %vm2457, %v2450, %v2452
        %v2464 = vsel %vm2457, %v2452, %v2454
        %v2465 = vsel %vm2457, %v2454, %v2456
        %v2475 = vadd.f32 %v2350, %v2458
        %v2476 = vadd.f32 %v2351, %v2459
        %v2477 = vadd.f32 %v2352, %v2460
        %v2478 = vadd.f32 %v2353, %v2461
        %v2479 = vadd.f32 %v2354, %v2462
        %v2480 = vadd.f32 %v2355, %v2463
        %v2481 = vadd.f32 %v2356, %v2464
        %v2482 = vadd.f32 %v2357, %v2465
        %v2483 = vadd.f32 %v2358, %v2456
        %v2484 = vld [vmem:[#allocation2 + $0x4] sm:$0x33]
        %v2485 = vld [vmem:[#allocation2 + $0xc] sm:$0x33]
        %v2486 = vld [vmem:[#allocation2 + $0x14] sm:$0x33]
        %v2487 = vld [vmem:[#allocation2 + $0x1c] sm:$0x33]
        %s2488 = scalar_lea.vmem %s4, 16
        %v2489 = vld [vmem:[%s2488] sm:$0xf]
        %v2490 = vunpack.c.l.bf16 %v2484
        %v2491 = vunpack.c.h.bf16 %v2484
        %v2492 = vunpack.c.l.bf16 %v2485
        %v2493 = vunpack.c.h.bf16 %v2485
        %v2494 = vunpack.c.l.bf16 %v2486
        %v2495 = vunpack.c.h.bf16 %v2486
        %v2496 = vunpack.c.l.bf16 %v2487
        %v2497 = vunpack.c.h.bf16 %v2487
        %2499 = vset.pattern.permute.xlu0 0
        %2500 = vperm.xlu0 %2499, %v2489
        %v2501 = vpop.permute.xlu0 %2500
        %v2503 = vmul.f32 %v2501, %v2490
        %v2504 = vmul.f32 %v2501, %v2491
        %v2505 = vmul.f32 %v2501, %v2492
        %v2506 = vmul.f32 %v2501, %v2493
        %v2507 = vmul.f32 %v2501, %v2494
        %v2508 = vmul.f32 %v2501, %v2495
        %v2509 = vmul.f32 %v2501, %v2496
        %v2510 = vmul.f32 %v2501, %v2497
        %2519 = vrot.lane.b32.xlu0 %v2503, 62
        %v2520 = vpop.permute.xlu0 %2519
        %2521 = vrot.lane.b32.xlu0 %v2504, 62
        %v2522 = vpop.permute.xlu0 %2521
        %2523 = vrot.lane.b32.xlu0 %v2505, 62
        %v2524 = vpop.permute.xlu0 %2523
        %2525 = vrot.lane.b32.xlu0 %v2506, 62
        %v2526 = vpop.permute.xlu0 %2525
        %2527 = vrot.lane.b32.xlu0 %v2507, 62
        %v2528 = vpop.permute.xlu0 %2527
        %2529 = vrot.lane.b32.xlu0 %v2508, 62
        %v2530 = vpop.permute.xlu0 %2529
        %2531 = vrot.lane.b32.xlu0 %v2509, 62
        %v2532 = vpop.permute.xlu0 %2531
        %2533 = vrot.lane.b32.xlu0 %v2510, 62
        %v2534 = vpop.permute.xlu0 %2533
        %v2535 = vsel %vm2027, %v2520, %v2522
        %v2536 = vsel %vm2027, %v2522, %v2524
        %v2537 = vsel %vm2027, %v2524, %v2526
        %v2538 = vsel %vm2027, %v2526, %v2528
        %v2539 = vsel %vm2027, %v2528, %v2530
        %v2540 = vsel %vm2027, %v2530, %v2532
        %v2541 = vsel %vm2027, %v2532, %v2534
        %v2551 = vadd.f32 %v2475, %v2520
        %v2552 = vadd.f32 %v2476, %v2535
        %v2553 = vadd.f32 %v2477, %v2536
        %v2554 = vadd.f32 %v2478, %v2537
        %v2555 = vadd.f32 %v2479, %v2538
        %v2556 = vadd.f32 %v2480, %v2539
        %v2557 = vadd.f32 %v2481, %v2540
        %v2558 = vadd.f32 %v2482, %v2541
        %v2559 = vadd.f32 %v2483, %v2534
        %v2560 = vld [vmem:[#allocation2 + $0x4] sm:$0x33]
        %v2561 = vld [vmem:[#allocation2 + $0xc] sm:$0x33]
        %v2562 = vld [vmem:[#allocation2 + $0x14] sm:$0x33]
        %v2563 = vld [vmem:[#allocation2 + $0x1c] sm:$0x33]
        %v2564 = vld [vmem:[#allocation2 + $0x24] sm:$0x3]
        %v2565 = vunpack.c.l.bf16 %v2560
        %v2566 = vunpack.c.h.bf16 %v2560
        %v2567 = vunpack.c.l.bf16 %v2561
        %v2568 = vunpack.c.h.bf16 %v2561
        %v2569 = vunpack.c.l.bf16 %v2562
        %v2570 = vunpack.c.h.bf16 %v2562
        %v2571 = vunpack.c.l.bf16 %v2563
        %v2572 = vunpack.c.h.bf16 %v2563
        %v2573 = vunpack.c.l.bf16 %v2564
        %2574 = vrot.lane.b32.xlu0 %v2217, 2
        %v2575 = vpop.permute.xlu0 %2574
        %2576 = vrot.lane.b32.xlu0 %v2218, 2
        %v2577 = vpop.permute.xlu0 %2576
        %2578 = vrot.lane.b32.xlu0 %v2219, 2
        %v2579 = vpop.permute.xlu0 %2578
        %2580 = vrot.lane.b32.xlu0 %v2220, 2
        %v2581 = vpop.permute.xlu0 %2580
        %2582 = vrot.lane.b32.xlu0 %v2221, 2
        %v2583 = vpop.permute.xlu0 %2582
        %2584 = vrot.lane.b32.xlu0 %v2222, 2
        %v2585 = vpop.permute.xlu0 %2584
        %2586 = vrot.lane.b32.xlu0 %v2223, 2
        %v2587 = vpop.permute.xlu0 %2586
        %2588 = vrot.lane.b32.xlu0 %v2224, 2
        %v2589 = vpop.permute.xlu0 %2588
        %vm2590 = vcmask 15360
        %v2591 = vsel %vm2590, %v2575, %v2577
        %v2592 = vsel %vm2590, %v2577, %v2579
        %v2593 = vsel %vm2590, %v2579, %v2581
        %v2594 = vsel %vm2590, %v2581, %v2583
        %v2595 = vsel %vm2590, %v2583, %v2585
        %v2596 = vsel %vm2590, %v2585, %v2587
        %v2597 = vsel %vm2590, %v2587, %v2589
        %v2607 = vmul.f32 %v2565, %v2575
        %v2608 = vmul.f32 %v2566, %v2591
        %v2609 = vmul.f32 %v2567, %v2592
        %v2610 = vmul.f32 %v2568, %v2593
        %v2611 = vmul.f32 %v2569, %v2594
        %v2612 = vmul.f32 %v2570, %v2595
        %v2613 = vmul.f32 %v2571, %v2596
        %v2614 = vmul.f32 %v2572, %v2597
        %v2615 = vmul.f32 %v2573, %v2589
        %v2616 = vpack.c.bf16 %v2608, %v2607
        %v2617 = vpack.c.bf16 %v2610, %v2609
        %v2618 = vpack.c.bf16 %v2612, %v2611
        %v2619 = vpack.c.bf16 %v2614, %v2613
        %v2620 = vpack.c.bf16 %v2615, %v2615
        %s2621 = scalar_lea.vmem %s4, 20
        %v2622 = vld [vmem:[%s2621] sm:$0xf]
        %v2623 = vunpack.c.l.bf16 %v2616
        %v2624 = vunpack.c.h.bf16 %v2616
        %v2625 = vunpack.c.l.bf16 %v2617
        %v2626 = vunpack.c.h.bf16 %v2617
        %v2627 = vunpack.c.l.bf16 %v2618
        %v2628 = vunpack.c.h.bf16 %v2618
        %v2629 = vunpack.c.l.bf16 %v2619
        %v2630 = vunpack.c.h.bf16 %v2619
        %v2631 = vunpack.c.l.bf16 %v2620
        %2633 = vset.pattern.permute.xlu0 0
        %2634 = vperm.xlu0 %2633, %v2622
        %v2635 = vpop.permute.xlu0 %2634
        %v2637 = vmul.f32 %v2635, %v2623
        %v2638 = vmul.f32 %v2635, %v2624
        %v2639 = vmul.f32 %v2635, %v2625
        %v2640 = vmul.f32 %v2635, %v2626
        %v2641 = vmul.f32 %v2635, %v2627
        %v2642 = vmul.f32 %v2635, %v2628
        %v2643 = vmul.f32 %v2635, %v2629
        %v2644 = vmul.f32 %v2635, %v2630
        %v2645 = vmul.f32 %v2635, %v2631
        %2655 = vrot.lane.b32.xlu0 %v2637, 60
        %v2656 = vpop.permute.xlu0 %2655
        %2657 = vrot.lane.b32.xlu0 %v2638, 60
        %v2658 = vpop.permute.xlu0 %2657
        %2659 = vrot.lane.b32.xlu0 %v2639, 60
        %v2660 = vpop.permute.xlu0 %2659
        %2661 = vrot.lane.b32.xlu0 %v2640, 60
        %v2662 = vpop.permute.xlu0 %2661
        %2663 = vrot.lane.b32.xlu0 %v2641, 60
        %v2664 = vpop.permute.xlu0 %2663
        %2665 = vrot.lane.b32.xlu0 %v2642, 60
        %v2666 = vpop.permute.xlu0 %2665
        %2667 = vrot.lane.b32.xlu0 %v2643, 60
        %v2668 = vpop.permute.xlu0 %2667
        %2669 = vrot.lane.b32.xlu0 %v2644, 60
        %v2670 = vpop.permute.xlu0 %2669
        %2671 = vrot.lane.b32.xlu0 %v2645, 60
        %v2672 = vpop.permute.xlu0 %2671
        %vm2673 = vcmask 490496
        %v2674 = vsel %vm2673, %v2656, %v2658
        %v2675 = vsel %vm2673, %v2658, %v2660
        %v2676 = vsel %vm2673, %v2660, %v2662
        %v2677 = vsel %vm2673, %v2662, %v2664
        %v2678 = vsel %vm2673, %v2664, %v2666
        %v2679 = vsel %vm2673, %v2666, %v2668
        %v2680 = vsel %vm2673, %v2668, %v2670
        %v2681 = vsel %vm2673, %v2670, %v2672
        %v2691 = vadd.f32 %v2551, %v2656
        %v2692 = vadd.f32 %v2552, %v2674
        %v2693 = vadd.f32 %v2553, %v2675
        %v2694 = vadd.f32 %v2554, %v2676
        %v2695 = vadd.f32 %v2555, %v2677
        %v2696 = vadd.f32 %v2556, %v2678
        %v2697 = vadd.f32 %v2557, %v2679
        %v2698 = vadd.f32 %v2558, %v2680
        %v2699 = vadd.f32 %v2559, %v2681
        %v2700 = vmul.f32 %v2565, %v2012
        %v2701 = vmul.f32 %v2566, %v2028
        %v2702 = vmul.f32 %v2567, %v2029
        %v2703 = vmul.f32 %v2568, %v2030
        %v2704 = vmul.f32 %v2569, %v2031
        %v2705 = vmul.f32 %v2570, %v2032
        %v2706 = vmul.f32 %v2571, %v2033
        %v2707 = vmul.f32 %v2572, %v2034
        %v2708 = vmul.f32 %v2573, %v2026
        %v2709 = vpack.c.bf16 %v2701, %v2700
        %v2710 = vpack.c.bf16 %v2703, %v2702
        %v2711 = vpack.c.bf16 %v2705, %v2704
        %v2712 = vpack.c.bf16 %v2707, %v2706
        %v2713 = vpack.c.bf16 %v2708, %v2708
        %s2714 = scalar_lea.vmem %s4, 24
        %v2715 = vld [vmem:[%s2714] sm:$0xf]
        %v2716 = vunpack.c.l.bf16 %v2709
        %v2717 = vunpack.c.h.bf16 %v2709
        %v2718 = vunpack.c.l.bf16 %v2710
        %v2719 = vunpack.c.h.bf16 %v2710
        %v2720 = vunpack.c.l.bf16 %v2711
        %v2721 = vunpack.c.h.bf16 %v2711
        %v2722 = vunpack.c.l.bf16 %v2712
        %v2723 = vunpack.c.h.bf16 %v2712
        %v2724 = vunpack.c.l.bf16 %v2713
        %2726 = vset.pattern.permute.xlu0 0
        %2727 = vperm.xlu0 %2726, %v2715
        %v2728 = vpop.permute.xlu0 %2727
        %v2730 = vmul.f32 %v2728, %v2716
        %v2731 = vmul.f32 %v2728, %v2717
        %v2732 = vmul.f32 %v2728, %v2718
        %v2733 = vmul.f32 %v2728, %v2719
        %v2734 = vmul.f32 %v2728, %v2720
        %v2735 = vmul.f32 %v2728, %v2721
        %v2736 = vmul.f32 %v2728, %v2722
        %v2737 = vmul.f32 %v2728, %v2723
        %v2738 = vmul.f32 %v2728, %v2724
        %v2739 = vadd.f32 %v2691, %v2730
        %v2740 = vadd.f32 %v2692, %v2731
        %v2741 = vadd.f32 %v2693, %v2732
        %v2742 = vadd.f32 %v2694, %v2733
        %v2743 = vadd.f32 %v2695, %v2734
        %v2744 = vadd.f32 %v2696, %v2735
        %v2745 = vadd.f32 %v2697, %v2736
        %v2746 = vadd.f32 %v2698, %v2737
        %v2747 = vadd.f32 %v2699, %v2738
        %s2748 = scalar_lea.vmem %s4, 28
        %v2749 = vld [vmem:[%s2748] sm:$0xf]
        %2751 = vset.pattern.permute.xlu0 0
        %2752 = vperm.xlu0 %2751, %v2749
        %v2753 = vpop.permute.xlu0 %2752
        %v2755 = vmul.f32 %v2753, %v2565
        %v2756 = vmul.f32 %v2753, %v2566
        %v2757 = vmul.f32 %v2753, %v2567
        %v2758 = vmul.f32 %v2753, %v2568
        %v2759 = vmul.f32 %v2753, %v2569
        %v2760 = vmul.f32 %v2753, %v2570
        %v2761 = vmul.f32 %v2753, %v2571
        %v2762 = vmul.f32 %v2753, %v2572
        %v2763 = vmul.f32 %v2753, %v2573
        %2773 = vrot.lane.b32.xlu0 %v2755, 126
        %v2774 = vpop.permute.xlu0 %2773
        %2775 = vrot.lane.b32.xlu0 %v2756, 126
        %v2776 = vpop.permute.xlu0 %2775
        %2777 = vrot.lane.b32.xlu0 %v2757, 126
        %v2778 = vpop.permute.xlu0 %2777
        %2779 = vrot.lane.b32.xlu0 %v2758, 126
        %v2780 = vpop.permute.xlu0 %2779
        %2781 = vrot.lane.b32.xlu0 %v2759, 126
        %v2782 = vpop.permute.xlu0 %2781
        %2783 = vrot.lane.b32.xlu0 %v2760, 126
        %v2784 = vpop.permute.xlu0 %2783
        %2785 = vrot.lane.b32.xlu0 %v2761, 126
        %v2786 = vpop.permute.xlu0 %2785
        %2787 = vrot.lane.b32.xlu0 %v2762, 126
        %v2788 = vpop.permute.xlu0 %2787
        %2789 = vrot.lane.b32.xlu0 %v2763, 126
        %v2790 = vpop.permute.xlu0 %2789
        %v2791 = vsel %vm2134, %v2774, %v2776
        %v2792 = vsel %vm2134, %v2776, %v2778
        %v2793 = vsel %vm2134, %v2778, %v2780
        %v2794 = vsel %vm2134, %v2780, %v2782
        %v2795 = vsel %vm2134, %v2782, %v2784
        %v2796 = vsel %vm2134, %v2784, %v2786
        %v2797 = vsel %vm2134, %v2786, %v2788
        %v2798 = vsel %vm2134, %v2788, %v2790
        %v2808 = vadd.f32 %v2739, %v2791
        %v2809 = vadd.f32 %v2740, %v2792
        %v2810 = vadd.f32 %v2741, %v2793
        %v2811 = vadd.f32 %v2742, %v2794
        %v2812 = vadd.f32 %v2743, %v2795
        %v2813 = vadd.f32 %v2744, %v2796
        %v2814 = vadd.f32 %v2745, %v2797
        %v2815 = vadd.f32 %v2746, %v2798
        %v2816 = vadd.f32 %v2747, %v2790
        %v2817 = vmul.f32 %v2565, %v2234
        %v2818 = vmul.f32 %v2566, %v2250
        %v2819 = vmul.f32 %v2567, %v2251
        %v2820 = vmul.f32 %v2568, %v2252
        %v2821 = vmul.f32 %v2569, %v2253
        %v2822 = vmul.f32 %v2570, %v2254
        %v2823 = vmul.f32 %v2571, %v2255
        %v2824 = vmul.f32 %v2572, %v2256
        %v2825 = vmul.f32 %v2573, %v2248
        %v2826 = vpack.c.bf16 %v2818, %v2817
        %v2827 = vpack.c.bf16 %v2820, %v2819
        %v2828 = vpack.c.bf16 %v2822, %v2821
        %v2829 = vpack.c.bf16 %v2824, %v2823
        %v2830 = vpack.c.bf16 %v2825, %v2825
        %s2831 = scalar_lea.vmem %s4, 32
        %v2832 = vld [vmem:[%s2831] sm:$0xf]
        %v2833 = vunpack.c.l.bf16 %v2826
        %v2834 = vunpack.c.h.bf16 %v2826
        %v2835 = vunpack.c.l.bf16 %v2827
        %v2836 = vunpack.c.h.bf16 %v2827
        %v2837 = vunpack.c.l.bf16 %v2828
        %v2838 = vunpack.c.h.bf16 %v2828
        %v2839 = vunpack.c.l.bf16 %v2829
        %v2840 = vunpack.c.h.bf16 %v2829
        %v2841 = vunpack.c.l.bf16 %v2830
        %2843 = vset.pattern.permute.xlu0 0
        %2844 = vperm.xlu0 %2843, %v2832
        %v2845 = vpop.permute.xlu0 %2844
        %v2847 = vmul.f32 %v2845, %v2833
        %v2848 = vmul.f32 %v2845, %v2834
        %v2849 = vmul.f32 %v2845, %v2835
        %v2850 = vmul.f32 %v2845, %v2836
        %v2851 = vmul.f32 %v2845, %v2837
        %v2852 = vmul.f32 %v2845, %v2838
        %v2853 = vmul.f32 %v2845, %v2839
        %v2854 = vmul.f32 %v2845, %v2840
        %v2855 = vmul.f32 %v2845, %v2841
        %2865 = vrot.lane.b32.xlu0 %v2847, 124
        %v2866 = vpop.permute.xlu0 %2865
        %2867 = vrot.lane.b32.xlu0 %v2848, 124
        %v2868 = vpop.permute.xlu0 %2867
        %2869 = vrot.lane.b32.xlu0 %v2849, 124
        %v2870 = vpop.permute.xlu0 %2869
        %2871 = vrot.lane.b32.xlu0 %v2850, 124
        %v2872 = vpop.permute.xlu0 %2871
        %2873 = vrot.lane.b32.xlu0 %v2851, 124
        %v2874 = vpop.permute.xlu0 %2873
        %2875 = vrot.lane.b32.xlu0 %v2852, 124
        %v2876 = vpop.permute.xlu0 %2875
        %2877 = vrot.lane.b32.xlu0 %v2853, 124
        %v2878 = vpop.permute.xlu0 %2877
        %2879 = vrot.lane.b32.xlu0 %v2854, 124
        %v2880 = vpop.permute.xlu0 %2879
        %2881 = vrot.lane.b32.xlu0 %v2855, 124
        %v2882 = vpop.permute.xlu0 %2881
        %v2883 = vsel %vm2332, %v2866, %v2868
        %v2884 = vsel %vm2332, %v2868, %v2870
        %v2885 = vsel %vm2332, %v2870, %v2872
        %v2886 = vsel %vm2332, %v2872, %v2874
        %v2887 = vsel %vm2332, %v2874, %v2876
        %v2888 = vsel %vm2332, %v2876, %v2878
        %v2889 = vsel %vm2332, %v2878, %v2880
        %v2890 = vsel %vm2332, %v2880, %v2882
        %v2900 = vadd.f32 %v2808, %v2883
        %v2901 = vadd.f32 %v2809, %v2884
        %v2902 = vadd.f32 %v2810, %v2885
        %v2903 = vadd.f32 %v2811, %v2886
        %v2904 = vadd.f32 %v2812, %v2887
        %v2905 = vadd.f32 %v2813, %v2888
        %v2906 = vadd.f32 %v2814, %v2889
        %v2907 = vadd.f32 %v2815, %v2890
        %v2908 = vadd.f32 %v2816, %v2882
        %vm2909 = vcmask 1043952
        %v2910 = vsel %vm2909, %v2900, 0.0
        %v2911 = vrot.slane %v2910, 4
        %v2912 = vadd.f32 %v2910, %v2911
        %v2913 = vrot.slane %v2912, 2
        %v2914 = vadd.f32 %v2912, %v2913
        %v2915 = vrot.slane %v2914, 1
        %v2916 = vadd.f32 %v2914, %v2915
        %vm2917 = vcmask 1043456
        %v2918 = vsel %vm2917, %v2901, 0.0
        %v2919 = vrot.slane %v2918, 4
        %v2920 = vadd.f32 %v2918, %v2919
        %v2921 = vrot.slane %v2920, 2
        %v2922 = vadd.f32 %v2920, %v2921
        %v2923 = vrot.slane %v2922, 1
        %v2924 = vadd.f32 %v2922, %v2923
        %v2925 = vsel %vm2917, %v2902, 0.0
        %v2926 = vrot.slane %v2925, 4
        %v2927 = vadd.f32 %v2925, %v2926
        %v2928 = vrot.slane %v2927, 2
        %v2929 = vadd.f32 %v2927, %v2928
        %v2930 = vrot.slane %v2929, 1
        %v2931 = vadd.f32 %v2929, %v2930
        %v2932 = vsel %vm2917, %v2903, 0.0
        %v2933 = vrot.slane %v2932, 4
        %v2934 = vadd.f32 %v2932, %v2933
        %v2935 = vrot.slane %v2934, 2
        %v2936 = vadd.f32 %v2934, %v2935
        %v2937 = vrot.slane %v2936, 1
        %v2938 = vadd.f32 %v2936, %v2937
        %v2939 = vsel %vm2917, %v2904, 0.0
        %v2940 = vrot.slane %v2939, 4
        %v2941 = vadd.f32 %v2939, %v2940
        %v2942 = vrot.slane %v2941, 2
        %v2943 = vadd.f32 %v2941, %v2942
        %v2944 = vrot.slane %v2943, 1
        %v2945 = vadd.f32 %v2943, %v2944
        %v2946 = vsel %vm2917, %v2905, 0.0
        %v2947 = vrot.slane %v2946, 4
        %v2948 = vadd.f32 %v2946, %v2947
        %v2949 = vrot.slane %v2948, 2
        %v2950 = vadd.f32 %v2948, %v2949
        %v2951 = vrot.slane %v2950, 1
        %v2952 = vadd.f32 %v2950, %v2951
        %v2953 = vsel %vm2917, %v2906, 0.0
        %v2954 = vrot.slane %v2953, 4
        %v2955 = vadd.f32 %v2953, %v2954
        %v2956 = vrot.slane %v2955, 2
        %v2957 = vadd.f32 %v2955, %v2956
        %v2958 = vrot.slane %v2957, 1
        %v2959 = vadd.f32 %v2957, %v2958
        %v2960 = vsel %vm2917, %v2907, 0.0
        %v2961 = vrot.slane %v2960, 4
        %v2962 = vadd.f32 %v2960, %v2961
        %v2963 = vrot.slane %v2962, 2
        %v2964 = vadd.f32 %v2962, %v2963
        %v2965 = vrot.slane %v2964, 1
        %v2966 = vadd.f32 %v2964, %v2965
        %vm2967 = vcmask 502784
        %v2968 = vsel %vm2967, %v2908, 0.0
        %v2969 = vrot.slane %v2968, 4
        %v2970 = vadd.f32 %v2968, %v2969
        %v2971 = vrot.slane %v2970, 2
        %v2972 = vadd.f32 %v2970, %v2971
        %v2973 = vrot.slane %v2972, 1
        %v2974 = vadd.f32 %v2972, %v2973
        %v2975 = vld [vmem:[#allocation4] sm:$0x1]
        %2977 = vset.pattern.permute.xlu0 0
        %2978 = vperm.xlu0 %2977, %v2975
        %v2979 = vpop.permute.xlu0 %2978
        %v2981 = vperm.slane %v2979, 0
        %v2982 = vadd.f32 %v2916, %v2981
        %v2983 = vadd.f32 %v2924, %v2981
        %v2984 = vadd.f32 %v2931, %v2981
        %v2985 = vadd.f32 %v2938, %v2981
        %v2986 = vadd.f32 %v2945, %v2981
        %v2987 = vadd.f32 %v2952, %v2981
        %v2988 = vadd.f32 %v2959, %v2981
        %v2989 = vadd.f32 %v2966, %v2981
        %v2990 = vadd.f32 %v2974, %v2981
        %v2991 = vsub.f32 0.0, %v2982
        %v2992 = vsub.f32 0.0, %v2983
        %v2993 = vsub.f32 0.0, %v2984
        %v2994 = vsub.f32 0.0, %v2985
        %v2995 = vsub.f32 0.0, %v2986
        %v2996 = vsub.f32 0.0, %v2987
        %v2997 = vsub.f32 0.0, %v2988
        %v2998 = vsub.f32 0.0, %v2989
        %v2999 = vsub.f32 0.0, %v2990
        %v3000 = vmul.f32 %v2991, 1.442695
        %v3001 = vpow.pop %v3000
        %v3002 = vmul.f32 %v2992, 1.442695
        %v3003 = vpow.pop %v3002
        %v3004 = vmul.f32 %v2993, 1.442695
        %v3005 = vpow.pop %v3004
        %v3006 = vmul.f32 %v2994, 1.442695
        %v3007 = vpow.pop %v3006
        %v3008 = vmul.f32 %v2995, 1.442695
        %v3009 = vpow.pop %v3008
        %v3010 = vmul.f32 %v2996, 1.442695
        %v3011 = vpow.pop %v3010
        %v3012 = vmul.f32 %v2997, 1.442695
        %v3013 = vpow.pop %v3012
        %v3014 = vmul.f32 %v2998, 1.442695
        %v3015 = vpow.pop %v3014
        %v3016 = vmul.f32 %v2999, 1.442695
        %v3017 = vpow.pop %v3016
        %v3018 = vadd.f32 %v3001, 1.0
        %v3019 = vadd.f32 %v3003, 1.0
        %v3020 = vadd.f32 %v3005, 1.0
        %v3021 = vadd.f32 %v3007, 1.0
        %v3022 = vadd.f32 %v3009, 1.0
        %v3023 = vadd.f32 %v3011, 1.0
        %v3024 = vadd.f32 %v3013, 1.0
        %v3025 = vadd.f32 %v3015, 1.0
        %v3026 = vadd.f32 %v3017, 1.0
        %v3027 = vrcp.pop %v3018
        %v3028 = vrcp.pop %v3019
        %v3029 = vrcp.pop %v3020
        %v3030 = vrcp.pop %v3021
        %v3031 = vrcp.pop %v3022
        %v3032 = vrcp.pop %v3023
        %v3033 = vrcp.pop %v3024
        %v3034 = vrcp.pop %v3025
        %v3035 = vrcp.pop %v3026
        %v3036 = vld [vmem:[%s379] sm:$0xff]
        %v3037 = vld [vmem:[%s379 + $0x8] sm:$0xff]
        %v3038 = vunpack.c.l.bf16 %v3036
        %v3039 = vunpack.c.h.bf16 %v3036
        %v3040 = vunpack.c.l.bf16 %v3037
        %v3041 = vunpack.c.h.bf16 %v3037
        %v3051 = vrot.slane %v3028, 4
        %v3052 = vrot.slane %v3030, 4
        %v3053 = vrot.slane %v3032, 4
        %v3054 = vrot.slane %v3034, 4
        %v3055 = vsel %vm2917, %v3027, %v3051
        %v3056 = vsel %vm2917, %v3029, %v3052
        %v3057 = vsel %vm2917, %v3031, %v3053
        %v3058 = vsel %vm2917, %v3033, %v3054
        %3059 = vrot.lane.b32.xlu0 %v3055, 66
        %v3060 = vpop.permute.xlu0 %3059
        %3061 = vrot.lane.b32.xlu0 %v3056, 66
        %v3062 = vpop.permute.xlu0 %3061
        %3063 = vrot.lane.b32.xlu0 %v3057, 66
        %v3064 = vpop.permute.xlu0 %3063
        %3065 = vrot.lane.b32.xlu0 %v3058, 66
        %v3066 = vpop.permute.xlu0 %3065
        %3067 = vrot.lane.b32.xlu0 %v3035, 66
        %v3068 = vpop.permute.xlu0 %3067
        %v3069 = vrot.slane %v3060, 4
        %v3070 = vrot.slane %v3062, 4
        %v3071 = vrot.slane %v3064, 4
        %v3072 = vrot.slane %v3066, 4
        %v3073 = vrot.slane %v3068, 4
        %v3074 = vsel %vm2917, %v3069, %v3070
        %v3075 = vsel %vm2249, %v3060, %v3074
        %v3076 = vsel %vm2917, %v3070, %v3071
        %v3077 = vsel %vm2249, %v3062, %v3076
        %v3078 = vsel %vm2917, %v3071, %v3072
        %v3079 = vsel %vm2249, %v3064, %v3078
        %v3080 = vsel %vm2917, %v3072, %v3073
        %v3081 = vsel %vm2249, %v3066, %v3080
        %v3086 = vmul.f32 %v3038, %v3075
        %v3087 = vmul.f32 %v3039, %v3077
        %v3088 = vmul.f32 %v3040, %v3079
        %v3089 = vmul.f32 %v3041, %v3081
        %3094 = vst [vmem:[#allocation1] ss:$2 sm:$0xff] %v3086
        %s3095 = scalar_lea.vmem [#allocation1], 16
        %3096 = vst [vmem:[%s3095] ss:$2 sm:$0xff] %v3087
        %s3097 = scalar_lea.vmem [#allocation1], 32
        %3098 = vst [vmem:[%s3097] ss:$2 sm:$0xff] %v3088
        %s3099 = scalar_lea.vmem [#allocation1], 48
        %3100 = vst [vmem:[%s3099] ss:$2 sm:$0xff] %v3089
        %v3101 = vld.sshfl [vmem:[#allocation1] sm:$0xff pattern:$0x75316420]
        %v3102 = vld.sshfl [vmem:[#allocation1 + $0x8] sm:$0xff pattern:$0x75316420]
        %v3103 = vld.sshfl [vmem:[#allocation1 + $0x10] sm:$0xff pattern:$0x75316420]
        %v3104 = vld.sshfl [vmem:[#allocation1 + $0x18] sm:$0xff pattern:$0x75316420]
        %v3105 = vld.sshfl [vmem:[#allocation1 + $0x20] sm:$0xff pattern:$0x75316420]
        %v3106 = vld.sshfl [vmem:[#allocation1 + $0x28] sm:$0xff pattern:$0x75316420]
        %v3107 = vld.sshfl [vmem:[#allocation1 + $0x30] sm:$0xff pattern:$0x75316420]
        %v3108 = vld.sshfl [vmem:[#allocation1 + $0x38] sm:$0xff pattern:$0x75316420]
        %v3117 = vpack.c.bf16 %v3102, %v3101
        %v3118 = vpack.c.bf16 %v3104, %v3103
        %v3119 = vpack.c.bf16 %v3106, %v3105
        %v3120 = vpack.c.bf16 %v3108, %v3107
        %v3125 = vrot.slane %v3117, 6
        %v3126 = vrot.slane %v3118, 6
        %v3127 = vrot.slane %v3119, 6
        %v3128 = vrot.slane %v3120, 6
        %3133 = vst [vmem:[#allocation2 + $0x4] sm:$0xcc] %v3125
        %3134 = vst [vmem:[#allocation2 + $0xc] sm:$0xcc] %v3126
        %3135 = vst [vmem:[#allocation2 + $0x14] sm:$0xcc] %v3127
        %3136 = vst [vmem:[#allocation2 + $0x1c] sm:$0xcc] %v3128
        %v3137 = vld [vmem:[%s6] sm:$0xf]
        %v3138 = vld [vmem:[#allocation2] sm:$0xff]
        %v3139 = vld [vmem:[#allocation2 + $0x8] sm:$0xff]
        %v3140 = vld [vmem:[#allocation2 + $0x10] sm:$0xff]
        %v3141 = vld [vmem:[#allocation2 + $0x18] sm:$0xff]
        %v3142 = vld [vmem:[#allocation2 + $0x20] sm:$0xf]
        %v3143 = vld [vmem:[%s3] sm:$0x11]
        %v3144 = vld [vmem:[%s3 + $0x8] sm:$0x11]
        %v3145 = vld [vmem:[%s3 + $0x10] sm:$0x11]
        %v3146 = vld [vmem:[%s3 + $0x18] sm:$0x11]
        %v3151 = vunpack.c.l.b16 %v3143
        %v3152 = vunpack.c.h.b16 %v3143
        %v3153 = vunpack.c.l.b16 %v3144
        %v3154 = vunpack.c.h.b16 %v3144
        %v3155 = vunpack.c.l.b16 %v3145
        %v3156 = vunpack.c.h.b16 %v3145
        %v3157 = vunpack.c.l.b16 %v3146
        %v3158 = vunpack.c.h.b16 %v3146
        %v3159 = vpack.c.b16 %v3151, %v3151
        %v3160 = vpack.c.b16 %v3152, %v3152
        %v3161 = vpack.c.b16 %v3153, %v3153
        %v3162 = vpack.c.b16 %v3154, %v3154
        %v3163 = vpack.c.b16 %v3155, %v3155
        %v3164 = vpack.c.b16 %v3156, %v3156
        %v3165 = vpack.c.b16 %v3157, %v3157
        %v3166 = vpack.c.b16 %v3158, %v3158
        %v3168 = vshrl.u32 %v3159, 16
        %v3169 = vpack.i.b16 %v3168, %v3168
        %v3171 = vperm.slane %v3169, 0
        %v3173 = vshrl.u32 %v3160, 16
        %v3174 = vpack.i.b16 %v3173, %v3173
        %v3176 = vperm.slane %v3174, 0
        %v3178 = vshrl.u32 %v3161, 16
        %v3179 = vpack.i.b16 %v3178, %v3178
        %v3181 = vperm.slane %v3179, 0
        %v3183 = vshrl.u32 %v3162, 16
        %v3184 = vpack.i.b16 %v3183, %v3183
        %v3186 = vperm.slane %v3184, 0
        %v3188 = vshrl.u32 %v3163, 16
        %v3189 = vpack.i.b16 %v3188, %v3188
        %v3191 = vperm.slane %v3189, 0
        %v3193 = vshrl.u32 %v3164, 16
        %v3194 = vpack.i.b16 %v3193, %v3193
        %v3196 = vperm.slane %v3194, 0
        %v3198 = vshrl.u32 %v3165, 16
        %v3199 = vpack.i.b16 %v3198, %v3198
        %v3201 = vperm.slane %v3199, 0
        %v3203 = vshrl.u32 %v3166, 16
        %v3204 = vpack.i.b16 %v3203, %v3203
        %v3206 = vperm.slane %v3204, 0
        %v3207 = vunpack.c.l.bf16 %v3138
        %v3208 = vunpack.c.h.bf16 %v3138
        %v3209 = vunpack.c.l.bf16 %v3139
        %v3210 = vunpack.c.h.bf16 %v3139
        %v3211 = vunpack.c.l.bf16 %v3140
        %v3212 = vunpack.c.h.bf16 %v3140
        %v3213 = vunpack.c.l.bf16 %v3141
        %v3214 = vunpack.c.h.bf16 %v3141
        %v3215 = vunpack.c.l.bf16 %v3142
        %v3216 = vunpack.c.l.bf16 %v3171
        %v3217 = vunpack.c.l.bf16 %v3176
        %v3218 = vunpack.c.l.bf16 %v3181
        %v3219 = vunpack.c.l.bf16 %v3186
        %v3220 = vunpack.c.l.bf16 %v3191
        %v3221 = vunpack.c.l.bf16 %v3196
        %v3222 = vunpack.c.l.bf16 %v3201
        %v3223 = vunpack.c.l.bf16 %v3206
        %3232 = vrot.lane.b32.xlu0 %v3216, 95
        %v3233 = vpop.permute.xlu0 %3232
        %3234 = vrot.lane.b32.xlu0 %v3217, 95
        %v3235 = vpop.permute.xlu0 %3234
        %3236 = vrot.lane.b32.xlu0 %v3218, 95
        %v3237 = vpop.permute.xlu0 %3236
        %3238 = vrot.lane.b32.xlu0 %v3219, 95
        %v3239 = vpop.permute.xlu0 %3238
        %3240 = vrot.lane.b32.xlu0 %v3220, 95
        %v3241 = vpop.permute.xlu0 %3240
        %3242 = vrot.lane.b32.xlu0 %v3221, 95
        %v3243 = vpop.permute.xlu0 %3242
        %3244 = vrot.lane.b32.xlu0 %v3222, 95
        %v3245 = vpop.permute.xlu0 %3244
        %3246 = vrot.lane.b32.xlu0 %v3223, 95
        %v3247 = vpop.permute.xlu0 %3246
        %vm3248 = vcmask 777216
        %v3249 = vsel %vm3248, %v3233, %v3235
        %v3250 = vsel %vm3248, %v3235, %v3237
        %v3251 = vsel %vm3248, %v3237, %v3239
        %v3252 = vsel %vm3248, %v3239, %v3241
        %v3253 = vsel %vm3248, %v3241, %v3243
        %v3254 = vsel %vm3248, %v3243, %v3245
        %v3255 = vsel %vm3248, %v3245, %v3247
        %v3265 = vmul.f32 %v3207, %v3233
        %v3266 = vmul.f32 %v3208, %v3249
        %v3267 = vmul.f32 %v3209, %v3250
        %v3268 = vmul.f32 %v3210, %v3251
        %v3269 = vmul.f32 %v3211, %v3252
        %v3270 = vmul.f32 %v3212, %v3253
        %v3271 = vmul.f32 %v3213, %v3254
        %v3272 = vmul.f32 %v3214, %v3255
        %v3273 = vmul.f32 %v3215, %v3247
        %v3274 = vpack.c.bf16 %v3265, %v3265
        %v3275 = vpack.c.bf16 %v3266, %v3266
        %v3276 = vpack.c.bf16 %v3267, %v3267
        %v3277 = vpack.c.bf16 %v3268, %v3268
        %v3278 = vpack.c.bf16 %v3269, %v3269
        %v3279 = vpack.c.bf16 %v3270, %v3270
        %v3280 = vpack.c.bf16 %v3271, %v3271
        %v3281 = vpack.c.bf16 %v3272, %v3272
        %v3282 = vpack.c.bf16 %v3273, %v3273
        %s3283 = scalar_lea.vmem %s6, 4
        %v3284 = vld [vmem:[%s3283] sm:$0xf]
        %v3290 = vunpack.c.l.b16 %v3138
        %v3291 = vunpack.c.h.b16 %v3138
        %v3292 = vunpack.c.l.b16 %v3139
        %v3293 = vunpack.c.h.b16 %v3139
        %v3294 = vunpack.c.l.b16 %v3140
        %v3295 = vunpack.c.h.b16 %v3140
        %v3296 = vunpack.c.l.b16 %v3141
        %v3297 = vunpack.c.h.b16 %v3141
        %v3298 = vunpack.c.l.b16 %v3142
        %v3299 = vpack.c.b16 %v3290, %v3290
        %v3300 = vpack.c.b16 %v3291, %v3291
        %v3301 = vpack.c.b16 %v3292, %v3292
        %v3302 = vpack.c.b16 %v3293, %v3293
        %v3303 = vpack.c.b16 %v3294, %v3294
        %v3304 = vpack.c.b16 %v3295, %v3295
        %v3305 = vpack.c.b16 %v3296, %v3296
        %v3306 = vpack.c.b16 %v3297, %v3297
        %v3307 = vpack.c.b16 %v3298, %v3298
        %3308 = vrot.lane.b32.xlu0 %v3299, 32
        %v3309 = vpop.permute.xlu0 %3308
        %3310 = vrot.lane.b32.xlu0 %v3300, 32
        %v3311 = vpop.permute.xlu0 %3310
        %3312 = vrot.lane.b32.xlu0 %v3301, 32
        %v3313 = vpop.permute.xlu0 %3312
        %3314 = vrot.lane.b32.xlu0 %v3302, 32
        %v3315 = vpop.permute.xlu0 %3314
        %3316 = vrot.lane.b32.xlu0 %v3303, 32
        %v3317 = vpop.permute.xlu0 %3316
        %3318 = vrot.lane.b32.xlu0 %v3304, 32
        %v3319 = vpop.permute.xlu0 %3318
        %3320 = vrot.lane.b32.xlu0 %v3305, 32
        %v3321 = vpop.permute.xlu0 %3320
        %3322 = vrot.lane.b32.xlu0 %v3306, 32
        %v3323 = vpop.permute.xlu0 %3322
        %3324 = vrot.lane.b32.xlu0 %v3307, 32
        %v3325 = vpop.permute.xlu0 %3324
        %vm3326 = vcmask 261120
        %v3327 = vsel %vm3326, %v3309, %v3311
        %v3328 = vsel %vm3326, %v3311, %v3313
        %v3329 = vsel %vm3326, %v3313, %v3315
        %v3330 = vsel %vm3326, %v3315, %v3317
        %v3331 = vsel %vm3326, %v3317, %v3319
        %v3332 = vsel %vm3326, %v3319, %v3321
        %v3333 = vsel %vm3326, %v3321, %v3323
        %v3334 = vsel %vm3326, %v3323, %v3325
        %vm3335 = vcmask 64512
        %v3337 = vsel %vm3335, %v3284, 0
        %v3340 = vsel %vm2917, %v3327, 0
        %v3343 = vsel %vm2917, %v3328, 0
        %v3346 = vsel %vm2917, %v3329, 0
        %v3349 = vsel %vm2917, %v3330, 0
        %v3352 = vsel %vm2917, %v3331, 0
        %v3355 = vsel %vm2917, %v3332, 0
        %v3358 = vsel %vm2917, %v3333, 0
        %v3361 = vsel %vm2917, %v3334, 0
        %3363 = vmatpush.bf16.msra.mxu0 0
        %3364 = vmatpush.bf16.msra.mxu0 0
        %3365 = vmatpush.bf16.msra.mxu0 0
        %3366 = vmatpush.bf16.msra.mxu0 0
        %3367 = vmatpush.bf16.msra.mxu0 0
        %3368 = vmatpush.bf16.msra.mxu0 0
        %3369 = vmatpush.bf16.msra.mxu0 0
        %3370 = vmatpush.bf16.msra.mxu0 %v3340
        %3371 = vmatmul.bf16.gmra.mxu0 %v3337
        %v3372 = vpop.f32.mrf.mxu0
        %v3373 = vadd.f32 0.0, %v3372
        %v3374 = vpop.f32.mrf.mxu0
        %3375 = vdwg.mxu0
        %3376 = vmatpush.bf16.msra.mxu0 0
        %3377 = vmatpush.bf16.msra.mxu0 0
        %3378 = vmatpush.bf16.msra.mxu0 0
        %3379 = vmatpush.bf16.msra.mxu0 0
        %3380 = vmatpush.bf16.msra.mxu0 0
        %3381 = vmatpush.bf16.msra.mxu0 0
        %3382 = vmatpush.bf16.msra.mxu0 0
        %3383 = vmatpush.bf16.msra.mxu0 %v3343
        %3384 = vmatmul.bf16.gmra.mxu0 %v3337
        %v3385 = vpop.f32.mrf.mxu0
        %v3386 = vadd.f32 0.0, %v3385
        %v3387 = vpop.f32.mrf.mxu0
        %3388 = vdwg.mxu0
        %3389 = vmatpush.bf16.msra.mxu0 0
        %3390 = vmatpush.bf16.msra.mxu0 0
        %3391 = vmatpush.bf16.msra.mxu0 0
        %3392 = vmatpush.bf16.msra.mxu0 0
        %3393 = vmatpush.bf16.msra.mxu0 0
        %3394 = vmatpush.bf16.msra.mxu0 0
        %3395 = vmatpush.bf16.msra.mxu0 0
        %3396 = vmatpush.bf16.msra.mxu0 %v3346
        %3397 = vmatmul.bf16.gmra.mxu0 %v3337
        %v3398 = vpop.f32.mrf.mxu0
        %v3399 = vadd.f32 0.0, %v3398
        %v3400 = vpop.f32.mrf.mxu0
        %3401 = vdwg.mxu0
        %3402 = vmatpush.bf16.msra.mxu0 0
        %3403 = vmatpush.bf16.msra.mxu0 0
        %3404 = vmatpush.bf16.msra.mxu0 0
        %3405 = vmatpush.bf16.msra.mxu0 0
        %3406 = vmatpush.bf16.msra.mxu0 0
        %3407 = vmatpush.bf16.msra.mxu0 0
        %3408 = vmatpush.bf16.msra.mxu0 0
        %3409 = vmatpush.bf16.msra.mxu0 %v3349
        %3410 = vmatmul.bf16.gmra.mxu0 %v3337
        %v3411 = vpop.f32.mrf.mxu0
        %v3412 = vadd.f32 0.0, %v3411
        %v3413 = vpop.f32.mrf.mxu0
        %3414 = vdwg.mxu0
        %3415 = vmatpush.bf16.msra.mxu0 0
        %3416 = vmatpush.bf16.msra.mxu0 0
        %3417 = vmatpush.bf16.msra.mxu0 0
        %3418 = vmatpush.bf16.msra.mxu0 0
        %3419 = vmatpush.bf16.msra.mxu0 0
        %3420 = vmatpush.bf16.msra.mxu0 0
        %3421 = vmatpush.bf16.msra.mxu0 0
        %3422 = vmatpush.bf16.msra.mxu0 %v3352
        %3423 = vmatmul.bf16.gmra.mxu0 %v3337
        %v3424 = vpop.f32.mrf.mxu0
        %v3425 = vadd.f32 0.0, %v3424
        %v3426 = vpop.f32.mrf.mxu0
        %3427 = vdwg.mxu0
        %3428 = vmatpush.bf16.msra.mxu0 0
        %3429 = vmatpush.bf16.msra.mxu0 0
        %3430 = vmatpush.bf16.msra.mxu0 0
        %3431 = vmatpush.bf16.msra.mxu0 0
        %3432 = vmatpush.bf16.msra.mxu0 0
        %3433 = vmatpush.bf16.msra.mxu0 0
        %3434 = vmatpush.bf16.msra.mxu0 0
        %3435 = vmatpush.bf16.msra.mxu0 %v3355
        %3436 = vmatmul.bf16.gmra.mxu0 %v3337
        %v3437 = vpop.f32.mrf.mxu0
        %v3438 = vadd.f32 0.0, %v3437
        %v3439 = vpop.f32.mrf.mxu0
        %3440 = vdwg.mxu0
        %3441 = vmatpush.bf16.msra.mxu0 0
        %3442 = vmatpush.bf16.msra.mxu0 0
        %3443 = vmatpush.bf16.msra.mxu0 0
        %3444 = vmatpush.bf16.msra.mxu0 0
        %3445 = vmatpush.bf16.msra.mxu0 0
        %3446 = vmatpush.bf16.msra.mxu0 0
        %3447 = vmatpush.bf16.msra.mxu0 0
        %3448 = vmatpush.bf16.msra.mxu0 %v3358
        %3449 = vmatmul.bf16.gmra.mxu0 %v3337
        %v3450 = vpop.f32.mrf.mxu0
        %v3451 = vadd.f32 0.0, %v3450
        %v3452 = vpop.f32.mrf.mxu0
        %3453 = vdwg.mxu0
        %3454 = vmatpush.bf16.msra.mxu0 0
        %3455 = vmatpush.bf16.msra.mxu0 0
        %3456 = vmatpush.bf16.msra.mxu0 0
        %3457 = vmatpush.bf16.msra.mxu0 0
        %3458 = vmatpush.bf16.msra.mxu0 0
        %3459 = vmatpush.bf16.msra.mxu0 0
        %3460 = vmatpush.bf16.msra.mxu0 0
        %3461 = vmatpush.bf16.msra.mxu0 %v3361
        %3462 = vmatmul.bf16.gmra.mxu0 %v3337
        %v3463 = vpop.f32.mrf.mxu0
        %v3464 = vadd.f32 0.0, %v3463
        %v3465 = vpop.f32.mrf.mxu0
        %3466 = vdwg.mxu0
        %3476 = vrot.lane.b32.xlu0 %v3274, 33
        %v3477 = vpop.permute.xlu0 %3476
        %3478 = vrot.lane.b32.xlu0 %v3275, 33
        %v3479 = vpop.permute.xlu0 %3478
        %3480 = vrot.lane.b32.xlu0 %v3276, 33
        %v3481 = vpop.permute.xlu0 %3480
        %3482 = vrot.lane.b32.xlu0 %v3277, 33
        %v3483 = vpop.permute.xlu0 %3482
        %3484 = vrot.lane.b32.xlu0 %v3278, 33
        %v3485 = vpop.permute.xlu0 %3484
        %3486 = vrot.lane.b32.xlu0 %v3279, 33
        %v3487 = vpop.permute.xlu0 %3486
        %3488 = vrot.lane.b32.xlu0 %v3280, 33
        %v3489 = vpop.permute.xlu0 %3488
        %3490 = vrot.lane.b32.xlu0 %v3281, 33
        %v3491 = vpop.permute.xlu0 %3490
        %3492 = vrot.lane.b32.xlu0 %v3282, 33
        %v3493 = vpop.permute.xlu0 %3492
        %vm3494 = vcmask 269312
        %v3495 = vsel %vm3494, %v3477, %v3479
        %v3496 = vsel %vm3494, %v3479, %v3481
        %v3497 = vsel %vm3494, %v3481, %v3483
        %v3498 = vsel %vm3494, %v3483, %v3485
        %v3499 = vsel %vm3494, %v3485, %v3487
        %v3500 = vsel %vm3494, %v3487, %v3489
        %v3501 = vsel %vm3494, %v3489, %v3491
        %v3502 = vsel %vm3494, %v3491, %v3493
        %v3504 = vsel %vm3335, %v3137, 0
        %v3507 = vsel %vm2917, %v3495, 0
        %v3510 = vsel %vm2917, %v3496, 0
        %v3513 = vsel %vm2917, %v3497, 0
        %v3516 = vsel %vm2917, %v3498, 0
        %v3519 = vsel %vm2917, %v3499, 0
        %v3522 = vsel %vm2917, %v3500, 0
        %v3525 = vsel %vm2917, %v3501, 0
        %v3528 = vsel %vm2917, %v3502, 0
        %3530 = vmatpush.bf16.msra.mxu0 0
        %3531 = vmatpush.bf16.msra.mxu0 0
        %3532 = vmatpush.bf16.msra.mxu0 0
        %3533 = vmatpush.bf16.msra.mxu0 0
        %3534 = vmatpush.bf16.msra.mxu0 0
        %3535 = vmatpush.bf16.msra.mxu0 0
        %3536 = vmatpush.bf16.msra.mxu0 0
        %3537 = vmatpush.bf16.msra.mxu0 %v3507
        %3538 = vmatmul.bf16.gmra.mxu0 %v3504
        %v3539 = vpop.f32.mrf.mxu0
        %v3540 = vadd.f32 %v3373, %v3539
        %v3541 = vpop.f32.mrf.mxu0
        %3542 = vdwg.mxu0
        %3543 = vmatpush.bf16.msra.mxu0 0
        %3544 = vmatpush.bf16.msra.mxu0 0
        %3545 = vmatpush.bf16.msra.mxu0 0
        %3546 = vmatpush.bf16.msra.mxu0 0
        %3547 = vmatpush.bf16.msra.mxu0 0
        %3548 = vmatpush.bf16.msra.mxu0 0
        %3549 = vmatpush.bf16.msra.mxu0 0
        %3550 = vmatpush.bf16.msra.mxu0 %v3510
        %3551 = vmatmul.bf16.gmra.mxu0 %v3504
        %v3552 = vpop.f32.mrf.mxu0
        %v3553 = vadd.f32 %v3386, %v3552
        %v3554 = vpop.f32.mrf.mxu0
        %3555 = vdwg.mxu0
        %3556 = vmatpush.bf16.msra.mxu0 0
        %3557 = vmatpush.bf16.msra.mxu0 0
        %3558 = vmatpush.bf16.msra.mxu0 0
        %3559 = vmatpush.bf16.msra.mxu0 0
        %3560 = vmatpush.bf16.msra.mxu0 0
        %3561 = vmatpush.bf16.msra.mxu0 0
        %3562 = vmatpush.bf16.msra.mxu0 0
        %3563 = vmatpush.bf16.msra.mxu0 %v3513
        %3564 = vmatmul.bf16.gmra.mxu0 %v3504
        %v3565 = vpop.f32.mrf.mxu0
        %v3566 = vadd.f32 %v3399, %v3565
        %v3567 = vpop.f32.mrf.mxu0
        %3568 = vdwg.mxu0
        %3569 = vmatpush.bf16.msra.mxu0 0
        %3570 = vmatpush.bf16.msra.mxu0 0
        %3571 = vmatpush.bf16.msra.mxu0 0
        %3572 = vmatpush.bf16.msra.mxu0 0
        %3573 = vmatpush.bf16.msra.mxu0 0
        %3574 = vmatpush.bf16.msra.mxu0 0
        %3575 = vmatpush.bf16.msra.mxu0 0
        %3576 = vmatpush.bf16.msra.mxu0 %v3516
        %3577 = vmatmul.bf16.gmra.mxu0 %v3504
        %v3578 = vpop.f32.mrf.mxu0
        %v3579 = vadd.f32 %v3412, %v3578
        %v3580 = vpop.f32.mrf.mxu0
        %3581 = vdwg.mxu0
        %3582 = vmatpush.bf16.msra.mxu0 0
        %3583 = vmatpush.bf16.msra.mxu0 0
        %3584 = vmatpush.bf16.msra.mxu0 0
        %3585 = vmatpush.bf16.msra.mxu0 0
        %3586 = vmatpush.bf16.msra.mxu0 0
        %3587 = vmatpush.bf16.msra.mxu0 0
        %3588 = vmatpush.bf16.msra.mxu0 0
        %3589 = vmatpush.bf16.msra.mxu0 %v3519
        %3590 = vmatmul.bf16.gmra.mxu0 %v3504
        %v3591 = vpop.f32.mrf.mxu0
        %v3592 = vadd.f32 %v3425, %v3591
        %v3593 = vpop.f32.mrf.mxu0
        %3594 = vdwg.mxu0
        %3595 = vmatpush.bf16.msra.mxu0 0
        %3596 = vmatpush.bf16.msra.mxu0 0
        %3597 = vmatpush.bf16.msra.mxu0 0
        %3598 = vmatpush.bf16.msra.mxu0 0
        %3599 = vmatpush.bf16.msra.mxu0 0
        %3600 = vmatpush.bf16.msra.mxu0 0
        %3601 = vmatpush.bf16.msra.mxu0 0
        %3602 = vmatpush.bf16.msra.mxu0 %v3522
        %3603 = vmatmul.bf16.gmra.mxu0 %v3504
        %v3604 = vpop.f32.mrf.mxu0
        %v3605 = vadd.f32 %v3438, %v3604
        %v3606 = vpop.f32.mrf.mxu0
        %3607 = vdwg.mxu0
        %3608 = vmatpush.bf16.msra.mxu0 0
        %3609 = vmatpush.bf16.msra.mxu0 0
        %3610 = vmatpush.bf16.msra.mxu0 0
        %3611 = vmatpush.bf16.msra.mxu0 0
        %3612 = vmatpush.bf16.msra.mxu0 0
        %3613 = vmatpush.bf16.msra.mxu0 0
        %3614 = vmatpush.bf16.msra.mxu0 0
        %3615 = vmatpush.bf16.msra.mxu0 %v3525
        %3616 = vmatmul.bf16.gmra.mxu0 %v3504
        %v3617 = vpop.f32.mrf.mxu0
        %v3618 = vadd.f32 %v3451, %v3617
        %v3619 = vpop.f32.mrf.mxu0
        %3620 = vdwg.mxu0
        %3621 = vmatpush.bf16.msra.mxu0 0
        %3622 = vmatpush.bf16.msra.mxu0 0
        %3623 = vmatpush.bf16.msra.mxu0 0
        %3624 = vmatpush.bf16.msra.mxu0 0
        %3625 = vmatpush.bf16.msra.mxu0 0
        %3626 = vmatpush.bf16.msra.mxu0 0
        %3627 = vmatpush.bf16.msra.mxu0 0
        %3628 = vmatpush.bf16.msra.mxu0 %v3528
        %3629 = vmatmul.bf16.gmra.mxu0 %v3504
        %v3630 = vpop.f32.mrf.mxu0
        %v3631 = vadd.f32 %v3464, %v3630
        %v3632 = vpop.f32.mrf.mxu0
        %3633 = vdwg.mxu0
        %s3634 = scalar_lea.vmem %s6, 8
        %v3635 = vld [vmem:[%s3634] sm:$0xf]
        %v3636 = vld [vmem:[%s3] sm:$0x22]
        %v3637 = vld [vmem:[%s3 + $0x8] sm:$0x22]
        %v3638 = vld [vmem:[%s3 + $0x10] sm:$0x22]
        %v3639 = vld [vmem:[%s3 + $0x18] sm:$0x22]
        %v3644 = vunpack.c.l.b16 %v3636
        %v3645 = vunpack.c.h.b16 %v3636
        %v3646 = vunpack.c.l.b16 %v3637
        %v3647 = vunpack.c.h.b16 %v3637
        %v3648 = vunpack.c.l.b16 %v3638
        %v3649 = vunpack.c.h.b16 %v3638
        %v3650 = vunpack.c.l.b16 %v3639
        %v3651 = vunpack.c.h.b16 %v3639
        %v3652 = vpack.c.b16 %v3644, %v3644
        %v3653 = vpack.c.b16 %v3645, %v3645
        %v3654 = vpack.c.b16 %v3646, %v3646
        %v3655 = vpack.c.b16 %v3647, %v3647
        %v3656 = vpack.c.b16 %v3648, %v3648
        %v3657 = vpack.c.b16 %v3649, %v3649
        %v3658 = vpack.c.b16 %v3650, %v3650
        %v3659 = vpack.c.b16 %v3651, %v3651
        %v3661 = vshrl.u32 %v3652, 16
        %v3662 = vpack.i.b16 %v3661, %v3661
        %v3664 = vperm.slane %v3662, 1
        %v3666 = vshrl.u32 %v3653, 16
        %v3667 = vpack.i.b16 %v3666, %v3666
        %v3669 = vperm.slane %v3667, 1
        %v3671 = vshrl.u32 %v3654, 16
        %v3672 = vpack.i.b16 %v3671, %v3671
        %v3674 = vperm.slane %v3672, 1
        %v3676 = vshrl.u32 %v3655, 16
        %v3677 = vpack.i.b16 %v3676, %v3676
        %v3679 = vperm.slane %v3677, 1
        %v3681 = vshrl.u32 %v3656, 16
        %v3682 = vpack.i.b16 %v3681, %v3681
        %v3684 = vperm.slane %v3682, 1
        %v3686 = vshrl.u32 %v3657, 16
        %v3687 = vpack.i.b16 %v3686, %v3686
        %v3689 = vperm.slane %v3687, 1
        %v3691 = vshrl.u32 %v3658, 16
        %v3692 = vpack.i.b16 %v3691, %v3691
        %v3694 = vperm.slane %v3692, 1
        %v3696 = vshrl.u32 %v3659, 16
        %v3697 = vpack.i.b16 %v3696, %v3696
        %v3699 = vperm.slane %v3697, 1
        %v3700 = vunpack.c.l.bf16 %v3664
        %v3701 = vunpack.c.l.bf16 %v3669
        %v3702 = vunpack.c.l.bf16 %v3674
        %v3703 = vunpack.c.l.bf16 %v3679
        %v3704 = vunpack.c.l.bf16 %v3684
        %v3705 = vunpack.c.l.bf16 %v3689
        %v3706 = vunpack.c.l.bf16 %v3694
        %v3707 = vunpack.c.l.bf16 %v3699
        %3716 = vrot.lane.b32.xlu0 %v3700, 97
        %v3717 = vpop.permute.xlu0 %3716
        %3718 = vrot.lane.b32.xlu0 %v3701, 97
        %v3719 = vpop.permute.xlu0 %3718
        %3720 = vrot.lane.b32.xlu0 %v3702, 97
        %v3721 = vpop.permute.xlu0 %3720
        %3722 = vrot.lane.b32.xlu0 %v3703, 97
        %v3723 = vpop.permute.xlu0 %3722
        %3724 = vrot.lane.b32.xlu0 %v3704, 97
        %v3725 = vpop.permute.xlu0 %3724
        %3726 = vrot.lane.b32.xlu0 %v3705, 97
        %v3727 = vpop.permute.xlu0 %3726
        %3728 = vrot.lane.b32.xlu0 %v3706, 97
        %v3729 = vpop.permute.xlu0 %3728
        %3730 = vrot.lane.b32.xlu0 %v3707, 97
        %v3731 = vpop.permute.xlu0 %3730
        %vm3732 = vcmask 793600
        %v3733 = vsel %vm3732, %v3717, %v3719
        %v3734 = vsel %vm3732, %v3719, %v3721
        %v3735 = vsel %vm3732, %v3721, %v3723
        %v3736 = vsel %vm3732, %v3723, %v3725
        %v3737 = vsel %vm3732, %v3725, %v3727
        %v3738 = vsel %vm3732, %v3727, %v3729
        %v3739 = vsel %vm3732, %v3729, %v3731
        %v3749 = vmul.f32 %v3207, %v3717
        %v3750 = vmul.f32 %v3208, %v3733
        %v3751 = vmul.f32 %v3209, %v3734
        %v3752 = vmul.f32 %v3210, %v3735
        %v3753 = vmul.f32 %v3211, %v3736
        %v3754 = vmul.f32 %v3212, %v3737
        %v3755 = vmul.f32 %v3213, %v3738
        %v3756 = vmul.f32 %v3214, %v3739
        %v3757 = vmul.f32 %v3215, %v3731
        %v3758 = vpack.c.bf16 %v3749, %v3749
        %v3759 = vpack.c.bf16 %v3750, %v3750
        %v3760 = vpack.c.bf16 %v3751, %v3751
        %v3761 = vpack.c.bf16 %v3752, %v3752
        %v3762 = vpack.c.bf16 %v3753, %v3753
        %v3763 = vpack.c.bf16 %v3754, %v3754
        %v3764 = vpack.c.bf16 %v3755, %v3755
        %v3765 = vpack.c.bf16 %v3756, %v3756
        %v3766 = vpack.c.bf16 %v3757, %v3757
        %3776 = vrot.lane.b32.xlu0 %v3758, 31
        %v3777 = vpop.permute.xlu0 %3776
        %3778 = vrot.lane.b32.xlu0 %v3759, 31
        %v3779 = vpop.permute.xlu0 %3778
        %3780 = vrot.lane.b32.xlu0 %v3760, 31
        %v3781 = vpop.permute.xlu0 %3780
        %3782 = vrot.lane.b32.xlu0 %v3761, 31
        %v3783 = vpop.permute.xlu0 %3782
        %3784 = vrot.lane.b32.xlu0 %v3762, 31
        %v3785 = vpop.permute.xlu0 %3784
        %3786 = vrot.lane.b32.xlu0 %v3763, 31
        %v3787 = vpop.permute.xlu0 %3786
        %3788 = vrot.lane.b32.xlu0 %v3764, 31
        %v3789 = vpop.permute.xlu0 %3788
        %3790 = vrot.lane.b32.xlu0 %v3765, 31
        %v3791 = vpop.permute.xlu0 %3790
        %3792 = vrot.lane.b32.xlu0 %v3766, 31
        %v3793 = vpop.permute.xlu0 %3792
        %vm3794 = vcmask 252928
        %v3795 = vsel %vm3794, %v3777, %v3779
        %v3796 = vsel %vm3794, %v3779, %v3781
        %v3797 = vsel %vm3794, %v3781, %v3783
        %v3798 = vsel %vm3794, %v3783, %v3785
        %v3799 = vsel %vm3794, %v3785, %v3787
        %v3800 = vsel %vm3794, %v3787, %v3789
        %v3801 = vsel %vm3794, %v3789, %v3791
        %v3802 = vsel %vm3794, %v3791, %v3793
        %v3804 = vsel %vm3335, %v3635, 0
        %v3807 = vsel %vm2917, %v3795, 0
        %v3810 = vsel %vm2917, %v3796, 0
        %v3813 = vsel %vm2917, %v3797, 0
        %v3816 = vsel %vm2917, %v3798, 0
        %v3819 = vsel %vm2917, %v3799, 0
        %v3822 = vsel %vm2917, %v3800, 0
        %v3825 = vsel %vm2917, %v3801, 0
        %v3828 = vsel %vm2917, %v3802, 0
        %3830 = vmatpush.bf16.msra.mxu0 0
        %3831 = vmatpush.bf16.msra.mxu0 0
        %3832 = vmatpush.bf16.msra.mxu0 0
        %3833 = vmatpush.bf16.msra.mxu0 0
        %3834 = vmatpush.bf16.msra.mxu0 0
        %3835 = vmatpush.bf16.msra.mxu0 0
        %3836 = vmatpush.bf16.msra.mxu0 0
        %3837 = vmatpush.bf16.msra.mxu0 %v3807
        %3838 = vmatmul.bf16.gmra.mxu0 %v3804
        %v3839 = vpop.f32.mrf.mxu0
        %v3840 = vadd.f32 0.0, %v3839
        %v3841 = vpop.f32.mrf.mxu0
        %3842 = vdwg.mxu0
        %3843 = vmatpush.bf16.msra.mxu0 0
        %3844 = vmatpush.bf16.msra.mxu0 0
        %3845 = vmatpush.bf16.msra.mxu0 0
        %3846 = vmatpush.bf16.msra.mxu0 0
        %3847 = vmatpush.bf16.msra.mxu0 0
        %3848 = vmatpush.bf16.msra.mxu0 0
        %3849 = vmatpush.bf16.msra.mxu0 0
        %3850 = vmatpush.bf16.msra.mxu0 %v3810
        %3851 = vmatmul.bf16.gmra.mxu0 %v3804
        %v3852 = vpop.f32.mrf.mxu0
        %v3853 = vadd.f32 0.0, %v3852
        %v3854 = vpop.f32.mrf.mxu0
        %3855 = vdwg.mxu0
        %3856 = vmatpush.bf16.msra.mxu0 0
        %3857 = vmatpush.bf16.msra.mxu0 0
        %3858 = vmatpush.bf16.msra.mxu0 0
        %3859 = vmatpush.bf16.msra.mxu0 0
        %3860 = vmatpush.bf16.msra.mxu0 0
        %3861 = vmatpush.bf16.msra.mxu0 0
        %3862 = vmatpush.bf16.msra.mxu0 0
        %3863 = vmatpush.bf16.msra.mxu0 %v3813
        %3864 = vmatmul.bf16.gmra.mxu0 %v3804
        %v3865 = vpop.f32.mrf.mxu0
        %v3866 = vadd.f32 0.0, %v3865
        %v3867 = vpop.f32.mrf.mxu0
        %3868 = vdwg.mxu0
        %3869 = vmatpush.bf16.msra.mxu0 0
        %3870 = vmatpush.bf16.msra.mxu0 0
        %3871 = vmatpush.bf16.msra.mxu0 0
        %3872 = vmatpush.bf16.msra.mxu0 0
        %3873 = vmatpush.bf16.msra.mxu0 0
        %3874 = vmatpush.bf16.msra.mxu0 0
        %3875 = vmatpush.bf16.msra.mxu0 0
        %3876 = vmatpush.bf16.msra.mxu0 %v3816
        %3877 = vmatmul.bf16.gmra.mxu0 %v3804
        %v3878 = vpop.f32.mrf.mxu0
        %v3879 = vadd.f32 0.0, %v3878
        %v3880 = vpop.f32.mrf.mxu0
        %3881 = vdwg.mxu0
        %3882 = vmatpush.bf16.msra.mxu0 0
        %3883 = vmatpush.bf16.msra.mxu0 0
        %3884 = vmatpush.bf16.msra.mxu0 0
        %3885 = vmatpush.bf16.msra.mxu0 0
        %3886 = vmatpush.bf16.msra.mxu0 0
        %3887 = vmatpush.bf16.msra.mxu0 0
        %3888 = vmatpush.bf16.msra.mxu0 0
        %3889 = vmatpush.bf16.msra.mxu0 %v3819
        %3890 = vmatmul.bf16.gmra.mxu0 %v3804
        %v3891 = vpop.f32.mrf.mxu0
        %v3892 = vadd.f32 0.0, %v3891
        %v3893 = vpop.f32.mrf.mxu0
        %3894 = vdwg.mxu0
        %3895 = vmatpush.bf16.msra.mxu0 0
        %3896 = vmatpush.bf16.msra.mxu0 0
        %3897 = vmatpush.bf16.msra.mxu0 0
        %3898 = vmatpush.bf16.msra.mxu0 0
        %3899 = vmatpush.bf16.msra.mxu0 0
        %3900 = vmatpush.bf16.msra.mxu0 0
        %3901 = vmatpush.bf16.msra.mxu0 0
        %3902 = vmatpush.bf16.msra.mxu0 %v3822
        %3903 = vmatmul.bf16.gmra.mxu0 %v3804
        %v3904 = vpop.f32.mrf.mxu0
        %v3905 = vadd.f32 0.0, %v3904
        %v3906 = vpop.f32.mrf.mxu0
        %3907 = vdwg.mxu0
        %3908 = vmatpush.bf16.msra.mxu0 0
        %3909 = vmatpush.bf16.msra.mxu0 0
        %3910 = vmatpush.bf16.msra.mxu0 0
        %3911 = vmatpush.bf16.msra.mxu0 0
        %3912 = vmatpush.bf16.msra.mxu0 0
        %3913 = vmatpush.bf16.msra.mxu0 0
        %3914 = vmatpush.bf16.msra.mxu0 0
        %3915 = vmatpush.bf16.msra.mxu0 %v3825
        %3916 = vmatmul.bf16.gmra.mxu0 %v3804
        %v3917 = vpop.f32.mrf.mxu0
        %v3918 = vadd.f32 0.0, %v3917
        %v3919 = vpop.f32.mrf.mxu0
        %3920 = vdwg.mxu0
        %3921 = vmatpush.bf16.msra.mxu0 0
        %3922 = vmatpush.bf16.msra.mxu0 0
        %3923 = vmatpush.bf16.msra.mxu0 0
        %3924 = vmatpush.bf16.msra.mxu0 0
        %3925 = vmatpush.bf16.msra.mxu0 0
        %3926 = vmatpush.bf16.msra.mxu0 0
        %3927 = vmatpush.bf16.msra.mxu0 0
        %3928 = vmatpush.bf16.msra.mxu0 %v3828
        %3929 = vmatmul.bf16.gmra.mxu0 %v3804
        %v3930 = vpop.f32.mrf.mxu0
        %v3931 = vadd.f32 0.0, %v3930
        %v3932 = vpop.f32.mrf.mxu0
        %3933 = vdwg.mxu0
        %v3934 = vadd.f32 %v3540, %v3840
        %v3935 = vadd.f32 %v3553, %v3853
        %v3936 = vadd.f32 %v3566, %v3866
        %v3937 = vadd.f32 %v3579, %v3879
        %v3938 = vadd.f32 %v3592, %v3892
        %v3939 = vadd.f32 %v3605, %v3905
        %v3940 = vadd.f32 %v3618, %v3918
        %v3941 = vadd.f32 %v3631, %v3931
        %s3942 = scalar_lea.vmem %s6, 12
        %v3943 = vld [vmem:[%s3942] sm:$0xf]
        %3944 = vrot.lane.b32.xlu0 %v3216, 127
        %v3945 = vpop.permute.xlu0 %3944
        %3946 = vrot.lane.b32.xlu0 %v3217, 127
        %v3947 = vpop.permute.xlu0 %3946
        %3948 = vrot.lane.b32.xlu0 %v3218, 127
        %v3949 = vpop.permute.xlu0 %3948
        %3950 = vrot.lane.b32.xlu0 %v3219, 127
        %v3951 = vpop.permute.xlu0 %3950
        %3952 = vrot.lane.b32.xlu0 %v3220, 127
        %v3953 = vpop.permute.xlu0 %3952
        %3954 = vrot.lane.b32.xlu0 %v3221, 127
        %v3955 = vpop.permute.xlu0 %3954
        %3956 = vrot.lane.b32.xlu0 %v3222, 127
        %v3957 = vpop.permute.xlu0 %3956
        %3958 = vrot.lane.b32.xlu0 %v3223, 127
        %v3959 = vpop.permute.xlu0 %3958
        %vm3960 = vcmask 1039360
        %v3961 = vsel %vm3960, %v3945, %v3947
        %v3962 = vsel %vm3960, %v3947, %v3949
        %v3963 = vsel %vm3960, %v3949, %v3951
        %v3964 = vsel %vm3960, %v3951, %v3953
        %v3965 = vsel %vm3960, %v3953, %v3955
        %v3966 = vsel %vm3960, %v3955, %v3957
        %v3967 = vsel %vm3960, %v3957, %v3959
        %v3977 = vmul.f32 %v3207, %v3945
        %v3978 = vmul.f32 %v3208, %v3961
        %v3979 = vmul.f32 %v3209, %v3962
        %v3980 = vmul.f32 %v3210, %v3963
        %v3981 = vmul.f32 %v3211, %v3964
        %v3982 = vmul.f32 %v3212, %v3965
        %v3983 = vmul.f32 %v3213, %v3966
        %v3984 = vmul.f32 %v3214, %v3967
        %v3985 = vmul.f32 %v3215, %v3959
        %v3986 = vpack.c.bf16 %v3977, %v3977
        %v3987 = vpack.c.bf16 %v3978, %v3978
        %v3988 = vpack.c.bf16 %v3979, %v3979
        %v3989 = vpack.c.bf16 %v3980, %v3980
        %v3990 = vpack.c.bf16 %v3981, %v3981
        %v3991 = vpack.c.bf16 %v3982, %v3982
        %v3992 = vpack.c.bf16 %v3983, %v3983
        %v3993 = vpack.c.bf16 %v3984, %v3984
        %v3994 = vpack.c.bf16 %v3985, %v3985
        %4004 = vrot.lane.b32.xlu0 %v3986, 1
        %v4005 = vpop.permute.xlu0 %4004
        %4006 = vrot.lane.b32.xlu0 %v3987, 1
        %v4007 = vpop.permute.xlu0 %4006
        %4008 = vrot.lane.b32.xlu0 %v3988, 1
        %v4009 = vpop.permute.xlu0 %4008
        %4010 = vrot.lane.b32.xlu0 %v3989, 1
        %v4011 = vpop.permute.xlu0 %4010
        %4012 = vrot.lane.b32.xlu0 %v3990, 1
        %v4013 = vpop.permute.xlu0 %4012
        %4014 = vrot.lane.b32.xlu0 %v3991, 1
        %v4015 = vpop.permute.xlu0 %4014
        %4016 = vrot.lane.b32.xlu0 %v3992, 1
        %v4017 = vpop.permute.xlu0 %4016
        %4018 = vrot.lane.b32.xlu0 %v3993, 1
        %v4019 = vpop.permute.xlu0 %4018
        %4020 = vrot.lane.b32.xlu0 %v3994, 1
        %v4021 = vpop.permute.xlu0 %4020
        %vm4022 = vcmask 7168
        %v4023 = vsel %vm4022, %v4005, %v4007
        %v4024 = vsel %vm4022, %v4007, %v4009
        %v4025 = vsel %vm4022, %v4009, %v4011
        %v4026 = vsel %vm4022, %v4011, %v4013
        %v4027 = vsel %vm4022, %v4013, %v4015
        %v4028 = vsel %vm4022, %v4015, %v4017
        %v4029 = vsel %vm4022, %v4017, %v4019
        %v4030 = vsel %vm4022, %v4019, %v4021
        %v4032 = vsel %vm3335, %v3943, 0
        %v4035 = vsel %vm2917, %v4023, 0
        %v4038 = vsel %vm2917, %v4024, 0
        %v4041 = vsel %vm2917, %v4025, 0
        %v4044 = vsel %vm2917, %v4026, 0
        %v4047 = vsel %vm2917, %v4027, 0
        %v4050 = vsel %vm2917, %v4028, 0
        %v4053 = vsel %vm2917, %v4029, 0
        %v4056 = vsel %vm2917, %v4030, 0
        %4058 = vmatpush.bf16.msra.mxu0 0
        %4059 = vmatpush.bf16.msra.mxu0 0
        %4060 = vmatpush.bf16.msra.mxu0 0
        %4061 = vmatpush.bf16.msra.mxu0 0
        %4062 = vmatpush.bf16.msra.mxu0 0
        %4063 = vmatpush.bf16.msra.mxu0 0
        %4064 = vmatpush.bf16.msra.mxu0 0
        %4065 = vmatpush.bf16.msra.mxu0 %v4035
        %4066 = vmatmul.bf16.gmra.mxu0 %v4032
        %v4067 = vpop.f32.mrf.mxu0
        %v4068 = vadd.f32 0.0, %v4067
        %v4069 = vpop.f32.mrf.mxu0
        %4070 = vdwg.mxu0
        %4071 = vmatpush.bf16.msra.mxu0 0
        %4072 = vmatpush.bf16.msra.mxu0 0
        %4073 = vmatpush.bf16.msra.mxu0 0
        %4074 = vmatpush.bf16.msra.mxu0 0
        %4075 = vmatpush.bf16.msra.mxu0 0
        %4076 = vmatpush.bf16.msra.mxu0 0
        %4077 = vmatpush.bf16.msra.mxu0 0
        %4078 = vmatpush.bf16.msra.mxu0 %v4038
        %4079 = vmatmul.bf16.gmra.mxu0 %v4032
        %v4080 = vpop.f32.mrf.mxu0
        %v4081 = vadd.f32 0.0, %v4080
        %v4082 = vpop.f32.mrf.mxu0
        %4083 = vdwg.mxu0
        %4084 = vmatpush.bf16.msra.mxu0 0
        %4085 = vmatpush.bf16.msra.mxu0 0
        %4086 = vmatpush.bf16.msra.mxu0 0
        %4087 = vmatpush.bf16.msra.mxu0 0
        %4088 = vmatpush.bf16.msra.mxu0 0
        %4089 = vmatpush.bf16.msra.mxu0 0
        %4090 = vmatpush.bf16.msra.mxu0 0
        %4091 = vmatpush.bf16.msra.mxu0 %v4041
        %4092 = vmatmul.bf16.gmra.mxu0 %v4032
        %v4093 = vpop.f32.mrf.mxu0
        %v4094 = vadd.f32 0.0, %v4093
        %v4095 = vpop.f32.mrf.mxu0
        %4096 = vdwg.mxu0
        %4097 = vmatpush.bf16.msra.mxu0 0
        %4098 = vmatpush.bf16.msra.mxu0 0
        %4099 = vmatpush.bf16.msra.mxu0 0
        %4100 = vmatpush.bf16.msra.mxu0 0
        %4101 = vmatpush.bf16.msra.mxu0 0
        %4102 = vmatpush.bf16.msra.mxu0 0
        %4103 = vmatpush.bf16.msra.mxu0 0
        %4104 = vmatpush.bf16.msra.mxu0 %v4044
        %4105 = vmatmul.bf16.gmra.mxu0 %v4032
        %v4106 = vpop.f32.mrf.mxu0
        %v4107 = vadd.f32 0.0, %v4106
        %v4108 = vpop.f32.mrf.mxu0
        %4109 = vdwg.mxu0
        %4110 = vmatpush.bf16.msra.mxu0 0
        %4111 = vmatpush.bf16.msra.mxu0 0
        %4112 = vmatpush.bf16.msra.mxu0 0
        %4113 = vmatpush.bf16.msra.mxu0 0
        %4114 = vmatpush.bf16.msra.mxu0 0
        %4115 = vmatpush.bf16.msra.mxu0 0
        %4116 = vmatpush.bf16.msra.mxu0 0
        %4117 = vmatpush.bf16.msra.mxu0 %v4047
        %4118 = vmatmul.bf16.gmra.mxu0 %v4032
        %v4119 = vpop.f32.mrf.mxu0
        %v4120 = vadd.f32 0.0, %v4119
        %v4121 = vpop.f32.mrf.mxu0
        %4122 = vdwg.mxu0
        %4123 = vmatpush.bf16.msra.mxu0 0
        %4124 = vmatpush.bf16.msra.mxu0 0
        %4125 = vmatpush.bf16.msra.mxu0 0
        %4126 = vmatpush.bf16.msra.mxu0 0
        %4127 = vmatpush.bf16.msra.mxu0 0
        %4128 = vmatpush.bf16.msra.mxu0 0
        %4129 = vmatpush.bf16.msra.mxu0 0
        %4130 = vmatpush.bf16.msra.mxu0 %v4050
        %4131 = vmatmul.bf16.gmra.mxu0 %v4032
        %v4132 = vpop.f32.mrf.mxu0
        %v4133 = vadd.f32 0.0, %v4132
        %v4134 = vpop.f32.mrf.mxu0
        %4135 = vdwg.mxu0
        %4136 = vmatpush.bf16.msra.mxu0 0
        %4137 = vmatpush.bf16.msra.mxu0 0
        %4138 = vmatpush.bf16.msra.mxu0 0
        %4139 = vmatpush.bf16.msra.mxu0 0
        %4140 = vmatpush.bf16.msra.mxu0 0
        %4141 = vmatpush.bf16.msra.mxu0 0
        %4142 = vmatpush.bf16.msra.mxu0 0
        %4143 = vmatpush.bf16.msra.mxu0 %v4053
        %4144 = vmatmul.bf16.gmra.mxu0 %v4032
        %v4145 = vpop.f32.mrf.mxu0
        %v4146 = vadd.f32 0.0, %v4145
        %v4147 = vpop.f32.mrf.mxu0
        %4148 = vdwg.mxu0
        %4149 = vmatpush.bf16.msra.mxu0 0
        %4150 = vmatpush.bf16.msra.mxu0 0
        %4151 = vmatpush.bf16.msra.mxu0 0
        %4152 = vmatpush.bf16.msra.mxu0 0
        %4153 = vmatpush.bf16.msra.mxu0 0
        %4154 = vmatpush.bf16.msra.mxu0 0
        %4155 = vmatpush.bf16.msra.mxu0 0
        %4156 = vmatpush.bf16.msra.mxu0 %v4056
        %4157 = vmatmul.bf16.gmra.mxu0 %v4032
        %v4158 = vpop.f32.mrf.mxu0
        %v4159 = vadd.f32 0.0, %v4158
        %v4160 = vpop.f32.mrf.mxu0
        %4161 = vdwg.mxu0
        %v4162 = vadd.f32 %v3934, %v4068
        %v4163 = vadd.f32 %v3935, %v4081
        %v4164 = vadd.f32 %v3936, %v4094
        %v4165 = vadd.f32 %v3937, %v4107
        %v4166 = vadd.f32 %v3938, %v4120
        %v4167 = vadd.f32 %v3939, %v4133
        %v4168 = vadd.f32 %v3940, %v4146
        %v4169 = vadd.f32 %v3941, %v4159
        %s4170 = scalar_lea.vmem %s6, 16
        %v4171 = vld [vmem:[%s4170] sm:$0xf]
        %v4172 = vld [vmem:[#allocation2 + $0x4] sm:$0xff]
        %v4173 = vld [vmem:[#allocation2 + $0xc] sm:$0xff]
        %v4174 = vld [vmem:[#allocation2 + $0x14] sm:$0xff]
        %v4175 = vld [vmem:[#allocation2 + $0x1c] sm:$0xff]
        %v4180 = vunpack.c.l.b16 %v4172
        %v4181 = vunpack.c.h.b16 %v4172
        %v4182 = vunpack.c.l.b16 %v4173
        %v4183 = vunpack.c.h.b16 %v4173
        %v4184 = vunpack.c.l.b16 %v4174
        %v4185 = vunpack.c.h.b16 %v4174
        %v4186 = vunpack.c.l.b16 %v4175
        %v4187 = vunpack.c.h.b16 %v4175
        %v4188 = vpack.c.b16 %v4180, %v4180
        %v4189 = vpack.c.b16 %v4181, %v4181
        %v4190 = vpack.c.b16 %v4182, %v4182
        %v4191 = vpack.c.b16 %v4183, %v4183
        %v4192 = vpack.c.b16 %v4184, %v4184
        %v4193 = vpack.c.b16 %v4185, %v4185
        %v4194 = vpack.c.b16 %v4186, %v4186
        %v4195 = vpack.c.b16 %v4187, %v4187
        %v4197 = vsel %vm3335, %v4171, 0
        %v4200 = vsel %vm2917, %v4188, 0
        %v4203 = vsel %vm2917, %v4189, 0
        %v4206 = vsel %vm2917, %v4190, 0
        %v4209 = vsel %vm2917, %v4191, 0
        %v4212 = vsel %vm2917, %v4192, 0
        %v4215 = vsel %vm2917, %v4193, 0
        %v4218 = vsel %vm2917, %v4194, 0
        %v4221 = vsel %vm2917, %v4195, 0
        %4223 = vmatpush.bf16.msra.mxu0 0
        %4224 = vmatpush.bf16.msra.mxu0 0
        %4225 = vmatpush.bf16.msra.mxu0 0
        %4226 = vmatpush.bf16.msra.mxu0 0
        %4227 = vmatpush.bf16.msra.mxu0 0
        %4228 = vmatpush.bf16.msra.mxu0 0
        %4229 = vmatpush.bf16.msra.mxu0 0
        %4230 = vmatpush.bf16.msra.mxu0 %v4200
        %4231 = vmatmul.bf16.gmra.mxu0 %v4197
        %v4232 = vpop.f32.mrf.mxu0
        %v4233 = vadd.f32 0.0, %v4232
        %v4234 = vpop.f32.mrf.mxu0
        %4235 = vdwg.mxu0
        %4236 = vmatpush.bf16.msra.mxu0 0
        %4237 = vmatpush.bf16.msra.mxu0 0
        %4238 = vmatpush.bf16.msra.mxu0 0
        %4239 = vmatpush.bf16.msra.mxu0 0
        %4240 = vmatpush.bf16.msra.mxu0 0
        %4241 = vmatpush.bf16.msra.mxu0 0
        %4242 = vmatpush.bf16.msra.mxu0 0
        %4243 = vmatpush.bf16.msra.mxu0 %v4203
        %4244 = vmatmul.bf16.gmra.mxu0 %v4197
        %v4245 = vpop.f32.mrf.mxu0
        %v4246 = vadd.f32 0.0, %v4245
        %v4247 = vpop.f32.mrf.mxu0
        %4248 = vdwg.mxu0
        %4249 = vmatpush.bf16.msra.mxu0 0
        %4250 = vmatpush.bf16.msra.mxu0 0
        %4251 = vmatpush.bf16.msra.mxu0 0
        %4252 = vmatpush.bf16.msra.mxu0 0
        %4253 = vmatpush.bf16.msra.mxu0 0
        %4254 = vmatpush.bf16.msra.mxu0 0
        %4255 = vmatpush.bf16.msra.mxu0 0
        %4256 = vmatpush.bf16.msra.mxu0 %v4206
        %4257 = vmatmul.bf16.gmra.mxu0 %v4197
        %v4258 = vpop.f32.mrf.mxu0
        %v4259 = vadd.f32 0.0, %v4258
        %v4260 = vpop.f32.mrf.mxu0
        %4261 = vdwg.mxu0
        %4262 = vmatpush.bf16.msra.mxu0 0
        %4263 = vmatpush.bf16.msra.mxu0 0
        %4264 = vmatpush.bf16.msra.mxu0 0
        %4265 = vmatpush.bf16.msra.mxu0 0
        %4266 = vmatpush.bf16.msra.mxu0 0
        %4267 = vmatpush.bf16.msra.mxu0 0
        %4268 = vmatpush.bf16.msra.mxu0 0
        %4269 = vmatpush.bf16.msra.mxu0 %v4209
        %4270 = vmatmul.bf16.gmra.mxu0 %v4197
        %v4271 = vpop.f32.mrf.mxu0
        %v4272 = vadd.f32 0.0, %v4271
        %v4273 = vpop.f32.mrf.mxu0
        %4274 = vdwg.mxu0
        %4275 = vmatpush.bf16.msra.mxu0 0
        %4276 = vmatpush.bf16.msra.mxu0 0
        %4277 = vmatpush.bf16.msra.mxu0 0
        %4278 = vmatpush.bf16.msra.mxu0 0
        %4279 = vmatpush.bf16.msra.mxu0 0
        %4280 = vmatpush.bf16.msra.mxu0 0
        %4281 = vmatpush.bf16.msra.mxu0 0
        %4282 = vmatpush.bf16.msra.mxu0 %v4212
        %4283 = vmatmul.bf16.gmra.mxu0 %v4197
        %v4284 = vpop.f32.mrf.mxu0
        %v4285 = vadd.f32 0.0, %v4284
        %v4286 = vpop.f32.mrf.mxu0
        %4287 = vdwg.mxu0
        %4288 = vmatpush.bf16.msra.mxu0 0
        %4289 = vmatpush.bf16.msra.mxu0 0
        %4290 = vmatpush.bf16.msra.mxu0 0
        %4291 = vmatpush.bf16.msra.mxu0 0
        %4292 = vmatpush.bf16.msra.mxu0 0
        %4293 = vmatpush.bf16.msra.mxu0 0
        %4294 = vmatpush.bf16.msra.mxu0 0
        %4295 = vmatpush.bf16.msra.mxu0 %v4215
        %4296 = vmatmul.bf16.gmra.mxu0 %v4197
        %v4297 = vpop.f32.mrf.mxu0
        %v4298 = vadd.f32 0.0, %v4297
        %v4299 = vpop.f32.mrf.mxu0
        %4300 = vdwg.mxu0
        %4301 = vmatpush.bf16.msra.mxu0 0
        %4302 = vmatpush.bf16.msra.mxu0 0
        %4303 = vmatpush.bf16.msra.mxu0 0
        %4304 = vmatpush.bf16.msra.mxu0 0
        %4305 = vmatpush.bf16.msra.mxu0 0
        %4306 = vmatpush.bf16.msra.mxu0 0
        %4307 = vmatpush.bf16.msra.mxu0 0
        %4308 = vmatpush.bf16.msra.mxu0 %v4218
        %4309 = vmatmul.bf16.gmra.mxu0 %v4197
        %v4310 = vpop.f32.mrf.mxu0
        %v4311 = vadd.f32 0.0, %v4310
        %v4312 = vpop.f32.mrf.mxu0
        %4313 = vdwg.mxu0
        %4314 = vmatpush.bf16.msra.mxu0 0
        %4315 = vmatpush.bf16.msra.mxu0 0
        %4316 = vmatpush.bf16.msra.mxu0 0
        %4317 = vmatpush.bf16.msra.mxu0 0
        %4318 = vmatpush.bf16.msra.mxu0 0
        %4319 = vmatpush.bf16.msra.mxu0 0
        %4320 = vmatpush.bf16.msra.mxu0 0
        %4321 = vmatpush.bf16.msra.mxu0 %v4221
        %4322 = vmatmul.bf16.gmra.mxu0 %v4197
        %v4323 = vpop.f32.mrf.mxu0
        %v4324 = vadd.f32 0.0, %v4323
        %v4325 = vpop.f32.mrf.mxu0
        %4326 = vdwg.mxu0
        %v4327 = vadd.f32 %v4162, %v4233
        %v4328 = vadd.f32 %v4163, %v4246
        %v4329 = vadd.f32 %v4164, %v4259
        %v4330 = vadd.f32 %v4165, %v4272
        %v4331 = vadd.f32 %v4166, %v4285
        %v4332 = vadd.f32 %v4167, %v4298
        %v4333 = vadd.f32 %v4168, %v4311
        %v4334 = vadd.f32 %v4169, %v4324
        %s4335 = scalar_lea.vmem %s6, 20
        %v4336 = vld [vmem:[%s4335] sm:$0xf]
        %v4337 = vld [vmem:[#allocation2 + $0x4] sm:$0xff]
        %v4338 = vld [vmem:[#allocation2 + $0xc] sm:$0xff]
        %v4339 = vld [vmem:[#allocation2 + $0x14] sm:$0xff]
        %v4340 = vld [vmem:[#allocation2 + $0x1c] sm:$0xff]
        %v4341 = vld [vmem:[#allocation2 + $0x24] sm:$0xf]
        %v4342 = vunpack.c.l.bf16 %v4337
        %v4343 = vunpack.c.h.bf16 %v4337
        %v4344 = vunpack.c.l.bf16 %v4338
        %v4345 = vunpack.c.h.bf16 %v4338
        %v4346 = vunpack.c.l.bf16 %v4339
        %v4347 = vunpack.c.h.bf16 %v4339
        %v4348 = vunpack.c.l.bf16 %v4340
        %v4349 = vunpack.c.h.bf16 %v4340
        %v4350 = vunpack.c.l.bf16 %v4341
        %4351 = vrot.lane.b32.xlu0 %v3700, 1
        %v4352 = vpop.permute.xlu0 %4351
        %4353 = vrot.lane.b32.xlu0 %v3701, 1
        %v4354 = vpop.permute.xlu0 %4353
        %4355 = vrot.lane.b32.xlu0 %v3702, 1
        %v4356 = vpop.permute.xlu0 %4355
        %4357 = vrot.lane.b32.xlu0 %v3703, 1
        %v4358 = vpop.permute.xlu0 %4357
        %4359 = vrot.lane.b32.xlu0 %v3704, 1
        %v4360 = vpop.permute.xlu0 %4359
        %4361 = vrot.lane.b32.xlu0 %v3705, 1
        %v4362 = vpop.permute.xlu0 %4361
        %4363 = vrot.lane.b32.xlu0 %v3706, 1
        %v4364 = vpop.permute.xlu0 %4363
        %4365 = vrot.lane.b32.xlu0 %v3707, 1
        %v4366 = vpop.permute.xlu0 %4365
        %vm4367 = vcmask 7168
        %v4368 = vsel %vm4367, %v4352, %v4354
        %v4369 = vsel %vm4367, %v4354, %v4356
        %v4370 = vsel %vm4367, %v4356, %v4358
        %v4371 = vsel %vm4367, %v4358, %v4360
        %v4372 = vsel %vm4367, %v4360, %v4362
        %v4373 = vsel %vm4367, %v4362, %v4364
        %v4374 = vsel %vm4367, %v4364, %v4366
        %v4384 = vmul.f32 %v4342, %v4352
        %v4385 = vmul.f32 %v4343, %v4368
        %v4386 = vmul.f32 %v4344, %v4369
        %v4387 = vmul.f32 %v4345, %v4370
        %v4388 = vmul.f32 %v4346, %v4371
        %v4389 = vmul.f32 %v4347, %v4372
        %v4390 = vmul.f32 %v4348, %v4373
        %v4391 = vmul.f32 %v4349, %v4374
        %v4392 = vmul.f32 %v4350, %v4366
        %v4393 = vpack.c.bf16 %v4384, %v4384
        %v4394 = vpack.c.bf16 %v4385, %v4385
        %v4395 = vpack.c.bf16 %v4386, %v4386
        %v4396 = vpack.c.bf16 %v4387, %v4387
        %v4397 = vpack.c.bf16 %v4388, %v4388
        %v4398 = vpack.c.bf16 %v4389, %v4389
        %v4399 = vpack.c.bf16 %v4390, %v4390
        %v4400 = vpack.c.bf16 %v4391, %v4391
        %v4401 = vpack.c.bf16 %v4392, %v4392
        %4411 = vrot.lane.b32.xlu0 %v4393, 127
        %v4412 = vpop.permute.xlu0 %4411
        %4413 = vrot.lane.b32.xlu0 %v4394, 127
        %v4414 = vpop.permute.xlu0 %4413
        %4415 = vrot.lane.b32.xlu0 %v4395, 127
        %v4416 = vpop.permute.xlu0 %4415
        %4417 = vrot.lane.b32.xlu0 %v4396, 127
        %v4418 = vpop.permute.xlu0 %4417
        %4419 = vrot.lane.b32.xlu0 %v4397, 127
        %v4420 = vpop.permute.xlu0 %4419
        %4421 = vrot.lane.b32.xlu0 %v4398, 127
        %v4422 = vpop.permute.xlu0 %4421
        %4423 = vrot.lane.b32.xlu0 %v4399, 127
        %v4424 = vpop.permute.xlu0 %4423
        %4425 = vrot.lane.b32.xlu0 %v4400, 127
        %v4426 = vpop.permute.xlu0 %4425
        %4427 = vrot.lane.b32.xlu0 %v4401, 127
        %v4428 = vpop.permute.xlu0 %4427
        %vm4429 = vcmask 1039360
        %v4430 = vsel %vm4429, %v4412, %v4414
        %v4431 = vsel %vm4429, %v4414, %v4416
        %v4432 = vsel %vm4429, %v4416, %v4418
        %v4433 = vsel %vm4429, %v4418, %v4420
        %v4434 = vsel %vm4429, %v4420, %v4422
        %v4435 = vsel %vm4429, %v4422, %v4424
        %v4436 = vsel %vm4429, %v4424, %v4426
        %v4437 = vsel %vm4429, %v4426, %v4428
        %v4439 = vsel %vm3335, %v4336, 0
        %v4442 = vsel %vm2917, %v4430, 0
        %v4445 = vsel %vm2917, %v4431, 0
        %v4448 = vsel %vm2917, %v4432, 0
        %v4451 = vsel %vm2917, %v4433, 0
        %v4454 = vsel %vm2917, %v4434, 0
        %v4457 = vsel %vm2917, %v4435, 0
        %v4460 = vsel %vm2917, %v4436, 0
        %v4463 = vsel %vm2917, %v4437, 0
        %4465 = vmatpush.bf16.msra.mxu0 0
        %4466 = vmatpush.bf16.msra.mxu0 0
        %4467 = vmatpush.bf16.msra.mxu0 0
        %4468 = vmatpush.bf16.msra.mxu0 0
        %4469 = vmatpush.bf16.msra.mxu0 0
        %4470 = vmatpush.bf16.msra.mxu0 0
        %4471 = vmatpush.bf16.msra.mxu0 0
        %4472 = vmatpush.bf16.msra.mxu0 %v4442
        %4473 = vmatmul.bf16.gmra.mxu0 %v4439
        %v4474 = vpop.f32.mrf.mxu0
        %v4475 = vadd.f32 0.0, %v4474
        %v4476 = vpop.f32.mrf.mxu0
        %4477 = vdwg.mxu0
        %4478 = vmatpush.bf16.msra.mxu0 0
        %4479 = vmatpush.bf16.msra.mxu0 0
        %4480 = vmatpush.bf16.msra.mxu0 0
        %4481 = vmatpush.bf16.msra.mxu0 0
        %4482 = vmatpush.bf16.msra.mxu0 0
        %4483 = vmatpush.bf16.msra.mxu0 0
        %4484 = vmatpush.bf16.msra.mxu0 0
        %4485 = vmatpush.bf16.msra.mxu0 %v4445
        %4486 = vmatmul.bf16.gmra.mxu0 %v4439
        %v4487 = vpop.f32.mrf.mxu0
        %v4488 = vadd.f32 0.0, %v4487
        %v4489 = vpop.f32.mrf.mxu0
        %4490 = vdwg.mxu0
        %4491 = vmatpush.bf16.msra.mxu0 0
        %4492 = vmatpush.bf16.msra.mxu0 0
        %4493 = vmatpush.bf16.msra.mxu0 0
        %4494 = vmatpush.bf16.msra.mxu0 0
        %4495 = vmatpush.bf16.msra.mxu0 0
        %4496 = vmatpush.bf16.msra.mxu0 0
        %4497 = vmatpush.bf16.msra.mxu0 0
        %4498 = vmatpush.bf16.msra.mxu0 %v4448
        %4499 = vmatmul.bf16.gmra.mxu0 %v4439
        %v4500 = vpop.f32.mrf.mxu0
        %v4501 = vadd.f32 0.0, %v4500
        %v4502 = vpop.f32.mrf.mxu0
        %4503 = vdwg.mxu0
        %4504 = vmatpush.bf16.msra.mxu0 0
        %4505 = vmatpush.bf16.msra.mxu0 0
        %4506 = vmatpush.bf16.msra.mxu0 0
        %4507 = vmatpush.bf16.msra.mxu0 0
        %4508 = vmatpush.bf16.msra.mxu0 0
        %4509 = vmatpush.bf16.msra.mxu0 0
        %4510 = vmatpush.bf16.msra.mxu0 0
        %4511 = vmatpush.bf16.msra.mxu0 %v4451
        %4512 = vmatmul.bf16.gmra.mxu0 %v4439
        %v4513 = vpop.f32.mrf.mxu0
        %v4514 = vadd.f32 0.0, %v4513
        %v4515 = vpop.f32.mrf.mxu0
        %4516 = vdwg.mxu0
        %4517 = vmatpush.bf16.msra.mxu0 0
        %4518 = vmatpush.bf16.msra.mxu0 0
        %4519 = vmatpush.bf16.msra.mxu0 0
        %4520 = vmatpush.bf16.msra.mxu0 0
        %4521 = vmatpush.bf16.msra.mxu0 0
        %4522 = vmatpush.bf16.msra.mxu0 0
        %4523 = vmatpush.bf16.msra.mxu0 0
        %4524 = vmatpush.bf16.msra.mxu0 %v4454
        %4525 = vmatmul.bf16.gmra.mxu0 %v4439
        %v4526 = vpop.f32.mrf.mxu0
        %v4527 = vadd.f32 0.0, %v4526
        %v4528 = vpop.f32.mrf.mxu0
        %4529 = vdwg.mxu0
        %4530 = vmatpush.bf16.msra.mxu0 0
        %4531 = vmatpush.bf16.msra.mxu0 0
        %4532 = vmatpush.bf16.msra.mxu0 0
        %4533 = vmatpush.bf16.msra.mxu0 0
        %4534 = vmatpush.bf16.msra.mxu0 0
        %4535 = vmatpush.bf16.msra.mxu0 0
        %4536 = vmatpush.bf16.msra.mxu0 0
        %4537 = vmatpush.bf16.msra.mxu0 %v4457
        %4538 = vmatmul.bf16.gmra.mxu0 %v4439
        %v4539 = vpop.f32.mrf.mxu0
        %v4540 = vadd.f32 0.0, %v4539
        %v4541 = vpop.f32.mrf.mxu0
        %4542 = vdwg.mxu0
        %4543 = vmatpush.bf16.msra.mxu0 0
        %4544 = vmatpush.bf16.msra.mxu0 0
        %4545 = vmatpush.bf16.msra.mxu0 0
        %4546 = vmatpush.bf16.msra.mxu0 0
        %4547 = vmatpush.bf16.msra.mxu0 0
        %4548 = vmatpush.bf16.msra.mxu0 0
        %4549 = vmatpush.bf16.msra.mxu0 0
        %4550 = vmatpush.bf16.msra.mxu0 %v4460
        %4551 = vmatmul.bf16.gmra.mxu0 %v4439
        %v4552 = vpop.f32.mrf.mxu0
        %v4553 = vadd.f32 0.0, %v4552
        %v4554 = vpop.f32.mrf.mxu0
        %4555 = vdwg.mxu0
        %4556 = vmatpush.bf16.msra.mxu0 0
        %4557 = vmatpush.bf16.msra.mxu0 0
        %4558 = vmatpush.bf16.msra.mxu0 0
        %4559 = vmatpush.bf16.msra.mxu0 0
        %4560 = vmatpush.bf16.msra.mxu0 0
        %4561 = vmatpush.bf16.msra.mxu0 0
        %4562 = vmatpush.bf16.msra.mxu0 0
        %4563 = vmatpush.bf16.msra.mxu0 %v4463
        %4564 = vmatmul.bf16.gmra.mxu0 %v4439
        %v4565 = vpop.f32.mrf.mxu0
        %v4566 = vadd.f32 0.0, %v4565
        %v4567 = vpop.f32.mrf.mxu0
        %4568 = vdwg.mxu0
        %v4569 = vadd.f32 %v4327, %v4475
        %v4570 = vadd.f32 %v4328, %v4488
        %v4571 = vadd.f32 %v4329, %v4501
        %v4572 = vadd.f32 %v4330, %v4514
        %v4573 = vadd.f32 %v4331, %v4527
        %v4574 = vadd.f32 %v4332, %v4540
        %v4575 = vadd.f32 %v4333, %v4553
        %v4576 = vadd.f32 %v4334, %v4566
        %s4577 = scalar_lea.vmem %s6, 24
        %v4578 = vld [vmem:[%s4577] sm:$0xf]
        %4579 = vrot.lane.b32.xlu0 %v3216, 31
        %v4580 = vpop.permute.xlu0 %4579
        %4581 = vrot.lane.b32.xlu0 %v3217, 31
        %v4582 = vpop.permute.xlu0 %4581
        %4583 = vrot.lane.b32.xlu0 %v3218, 31
        %v4584 = vpop.permute.xlu0 %4583
        %4585 = vrot.lane.b32.xlu0 %v3219, 31
        %v4586 = vpop.permute.xlu0 %4585
        %4587 = vrot.lane.b32.xlu0 %v3220, 31
        %v4588 = vpop.permute.xlu0 %4587
        %4589 = vrot.lane.b32.xlu0 %v3221, 31
        %v4590 = vpop.permute.xlu0 %4589
        %4591 = vrot.lane.b32.xlu0 %v3222, 31
        %v4592 = vpop.permute.xlu0 %4591
        %4593 = vrot.lane.b32.xlu0 %v3223, 31
        %v4594 = vpop.permute.xlu0 %4593
        %vm4595 = vcmask 252928
        %v4596 = vsel %vm4595, %v4580, %v4582
        %v4597 = vsel %vm4595, %v4582, %v4584
        %v4598 = vsel %vm4595, %v4584, %v4586
        %v4599 = vsel %vm4595, %v4586, %v4588
        %v4600 = vsel %vm4595, %v4588, %v4590
        %v4601 = vsel %vm4595, %v4590, %v4592
        %v4602 = vsel %vm4595, %v4592, %v4594
        %v4612 = vmul.f32 %v4342, %v4580
        %v4613 = vmul.f32 %v4343, %v4596
        %v4614 = vmul.f32 %v4344, %v4597
        %v4615 = vmul.f32 %v4345, %v4598
        %v4616 = vmul.f32 %v4346, %v4599
        %v4617 = vmul.f32 %v4347, %v4600
        %v4618 = vmul.f32 %v4348, %v4601
        %v4619 = vmul.f32 %v4349, %v4602
        %v4620 = vmul.f32 %v4350, %v4594
        %v4621 = vpack.c.bf16 %v4612, %v4612
        %v4622 = vpack.c.bf16 %v4613, %v4613
        %v4623 = vpack.c.bf16 %v4614, %v4614
        %v4624 = vpack.c.bf16 %v4615, %v4615
        %v4625 = vpack.c.bf16 %v4616, %v4616
        %v4626 = vpack.c.bf16 %v4617, %v4617
        %v4627 = vpack.c.bf16 %v4618, %v4618
        %v4628 = vpack.c.bf16 %v4619, %v4619
        %v4629 = vpack.c.bf16 %v4620, %v4620
        %4639 = vrot.lane.b32.xlu0 %v4621, 97
        %v4640 = vpop.permute.xlu0 %4639
        %4641 = vrot.lane.b32.xlu0 %v4622, 97
        %v4642 = vpop.permute.xlu0 %4641
        %4643 = vrot.lane.b32.xlu0 %v4623, 97
        %v4644 = vpop.permute.xlu0 %4643
        %4645 = vrot.lane.b32.xlu0 %v4624, 97
        %v4646 = vpop.permute.xlu0 %4645
        %4647 = vrot.lane.b32.xlu0 %v4625, 97
        %v4648 = vpop.permute.xlu0 %4647
        %4649 = vrot.lane.b32.xlu0 %v4626, 97
        %v4650 = vpop.permute.xlu0 %4649
        %4651 = vrot.lane.b32.xlu0 %v4627, 97
        %v4652 = vpop.permute.xlu0 %4651
        %4653 = vrot.lane.b32.xlu0 %v4628, 97
        %v4654 = vpop.permute.xlu0 %4653
        %4655 = vrot.lane.b32.xlu0 %v4629, 97
        %v4656 = vpop.permute.xlu0 %4655
        %vm4657 = vcmask 793600
        %v4658 = vsel %vm4657, %v4640, %v4642
        %v4659 = vsel %vm4657, %v4642, %v4644
        %v4660 = vsel %vm4657, %v4644, %v4646
        %v4661 = vsel %vm4657, %v4646, %v4648
        %v4662 = vsel %vm4657, %v4648, %v4650
        %v4663 = vsel %vm4657, %v4650, %v4652
        %v4664 = vsel %vm4657, %v4652, %v4654
        %v4665 = vsel %vm4657, %v4654, %v4656
        %v4667 = vsel %vm3335, %v4578, 0
        %v4670 = vsel %vm2917, %v4658, 0
        %v4673 = vsel %vm2917, %v4659, 0
        %v4676 = vsel %vm2917, %v4660, 0
        %v4679 = vsel %vm2917, %v4661, 0
        %v4682 = vsel %vm2917, %v4662, 0
        %v4685 = vsel %vm2917, %v4663, 0
        %v4688 = vsel %vm2917, %v4664, 0
        %v4691 = vsel %vm2917, %v4665, 0
        %4693 = vmatpush.bf16.msra.mxu0 0
        %4694 = vmatpush.bf16.msra.mxu0 0
        %4695 = vmatpush.bf16.msra.mxu0 0
        %4696 = vmatpush.bf16.msra.mxu0 0
        %4697 = vmatpush.bf16.msra.mxu0 0
        %4698 = vmatpush.bf16.msra.mxu0 0
        %4699 = vmatpush.bf16.msra.mxu0 0
        %4700 = vmatpush.bf16.msra.mxu0 %v4670
        %4701 = vmatmul.bf16.gmra.mxu0 %v4667
        %v4702 = vpop.f32.mrf.mxu0
        %v4703 = vadd.f32 0.0, %v4702
        %v4704 = vpop.f32.mrf.mxu0
        %4705 = vdwg.mxu0
        %4706 = vmatpush.bf16.msra.mxu0 0
        %4707 = vmatpush.bf16.msra.mxu0 0
        %4708 = vmatpush.bf16.msra.mxu0 0
        %4709 = vmatpush.bf16.msra.mxu0 0
        %4710 = vmatpush.bf16.msra.mxu0 0
        %4711 = vmatpush.bf16.msra.mxu0 0
        %4712 = vmatpush.bf16.msra.mxu0 0
        %4713 = vmatpush.bf16.msra.mxu0 %v4673
        %4714 = vmatmul.bf16.gmra.mxu0 %v4667
        %v4715 = vpop.f32.mrf.mxu0
        %v4716 = vadd.f32 0.0, %v4715
        %v4717 = vpop.f32.mrf.mxu0
        %4718 = vdwg.mxu0
        %4719 = vmatpush.bf16.msra.mxu0 0
        %4720 = vmatpush.bf16.msra.mxu0 0
        %4721 = vmatpush.bf16.msra.mxu0 0
        %4722 = vmatpush.bf16.msra.mxu0 0
        %4723 = vmatpush.bf16.msra.mxu0 0
        %4724 = vmatpush.bf16.msra.mxu0 0
        %4725 = vmatpush.bf16.msra.mxu0 0
        %4726 = vmatpush.bf16.msra.mxu0 %v4676
        %4727 = vmatmul.bf16.gmra.mxu0 %v4667
        %v4728 = vpop.f32.mrf.mxu0
        %v4729 = vadd.f32 0.0, %v4728
        %v4730 = vpop.f32.mrf.mxu0
        %4731 = vdwg.mxu0
        %4732 = vmatpush.bf16.msra.mxu0 0
        %4733 = vmatpush.bf16.msra.mxu0 0
        %4734 = vmatpush.bf16.msra.mxu0 0
        %4735 = vmatpush.bf16.msra.mxu0 0
        %4736 = vmatpush.bf16.msra.mxu0 0
        %4737 = vmatpush.bf16.msra.mxu0 0
        %4738 = vmatpush.bf16.msra.mxu0 0
        %4739 = vmatpush.bf16.msra.mxu0 %v4679
        %4740 = vmatmul.bf16.gmra.mxu0 %v4667
        %v4741 = vpop.f32.mrf.mxu0
        %v4742 = vadd.f32 0.0, %v4741
        %v4743 = vpop.f32.mrf.mxu0
        %4744 = vdwg.mxu0
        %4745 = vmatpush.bf16.msra.mxu0 0
        %4746 = vmatpush.bf16.msra.mxu0 0
        %4747 = vmatpush.bf16.msra.mxu0 0
        %4748 = vmatpush.bf16.msra.mxu0 0
        %4749 = vmatpush.bf16.msra.mxu0 0
        %4750 = vmatpush.bf16.msra.mxu0 0
        %4751 = vmatpush.bf16.msra.mxu0 0
        %4752 = vmatpush.bf16.msra.mxu0 %v4682
        %4753 = vmatmul.bf16.gmra.mxu0 %v4667
        %v4754 = vpop.f32.mrf.mxu0
        %v4755 = vadd.f32 0.0, %v4754
        %v4756 = vpop.f32.mrf.mxu0
        %4757 = vdwg.mxu0
        %4758 = vmatpush.bf16.msra.mxu0 0
        %4759 = vmatpush.bf16.msra.mxu0 0
        %4760 = vmatpush.bf16.msra.mxu0 0
        %4761 = vmatpush.bf16.msra.mxu0 0
        %4762 = vmatpush.bf16.msra.mxu0 0
        %4763 = vmatpush.bf16.msra.mxu0 0
        %4764 = vmatpush.bf16.msra.mxu0 0
        %4765 = vmatpush.bf16.msra.mxu0 %v4685
        %4766 = vmatmul.bf16.gmra.mxu0 %v4667
        %v4767 = vpop.f32.mrf.mxu0
        %v4768 = vadd.f32 0.0, %v4767
        %v4769 = vpop.f32.mrf.mxu0
        %4770 = vdwg.mxu0
        %4771 = vmatpush.bf16.msra.mxu0 0
        %4772 = vmatpush.bf16.msra.mxu0 0
        %4773 = vmatpush.bf16.msra.mxu0 0
        %4774 = vmatpush.bf16.msra.mxu0 0
        %4775 = vmatpush.bf16.msra.mxu0 0
        %4776 = vmatpush.bf16.msra.mxu0 0
        %4777 = vmatpush.bf16.msra.mxu0 0
        %4778 = vmatpush.bf16.msra.mxu0 %v4688
        %4779 = vmatmul.bf16.gmra.mxu0 %v4667
        %v4780 = vpop.f32.mrf.mxu0
        %v4781 = vadd.f32 0.0, %v4780
        %v4782 = vpop.f32.mrf.mxu0
        %4783 = vdwg.mxu0
        %4784 = vmatpush.bf16.msra.mxu0 0
        %4785 = vmatpush.bf16.msra.mxu0 0
        %4786 = vmatpush.bf16.msra.mxu0 0
        %4787 = vmatpush.bf16.msra.mxu0 0
        %4788 = vmatpush.bf16.msra.mxu0 0
        %4789 = vmatpush.bf16.msra.mxu0 0
        %4790 = vmatpush.bf16.msra.mxu0 0
        %4791 = vmatpush.bf16.msra.mxu0 %v4691
        %4792 = vmatmul.bf16.gmra.mxu0 %v4667
        %v4793 = vpop.f32.mrf.mxu0
        %v4794 = vadd.f32 0.0, %v4793
        %v4795 = vpop.f32.mrf.mxu0
        %4796 = vdwg.mxu0
        %v4797 = vadd.f32 %v4569, %v4703
        %v4798 = vadd.f32 %v4570, %v4716
        %v4799 = vadd.f32 %v4571, %v4729
        %v4800 = vadd.f32 %v4572, %v4742
        %v4801 = vadd.f32 %v4573, %v4755
        %v4802 = vadd.f32 %v4574, %v4768
        %v4803 = vadd.f32 %v4575, %v4781
        %v4804 = vadd.f32 %v4576, %v4794
        %s4805 = scalar_lea.vmem %s6, 28
        %v4806 = vld [vmem:[%s4805] sm:$0xf]
        %v4812 = vunpack.c.l.b16 %v4337
        %v4813 = vunpack.c.h.b16 %v4337
        %v4814 = vunpack.c.l.b16 %v4338
        %v4815 = vunpack.c.h.b16 %v4338
        %v4816 = vunpack.c.l.b16 %v4339
        %v4817 = vunpack.c.h.b16 %v4339
        %v4818 = vunpack.c.l.b16 %v4340
        %v4819 = vunpack.c.h.b16 %v4340
        %v4820 = vunpack.c.l.b16 %v4341
        %v4821 = vpack.c.b16 %v4812, %v4812
        %v4822 = vpack.c.b16 %v4813, %v4813
        %v4823 = vpack.c.b16 %v4814, %v4814
        %v4824 = vpack.c.b16 %v4815, %v4815
        %v4825 = vpack.c.b16 %v4816, %v4816
        %v4826 = vpack.c.b16 %v4817, %v4817
        %v4827 = vpack.c.b16 %v4818, %v4818
        %v4828 = vpack.c.b16 %v4819, %v4819
        %v4829 = vpack.c.b16 %v4820, %v4820
        %4830 = vrot.lane.b32.xlu0 %v4821, 96
        %v4831 = vpop.permute.xlu0 %4830
        %4832 = vrot.lane.b32.xlu0 %v4822, 96
        %v4833 = vpop.permute.xlu0 %4832
        %4834 = vrot.lane.b32.xlu0 %v4823, 96
        %v4835 = vpop.permute.xlu0 %4834
        %4836 = vrot.lane.b32.xlu0 %v4824, 96
        %v4837 = vpop.permute.xlu0 %4836
        %4838 = vrot.lane.b32.xlu0 %v4825, 96
        %v4839 = vpop.permute.xlu0 %4838
        %4840 = vrot.lane.b32.xlu0 %v4826, 96
        %v4841 = vpop.permute.xlu0 %4840
        %4842 = vrot.lane.b32.xlu0 %v4827, 96
        %v4843 = vpop.permute.xlu0 %4842
        %4844 = vrot.lane.b32.xlu0 %v4828, 96
        %v4845 = vpop.permute.xlu0 %4844
        %4846 = vrot.lane.b32.xlu0 %v4829, 96
        %v4847 = vpop.permute.xlu0 %4846
        %vm4848 = vcmask 785408
        %v4849 = vsel %vm4848, %v4831, %v4833
        %v4850 = vsel %vm4848, %v4833, %v4835
        %v4851 = vsel %vm4848, %v4835, %v4837
        %v4852 = vsel %vm4848, %v4837, %v4839
        %v4853 = vsel %vm4848, %v4839, %v4841
        %v4854 = vsel %vm4848, %v4841, %v4843
        %v4855 = vsel %vm4848, %v4843, %v4845
        %v4856 = vsel %vm4848, %v4845, %v4847
        %v4858 = vsel %vm3335, %v4806, 0
        %v4861 = vsel %vm2917, %v4849, 0
        %v4864 = vsel %vm2917, %v4850, 0
        %v4867 = vsel %vm2917, %v4851, 0
        %v4870 = vsel %vm2917, %v4852, 0
        %v4873 = vsel %vm2917, %v4853, 0
        %v4876 = vsel %vm2917, %v4854, 0
        %v4879 = vsel %vm2917, %v4855, 0
        %v4882 = vsel %vm2917, %v4856, 0
        %4884 = vmatpush.bf16.msra.mxu0 0
        %4885 = vmatpush.bf16.msra.mxu0 0
        %4886 = vmatpush.bf16.msra.mxu0 0
        %4887 = vmatpush.bf16.msra.mxu0 0
        %4888 = vmatpush.bf16.msra.mxu0 0
        %4889 = vmatpush.bf16.msra.mxu0 0
        %4890 = vmatpush.bf16.msra.mxu0 0
        %4891 = vmatpush.bf16.msra.mxu0 %v4861
        %4892 = vmatmul.bf16.gmra.mxu0 %v4858
        %v4893 = vpop.f32.mrf.mxu0
        %v4894 = vadd.f32 0.0, %v4893
        %v4895 = vpop.f32.mrf.mxu0
        %4896 = vdwg.mxu0
        %4897 = vmatpush.bf16.msra.mxu0 0
        %4898 = vmatpush.bf16.msra.mxu0 0
        %4899 = vmatpush.bf16.msra.mxu0 0
        %4900 = vmatpush.bf16.msra.mxu0 0
        %4901 = vmatpush.bf16.msra.mxu0 0
        %4902 = vmatpush.bf16.msra.mxu0 0
        %4903 = vmatpush.bf16.msra.mxu0 0
        %4904 = vmatpush.bf16.msra.mxu0 %v4864
        %4905 = vmatmul.bf16.gmra.mxu0 %v4858
        %v4906 = vpop.f32.mrf.mxu0
        %v4907 = vadd.f32 0.0, %v4906
        %v4908 = vpop.f32.mrf.mxu0
        %4909 = vdwg.mxu0
        %4910 = vmatpush.bf16.msra.mxu0 0
        %4911 = vmatpush.bf16.msra.mxu0 0
        %4912 = vmatpush.bf16.msra.mxu0 0
        %4913 = vmatpush.bf16.msra.mxu0 0
        %4914 = vmatpush.bf16.msra.mxu0 0
        %4915 = vmatpush.bf16.msra.mxu0 0
        %4916 = vmatpush.bf16.msra.mxu0 0
        %4917 = vmatpush.bf16.msra.mxu0 %v4867
        %4918 = vmatmul.bf16.gmra.mxu0 %v4858
        %v4919 = vpop.f32.mrf.mxu0
        %v4920 = vadd.f32 0.0, %v4919
        %v4921 = vpop.f32.mrf.mxu0
        %4922 = vdwg.mxu0
        %4923 = vmatpush.bf16.msra.mxu0 0
        %4924 = vmatpush.bf16.msra.mxu0 0
        %4925 = vmatpush.bf16.msra.mxu0 0
        %4926 = vmatpush.bf16.msra.mxu0 0
        %4927 = vmatpush.bf16.msra.mxu0 0
        %4928 = vmatpush.bf16.msra.mxu0 0
        %4929 = vmatpush.bf16.msra.mxu0 0
        %4930 = vmatpush.bf16.msra.mxu0 %v4870
        %4931 = vmatmul.bf16.gmra.mxu0 %v4858
        %v4932 = vpop.f32.mrf.mxu0
        %v4933 = vadd.f32 0.0, %v4932
        %v4934 = vpop.f32.mrf.mxu0
        %4935 = vdwg.mxu0
        %4936 = vmatpush.bf16.msra.mxu0 0
        %4937 = vmatpush.bf16.msra.mxu0 0
        %4938 = vmatpush.bf16.msra.mxu0 0
        %4939 = vmatpush.bf16.msra.mxu0 0
        %4940 = vmatpush.bf16.msra.mxu0 0
        %4941 = vmatpush.bf16.msra.mxu0 0
        %4942 = vmatpush.bf16.msra.mxu0 0
        %4943 = vmatpush.bf16.msra.mxu0 %v4873
        %4944 = vmatmul.bf16.gmra.mxu0 %v4858
        %v4945 = vpop.f32.mrf.mxu0
        %v4946 = vadd.f32 0.0, %v4945
        %v4947 = vpop.f32.mrf.mxu0
        %4948 = vdwg.mxu0
        %4949 = vmatpush.bf16.msra.mxu0 0
        %4950 = vmatpush.bf16.msra.mxu0 0
        %4951 = vmatpush.bf16.msra.mxu0 0
        %4952 = vmatpush.bf16.msra.mxu0 0
        %4953 = vmatpush.bf16.msra.mxu0 0
        %4954 = vmatpush.bf16.msra.mxu0 0
        %4955 = vmatpush.bf16.msra.mxu0 0
        %4956 = vmatpush.bf16.msra.mxu0 %v4876
        %4957 = vmatmul.bf16.gmra.mxu0 %v4858
        %v4958 = vpop.f32.mrf.mxu0
        %v4959 = vadd.f32 0.0, %v4958
        %v4960 = vpop.f32.mrf.mxu0
        %4961 = vdwg.mxu0
        %4962 = vmatpush.bf16.msra.mxu0 0
        %4963 = vmatpush.bf16.msra.mxu0 0
        %4964 = vmatpush.bf16.msra.mxu0 0
        %4965 = vmatpush.bf16.msra.mxu0 0
        %4966 = vmatpush.bf16.msra.mxu0 0
        %4967 = vmatpush.bf16.msra.mxu0 0
        %4968 = vmatpush.bf16.msra.mxu0 0
        %4969 = vmatpush.bf16.msra.mxu0 %v4879
        %4970 = vmatmul.bf16.gmra.mxu0 %v4858
        %v4971 = vpop.f32.mrf.mxu0
        %v4972 = vadd.f32 0.0, %v4971
        %v4973 = vpop.f32.mrf.mxu0
        %4974 = vdwg.mxu0
        %4975 = vmatpush.bf16.msra.mxu0 0
        %4976 = vmatpush.bf16.msra.mxu0 0
        %4977 = vmatpush.bf16.msra.mxu0 0
        %4978 = vmatpush.bf16.msra.mxu0 0
        %4979 = vmatpush.bf16.msra.mxu0 0
        %4980 = vmatpush.bf16.msra.mxu0 0
        %4981 = vmatpush.bf16.msra.mxu0 0
        %4982 = vmatpush.bf16.msra.mxu0 %v4882
        %4983 = vmatmul.bf16.gmra.mxu0 %v4858
        %v4984 = vpop.f32.mrf.mxu0
        %v4985 = vadd.f32 0.0, %v4984
        %v4986 = vpop.f32.mrf.mxu0
        %4987 = vdwg.mxu0
        %v4988 = vadd.f32 %v4797, %v4894
        %v4989 = vadd.f32 %v4798, %v4907
        %v4990 = vadd.f32 %v4799, %v4920
        %v4991 = vadd.f32 %v4800, %v4933
        %v4992 = vadd.f32 %v4801, %v4946
        %v4993 = vadd.f32 %v4802, %v4959
        %v4994 = vadd.f32 %v4803, %v4972
        %v4995 = vadd.f32 %v4804, %v4985
        %s4996 = scalar_lea.vmem %s6, 32
        %v4997 = vld [vmem:[%s4996] sm:$0xf]
        %4998 = vrot.lane.b32.xlu0 %v3700, 33
        %v4999 = vpop.permute.xlu0 %4998
        %5000 = vrot.lane.b32.xlu0 %v3701, 33
        %v5001 = vpop.permute.xlu0 %5000
        %5002 = vrot.lane.b32.xlu0 %v3702, 33
        %v5003 = vpop.permute.xlu0 %5002
        %5004 = vrot.lane.b32.xlu0 %v3703, 33
        %v5005 = vpop.permute.xlu0 %5004
        %5006 = vrot.lane.b32.xlu0 %v3704, 33
        %v5007 = vpop.permute.xlu0 %5006
        %5008 = vrot.lane.b32.xlu0 %v3705, 33
        %v5009 = vpop.permute.xlu0 %5008
        %5010 = vrot.lane.b32.xlu0 %v3706, 33
        %v5011 = vpop.permute.xlu0 %5010
        %5012 = vrot.lane.b32.xlu0 %v3707, 33
        %v5013 = vpop.permute.xlu0 %5012
        %vm5014 = vcmask 269312
        %v5015 = vsel %vm5014, %v4999, %v5001
        %v5016 = vsel %vm5014, %v5001, %v5003
        %v5017 = vsel %vm5014, %v5003, %v5005
        %v5018 = vsel %vm5014, %v5005, %v5007
        %v5019 = vsel %vm5014, %v5007, %v5009
        %v5020 = vsel %vm5014, %v5009, %v5011
        %v5021 = vsel %vm5014, %v5011, %v5013
        %v5031 = vmul.f32 %v4342, %v4999
        %v5032 = vmul.f32 %v4343, %v5015
        %v5033 = vmul.f32 %v4344, %v5016
        %v5034 = vmul.f32 %v4345, %v5017
        %v5035 = vmul.f32 %v4346, %v5018
        %v5036 = vmul.f32 %v4347, %v5019
        %v5037 = vmul.f32 %v4348, %v5020
        %v5038 = vmul.f32 %v4349, %v5021
        %v5039 = vmul.f32 %v4350, %v5013
        %v5040 = vpack.c.bf16 %v5031, %v5031
        %v5041 = vpack.c.bf16 %v5032, %v5032
        %v5042 = vpack.c.bf16 %v5033, %v5033
        %v5043 = vpack.c.bf16 %v5034, %v5034
        %v5044 = vpack.c.bf16 %v5035, %v5035
        %v5045 = vpack.c.bf16 %v5036, %v5036
        %v5046 = vpack.c.bf16 %v5037, %v5037
        %v5047 = vpack.c.bf16 %v5038, %v5038
        %v5048 = vpack.c.bf16 %v5039, %v5039
        %5058 = vrot.lane.b32.xlu0 %v5040, 95
        %v5059 = vpop.permute.xlu0 %5058
        %5060 = vrot.lane.b32.xlu0 %v5041, 95
        %v5061 = vpop.permute.xlu0 %5060
        %5062 = vrot.lane.b32.xlu0 %v5042, 95
        %v5063 = vpop.permute.xlu0 %5062
        %5064 = vrot.lane.b32.xlu0 %v5043, 95
        %v5065 = vpop.permute.xlu0 %5064
        %5066 = vrot.lane.b32.xlu0 %v5044, 95
        %v5067 = vpop.permute.xlu0 %5066
        %5068 = vrot.lane.b32.xlu0 %v5045, 95
        %v5069 = vpop.permute.xlu0 %5068
        %5070 = vrot.lane.b32.xlu0 %v5046, 95
        %v5071 = vpop.permute.xlu0 %5070
        %5072 = vrot.lane.b32.xlu0 %v5047, 95
        %v5073 = vpop.permute.xlu0 %5072
        %5074 = vrot.lane.b32.xlu0 %v5048, 95
        %v5075 = vpop.permute.xlu0 %5074
        %vm5076 = vcmask 777216
        %v5077 = vsel %vm5076, %v5059, %v5061
        %v5078 = vsel %vm5076, %v5061, %v5063
        %v5079 = vsel %vm5076, %v5063, %v5065
        %v5080 = vsel %vm5076, %v5065, %v5067
        %v5081 = vsel %vm5076, %v5067, %v5069
        %v5082 = vsel %vm5076, %v5069, %v5071
        %v5083 = vsel %vm5076, %v5071, %v5073
        %v5084 = vsel %vm5076, %v5073, %v5075
        %v5086 = vsel %vm3335, %v4997, 0
        %v5089 = vsel %vm2917, %v5077, 0
        %v5092 = vsel %vm2917, %v5078, 0
        %v5095 = vsel %vm2917, %v5079, 0
        %v5098 = vsel %vm2917, %v5080, 0
        %v5101 = vsel %vm2917, %v5081, 0
        %v5104 = vsel %vm2917, %v5082, 0
        %v5107 = vsel %vm2917, %v5083, 0
        %v5110 = vsel %vm2917, %v5084, 0
        %5112 = vmatpush.bf16.msra.mxu0 0
        %5113 = vmatpush.bf16.msra.mxu0 0
        %5114 = vmatpush.bf16.msra.mxu0 0
        %5115 = vmatpush.bf16.msra.mxu0 0
        %5116 = vmatpush.bf16.msra.mxu0 0
        %5117 = vmatpush.bf16.msra.mxu0 0
        %5118 = vmatpush.bf16.msra.mxu0 0
        %5119 = vmatpush.bf16.msra.mxu0 %v5089
        %5120 = vmatmul.bf16.gmra.mxu0 %v5086
        %v5121 = vpop.f32.mrf.mxu0
        %v5122 = vadd.f32 0.0, %v5121
        %v5123 = vpop.f32.mrf.mxu0
        %5124 = vdwg.mxu0
        %5125 = vmatpush.bf16.msra.mxu0 0
        %5126 = vmatpush.bf16.msra.mxu0 0
        %5127 = vmatpush.bf16.msra.mxu0 0
        %5128 = vmatpush.bf16.msra.mxu0 0
        %5129 = vmatpush.bf16.msra.mxu0 0
        %5130 = vmatpush.bf16.msra.mxu0 0
        %5131 = vmatpush.bf16.msra.mxu0 0
        %5132 = vmatpush.bf16.msra.mxu0 %v5092
        %5133 = vmatmul.bf16.gmra.mxu0 %v5086
        %v5134 = vpop.f32.mrf.mxu0
        %v5135 = vadd.f32 0.0, %v5134
        %v5136 = vpop.f32.mrf.mxu0
        %5137 = vdwg.mxu0
        %5138 = vmatpush.bf16.msra.mxu0 0
        %5139 = vmatpush.bf16.msra.mxu0 0
        %5140 = vmatpush.bf16.msra.mxu0 0
        %5141 = vmatpush.bf16.msra.mxu0 0
        %5142 = vmatpush.bf16.msra.mxu0 0
        %5143 = vmatpush.bf16.msra.mxu0 0
        %5144 = vmatpush.bf16.msra.mxu0 0
        %5145 = vmatpush.bf16.msra.mxu0 %v5095
        %5146 = vmatmul.bf16.gmra.mxu0 %v5086
        %v5147 = vpop.f32.mrf.mxu0
        %v5148 = vadd.f32 0.0, %v5147
        %v5149 = vpop.f32.mrf.mxu0
        %5150 = vdwg.mxu0
        %5151 = vmatpush.bf16.msra.mxu0 0
        %5152 = vmatpush.bf16.msra.mxu0 0
        %5153 = vmatpush.bf16.msra.mxu0 0
        %5154 = vmatpush.bf16.msra.mxu0 0
        %5155 = vmatpush.bf16.msra.mxu0 0
        %5156 = vmatpush.bf16.msra.mxu0 0
        %5157 = vmatpush.bf16.msra.mxu0 0
        %5158 = vmatpush.bf16.msra.mxu0 %v5098
        %5159 = vmatmul.bf16.gmra.mxu0 %v5086
        %v5160 = vpop.f32.mrf.mxu0
        %v5161 = vadd.f32 0.0, %v5160
        %v5162 = vpop.f32.mrf.mxu0
        %5163 = vdwg.mxu0
        %5164 = vmatpush.bf16.msra.mxu0 0
        %5165 = vmatpush.bf16.msra.mxu0 0
        %5166 = vmatpush.bf16.msra.mxu0 0
        %5167 = vmatpush.bf16.msra.mxu0 0
        %5168 = vmatpush.bf16.msra.mxu0 0
        %5169 = vmatpush.bf16.msra.mxu0 0
        %5170 = vmatpush.bf16.msra.mxu0 0
        %5171 = vmatpush.bf16.msra.mxu0 %v5101
        %5172 = vmatmul.bf16.gmra.mxu0 %v5086
        %v5173 = vpop.f32.mrf.mxu0
        %v5174 = vadd.f32 0.0, %v5173
        %v5175 = vpop.f32.mrf.mxu0
        %5176 = vdwg.mxu0
        %5177 = vmatpush.bf16.msra.mxu0 0
        %5178 = vmatpush.bf16.msra.mxu0 0
        %5179 = vmatpush.bf16.msra.mxu0 0
        %5180 = vmatpush.bf16.msra.mxu0 0
        %5181 = vmatpush.bf16.msra.mxu0 0
        %5182 = vmatpush.bf16.msra.mxu0 0
        %5183 = vmatpush.bf16.msra.mxu0 0
        %5184 = vmatpush.bf16.msra.mxu0 %v5104
        %5185 = vmatmul.bf16.gmra.mxu0 %v5086
        %v5186 = vpop.f32.mrf.mxu0
        %v5187 = vadd.f32 0.0, %v5186
        %v5188 = vpop.f32.mrf.mxu0
        %5189 = vdwg.mxu0
        %5190 = vmatpush.bf16.msra.mxu0 0
        %5191 = vmatpush.bf16.msra.mxu0 0
        %5192 = vmatpush.bf16.msra.mxu0 0
        %5193 = vmatpush.bf16.msra.mxu0 0
        %5194 = vmatpush.bf16.msra.mxu0 0
        %5195 = vmatpush.bf16.msra.mxu0 0
        %5196 = vmatpush.bf16.msra.mxu0 0
        %5197 = vmatpush.bf16.msra.mxu0 %v5107
        %5198 = vmatmul.bf16.gmra.mxu0 %v5086
        %v5199 = vpop.f32.mrf.mxu0
        %v5200 = vadd.f32 0.0, %v5199
        %v5201 = vpop.f32.mrf.mxu0
        %5202 = vdwg.mxu0
        %5203 = vmatpush.bf16.msra.mxu0 0
        %5204 = vmatpush.bf16.msra.mxu0 0
        %5205 = vmatpush.bf16.msra.mxu0 0
        %5206 = vmatpush.bf16.msra.mxu0 0
        %5207 = vmatpush.bf16.msra.mxu0 0
        %5208 = vmatpush.bf16.msra.mxu0 0
        %5209 = vmatpush.bf16.msra.mxu0 0
        %5210 = vmatpush.bf16.msra.mxu0 %v5110
        %5211 = vmatmul.bf16.gmra.mxu0 %v5086
        %v5212 = vpop.f32.mrf.mxu0
        %v5213 = vadd.f32 0.0, %v5212
        %v5214 = vpop.f32.mrf.mxu0
        %5215 = vdwg.mxu0
        %v5216 = vadd.f32 %v4988, %v5122
        %v5217 = vadd.f32 %v4989, %v5135
        %v5218 = vadd.f32 %v4990, %v5148
        %v5219 = vadd.f32 %v4991, %v5161
        %v5220 = vadd.f32 %v4992, %v5174
        %v5221 = vadd.f32 %v4993, %v5187
        %v5222 = vadd.f32 %v4994, %v5200
        %v5223 = vadd.f32 %v4995, %v5213
        %v5224 = vld [vmem:[%s7] sm:$0xff]
        %5226 = vset.pattern.permute.xlu0 0
        %5227 = vperm.xlu0 %5226, %v5224
        %v5228 = vpop.permute.xlu0 %5227
        %v5230 = vadd.f32 %v5216, %v5228
        %v5231 = vadd.f32 %v5217, %v5228
        %v5232 = vadd.f32 %v5218, %v5228
        %v5233 = vadd.f32 %v5219, %v5228
        %v5234 = vadd.f32 %v5220, %v5228
        %v5235 = vadd.f32 %v5221, %v5228
        %v5236 = vadd.f32 %v5222, %v5228
        %v5237 = vadd.f32 %v5223, %v5228
        %v5238 = vpack.c.bf16 %v5231, %v5230
        %v5239 = vpack.c.bf16 %v5233, %v5232
        %v5240 = vpack.c.bf16 %v5235, %v5234
        %v5241 = vpack.c.bf16 %v5237, %v5236
        %5242 = vst [vmem:[#allocation3 + $0x4] sm:$0xff] %v5238
        %5243 = vst [vmem:[#allocation3 + $0xc] sm:$0xff] %v5239
        %5244 = vst [vmem:[#allocation3 + $0x14] sm:$0xff] %v5240
        %5245 = vst [vmem:[#allocation3 + $0x1c] sm:$0xff] %v5241
        %v5246 = vld [vmem:[%s8] sm:$0x3]
        %v5247 = vld [vmem:[#allocation3] sm:$0xff]
        %v5248 = vld [vmem:[#allocation3 + $0x8] sm:$0xff]
        %v5249 = vld [vmem:[#allocation3 + $0x10] sm:$0xff]
        %v5250 = vld [vmem:[#allocation3 + $0x18] sm:$0xff]
        %v5251 = vld [vmem:[#allocation3 + $0x20] sm:$0xf]
        %v5252 = vld [vmem:[%s3] sm:$0x11]
        %v5253 = vld [vmem:[%s3 + $0x8] sm:$0x11]
        %v5254 = vld [vmem:[%s3 + $0x10] sm:$0x11]
        %v5255 = vld [vmem:[%s3 + $0x18] sm:$0x11]
        %v5260 = vunpack.c.l.b16 %v5252
        %v5261 = vunpack.c.h.b16 %v5252
        %v5262 = vunpack.c.l.b16 %v5253
        %v5263 = vunpack.c.h.b16 %v5253
        %v5264 = vunpack.c.l.b16 %v5254
        %v5265 = vunpack.c.h.b16 %v5254
        %v5266 = vunpack.c.l.b16 %v5255
        %v5267 = vunpack.c.h.b16 %v5255
        %v5268 = vpack.c.b16 %v5260, %v5260
        %v5269 = vpack.c.b16 %v5261, %v5261
        %v5270 = vpack.c.b16 %v5262, %v5262
        %v5271 = vpack.c.b16 %v5263, %v5263
        %v5272 = vpack.c.b16 %v5264, %v5264
        %v5273 = vpack.c.b16 %v5265, %v5265
        %v5274 = vpack.c.b16 %v5266, %v5266
        %v5275 = vpack.c.b16 %v5267, %v5267
        %v5277 = vshrl.u32 %v5268, 16
        %v5278 = vpack.i.b16 %v5277, %v5277
        %v5280 = vperm.slane %v5278, 0
        %v5282 = vshrl.u32 %v5269, 16
        %v5283 = vpack.i.b16 %v5282, %v5282
        %v5285 = vperm.slane %v5283, 0
        %v5287 = vshrl.u32 %v5270, 16
        %v5288 = vpack.i.b16 %v5287, %v5287
        %v5290 = vperm.slane %v5288, 0
        %v5292 = vshrl.u32 %v5271, 16
        %v5293 = vpack.i.b16 %v5292, %v5292
        %v5295 = vperm.slane %v5293, 0
        %v5297 = vshrl.u32 %v5272, 16
        %v5298 = vpack.i.b16 %v5297, %v5297
        %v5300 = vperm.slane %v5298, 0
        %v5302 = vshrl.u32 %v5273, 16
        %v5303 = vpack.i.b16 %v5302, %v5302
        %v5305 = vperm.slane %v5303, 0
        %v5307 = vshrl.u32 %v5274, 16
        %v5308 = vpack.i.b16 %v5307, %v5307
        %v5310 = vperm.slane %v5308, 0
        %v5312 = vshrl.u32 %v5275, 16
        %v5313 = vpack.i.b16 %v5312, %v5312
        %v5315 = vperm.slane %v5313, 0
        %v5316 = vunpack.c.l.bf16 %v5247
        %v5317 = vunpack.c.h.bf16 %v5247
        %v5318 = vunpack.c.l.bf16 %v5248
        %v5319 = vunpack.c.h.bf16 %v5248
        %v5320 = vunpack.c.l.bf16 %v5249
        %v5321 = vunpack.c.h.bf16 %v5249
        %v5322 = vunpack.c.l.bf16 %v5250
        %v5323 = vunpack.c.h.bf16 %v5250
        %v5324 = vunpack.c.l.bf16 %v5251
        %v5325 = vunpack.c.l.bf16 %v5280
        %v5326 = vunpack.c.l.bf16 %v5285
        %v5327 = vunpack.c.l.bf16 %v5290
        %v5328 = vunpack.c.l.bf16 %v5295
        %v5329 = vunpack.c.l.bf16 %v5300
        %v5330 = vunpack.c.l.bf16 %v5305
        %v5331 = vunpack.c.l.bf16 %v5310
        %v5332 = vunpack.c.l.bf16 %v5315
        %5341 = vrot.lane.b32.xlu0 %v5325, 95
        %v5342 = vpop.permute.xlu0 %5341
        %5343 = vrot.lane.b32.xlu0 %v5326, 95
        %v5344 = vpop.permute.xlu0 %5343
        %5345 = vrot.lane.b32.xlu0 %v5327, 95
        %v5346 = vpop.permute.xlu0 %5345
        %5347 = vrot.lane.b32.xlu0 %v5328, 95
        %v5348 = vpop.permute.xlu0 %5347
        %5349 = vrot.lane.b32.xlu0 %v5329, 95
        %v5350 = vpop.permute.xlu0 %5349
        %5351 = vrot.lane.b32.xlu0 %v5330, 95
        %v5352 = vpop.permute.xlu0 %5351
        %5353 = vrot.lane.b32.xlu0 %v5331, 95
        %v5354 = vpop.permute.xlu0 %5353
        %5355 = vrot.lane.b32.xlu0 %v5332, 95
        %v5356 = vpop.permute.xlu0 %5355
        %v5357 = vsel %vm3248, %v5342, %v5344
        %v5358 = vsel %vm3248, %v5344, %v5346
        %v5359 = vsel %vm3248, %v5346, %v5348
        %v5360 = vsel %vm3248, %v5348, %v5350
        %v5361 = vsel %vm3248, %v5350, %v5352
        %v5362 = vsel %vm3248, %v5352, %v5354
        %v5363 = vsel %vm3248, %v5354, %v5356
        %v5373 = vmul.f32 %v5316, %v5342
        %v5374 = vmul.f32 %v5317, %v5357
        %v5375 = vmul.f32 %v5318, %v5358
        %v5376 = vmul.f32 %v5319, %v5359
        %v5377 = vmul.f32 %v5320, %v5360
        %v5378 = vmul.f32 %v5321, %v5361
        %v5379 = vmul.f32 %v5322, %v5362
        %v5380 = vmul.f32 %v5323, %v5363
        %v5381 = vmul.f32 %v5324, %v5356
        %v5382 = vpack.c.bf16 %v5373, %v5373
        %v5383 = vpack.c.bf16 %v5374, %v5374
        %v5384 = vpack.c.bf16 %v5375, %v5375
        %v5385 = vpack.c.bf16 %v5376, %v5376
        %v5386 = vpack.c.bf16 %v5377, %v5377
        %v5387 = vpack.c.bf16 %v5378, %v5378
        %v5388 = vpack.c.bf16 %v5379, %v5379
        %v5389 = vpack.c.bf16 %v5380, %v5380
        %v5390 = vpack.c.bf16 %v5381, %v5381
        %s5391 = scalar_lea.vmem %s8, 2
        %v5392 = vld [vmem:[%s5391] sm:$0x3]
        %v5398 = vunpack.c.l.b16 %v5247
        %v5399 = vunpack.c.h.b16 %v5247
        %v5400 = vunpack.c.l.b16 %v5248
        %v5401 = vunpack.c.h.b16 %v5248
        %v5402 = vunpack.c.l.b16 %v5249
        %v5403 = vunpack.c.h.b16 %v5249
        %v5404 = vunpack.c.l.b16 %v5250
        %v5405 = vunpack.c.h.b16 %v5250
        %v5406 = vunpack.c.l.b16 %v5251
        %v5407 = vpack.c.b16 %v5398, %v5398
        %v5408 = vpack.c.b16 %v5399, %v5399
        %v5409 = vpack.c.b16 %v5400, %v5400
        %v5410 = vpack.c.b16 %v5401, %v5401
        %v5411 = vpack.c.b16 %v5402, %v5402
        %v5412 = vpack.c.b16 %v5403, %v5403
        %v5413 = vpack.c.b16 %v5404, %v5404
        %v5414 = vpack.c.b16 %v5405, %v5405
        %v5415 = vpack.c.b16 %v5406, %v5406
        %5416 = vrot.lane.b32.xlu0 %v5407, 32
        %v5417 = vpop.permute.xlu0 %5416
        %5418 = vrot.lane.b32.xlu0 %v5408, 32
        %v5419 = vpop.permute.xlu0 %5418
        %5420 = vrot.lane.b32.xlu0 %v5409, 32
        %v5421 = vpop.permute.xlu0 %5420
        %5422 = vrot.lane.b32.xlu0 %v5410, 32
        %v5423 = vpop.permute.xlu0 %5422
        %5424 = vrot.lane.b32.xlu0 %v5411, 32
        %v5425 = vpop.permute.xlu0 %5424
        %5426 = vrot.lane.b32.xlu0 %v5412, 32
        %v5427 = vpop.permute.xlu0 %5426
        %5428 = vrot.lane.b32.xlu0 %v5413, 32
        %v5429 = vpop.permute.xlu0 %5428
        %5430 = vrot.lane.b32.xlu0 %v5414, 32
        %v5431 = vpop.permute.xlu0 %5430
        %5432 = vrot.lane.b32.xlu0 %v5415, 32
        %v5433 = vpop.permute.xlu0 %5432
        %v5434 = vsel %vm3326, %v5417, %v5419
        %v5435 = vsel %vm3326, %v5419, %v5421
        %v5436 = vsel %vm3326, %v5421, %v5423
        %v5437 = vsel %vm3326, %v5423, %v5425
        %v5438 = vsel %vm3326, %v5425, %v5427
        %v5439 = vsel %vm3326, %v5427, %v5429
        %v5440 = vsel %vm3326, %v5429, %v5431
        %v5441 = vsel %vm3326, %v5431, %v5433
        %v5443 = vsel %vm3335, %v5392, 0
        %v5446 = vsel %vm2917, %v5434, 0
        %v5449 = vsel %vm2917, %v5435, 0
        %v5452 = vsel %vm2917, %v5436, 0
        %v5455 = vsel %vm2917, %v5437, 0
        %v5458 = vsel %vm2917, %v5438, 0
        %v5461 = vsel %vm2917, %v5439, 0
        %v5464 = vsel %vm2917, %v5440, 0
        %v5467 = vsel %vm2917, %v5441, 0
        %5469 = vmatpush.bf16.msra.mxu0 0
        %5470 = vmatpush.bf16.msra.mxu0 0
        %5471 = vmatpush.bf16.msra.mxu0 0
        %5472 = vmatpush.bf16.msra.mxu0 0
        %5473 = vmatpush.bf16.msra.mxu0 0
        %5474 = vmatpush.bf16.msra.mxu0 0
        %5475 = vmatpush.bf16.msra.mxu0 0
        %5476 = vmatpush.bf16.msra.mxu0 %v5446
        %5477 = vmatmul.bf16.gmra.mxu0 %v5443
        %v5478 = vpop.f32.mrf.mxu0
        %v5479 = vadd.f32 0.0, %v5478
        %v5480 = vpop.f32.mrf.mxu0
        %5481 = vdwg.mxu0
        %5482 = vmatpush.bf16.msra.mxu0 0
        %5483 = vmatpush.bf16.msra.mxu0 0
        %5484 = vmatpush.bf16.msra.mxu0 0
        %5485 = vmatpush.bf16.msra.mxu0 0
        %5486 = vmatpush.bf16.msra.mxu0 0
        %5487 = vmatpush.bf16.msra.mxu0 0
        %5488 = vmatpush.bf16.msra.mxu0 0
        %5489 = vmatpush.bf16.msra.mxu0 %v5449
        %5490 = vmatmul.bf16.gmra.mxu0 %v5443
        %v5491 = vpop.f32.mrf.mxu0
        %v5492 = vadd.f32 0.0, %v5491
        %v5493 = vpop.f32.mrf.mxu0
        %5494 = vdwg.mxu0
        %5495 = vmatpush.bf16.msra.mxu0 0
        %5496 = vmatpush.bf16.msra.mxu0 0
        %5497 = vmatpush.bf16.msra.mxu0 0
        %5498 = vmatpush.bf16.msra.mxu0 0
        %5499 = vmatpush.bf16.msra.mxu0 0
        %5500 = vmatpush.bf16.msra.mxu0 0
        %5501 = vmatpush.bf16.msra.mxu0 0
        %5502 = vmatpush.bf16.msra.mxu0 %v5452
        %5503 = vmatmul.bf16.gmra.mxu0 %v5443
        %v5504 = vpop.f32.mrf.mxu0
        %v5505 = vadd.f32 0.0, %v5504
        %v5506 = vpop.f32.mrf.mxu0
        %5507 = vdwg.mxu0
        %5508 = vmatpush.bf16.msra.mxu0 0
        %5509 = vmatpush.bf16.msra.mxu0 0
        %5510 = vmatpush.bf16.msra.mxu0 0
        %5511 = vmatpush.bf16.msra.mxu0 0
        %5512 = vmatpush.bf16.msra.mxu0 0
        %5513 = vmatpush.bf16.msra.mxu0 0
        %5514 = vmatpush.bf16.msra.mxu0 0
        %5515 = vmatpush.bf16.msra.mxu0 %v5455
        %5516 = vmatmul.bf16.gmra.mxu0 %v5443
        %v5517 = vpop.f32.mrf.mxu0
        %v5518 = vadd.f32 0.0, %v5517
        %v5519 = vpop.f32.mrf.mxu0
        %5520 = vdwg.mxu0
        %5521 = vmatpush.bf16.msra.mxu0 0
        %5522 = vmatpush.bf16.msra.mxu0 0
        %5523 = vmatpush.bf16.msra.mxu0 0
        %5524 = vmatpush.bf16.msra.mxu0 0
        %5525 = vmatpush.bf16.msra.mxu0 0
        %5526 = vmatpush.bf16.msra.mxu0 0
        %5527 = vmatpush.bf16.msra.mxu0 0
        %5528 = vmatpush.bf16.msra.mxu0 %v5458
        %5529 = vmatmul.bf16.gmra.mxu0 %v5443
        %v5530 = vpop.f32.mrf.mxu0
        %v5531 = vadd.f32 0.0, %v5530
        %v5532 = vpop.f32.mrf.mxu0
        %5533 = vdwg.mxu0
        %5534 = vmatpush.bf16.msra.mxu0 0
        %5535 = vmatpush.bf16.msra.mxu0 0
        %5536 = vmatpush.bf16.msra.mxu0 0
        %5537 = vmatpush.bf16.msra.mxu0 0
        %5538 = vmatpush.bf16.msra.mxu0 0
        %5539 = vmatpush.bf16.msra.mxu0 0
        %5540 = vmatpush.bf16.msra.mxu0 0
        %5541 = vmatpush.bf16.msra.mxu0 %v5461
        %5542 = vmatmul.bf16.gmra.mxu0 %v5443
        %v5543 = vpop.f32.mrf.mxu0
        %v5544 = vadd.f32 0.0, %v5543
        %v5545 = vpop.f32.mrf.mxu0
        %5546 = vdwg.mxu0
        %5547 = vmatpush.bf16.msra.mxu0 0
        %5548 = vmatpush.bf16.msra.mxu0 0
        %5549 = vmatpush.bf16.msra.mxu0 0
        %5550 = vmatpush.bf16.msra.mxu0 0
        %5551 = vmatpush.bf16.msra.mxu0 0
        %5552 = vmatpush.bf16.msra.mxu0 0
        %5553 = vmatpush.bf16.msra.mxu0 0
        %5554 = vmatpush.bf16.msra.mxu0 %v5464
        %5555 = vmatmul.bf16.gmra.mxu0 %v5443
        %v5556 = vpop.f32.mrf.mxu0
        %v5557 = vadd.f32 0.0, %v5556
        %v5558 = vpop.f32.mrf.mxu0
        %5559 = vdwg.mxu0
        %5560 = vmatpush.bf16.msra.mxu0 0
        %5561 = vmatpush.bf16.msra.mxu0 0
        %5562 = vmatpush.bf16.msra.mxu0 0
        %5563 = vmatpush.bf16.msra.mxu0 0
        %5564 = vmatpush.bf16.msra.mxu0 0
        %5565 = vmatpush.bf16.msra.mxu0 0
        %5566 = vmatpush.bf16.msra.mxu0 0
        %5567 = vmatpush.bf16.msra.mxu0 %v5467
        %5568 = vmatmul.bf16.gmra.mxu0 %v5443
        %v5569 = vpop.f32.mrf.mxu0
        %v5570 = vadd.f32 0.0, %v5569
        %v5571 = vpop.f32.mrf.mxu0
        %5572 = vdwg.mxu0
        %5582 = vrot.lane.b32.xlu0 %v5382, 33
        %v5583 = vpop.permute.xlu0 %5582
        %5584 = vrot.lane.b32.xlu0 %v5383, 33
        %v5585 = vpop.permute.xlu0 %5584
        %5586 = vrot.lane.b32.xlu0 %v5384, 33
        %v5587 = vpop.permute.xlu0 %5586
        %5588 = vrot.lane.b32.xlu0 %v5385, 33
        %v5589 = vpop.permute.xlu0 %5588
        %5590 = vrot.lane.b32.xlu0 %v5386, 33
        %v5591 = vpop.permute.xlu0 %5590
        %5592 = vrot.lane.b32.xlu0 %v5387, 33
        %v5593 = vpop.permute.xlu0 %5592
        %5594 = vrot.lane.b32.xlu0 %v5388, 33
        %v5595 = vpop.permute.xlu0 %5594
        %5596 = vrot.lane.b32.xlu0 %v5389, 33
        %v5597 = vpop.permute.xlu0 %5596
        %5598 = vrot.lane.b32.xlu0 %v5390, 33
        %v5599 = vpop.permute.xlu0 %5598
        %v5600 = vsel %vm3494, %v5583, %v5585
        %v5601 = vsel %vm3494, %v5585, %v5587
        %v5602 = vsel %vm3494, %v5587, %v5589
        %v5603 = vsel %vm3494, %v5589, %v5591
        %v5604 = vsel %vm3494, %v5591, %v5593
        %v5605 = vsel %vm3494, %v5593, %v5595
        %v5606 = vsel %vm3494, %v5595, %v5597
        %v5607 = vsel %vm3494, %v5597, %v5599
        %v5609 = vsel %vm3335, %v5246, 0
        %v5612 = vsel %vm2917, %v5600, 0
        %v5615 = vsel %vm2917, %v5601, 0
        %v5618 = vsel %vm2917, %v5602, 0
        %v5621 = vsel %vm2917, %v5603, 0
        %v5624 = vsel %vm2917, %v5604, 0
        %v5627 = vsel %vm2917, %v5605, 0
        %v5630 = vsel %vm2917, %v5606, 0
        %v5633 = vsel %vm2917, %v5607, 0
        %5635 = vmatpush.bf16.msra.mxu0 0
        %5636 = vmatpush.bf16.msra.mxu0 0
        %5637 = vmatpush.bf16.msra.mxu0 0
        %5638 = vmatpush.bf16.msra.mxu0 0
        %5639 = vmatpush.bf16.msra.mxu0 0
        %5640 = vmatpush.bf16.msra.mxu0 0
        %5641 = vmatpush.bf16.msra.mxu0 0
        %5642 = vmatpush.bf16.msra.mxu0 %v5612
        %5643 = vmatmul.bf16.gmra.mxu0 %v5609
        %v5644 = vpop.f32.mrf.mxu0
        %v5645 = vadd.f32 %v5479, %v5644
        %v5646 = vpop.f32.mrf.mxu0
        %5647 = vdwg.mxu0
        %5648 = vmatpush.bf16.msra.mxu0 0
        %5649 = vmatpush.bf16.msra.mxu0 0
        %5650 = vmatpush.bf16.msra.mxu0 0
        %5651 = vmatpush.bf16.msra.mxu0 0
        %5652 = vmatpush.bf16.msra.mxu0 0
        %5653 = vmatpush.bf16.msra.mxu0 0
        %5654 = vmatpush.bf16.msra.mxu0 0
        %5655 = vmatpush.bf16.msra.mxu0 %v5615
        %5656 = vmatmul.bf16.gmra.mxu0 %v5609
        %v5657 = vpop.f32.mrf.mxu0
        %v5658 = vadd.f32 %v5492, %v5657
        %v5659 = vpop.f32.mrf.mxu0
        %5660 = vdwg.mxu0
        %5661 = vmatpush.bf16.msra.mxu0 0
        %5662 = vmatpush.bf16.msra.mxu0 0
        %5663 = vmatpush.bf16.msra.mxu0 0
        %5664 = vmatpush.bf16.msra.mxu0 0
        %5665 = vmatpush.bf16.msra.mxu0 0
        %5666 = vmatpush.bf16.msra.mxu0 0
        %5667 = vmatpush.bf16.msra.mxu0 0
        %5668 = vmatpush.bf16.msra.mxu0 %v5618
        %5669 = vmatmul.bf16.gmra.mxu0 %v5609
        %v5670 = vpop.f32.mrf.mxu0
        %v5671 = vadd.f32 %v5505, %v5670
        %v5672 = vpop.f32.mrf.mxu0
        %5673 = vdwg.mxu0
        %5674 = vmatpush.bf16.msra.mxu0 0
        %5675 = vmatpush.bf16.msra.mxu0 0
        %5676 = vmatpush.bf16.msra.mxu0 0
        %5677 = vmatpush.bf16.msra.mxu0 0
        %5678 = vmatpush.bf16.msra.mxu0 0
        %5679 = vmatpush.bf16.msra.mxu0 0
        %5680 = vmatpush.bf16.msra.mxu0 0
        %5681 = vmatpush.bf16.msra.mxu0 %v5621
        %5682 = vmatmul.bf16.gmra.mxu0 %v5609
        %v5683 = vpop.f32.mrf.mxu0
        %v5684 = vadd.f32 %v5518, %v5683
        %v5685 = vpop.f32.mrf.mxu0
        %5686 = vdwg.mxu0
        %5687 = vmatpush.bf16.msra.mxu0 0
        %5688 = vmatpush.bf16.msra.mxu0 0
        %5689 = vmatpush.bf16.msra.mxu0 0
        %5690 = vmatpush.bf16.msra.mxu0 0
        %5691 = vmatpush.bf16.msra.mxu0 0
        %5692 = vmatpush.bf16.msra.mxu0 0
        %5693 = vmatpush.bf16.msra.mxu0 0
        %5694 = vmatpush.bf16.msra.mxu0 %v5624
        %5695 = vmatmul.bf16.gmra.mxu0 %v5609
        %v5696 = vpop.f32.mrf.mxu0
        %v5697 = vadd.f32 %v5531, %v5696
        %v5698 = vpop.f32.mrf.mxu0
        %5699 = vdwg.mxu0
        %5700 = vmatpush.bf16.msra.mxu0 0
        %5701 = vmatpush.bf16.msra.mxu0 0
        %5702 = vmatpush.bf16.msra.mxu0 0
        %5703 = vmatpush.bf16.msra.mxu0 0
        %5704 = vmatpush.bf16.msra.mxu0 0
        %5705 = vmatpush.bf16.msra.mxu0 0
        %5706 = vmatpush.bf16.msra.mxu0 0
        %5707 = vmatpush.bf16.msra.mxu0 %v5627
        %5708 = vmatmul.bf16.gmra.mxu0 %v5609
        %v5709 = vpop.f32.mrf.mxu0
        %v5710 = vadd.f32 %v5544, %v5709
        %v5711 = vpop.f32.mrf.mxu0
        %5712 = vdwg.mxu0
        %5713 = vmatpush.bf16.msra.mxu0 0
        %5714 = vmatpush.bf16.msra.mxu0 0
        %5715 = vmatpush.bf16.msra.mxu0 0
        %5716 = vmatpush.bf16.msra.mxu0 0
        %5717 = vmatpush.bf16.msra.mxu0 0
        %5718 = vmatpush.bf16.msra.mxu0 0
        %5719 = vmatpush.bf16.msra.mxu0 0
        %5720 = vmatpush.bf16.msra.mxu0 %v5630
        %5721 = vmatmul.bf16.gmra.mxu0 %v5609
        %v5722 = vpop.f32.mrf.mxu0
        %v5723 = vadd.f32 %v5557, %v5722
        %v5724 = vpop.f32.mrf.mxu0
        %5725 = vdwg.mxu0
        %5726 = vmatpush.bf16.msra.mxu0 0
        %5727 = vmatpush.bf16.msra.mxu0 0
        %5728 = vmatpush.bf16.msra.mxu0 0
        %5729 = vmatpush.bf16.msra.mxu0 0
        %5730 = vmatpush.bf16.msra.mxu0 0
        %5731 = vmatpush.bf16.msra.mxu0 0
        %5732 = vmatpush.bf16.msra.mxu0 0
        %5733 = vmatpush.bf16.msra.mxu0 %v5633
        %5734 = vmatmul.bf16.gmra.mxu0 %v5609
        %v5735 = vpop.f32.mrf.mxu0
        %v5736 = vadd.f32 %v5570, %v5735
        %v5737 = vpop.f32.mrf.mxu0
        %5738 = vdwg.mxu0
        %s5739 = scalar_lea.vmem %s8, 4
        %v5740 = vld [vmem:[%s5739] sm:$0x3]
        %v5741 = vld [vmem:[%s3] sm:$0x22]
        %v5742 = vld [vmem:[%s3 + $0x8] sm:$0x22]
        %v5743 = vld [vmem:[%s3 + $0x10] sm:$0x22]
        %v5744 = vld [vmem:[%s3 + $0x18] sm:$0x22]
        %v5749 = vunpack.c.l.b16 %v5741
        %v5750 = vunpack.c.h.b16 %v5741
        %v5751 = vunpack.c.l.b16 %v5742
        %v5752 = vunpack.c.h.b16 %v5742
        %v5753 = vunpack.c.l.b16 %v5743
        %v5754 = vunpack.c.h.b16 %v5743
        %v5755 = vunpack.c.l.b16 %v5744
        %v5756 = vunpack.c.h.b16 %v5744
        %v5757 = vpack.c.b16 %v5749, %v5749
        %v5758 = vpack.c.b16 %v5750, %v5750
        %v5759 = vpack.c.b16 %v5751, %v5751
        %v5760 = vpack.c.b16 %v5752, %v5752
        %v5761 = vpack.c.b16 %v5753, %v5753
        %v5762 = vpack.c.b16 %v5754, %v5754
        %v5763 = vpack.c.b16 %v5755, %v5755
        %v5764 = vpack.c.b16 %v5756, %v5756
        %v5766 = vshrl.u32 %v5757, 16
        %v5767 = vpack.i.b16 %v5766, %v5766
        %v5769 = vperm.slane %v5767, 1
        %v5771 = vshrl.u32 %v5758, 16
        %v5772 = vpack.i.b16 %v5771, %v5771
        %v5774 = vperm.slane %v5772, 1
        %v5776 = vshrl.u32 %v5759, 16
        %v5777 = vpack.i.b16 %v5776, %v5776
        %v5779 = vperm.slane %v5777, 1
        %v5781 = vshrl.u32 %v5760, 16
        %v5782 = vpack.i.b16 %v5781, %v5781
        %v5784 = vperm.slane %v5782, 1
        %v5786 = vshrl.u32 %v5761, 16
        %v5787 = vpack.i.b16 %v5786, %v5786
        %v5789 = vperm.slane %v5787, 1
        %v5791 = vshrl.u32 %v5762, 16
        %v5792 = vpack.i.b16 %v5791, %v5791
        %v5794 = vperm.slane %v5792, 1
        %v5796 = vshrl.u32 %v5763, 16
        %v5797 = vpack.i.b16 %v5796, %v5796
        %v5799 = vperm.slane %v5797, 1
        %v5801 = vshrl.u32 %v5764, 16
        %v5802 = vpack.i.b16 %v5801, %v5801
        %v5804 = vperm.slane %v5802, 1
        %v5805 = vunpack.c.l.bf16 %v5769
        %v5806 = vunpack.c.l.bf16 %v5774
        %v5807 = vunpack.c.l.bf16 %v5779
        %v5808 = vunpack.c.l.bf16 %v5784
        %v5809 = vunpack.c.l.bf16 %v5789
        %v5810 = vunpack.c.l.bf16 %v5794
        %v5811 = vunpack.c.l.bf16 %v5799
        %v5812 = vunpack.c.l.bf16 %v5804
        %5821 = vrot.lane.b32.xlu0 %v5805, 97
        %v5822 = vpop.permute.xlu0 %5821
        %5823 = vrot.lane.b32.xlu0 %v5806, 97
        %v5824 = vpop.permute.xlu0 %5823
        %5825 = vrot.lane.b32.xlu0 %v5807, 97
        %v5826 = vpop.permute.xlu0 %5825
        %5827 = vrot.lane.b32.xlu0 %v5808, 97
        %v5828 = vpop.permute.xlu0 %5827
        %5829 = vrot.lane.b32.xlu0 %v5809, 97
        %v5830 = vpop.permute.xlu0 %5829
        %5831 = vrot.lane.b32.xlu0 %v5810, 97
        %v5832 = vpop.permute.xlu0 %5831
        %5833 = vrot.lane.b32.xlu0 %v5811, 97
        %v5834 = vpop.permute.xlu0 %5833
        %5835 = vrot.lane.b32.xlu0 %v5812, 97
        %v5836 = vpop.permute.xlu0 %5835
        %v5837 = vsel %vm3732, %v5822, %v5824
        %v5838 = vsel %vm3732, %v5824, %v5826
        %v5839 = vsel %vm3732, %v5826, %v5828
        %v5840 = vsel %vm3732, %v5828, %v5830
        %v5841 = vsel %vm3732, %v5830, %v5832
        %v5842 = vsel %vm3732, %v5832, %v5834
        %v5843 = vsel %vm3732, %v5834, %v5836
        %v5853 = vmul.f32 %v5316, %v5822
        %v5854 = vmul.f32 %v5317, %v5837
        %v5855 = vmul.f32 %v5318, %v5838
        %v5856 = vmul.f32 %v5319, %v5839
        %v5857 = vmul.f32 %v5320, %v5840
        %v5858 = vmul.f32 %v5321, %v5841
        %v5859 = vmul.f32 %v5322, %v5842
        %v5860 = vmul.f32 %v5323, %v5843
        %v5861 = vmul.f32 %v5324, %v5836
        %v5862 = vpack.c.bf16 %v5853, %v5853
        %v5863 = vpack.c.bf16 %v5854, %v5854
        %v5864 = vpack.c.bf16 %v5855, %v5855
        %v5865 = vpack.c.bf16 %v5856, %v5856
        %v5866 = vpack.c.bf16 %v5857, %v5857
        %v5867 = vpack.c.bf16 %v5858, %v5858
        %v5868 = vpack.c.bf16 %v5859, %v5859
        %v5869 = vpack.c.bf16 %v5860, %v5860
        %v5870 = vpack.c.bf16 %v5861, %v5861
        %5880 = vrot.lane.b32.xlu0 %v5862, 31
        %v5881 = vpop.permute.xlu0 %5880
        %5882 = vrot.lane.b32.xlu0 %v5863, 31
        %v5883 = vpop.permute.xlu0 %5882
        %5884 = vrot.lane.b32.xlu0 %v5864, 31
        %v5885 = vpop.permute.xlu0 %5884
        %5886 = vrot.lane.b32.xlu0 %v5865, 31
        %v5887 = vpop.permute.xlu0 %5886
        %5888 = vrot.lane.b32.xlu0 %v5866, 31
        %v5889 = vpop.permute.xlu0 %5888
        %5890 = vrot.lane.b32.xlu0 %v5867, 31
        %v5891 = vpop.permute.xlu0 %5890
        %5892 = vrot.lane.b32.xlu0 %v5868, 31
        %v5893 = vpop.permute.xlu0 %5892
        %5894 = vrot.lane.b32.xlu0 %v5869, 31
        %v5895 = vpop.permute.xlu0 %5894
        %5896 = vrot.lane.b32.xlu0 %v5870, 31
        %v5897 = vpop.permute.xlu0 %5896
        %v5898 = vsel %vm3794, %v5881, %v5883
        %v5899 = vsel %vm3794, %v5883, %v5885
        %v5900 = vsel %vm3794, %v5885, %v5887
        %v5901 = vsel %vm3794, %v5887, %v5889
        %v5902 = vsel %vm3794, %v5889, %v5891
        %v5903 = vsel %vm3794, %v5891, %v5893
        %v5904 = vsel %vm3794, %v5893, %v5895
        %v5905 = vsel %vm3794, %v5895, %v5897
        %v5907 = vsel %vm3335, %v5740, 0
        %v5910 = vsel %vm2917, %v5898, 0
        %v5913 = vsel %vm2917, %v5899, 0
        %v5916 = vsel %vm2917, %v5900, 0
        %v5919 = vsel %vm2917, %v5901, 0
        %v5922 = vsel %vm2917, %v5902, 0
        %v5925 = vsel %vm2917, %v5903, 0
        %v5928 = vsel %vm2917, %v5904, 0
        %v5931 = vsel %vm2917, %v5905, 0
        %5933 = vmatpush.bf16.msra.mxu0 0
        %5934 = vmatpush.bf16.msra.mxu0 0
        %5935 = vmatpush.bf16.msra.mxu0 0
        %5936 = vmatpush.bf16.msra.mxu0 0
        %5937 = vmatpush.bf16.msra.mxu0 0
        %5938 = vmatpush.bf16.msra.mxu0 0
        %5939 = vmatpush.bf16.msra.mxu0 0
        %5940 = vmatpush.bf16.msra.mxu0 %v5910
        %5941 = vmatmul.bf16.gmra.mxu0 %v5907
        %v5942 = vpop.f32.mrf.mxu0
        %v5943 = vadd.f32 0.0, %v5942
        %v5944 = vpop.f32.mrf.mxu0
        %5945 = vdwg.mxu0
        %5946 = vmatpush.bf16.msra.mxu0 0
        %5947 = vmatpush.bf16.msra.mxu0 0
        %5948 = vmatpush.bf16.msra.mxu0 0
        %5949 = vmatpush.bf16.msra.mxu0 0
        %5950 = vmatpush.bf16.msra.mxu0 0
        %5951 = vmatpush.bf16.msra.mxu0 0
        %5952 = vmatpush.bf16.msra.mxu0 0
        %5953 = vmatpush.bf16.msra.mxu0 %v5913
        %5954 = vmatmul.bf16.gmra.mxu0 %v5907
        %v5955 = vpop.f32.mrf.mxu0
        %v5956 = vadd.f32 0.0, %v5955
        %v5957 = vpop.f32.mrf.mxu0
        %5958 = vdwg.mxu0
        %5959 = vmatpush.bf16.msra.mxu0 0
        %5960 = vmatpush.bf16.msra.mxu0 0
        %5961 = vmatpush.bf16.msra.mxu0 0
        %5962 = vmatpush.bf16.msra.mxu0 0
        %5963 = vmatpush.bf16.msra.mxu0 0
        %5964 = vmatpush.bf16.msra.mxu0 0
        %5965 = vmatpush.bf16.msra.mxu0 0
        %5966 = vmatpush.bf16.msra.mxu0 %v5916
        %5967 = vmatmul.bf16.gmra.mxu0 %v5907
        %v5968 = vpop.f32.mrf.mxu0
        %v5969 = vadd.f32 0.0, %v5968
        %v5970 = vpop.f32.mrf.mxu0
        %5971 = vdwg.mxu0
        %5972 = vmatpush.bf16.msra.mxu0 0
        %5973 = vmatpush.bf16.msra.mxu0 0
        %5974 = vmatpush.bf16.msra.mxu0 0
        %5975 = vmatpush.bf16.msra.mxu0 0
        %5976 = vmatpush.bf16.msra.mxu0 0
        %5977 = vmatpush.bf16.msra.mxu0 0
        %5978 = vmatpush.bf16.msra.mxu0 0
        %5979 = vmatpush.bf16.msra.mxu0 %v5919
        %5980 = vmatmul.bf16.gmra.mxu0 %v5907
        %v5981 = vpop.f32.mrf.mxu0
        %v5982 = vadd.f32 0.0, %v5981
        %v5983 = vpop.f32.mrf.mxu0
        %5984 = vdwg.mxu0
        %5985 = vmatpush.bf16.msra.mxu0 0
        %5986 = vmatpush.bf16.msra.mxu0 0
        %5987 = vmatpush.bf16.msra.mxu0 0
        %5988 = vmatpush.bf16.msra.mxu0 0
        %5989 = vmatpush.bf16.msra.mxu0 0
        %5990 = vmatpush.bf16.msra.mxu0 0
        %5991 = vmatpush.bf16.msra.mxu0 0
        %5992 = vmatpush.bf16.msra.mxu0 %v5922
        %5993 = vmatmul.bf16.gmra.mxu0 %v5907
        %v5994 = vpop.f32.mrf.mxu0
        %v5995 = vadd.f32 0.0, %v5994
        %v5996 = vpop.f32.mrf.mxu0
        %5997 = vdwg.mxu0
        %5998 = vmatpush.bf16.msra.mxu0 0
        %5999 = vmatpush.bf16.msra.mxu0 0
        %6000 = vmatpush.bf16.msra.mxu0 0
        %6001 = vmatpush.bf16.msra.mxu0 0
        %6002 = vmatpush.bf16.msra.mxu0 0
        %6003 = vmatpush.bf16.msra.mxu0 0
        %6004 = vmatpush.bf16.msra.mxu0 0
        %6005 = vmatpush.bf16.msra.mxu0 %v5925
        %6006 = vmatmul.bf16.gmra.mxu0 %v5907
        %v6007 = vpop.f32.mrf.mxu0
        %v6008 = vadd.f32 0.0, %v6007
        %v6009 = vpop.f32.mrf.mxu0
        %6010 = vdwg.mxu0
        %6011 = vmatpush.bf16.msra.mxu0 0
        %6012 = vmatpush.bf16.msra.mxu0 0
        %6013 = vmatpush.bf16.msra.mxu0 0
        %6014 = vmatpush.bf16.msra.mxu0 0
        %6015 = vmatpush.bf16.msra.mxu0 0
        %6016 = vmatpush.bf16.msra.mxu0 0
        %6017 = vmatpush.bf16.msra.mxu0 0
        %6018 = vmatpush.bf16.msra.mxu0 %v5928
        %6019 = vmatmul.bf16.gmra.mxu0 %v5907
        %v6020 = vpop.f32.mrf.mxu0
        %v6021 = vadd.f32 0.0, %v6020
        %v6022 = vpop.f32.mrf.mxu0
        %6023 = vdwg.mxu0
        %6024 = vmatpush.bf16.msra.mxu0 0
        %6025 = vmatpush.bf16.msra.mxu0 0
        %6026 = vmatpush.bf16.msra.mxu0 0
        %6027 = vmatpush.bf16.msra.mxu0 0
        %6028 = vmatpush.bf16.msra.mxu0 0
        %6029 = vmatpush.bf16.msra.mxu0 0
        %6030 = vmatpush.bf16.msra.mxu0 0
        %6031 = vmatpush.bf16.msra.mxu0 %v5931
        %6032 = vmatmul.bf16.gmra.mxu0 %v5907
        %v6033 = vpop.f32.mrf.mxu0
        %v6034 = vadd.f32 0.0, %v6033
        %v6035 = vpop.f32.mrf.mxu0
        %6036 = vdwg.mxu0
        %v6037 = vadd.f32 %v5645, %v5943
        %v6038 = vadd.f32 %v5658, %v5956
        %v6039 = vadd.f32 %v5671, %v5969
        %v6040 = vadd.f32 %v5684, %v5982
        %v6041 = vadd.f32 %v5697, %v5995
        %v6042 = vadd.f32 %v5710, %v6008
        %v6043 = vadd.f32 %v5723, %v6021
        %v6044 = vadd.f32 %v5736, %v6034
        %s6045 = scalar_lea.vmem %s8, 6
        %v6046 = vld [vmem:[%s6045] sm:$0x3]
        %6047 = vrot.lane.b32.xlu0 %v5325, 127
        %v6048 = vpop.permute.xlu0 %6047
        %6049 = vrot.lane.b32.xlu0 %v5326, 127
        %v6050 = vpop.permute.xlu0 %6049
        %6051 = vrot.lane.b32.xlu0 %v5327, 127
        %v6052 = vpop.permute.xlu0 %6051
        %6053 = vrot.lane.b32.xlu0 %v5328, 127
        %v6054 = vpop.permute.xlu0 %6053
        %6055 = vrot.lane.b32.xlu0 %v5329, 127
        %v6056 = vpop.permute.xlu0 %6055
        %6057 = vrot.lane.b32.xlu0 %v5330, 127
        %v6058 = vpop.permute.xlu0 %6057
        %6059 = vrot.lane.b32.xlu0 %v5331, 127
        %v6060 = vpop.permute.xlu0 %6059
        %6061 = vrot.lane.b32.xlu0 %v5332, 127
        %v6062 = vpop.permute.xlu0 %6061
        %v6063 = vsel %vm3960, %v6048, %v6050
        %v6064 = vsel %vm3960, %v6050, %v6052
        %v6065 = vsel %vm3960, %v6052, %v6054
        %v6066 = vsel %vm3960, %v6054, %v6056
        %v6067 = vsel %vm3960, %v6056, %v6058
        %v6068 = vsel %vm3960, %v6058, %v6060
        %v6069 = vsel %vm3960, %v6060, %v6062
        %v6079 = vmul.f32 %v5316, %v6048
        %v6080 = vmul.f32 %v5317, %v6063
        %v6081 = vmul.f32 %v5318, %v6064
        %v6082 = vmul.f32 %v5319, %v6065
        %v6083 = vmul.f32 %v5320, %v6066
        %v6084 = vmul.f32 %v5321, %v6067
        %v6085 = vmul.f32 %v5322, %v6068
        %v6086 = vmul.f32 %v5323, %v6069
        %v6087 = vmul.f32 %v5324, %v6062
        %v6088 = vpack.c.bf16 %v6079, %v6079
        %v6089 = vpack.c.bf16 %v6080, %v6080
        %v6090 = vpack.c.bf16 %v6081, %v6081
        %v6091 = vpack.c.bf16 %v6082, %v6082
        %v6092 = vpack.c.bf16 %v6083, %v6083
        %v6093 = vpack.c.bf16 %v6084, %v6084
        %v6094 = vpack.c.bf16 %v6085, %v6085
        %v6095 = vpack.c.bf16 %v6086, %v6086
        %v6096 = vpack.c.bf16 %v6087, %v6087
        %6106 = vrot.lane.b32.xlu0 %v6088, 1
        %v6107 = vpop.permute.xlu0 %6106
        %6108 = vrot.lane.b32.xlu0 %v6089, 1
        %v6109 = vpop.permute.xlu0 %6108
        %6110 = vrot.lane.b32.xlu0 %v6090, 1
        %v6111 = vpop.permute.xlu0 %6110
        %6112 = vrot.lane.b32.xlu0 %v6091, 1
        %v6113 = vpop.permute.xlu0 %6112
        %6114 = vrot.lane.b32.xlu0 %v6092, 1
        %v6115 = vpop.permute.xlu0 %6114
        %6116 = vrot.lane.b32.xlu0 %v6093, 1
        %v6117 = vpop.permute.xlu0 %6116
        %6118 = vrot.lane.b32.xlu0 %v6094, 1
        %v6119 = vpop.permute.xlu0 %6118
        %6120 = vrot.lane.b32.xlu0 %v6095, 1
        %v6121 = vpop.permute.xlu0 %6120
        %6122 = vrot.lane.b32.xlu0 %v6096, 1
        %v6123 = vpop.permute.xlu0 %6122
        %v6124 = vsel %vm4022, %v6107, %v6109
        %v6125 = vsel %vm4022, %v6109, %v6111
        %v6126 = vsel %vm4022, %v6111, %v6113
        %v6127 = vsel %vm4022, %v6113, %v6115
        %v6128 = vsel %vm4022, %v6115, %v6117
        %v6129 = vsel %vm4022, %v6117, %v6119
        %v6130 = vsel %vm4022, %v6119, %v6121
        %v6131 = vsel %vm4022, %v6121, %v6123
        %v6133 = vsel %vm3335, %v6046, 0
        %v6136 = vsel %vm2917, %v6124, 0
        %v6139 = vsel %vm2917, %v6125, 0
        %v6142 = vsel %vm2917, %v6126, 0
        %v6145 = vsel %vm2917, %v6127, 0
        %v6148 = vsel %vm2917, %v6128, 0
        %v6151 = vsel %vm2917, %v6129, 0
        %v6154 = vsel %vm2917, %v6130, 0
        %v6157 = vsel %vm2917, %v6131, 0
        %6159 = vmatpush.bf16.msra.mxu0 0
        %6160 = vmatpush.bf16.msra.mxu0 0
        %6161 = vmatpush.bf16.msra.mxu0 0
        %6162 = vmatpush.bf16.msra.mxu0 0
        %6163 = vmatpush.bf16.msra.mxu0 0
        %6164 = vmatpush.bf16.msra.mxu0 0
        %6165 = vmatpush.bf16.msra.mxu0 0
        %6166 = vmatpush.bf16.msra.mxu0 %v6136
        %6167 = vmatmul.bf16.gmra.mxu0 %v6133
        %v6168 = vpop.f32.mrf.mxu0
        %v6169 = vadd.f32 0.0, %v6168
        %v6170 = vpop.f32.mrf.mxu0
        %6171 = vdwg.mxu0
        %6172 = vmatpush.bf16.msra.mxu0 0
        %6173 = vmatpush.bf16.msra.mxu0 0
        %6174 = vmatpush.bf16.msra.mxu0 0
        %6175 = vmatpush.bf16.msra.mxu0 0
        %6176 = vmatpush.bf16.msra.mxu0 0
        %6177 = vmatpush.bf16.msra.mxu0 0
        %6178 = vmatpush.bf16.msra.mxu0 0
        %6179 = vmatpush.bf16.msra.mxu0 %v6139
        %6180 = vmatmul.bf16.gmra.mxu0 %v6133
        %v6181 = vpop.f32.mrf.mxu0
        %v6182 = vadd.f32 0.0, %v6181
        %v6183 = vpop.f32.mrf.mxu0
        %6184 = vdwg.mxu0
        %6185 = vmatpush.bf16.msra.mxu0 0
        %6186 = vmatpush.bf16.msra.mxu0 0
        %6187 = vmatpush.bf16.msra.mxu0 0
        %6188 = vmatpush.bf16.msra.mxu0 0
        %6189 = vmatpush.bf16.msra.mxu0 0
        %6190 = vmatpush.bf16.msra.mxu0 0
        %6191 = vmatpush.bf16.msra.mxu0 0
        %6192 = vmatpush.bf16.msra.mxu0 %v6142
        %6193 = vmatmul.bf16.gmra.mxu0 %v6133
        %v6194 = vpop.f32.mrf.mxu0
        %v6195 = vadd.f32 0.0, %v6194
        %v6196 = vpop.f32.mrf.mxu0
        %6197 = vdwg.mxu0
        %6198 = vmatpush.bf16.msra.mxu0 0
        %6199 = vmatpush.bf16.msra.mxu0 0
        %6200 = vmatpush.bf16.msra.mxu0 0
        %6201 = vmatpush.bf16.msra.mxu0 0
        %6202 = vmatpush.bf16.msra.mxu0 0
        %6203 = vmatpush.bf16.msra.mxu0 0
        %6204 = vmatpush.bf16.msra.mxu0 0
        %6205 = vmatpush.bf16.msra.mxu0 %v6145
        %6206 = vmatmul.bf16.gmra.mxu0 %v6133
        %v6207 = vpop.f32.mrf.mxu0
        %v6208 = vadd.f32 0.0, %v6207
        %v6209 = vpop.f32.mrf.mxu0
        %6210 = vdwg.mxu0
        %6211 = vmatpush.bf16.msra.mxu0 0
        %6212 = vmatpush.bf16.msra.mxu0 0
        %6213 = vmatpush.bf16.msra.mxu0 0
        %6214 = vmatpush.bf16.msra.mxu0 0
        %6215 = vmatpush.bf16.msra.mxu0 0
        %6216 = vmatpush.bf16.msra.mxu0 0
        %6217 = vmatpush.bf16.msra.mxu0 0
        %6218 = vmatpush.bf16.msra.mxu0 %v6148
        %6219 = vmatmul.bf16.gmra.mxu0 %v6133
        %v6220 = vpop.f32.mrf.mxu0
        %v6221 = vadd.f32 0.0, %v6220
        %v6222 = vpop.f32.mrf.mxu0
        %6223 = vdwg.mxu0
        %6224 = vmatpush.bf16.msra.mxu0 0
        %6225 = vmatpush.bf16.msra.mxu0 0
        %6226 = vmatpush.bf16.msra.mxu0 0
        %6227 = vmatpush.bf16.msra.mxu0 0
        %6228 = vmatpush.bf16.msra.mxu0 0
        %6229 = vmatpush.bf16.msra.mxu0 0
        %6230 = vmatpush.bf16.msra.mxu0 0
        %6231 = vmatpush.bf16.msra.mxu0 %v6151
        %6232 = vmatmul.bf16.gmra.mxu0 %v6133
        %v6233 = vpop.f32.mrf.mxu0
        %v6234 = vadd.f32 0.0, %v6233
        %v6235 = vpop.f32.mrf.mxu0
        %6236 = vdwg.mxu0
        %6237 = vmatpush.bf16.msra.mxu0 0
        %6238 = vmatpush.bf16.msra.mxu0 0
        %6239 = vmatpush.bf16.msra.mxu0 0
        %6240 = vmatpush.bf16.msra.mxu0 0
        %6241 = vmatpush.bf16.msra.mxu0 0
        %6242 = vmatpush.bf16.msra.mxu0 0
        %6243 = vmatpush.bf16.msra.mxu0 0
        %6244 = vmatpush.bf16.msra.mxu0 %v6154
        %6245 = vmatmul.bf16.gmra.mxu0 %v6133
        %v6246 = vpop.f32.mrf.mxu0
        %v6247 = vadd.f32 0.0, %v6246
        %v6248 = vpop.f32.mrf.mxu0
        %6249 = vdwg.mxu0
        %6250 = vmatpush.bf16.msra.mxu0 0
        %6251 = vmatpush.bf16.msra.mxu0 0
        %6252 = vmatpush.bf16.msra.mxu0 0
        %6253 = vmatpush.bf16.msra.mxu0 0
        %6254 = vmatpush.bf16.msra.mxu0 0
        %6255 = vmatpush.bf16.msra.mxu0 0
        %6256 = vmatpush.bf16.msra.mxu0 0
        %6257 = vmatpush.bf16.msra.mxu0 %v6157
        %6258 = vmatmul.bf16.gmra.mxu0 %v6133
        %v6259 = vpop.f32.mrf.mxu0
        %v6260 = vadd.f32 0.0, %v6259
        %v6261 = vpop.f32.mrf.mxu0
        %6262 = vdwg.mxu0
        %v6263 = vadd.f32 %v6037, %v6169
        %v6264 = vadd.f32 %v6038, %v6182
        %v6265 = vadd.f32 %v6039, %v6195
        %v6266 = vadd.f32 %v6040, %v6208
        %v6267 = vadd.f32 %v6041, %v6221
        %v6268 = vadd.f32 %v6042, %v6234
        %v6269 = vadd.f32 %v6043, %v6247
        %v6270 = vadd.f32 %v6044, %v6260
        %s6271 = scalar_lea.vmem %s8, 8
        %v6272 = vld [vmem:[%s6271] sm:$0x3]
        %v6273 = vld [vmem:[#allocation3 + $0x4] sm:$0xff]
        %v6274 = vld [vmem:[#allocation3 + $0xc] sm:$0xff]
        %v6275 = vld [vmem:[#allocation3 + $0x14] sm:$0xff]
        %v6276 = vld [vmem:[#allocation3 + $0x1c] sm:$0xff]
        %v6281 = vunpack.c.l.b16 %v6273
        %v6282 = vunpack.c.h.b16 %v6273
        %v6283 = vunpack.c.l.b16 %v6274
        %v6284 = vunpack.c.h.b16 %v6274
        %v6285 = vunpack.c.l.b16 %v6275
        %v6286 = vunpack.c.h.b16 %v6275
        %v6287 = vunpack.c.l.b16 %v6276
        %v6288 = vunpack.c.h.b16 %v6276
        %v6289 = vpack.c.b16 %v6281, %v6281
        %v6290 = vpack.c.b16 %v6282, %v6282
        %v6291 = vpack.c.b16 %v6283, %v6283
        %v6292 = vpack.c.b16 %v6284, %v6284
        %v6293 = vpack.c.b16 %v6285, %v6285
        %v6294 = vpack.c.b16 %v6286, %v6286
        %v6295 = vpack.c.b16 %v6287, %v6287
        %v6296 = vpack.c.b16 %v6288, %v6288
        %v6298 = vsel %vm3335, %v6272, 0
        %v6301 = vsel %vm2917, %v6289, 0
        %v6304 = vsel %vm2917, %v6290, 0
        %v6307 = vsel %vm2917, %v6291, 0
        %v6310 = vsel %vm2917, %v6292, 0
        %v6313 = vsel %vm2917, %v6293, 0
        %v6316 = vsel %vm2917, %v6294, 0
        %v6319 = vsel %vm2917, %v6295, 0
        %v6322 = vsel %vm2917, %v6296, 0
        %6324 = vmatpush.bf16.msra.mxu0 0
        %6325 = vmatpush.bf16.msra.mxu0 0
        %6326 = vmatpush.bf16.msra.mxu0 0
        %6327 = vmatpush.bf16.msra.mxu0 0
        %6328 = vmatpush.bf16.msra.mxu0 0
        %6329 = vmatpush.bf16.msra.mxu0 0
        %6330 = vmatpush.bf16.msra.mxu0 0
        %6331 = vmatpush.bf16.msra.mxu0 %v6301
        %6332 = vmatmul.bf16.gmra.mxu0 %v6298
        %v6333 = vpop.f32.mrf.mxu0
        %v6334 = vadd.f32 0.0, %v6333
        %v6335 = vpop.f32.mrf.mxu0
        %6336 = vdwg.mxu0
        %6337 = vmatpush.bf16.msra.mxu0 0
        %6338 = vmatpush.bf16.msra.mxu0 0
        %6339 = vmatpush.bf16.msra.mxu0 0
        %6340 = vmatpush.bf16.msra.mxu0 0
        %6341 = vmatpush.bf16.msra.mxu0 0
        %6342 = vmatpush.bf16.msra.mxu0 0
        %6343 = vmatpush.bf16.msra.mxu0 0
        %6344 = vmatpush.bf16.msra.mxu0 %v6304
        %6345 = vmatmul.bf16.gmra.mxu0 %v6298
        %v6346 = vpop.f32.mrf.mxu0
        %v6347 = vadd.f32 0.0, %v6346
        %v6348 = vpop.f32.mrf.mxu0
        %6349 = vdwg.mxu0
        %6350 = vmatpush.bf16.msra.mxu0 0
        %6351 = vmatpush.bf16.msra.mxu0 0
        %6352 = vmatpush.bf16.msra.mxu0 0
        %6353 = vmatpush.bf16.msra.mxu0 0
        %6354 = vmatpush.bf16.msra.mxu0 0
        %6355 = vmatpush.bf16.msra.mxu0 0
        %6356 = vmatpush.bf16.msra.mxu0 0
        %6357 = vmatpush.bf16.msra.mxu0 %v6307
        %6358 = vmatmul.bf16.gmra.mxu0 %v6298
        %v6359 = vpop.f32.mrf.mxu0
        %v6360 = vadd.f32 0.0, %v6359
        %v6361 = vpop.f32.mrf.mxu0
        %6362 = vdwg.mxu0
        %6363 = vmatpush.bf16.msra.mxu0 0
        %6364 = vmatpush.bf16.msra.mxu0 0
        %6365 = vmatpush.bf16.msra.mxu0 0
        %6366 = vmatpush.bf16.msra.mxu0 0
        %6367 = vmatpush.bf16.msra.mxu0 0
        %6368 = vmatpush.bf16.msra.mxu0 0
        %6369 = vmatpush.bf16.msra.mxu0 0
        %6370 = vmatpush.bf16.msra.mxu0 %v6310
        %6371 = vmatmul.bf16.gmra.mxu0 %v6298
        %v6372 = vpop.f32.mrf.mxu0
        %v6373 = vadd.f32 0.0, %v6372
        %v6374 = vpop.f32.mrf.mxu0
        %6375 = vdwg.mxu0
        %6376 = vmatpush.bf16.msra.mxu0 0
        %6377 = vmatpush.bf16.msra.mxu0 0
        %6378 = vmatpush.bf16.msra.mxu0 0
        %6379 = vmatpush.bf16.msra.mxu0 0
        %6380 = vmatpush.bf16.msra.mxu0 0
        %6381 = vmatpush.bf16.msra.mxu0 0
        %6382 = vmatpush.bf16.msra.mxu0 0
        %6383 = vmatpush.bf16.msra.mxu0 %v6313
        %6384 = vmatmul.bf16.gmra.mxu0 %v6298
        %v6385 = vpop.f32.mrf.mxu0
        %v6386 = vadd.f32 0.0, %v6385
        %v6387 = vpop.f32.mrf.mxu0
        %6388 = vdwg.mxu0
        %6389 = vmatpush.bf16.msra.mxu0 0
        %6390 = vmatpush.bf16.msra.mxu0 0
        %6391 = vmatpush.bf16.msra.mxu0 0
        %6392 = vmatpush.bf16.msra.mxu0 0
        %6393 = vmatpush.bf16.msra.mxu0 0
        %6394 = vmatpush.bf16.msra.mxu0 0
        %6395 = vmatpush.bf16.msra.mxu0 0
        %6396 = vmatpush.bf16.msra.mxu0 %v6316
        %6397 = vmatmul.bf16.gmra.mxu0 %v6298
        %v6398 = vpop.f32.mrf.mxu0
        %v6399 = vadd.f32 0.0, %v6398
        %v6400 = vpop.f32.mrf.mxu0
        %6401 = vdwg.mxu0
        %6402 = vmatpush.bf16.msra.mxu0 0
        %6403 = vmatpush.bf16.msra.mxu0 0
        %6404 = vmatpush.bf16.msra.mxu0 0
        %6405 = vmatpush.bf16.msra.mxu0 0
        %6406 = vmatpush.bf16.msra.mxu0 0
        %6407 = vmatpush.bf16.msra.mxu0 0
        %6408 = vmatpush.bf16.msra.mxu0 0
        %6409 = vmatpush.bf16.msra.mxu0 %v6319
        %6410 = vmatmul.bf16.gmra.mxu0 %v6298
        %v6411 = vpop.f32.mrf.mxu0
        %v6412 = vadd.f32 0.0, %v6411
        %v6413 = vpop.f32.mrf.mxu0
        %6414 = vdwg.mxu0
        %6415 = vmatpush.bf16.msra.mxu0 0
        %6416 = vmatpush.bf16.msra.mxu0 0
        %6417 = vmatpush.bf16.msra.mxu0 0
        %6418 = vmatpush.bf16.msra.mxu0 0
        %6419 = vmatpush.bf16.msra.mxu0 0
        %6420 = vmatpush.bf16.msra.mxu0 0
        %6421 = vmatpush.bf16.msra.mxu0 0
        %6422 = vmatpush.bf16.msra.mxu0 %v6322
        %6423 = vmatmul.bf16.gmra.mxu0 %v6298
        %v6424 = vpop.f32.mrf.mxu0
        %v6425 = vadd.f32 0.0, %v6424
        %v6426 = vpop.f32.mrf.mxu0
        %6427 = vdwg.mxu0
        %v6428 = vadd.f32 %v6263, %v6334
        %v6429 = vadd.f32 %v6264, %v6347
        %v6430 = vadd.f32 %v6265, %v6360
        %v6431 = vadd.f32 %v6266, %v6373
        %v6432 = vadd.f32 %v6267, %v6386
        %v6433 = vadd.f32 %v6268, %v6399
        %v6434 = vadd.f32 %v6269, %v6412
        %v6435 = vadd.f32 %v6270, %v6425
        %s6436 = scalar_lea.vmem %s8, 10
        %v6437 = vld [vmem:[%s6436] sm:$0x3]
        %v6438 = vld [vmem:[#allocation3 + $0x4] sm:$0xff]
        %v6439 = vld [vmem:[#allocation3 + $0xc] sm:$0xff]
        %v6440 = vld [vmem:[#allocation3 + $0x14] sm:$0xff]
        %v6441 = vld [vmem:[#allocation3 + $0x1c] sm:$0xff]
        %v6442 = vld [vmem:[#allocation3 + $0x24] sm:$0xf]
        %v6443 = vunpack.c.l.bf16 %v6438
        %v6444 = vunpack.c.h.bf16 %v6438
        %v6445 = vunpack.c.l.bf16 %v6439
        %v6446 = vunpack.c.h.bf16 %v6439
        %v6447 = vunpack.c.l.bf16 %v6440
        %v6448 = vunpack.c.h.bf16 %v6440
        %v6449 = vunpack.c.l.bf16 %v6441
        %v6450 = vunpack.c.h.bf16 %v6441
        %v6451 = vunpack.c.l.bf16 %v6442
        %6452 = vrot.lane.b32.xlu0 %v5805, 1
        %v6453 = vpop.permute.xlu0 %6452
        %6454 = vrot.lane.b32.xlu0 %v5806, 1
        %v6455 = vpop.permute.xlu0 %6454
        %6456 = vrot.lane.b32.xlu0 %v5807, 1
        %v6457 = vpop.permute.xlu0 %6456
        %6458 = vrot.lane.b32.xlu0 %v5808, 1
        %v6459 = vpop.permute.xlu0 %6458
        %6460 = vrot.lane.b32.xlu0 %v5809, 1
        %v6461 = vpop.permute.xlu0 %6460
        %6462 = vrot.lane.b32.xlu0 %v5810, 1
        %v6463 = vpop.permute.xlu0 %6462
        %6464 = vrot.lane.b32.xlu0 %v5811, 1
        %v6465 = vpop.permute.xlu0 %6464
        %6466 = vrot.lane.b32.xlu0 %v5812, 1
        %v6467 = vpop.permute.xlu0 %6466
        %v6468 = vsel %vm4367, %v6453, %v6455
        %v6469 = vsel %vm4367, %v6455, %v6457
        %v6470 = vsel %vm4367, %v6457, %v6459
        %v6471 = vsel %vm4367, %v6459, %v6461
        %v6472 = vsel %vm4367, %v6461, %v6463
        %v6473 = vsel %vm4367, %v6463, %v6465
        %v6474 = vsel %vm4367, %v6465, %v6467
        %v6484 = vmul.f32 %v6443, %v6453
        %v6485 = vmul.f32 %v6444, %v6468
        %v6486 = vmul.f32 %v6445, %v6469
        %v6487 = vmul.f32 %v6446, %v6470
        %v6488 = vmul.f32 %v6447, %v6471
        %v6489 = vmul.f32 %v6448, %v6472
        %v6490 = vmul.f32 %v6449, %v6473
        %v6491 = vmul.f32 %v6450, %v6474
        %v6492 = vmul.f32 %v6451, %v6467
        %v6493 = vpack.c.bf16 %v6484, %v6484
        %v6494 = vpack.c.bf16 %v6485, %v6485
        %v6495 = vpack.c.bf16 %v6486, %v6486
        %v6496 = vpack.c.bf16 %v6487, %v6487
        %v6497 = vpack.c.bf16 %v6488, %v6488
        %v6498 = vpack.c.bf16 %v6489, %v6489
        %v6499 = vpack.c.bf16 %v6490, %v6490
        %v6500 = vpack.c.bf16 %v6491, %v6491
        %v6501 = vpack.c.bf16 %v6492, %v6492
        %6511 = vrot.lane.b32.xlu0 %v6493, 127
        %v6512 = vpop.permute.xlu0 %6511
        %6513 = vrot.lane.b32.xlu0 %v6494, 127
        %v6514 = vpop.permute.xlu0 %6513
        %6515 = vrot.lane.b32.xlu0 %v6495, 127
        %v6516 = vpop.permute.xlu0 %6515
        %6517 = vrot.lane.b32.xlu0 %v6496, 127
        %v6518 = vpop.permute.xlu0 %6517
        %6519 = vrot.lane.b32.xlu0 %v6497, 127
        %v6520 = vpop.permute.xlu0 %6519
        %6521 = vrot.lane.b32.xlu0 %v6498, 127
        %v6522 = vpop.permute.xlu0 %6521
        %6523 = vrot.lane.b32.xlu0 %v6499, 127
        %v6524 = vpop.permute.xlu0 %6523
        %6525 = vrot.lane.b32.xlu0 %v6500, 127
        %v6526 = vpop.permute.xlu0 %6525
        %6527 = vrot.lane.b32.xlu0 %v6501, 127
        %v6528 = vpop.permute.xlu0 %6527
        %v6529 = vsel %vm4429, %v6512, %v6514
        %v6530 = vsel %vm4429, %v6514, %v6516
        %v6531 = vsel %vm4429, %v6516, %v6518
        %v6532 = vsel %vm4429, %v6518, %v6520
        %v6533 = vsel %vm4429, %v6520, %v6522
        %v6534 = vsel %vm4429, %v6522, %v6524
        %v6535 = vsel %vm4429, %v6524, %v6526
        %v6536 = vsel %vm4429, %v6526, %v6528
        %v6538 = vsel %vm3335, %v6437, 0
        %v6541 = vsel %vm2917, %v6529, 0
        %v6544 = vsel %vm2917, %v6530, 0
        %v6547 = vsel %vm2917, %v6531, 0
        %v6550 = vsel %vm2917, %v6532, 0
        %v6553 = vsel %vm2917, %v6533, 0
        %v6556 = vsel %vm2917, %v6534, 0
        %v6559 = vsel %vm2917, %v6535, 0
        %v6562 = vsel %vm2917, %v6536, 0
        %6564 = vmatpush.bf16.msra.mxu0 0
        %6565 = vmatpush.bf16.msra.mxu0 0
        %6566 = vmatpush.bf16.msra.mxu0 0
        %6567 = vmatpush.bf16.msra.mxu0 0
        %6568 = vmatpush.bf16.msra.mxu0 0
        %6569 = vmatpush.bf16.msra.mxu0 0
        %6570 = vmatpush.bf16.msra.mxu0 0
        %6571 = vmatpush.bf16.msra.mxu0 %v6541
        %6572 = vmatmul.bf16.gmra.mxu0 %v6538
        %v6573 = vpop.f32.mrf.mxu0
        %v6574 = vadd.f32 0.0, %v6573
        %v6575 = vpop.f32.mrf.mxu0
        %6576 = vdwg.mxu0
        %6577 = vmatpush.bf16.msra.mxu0 0
        %6578 = vmatpush.bf16.msra.mxu0 0
        %6579 = vmatpush.bf16.msra.mxu0 0
        %6580 = vmatpush.bf16.msra.mxu0 0
        %6581 = vmatpush.bf16.msra.mxu0 0
        %6582 = vmatpush.bf16.msra.mxu0 0
        %6583 = vmatpush.bf16.msra.mxu0 0
        %6584 = vmatpush.bf16.msra.mxu0 %v6544
        %6585 = vmatmul.bf16.gmra.mxu0 %v6538
        %v6586 = vpop.f32.mrf.mxu0
        %v6587 = vadd.f32 0.0, %v6586
        %v6588 = vpop.f32.mrf.mxu0
        %6589 = vdwg.mxu0
        %6590 = vmatpush.bf16.msra.mxu0 0
        %6591 = vmatpush.bf16.msra.mxu0 0
        %6592 = vmatpush.bf16.msra.mxu0 0
        %6593 = vmatpush.bf16.msra.mxu0 0
        %6594 = vmatpush.bf16.msra.mxu0 0
        %6595 = vmatpush.bf16.msra.mxu0 0
        %6596 = vmatpush.bf16.msra.mxu0 0
        %6597 = vmatpush.bf16.msra.mxu0 %v6547
        %6598 = vmatmul.bf16.gmra.mxu0 %v6538
        %v6599 = vpop.f32.mrf.mxu0
        %v6600 = vadd.f32 0.0, %v6599
        %v6601 = vpop.f32.mrf.mxu0
        %6602 = vdwg.mxu0
        %6603 = vmatpush.bf16.msra.mxu0 0
        %6604 = vmatpush.bf16.msra.mxu0 0
        %6605 = vmatpush.bf16.msra.mxu0 0
        %6606 = vmatpush.bf16.msra.mxu0 0
        %6607 = vmatpush.bf16.msra.mxu0 0
        %6608 = vmatpush.bf16.msra.mxu0 0
        %6609 = vmatpush.bf16.msra.mxu0 0
        %6610 = vmatpush.bf16.msra.mxu0 %v6550
        %6611 = vmatmul.bf16.gmra.mxu0 %v6538
        %v6612 = vpop.f32.mrf.mxu0
        %v6613 = vadd.f32 0.0, %v6612
        %v6614 = vpop.f32.mrf.mxu0
        %6615 = vdwg.mxu0
        %6616 = vmatpush.bf16.msra.mxu0 0
        %6617 = vmatpush.bf16.msra.mxu0 0
        %6618 = vmatpush.bf16.msra.mxu0 0
        %6619 = vmatpush.bf16.msra.mxu0 0
        %6620 = vmatpush.bf16.msra.mxu0 0
        %6621 = vmatpush.bf16.msra.mxu0 0
        %6622 = vmatpush.bf16.msra.mxu0 0
        %6623 = vmatpush.bf16.msra.mxu0 %v6553
        %6624 = vmatmul.bf16.gmra.mxu0 %v6538
        %v6625 = vpop.f32.mrf.mxu0
        %v6626 = vadd.f32 0.0, %v6625
        %v6627 = vpop.f32.mrf.mxu0
        %6628 = vdwg.mxu0
        %6629 = vmatpush.bf16.msra.mxu0 0
        %6630 = vmatpush.bf16.msra.mxu0 0
        %6631 = vmatpush.bf16.msra.mxu0 0
        %6632 = vmatpush.bf16.msra.mxu0 0
        %6633 = vmatpush.bf16.msra.mxu0 0
        %6634 = vmatpush.bf16.msra.mxu0 0
        %6635 = vmatpush.bf16.msra.mxu0 0
        %6636 = vmatpush.bf16.msra.mxu0 %v6556
        %6637 = vmatmul.bf16.gmra.mxu0 %v6538
        %v6638 = vpop.f32.mrf.mxu0
        %v6639 = vadd.f32 0.0, %v6638
        %v6640 = vpop.f32.mrf.mxu0
        %6641 = vdwg.mxu0
        %6642 = vmatpush.bf16.msra.mxu0 0
        %6643 = vmatpush.bf16.msra.mxu0 0
        %6644 = vmatpush.bf16.msra.mxu0 0
        %6645 = vmatpush.bf16.msra.mxu0 0
        %6646 = vmatpush.bf16.msra.mxu0 0
        %6647 = vmatpush.bf16.msra.mxu0 0
        %6648 = vmatpush.bf16.msra.mxu0 0
        %6649 = vmatpush.bf16.msra.mxu0 %v6559
        %6650 = vmatmul.bf16.gmra.mxu0 %v6538
        %v6651 = vpop.f32.mrf.mxu0
        %v6652 = vadd.f32 0.0, %v6651
        %v6653 = vpop.f32.mrf.mxu0
        %6654 = vdwg.mxu0
        %6655 = vmatpush.bf16.msra.mxu0 0
        %6656 = vmatpush.bf16.msra.mxu0 0
        %6657 = vmatpush.bf16.msra.mxu0 0
        %6658 = vmatpush.bf16.msra.mxu0 0
        %6659 = vmatpush.bf16.msra.mxu0 0
        %6660 = vmatpush.bf16.msra.mxu0 0
        %6661 = vmatpush.bf16.msra.mxu0 0
        %6662 = vmatpush.bf16.msra.mxu0 %v6562
        %6663 = vmatmul.bf16.gmra.mxu0 %v6538
        %v6664 = vpop.f32.mrf.mxu0
        %v6665 = vadd.f32 0.0, %v6664
        %v6666 = vpop.f32.mrf.mxu0
        %6667 = vdwg.mxu0
        %v6668 = vadd.f32 %v6428, %v6574
        %v6669 = vadd.f32 %v6429, %v6587
        %v6670 = vadd.f32 %v6430, %v6600
        %v6671 = vadd.f32 %v6431, %v6613
        %v6672 = vadd.f32 %v6432, %v6626
        %v6673 = vadd.f32 %v6433, %v6639
        %v6674 = vadd.f32 %v6434, %v6652
        %v6675 = vadd.f32 %v6435, %v6665
        %s6676 = scalar_lea.vmem %s8, 12
        %v6677 = vld [vmem:[%s6676] sm:$0x3]
        %6678 = vrot.lane.b32.xlu0 %v5325, 31
        %v6679 = vpop.permute.xlu0 %6678
        %6680 = vrot.lane.b32.xlu0 %v5326, 31
        %v6681 = vpop.permute.xlu0 %6680
        %6682 = vrot.lane.b32.xlu0 %v5327, 31
        %v6683 = vpop.permute.xlu0 %6682
        %6684 = vrot.lane.b32.xlu0 %v5328, 31
        %v6685 = vpop.permute.xlu0 %6684
        %6686 = vrot.lane.b32.xlu0 %v5329, 31
        %v6687 = vpop.permute.xlu0 %6686
        %6688 = vrot.lane.b32.xlu0 %v5330, 31
        %v6689 = vpop.permute.xlu0 %6688
        %6690 = vrot.lane.b32.xlu0 %v5331, 31
        %v6691 = vpop.permute.xlu0 %6690
        %6692 = vrot.lane.b32.xlu0 %v5332, 31
        %v6693 = vpop.permute.xlu0 %6692
        %v6694 = vsel %vm4595, %v6679, %v6681
        %v6695 = vsel %vm4595, %v6681, %v6683
        %v6696 = vsel %vm4595, %v6683, %v6685
        %v6697 = vsel %vm4595, %v6685, %v6687
        %v6698 = vsel %vm4595, %v6687, %v6689
        %v6699 = vsel %vm4595, %v6689, %v6691
        %v6700 = vsel %vm4595, %v6691, %v6693
        %v6710 = vmul.f32 %v6443, %v6679
        %v6711 = vmul.f32 %v6444, %v6694
        %v6712 = vmul.f32 %v6445, %v6695
        %v6713 = vmul.f32 %v6446, %v6696
        %v6714 = vmul.f32 %v6447, %v6697
        %v6715 = vmul.f32 %v6448, %v6698
        %v6716 = vmul.f32 %v6449, %v6699
        %v6717 = vmul.f32 %v6450, %v6700
        %v6718 = vmul.f32 %v6451, %v6693
        %v6719 = vpack.c.bf16 %v6710, %v6710
        %v6720 = vpack.c.bf16 %v6711, %v6711
        %v6721 = vpack.c.bf16 %v6712, %v6712
        %v6722 = vpack.c.bf16 %v6713, %v6713
        %v6723 = vpack.c.bf16 %v6714, %v6714
        %v6724 = vpack.c.bf16 %v6715, %v6715
        %v6725 = vpack.c.bf16 %v6716, %v6716
        %v6726 = vpack.c.bf16 %v6717, %v6717
        %v6727 = vpack.c.bf16 %v6718, %v6718
        %6737 = vrot.lane.b32.xlu0 %v6719, 97
        %v6738 = vpop.permute.xlu0 %6737
        %6739 = vrot.lane.b32.xlu0 %v6720, 97
        %v6740 = vpop.permute.xlu0 %6739
        %6741 = vrot.lane.b32.xlu0 %v6721, 97
        %v6742 = vpop.permute.xlu0 %6741
        %6743 = vrot.lane.b32.xlu0 %v6722, 97
        %v6744 = vpop.permute.xlu0 %6743
        %6745 = vrot.lane.b32.xlu0 %v6723, 97
        %v6746 = vpop.permute.xlu0 %6745
        %6747 = vrot.lane.b32.xlu0 %v6724, 97
        %v6748 = vpop.permute.xlu0 %6747
        %6749 = vrot.lane.b32.xlu0 %v6725, 97
        %v6750 = vpop.permute.xlu0 %6749
        %6751 = vrot.lane.b32.xlu0 %v6726, 97
        %v6752 = vpop.permute.xlu0 %6751
        %6753 = vrot.lane.b32.xlu0 %v6727, 97
        %v6754 = vpop.permute.xlu0 %6753
        %v6755 = vsel %vm4657, %v6738, %v6740
        %v6756 = vsel %vm4657, %v6740, %v6742
        %v6757 = vsel %vm4657, %v6742, %v6744
        %v6758 = vsel %vm4657, %v6744, %v6746
        %v6759 = vsel %vm4657, %v6746, %v6748
        %v6760 = vsel %vm4657, %v6748, %v6750
        %v6761 = vsel %vm4657, %v6750, %v6752
        %v6762 = vsel %vm4657, %v6752, %v6754
        %v6764 = vsel %vm3335, %v6677, 0
        %v6767 = vsel %vm2917, %v6755, 0
        %v6770 = vsel %vm2917, %v6756, 0
        %v6773 = vsel %vm2917, %v6757, 0
        %v6776 = vsel %vm2917, %v6758, 0
        %v6779 = vsel %vm2917, %v6759, 0
        %v6782 = vsel %vm2917, %v6760, 0
        %v6785 = vsel %vm2917, %v6761, 0
        %v6788 = vsel %vm2917, %v6762, 0
        %6790 = vmatpush.bf16.msra.mxu0 0
        %6791 = vmatpush.bf16.msra.mxu0 0
        %6792 = vmatpush.bf16.msra.mxu0 0
        %6793 = vmatpush.bf16.msra.mxu0 0
        %6794 = vmatpush.bf16.msra.mxu0 0
        %6795 = vmatpush.bf16.msra.mxu0 0
        %6796 = vmatpush.bf16.msra.mxu0 0
        %6797 = vmatpush.bf16.msra.mxu0 %v6767
        %6798 = vmatmul.bf16.gmra.mxu0 %v6764
        %v6799 = vpop.f32.mrf.mxu0
        %v6800 = vadd.f32 0.0, %v6799
        %v6801 = vpop.f32.mrf.mxu0
        %6802 = vdwg.mxu0
        %6803 = vmatpush.bf16.msra.mxu0 0
        %6804 = vmatpush.bf16.msra.mxu0 0
        %6805 = vmatpush.bf16.msra.mxu0 0
        %6806 = vmatpush.bf16.msra.mxu0 0
        %6807 = vmatpush.bf16.msra.mxu0 0
        %6808 = vmatpush.bf16.msra.mxu0 0
        %6809 = vmatpush.bf16.msra.mxu0 0
        %6810 = vmatpush.bf16.msra.mxu0 %v6770
        %6811 = vmatmul.bf16.gmra.mxu0 %v6764
        %v6812 = vpop.f32.mrf.mxu0
        %v6813 = vadd.f32 0.0, %v6812
        %v6814 = vpop.f32.mrf.mxu0
        %6815 = vdwg.mxu0
        %6816 = vmatpush.bf16.msra.mxu0 0
        %6817 = vmatpush.bf16.msra.mxu0 0
        %6818 = vmatpush.bf16.msra.mxu0 0
        %6819 = vmatpush.bf16.msra.mxu0 0
        %6820 = vmatpush.bf16.msra.mxu0 0
        %6821 = vmatpush.bf16.msra.mxu0 0
        %6822 = vmatpush.bf16.msra.mxu0 0
        %6823 = vmatpush.bf16.msra.mxu0 %v6773
        %6824 = vmatmul.bf16.gmra.mxu0 %v6764
        %v6825 = vpop.f32.mrf.mxu0
        %v6826 = vadd.f32 0.0, %v6825
        %v6827 = vpop.f32.mrf.mxu0
        %6828 = vdwg.mxu0
        %6829 = vmatpush.bf16.msra.mxu0 0
        %6830 = vmatpush.bf16.msra.mxu0 0
        %6831 = vmatpush.bf16.msra.mxu0 0
        %6832 = vmatpush.bf16.msra.mxu0 0
        %6833 = vmatpush.bf16.msra.mxu0 0
        %6834 = vmatpush.bf16.msra.mxu0 0
        %6835 = vmatpush.bf16.msra.mxu0 0
        %6836 = vmatpush.bf16.msra.mxu0 %v6776
        %6837 = vmatmul.bf16.gmra.mxu0 %v6764
        %v6838 = vpop.f32.mrf.mxu0
        %v6839 = vadd.f32 0.0, %v6838
        %v6840 = vpop.f32.mrf.mxu0
        %6841 = vdwg.mxu0
        %6842 = vmatpush.bf16.msra.mxu0 0
        %6843 = vmatpush.bf16.msra.mxu0 0
        %6844 = vmatpush.bf16.msra.mxu0 0
        %6845 = vmatpush.bf16.msra.mxu0 0
        %6846 = vmatpush.bf16.msra.mxu0 0
        %6847 = vmatpush.bf16.msra.mxu0 0
        %6848 = vmatpush.bf16.msra.mxu0 0
        %6849 = vmatpush.bf16.msra.mxu0 %v6779
        %6850 = vmatmul.bf16.gmra.mxu0 %v6764
        %v6851 = vpop.f32.mrf.mxu0
        %v6852 = vadd.f32 0.0, %v6851
        %v6853 = vpop.f32.mrf.mxu0
        %6854 = vdwg.mxu0
        %6855 = vmatpush.bf16.msra.mxu0 0
        %6856 = vmatpush.bf16.msra.mxu0 0
        %6857 = vmatpush.bf16.msra.mxu0 0
        %6858 = vmatpush.bf16.msra.mxu0 0
        %6859 = vmatpush.bf16.msra.mxu0 0
        %6860 = vmatpush.bf16.msra.mxu0 0
        %6861 = vmatpush.bf16.msra.mxu0 0
        %6862 = vmatpush.bf16.msra.mxu0 %v6782
        %6863 = vmatmul.bf16.gmra.mxu0 %v6764
        %v6864 = vpop.f32.mrf.mxu0
        %v6865 = vadd.f32 0.0, %v6864
        %v6866 = vpop.f32.mrf.mxu0
        %6867 = vdwg.mxu0
        %6868 = vmatpush.bf16.msra.mxu0 0
        %6869 = vmatpush.bf16.msra.mxu0 0
        %6870 = vmatpush.bf16.msra.mxu0 0
        %6871 = vmatpush.bf16.msra.mxu0 0
        %6872 = vmatpush.bf16.msra.mxu0 0
        %6873 = vmatpush.bf16.msra.mxu0 0
        %6874 = vmatpush.bf16.msra.mxu0 0
        %6875 = vmatpush.bf16.msra.mxu0 %v6785
        %6876 = vmatmul.bf16.gmra.mxu0 %v6764
        %v6877 = vpop.f32.mrf.mxu0
        %v6878 = vadd.f32 0.0, %v6877
        %v6879 = vpop.f32.mrf.mxu0
        %6880 = vdwg.mxu0
        %6881 = vmatpush.bf16.msra.mxu0 0
        %6882 = vmatpush.bf16.msra.mxu0 0
        %6883 = vmatpush.bf16.msra.mxu0 0
        %6884 = vmatpush.bf16.msra.mxu0 0
        %6885 = vmatpush.bf16.msra.mxu0 0
        %6886 = vmatpush.bf16.msra.mxu0 0
        %6887 = vmatpush.bf16.msra.mxu0 0
        %6888 = vmatpush.bf16.msra.mxu0 %v6788
        %6889 = vmatmul.bf16.gmra.mxu0 %v6764
        %v6890 = vpop.f32.mrf.mxu0
        %v6891 = vadd.f32 0.0, %v6890
        %v6892 = vpop.f32.mrf.mxu0
        %6893 = vdwg.mxu0
        %v6894 = vadd.f32 %v6668, %v6800
        %v6895 = vadd.f32 %v6669, %v6813
        %v6896 = vadd.f32 %v6670, %v6826
        %v6897 = vadd.f32 %v6671, %v6839
        %v6898 = vadd.f32 %v6672, %v6852
        %v6899 = vadd.f32 %v6673, %v6865
        %v6900 = vadd.f32 %v6674, %v6878
        %v6901 = vadd.f32 %v6675, %v6891
        %s6902 = scalar_lea.vmem %s8, 14
        %v6903 = vld [vmem:[%s6902] sm:$0x3]
        %v6909 = vunpack.c.l.b16 %v6438
        %v6910 = vunpack.c.h.b16 %v6438
        %v6911 = vunpack.c.l.b16 %v6439
        %v6912 = vunpack.c.h.b16 %v6439
        %v6913 = vunpack.c.l.b16 %v6440
        %v6914 = vunpack.c.h.b16 %v6440
        %v6915 = vunpack.c.l.b16 %v6441
        %v6916 = vunpack.c.h.b16 %v6441
        %v6917 = vunpack.c.l.b16 %v6442
        %v6918 = vpack.c.b16 %v6909, %v6909
        %v6919 = vpack.c.b16 %v6910, %v6910
        %v6920 = vpack.c.b16 %v6911, %v6911
        %v6921 = vpack.c.b16 %v6912, %v6912
        %v6922 = vpack.c.b16 %v6913, %v6913
        %v6923 = vpack.c.b16 %v6914, %v6914
        %v6924 = vpack.c.b16 %v6915, %v6915
        %v6925 = vpack.c.b16 %v6916, %v6916
        %v6926 = vpack.c.b16 %v6917, %v6917
        %6927 = vrot.lane.b32.xlu0 %v6918, 96
        %v6928 = vpop.permute.xlu0 %6927
        %6929 = vrot.lane.b32.xlu0 %v6919, 96
        %v6930 = vpop.permute.xlu0 %6929
        %6931 = vrot.lane.b32.xlu0 %v6920, 96
        %v6932 = vpop.permute.xlu0 %6931
        %6933 = vrot.lane.b32.xlu0 %v6921, 96
        %v6934 = vpop.permute.xlu0 %6933
        %6935 = vrot.lane.b32.xlu0 %v6922, 96
        %v6936 = vpop.permute.xlu0 %6935
        %6937 = vrot.lane.b32.xlu0 %v6923, 96
        %v6938 = vpop.permute.xlu0 %6937
        %6939 = vrot.lane.b32.xlu0 %v6924, 96
        %v6940 = vpop.permute.xlu0 %6939
        %6941 = vrot.lane.b32.xlu0 %v6925, 96
        %v6942 = vpop.permute.xlu0 %6941
        %6943 = vrot.lane.b32.xlu0 %v6926, 96
        %v6944 = vpop.permute.xlu0 %6943
        %v6945 = vsel %vm4848, %v6928, %v6930
        %v6946 = vsel %vm4848, %v6930, %v6932
        %v6947 = vsel %vm4848, %v6932, %v6934
        %v6948 = vsel %vm4848, %v6934, %v6936
        %v6949 = vsel %vm4848, %v6936, %v6938
        %v6950 = vsel %vm4848, %v6938, %v6940
        %v6951 = vsel %vm4848, %v6940, %v6942
        %v6952 = vsel %vm4848, %v6942, %v6944
        %v6954 = vsel %vm3335, %v6903, 0
        %v6957 = vsel %vm2917, %v6945, 0
        %v6960 = vsel %vm2917, %v6946, 0
        %v6963 = vsel %vm2917, %v6947, 0
        %v6966 = vsel %vm2917, %v6948, 0
        %v6969 = vsel %vm2917, %v6949, 0
        %v6972 = vsel %vm2917, %v6950, 0
        %v6975 = vsel %vm2917, %v6951, 0
        %v6978 = vsel %vm2917, %v6952, 0
        %6980 = vmatpush.bf16.msra.mxu0 0
        %6981 = vmatpush.bf16.msra.mxu0 0
        %6982 = vmatpush.bf16.msra.mxu0 0
        %6983 = vmatpush.bf16.msra.mxu0 0
        %6984 = vmatpush.bf16.msra.mxu0 0
        %6985 = vmatpush.bf16.msra.mxu0 0
        %6986 = vmatpush.bf16.msra.mxu0 0
        %6987 = vmatpush.bf16.msra.mxu0 %v6957
        %6988 = vmatmul.bf16.gmra.mxu0 %v6954
        %v6989 = vpop.f32.mrf.mxu0
        %v6990 = vadd.f32 0.0, %v6989
        %v6991 = vpop.f32.mrf.mxu0
        %6992 = vdwg.mxu0
        %6993 = vmatpush.bf16.msra.mxu0 0
        %6994 = vmatpush.bf16.msra.mxu0 0
        %6995 = vmatpush.bf16.msra.mxu0 0
        %6996 = vmatpush.bf16.msra.mxu0 0
        %6997 = vmatpush.bf16.msra.mxu0 0
        %6998 = vmatpush.bf16.msra.mxu0 0
        %6999 = vmatpush.bf16.msra.mxu0 0
        %7000 = vmatpush.bf16.msra.mxu0 %v6960
        %7001 = vmatmul.bf16.gmra.mxu0 %v6954
        %v7002 = vpop.f32.mrf.mxu0
        %v7003 = vadd.f32 0.0, %v7002
        %v7004 = vpop.f32.mrf.mxu0
        %7005 = vdwg.mxu0
        %7006 = vmatpush.bf16.msra.mxu0 0
        %7007 = vmatpush.bf16.msra.mxu0 0
        %7008 = vmatpush.bf16.msra.mxu0 0
        %7009 = vmatpush.bf16.msra.mxu0 0
        %7010 = vmatpush.bf16.msra.mxu0 0
        %7011 = vmatpush.bf16.msra.mxu0 0
        %7012 = vmatpush.bf16.msra.mxu0 0
        %7013 = vmatpush.bf16.msra.mxu0 %v6963
        %7014 = vmatmul.bf16.gmra.mxu0 %v6954
        %v7015 = vpop.f32.mrf.mxu0
        %v7016 = vadd.f32 0.0, %v7015
        %v7017 = vpop.f32.mrf.mxu0
        %7018 = vdwg.mxu0
        %7019 = vmatpush.bf16.msra.mxu0 0
        %7020 = vmatpush.bf16.msra.mxu0 0
        %7021 = vmatpush.bf16.msra.mxu0 0
        %7022 = vmatpush.bf16.msra.mxu0 0
        %7023 = vmatpush.bf16.msra.mxu0 0
        %7024 = vmatpush.bf16.msra.mxu0 0
        %7025 = vmatpush.bf16.msra.mxu0 0
        %7026 = vmatpush.bf16.msra.mxu0 %v6966
        %7027 = vmatmul.bf16.gmra.mxu0 %v6954
        %v7028 = vpop.f32.mrf.mxu0
        %v7029 = vadd.f32 0.0, %v7028
        %v7030 = vpop.f32.mrf.mxu0
        %7031 = vdwg.mxu0
        %7032 = vmatpush.bf16.msra.mxu0 0
        %7033 = vmatpush.bf16.msra.mxu0 0
        %7034 = vmatpush.bf16.msra.mxu0 0
        %7035 = vmatpush.bf16.msra.mxu0 0
        %7036 = vmatpush.bf16.msra.mxu0 0
        %7037 = vmatpush.bf16.msra.mxu0 0
        %7038 = vmatpush.bf16.msra.mxu0 0
        %7039 = vmatpush.bf16.msra.mxu0 %v6969
        %7040 = vmatmul.bf16.gmra.mxu0 %v6954
        %v7041 = vpop.f32.mrf.mxu0
        %v7042 = vadd.f32 0.0, %v7041
        %v7043 = vpop.f32.mrf.mxu0
        %7044 = vdwg.mxu0
        %7045 = vmatpush.bf16.msra.mxu0 0
        %7046 = vmatpush.bf16.msra.mxu0 0
        %7047 = vmatpush.bf16.msra.mxu0 0
        %7048 = vmatpush.bf16.msra.mxu0 0
        %7049 = vmatpush.bf16.msra.mxu0 0
        %7050 = vmatpush.bf16.msra.mxu0 0
        %7051 = vmatpush.bf16.msra.mxu0 0
        %7052 = vmatpush.bf16.msra.mxu0 %v6972
        %7053 = vmatmul.bf16.gmra.mxu0 %v6954
        %v7054 = vpop.f32.mrf.mxu0
        %v7055 = vadd.f32 0.0, %v7054
        %v7056 = vpop.f32.mrf.mxu0
        %7057 = vdwg.mxu0
        %7058 = vmatpush.bf16.msra.mxu0 0
        %7059 = vmatpush.bf16.msra.mxu0 0
        %7060 = vmatpush.bf16.msra.mxu0 0
        %7061 = vmatpush.bf16.msra.mxu0 0
        %7062 = vmatpush.bf16.msra.mxu0 0
        %7063 = vmatpush.bf16.msra.mxu0 0
        %7064 = vmatpush.bf16.msra.mxu0 0
        %7065 = vmatpush.bf16.msra.mxu0 %v6975
        %7066 = vmatmul.bf16.gmra.mxu0 %v6954
        %v7067 = vpop.f32.mrf.mxu0
        %v7068 = vadd.f32 0.0, %v7067
        %v7069 = vpop.f32.mrf.mxu0
        %7070 = vdwg.mxu0
        %7071 = vmatpush.bf16.msra.mxu0 0
        %7072 = vmatpush.bf16.msra.mxu0 0
        %7073 = vmatpush.bf16.msra.mxu0 0
        %7074 = vmatpush.bf16.msra.mxu0 0
        %7075 = vmatpush.bf16.msra.mxu0 0
        %7076 = vmatpush.bf16.msra.mxu0 0
        %7077 = vmatpush.bf16.msra.mxu0 0
        %7078 = vmatpush.bf16.msra.mxu0 %v6978
        %7079 = vmatmul.bf16.gmra.mxu0 %v6954
        %v7080 = vpop.f32.mrf.mxu0
        %v7081 = vadd.f32 0.0, %v7080
        %v7082 = vpop.f32.mrf.mxu0
        %7083 = vdwg.mxu0
        %v7084 = vadd.f32 %v6894, %v6990
        %v7085 = vadd.f32 %v6895, %v7003
        %v7086 = vadd.f32 %v6896, %v7016
        %v7087 = vadd.f32 %v6897, %v7029
        %v7088 = vadd.f32 %v6898, %v7042
        %v7089 = vadd.f32 %v6899, %v7055
        %v7090 = vadd.f32 %v6900, %v7068
        %v7091 = vadd.f32 %v6901, %v7081
        %s7092 = scalar_lea.vmem %s8, 16
        %v7093 = vld [vmem:[%s7092] sm:$0x3]
        %7094 = vrot.lane.b32.xlu0 %v5805, 33
        %v7095 = vpop.permute.xlu0 %7094
        %7096 = vrot.lane.b32.xlu0 %v5806, 33
        %v7097 = vpop.permute.xlu0 %7096
        %7098 = vrot.lane.b32.xlu0 %v5807, 33
        %v7099 = vpop.permute.xlu0 %7098
        %7100 = vrot.lane.b32.xlu0 %v5808, 33
        %v7101 = vpop.permute.xlu0 %7100
        %7102 = vrot.lane.b32.xlu0 %v5809, 33
        %v7103 = vpop.permute.xlu0 %7102
        %7104 = vrot.lane.b32.xlu0 %v5810, 33
        %v7105 = vpop.permute.xlu0 %7104
        %7106 = vrot.lane.b32.xlu0 %v5811, 33
        %v7107 = vpop.permute.xlu0 %7106
        %7108 = vrot.lane.b32.xlu0 %v5812, 33
        %v7109 = vpop.permute.xlu0 %7108
        %v7110 = vsel %vm5014, %v7095, %v7097
        %v7111 = vsel %vm5014, %v7097, %v7099
        %v7112 = vsel %vm5014, %v7099, %v7101
        %v7113 = vsel %vm5014, %v7101, %v7103
        %v7114 = vsel %vm5014, %v7103, %v7105
        %v7115 = vsel %vm5014, %v7105, %v7107
        %v7116 = vsel %vm5014, %v7107, %v7109
        %v7126 = vmul.f32 %v6443, %v7095
        %v7127 = vmul.f32 %v6444, %v7110
        %v7128 = vmul.f32 %v6445, %v7111
        %v7129 = vmul.f32 %v6446, %v7112
        %v7130 = vmul.f32 %v6447, %v7113
        %v7131 = vmul.f32 %v6448, %v7114
        %v7132 = vmul.f32 %v6449, %v7115
        %v7133 = vmul.f32 %v6450, %v7116
        %v7134 = vmul.f32 %v6451, %v7109
        %v7135 = vpack.c.bf16 %v7126, %v7126
        %v7136 = vpack.c.bf16 %v7127, %v7127
        %v7137 = vpack.c.bf16 %v7128, %v7128
        %v7138 = vpack.c.bf16 %v7129, %v7129
        %v7139 = vpack.c.bf16 %v7130, %v7130
        %v7140 = vpack.c.bf16 %v7131, %v7131
        %v7141 = vpack.c.bf16 %v7132, %v7132
        %v7142 = vpack.c.bf16 %v7133, %v7133
        %v7143 = vpack.c.bf16 %v7134, %v7134
        %7153 = vrot.lane.b32.xlu0 %v7135, 95
        %v7154 = vpop.permute.xlu0 %7153
        %7155 = vrot.lane.b32.xlu0 %v7136, 95
        %v7156 = vpop.permute.xlu0 %7155
        %7157 = vrot.lane.b32.xlu0 %v7137, 95
        %v7158 = vpop.permute.xlu0 %7157
        %7159 = vrot.lane.b32.xlu0 %v7138, 95
        %v7160 = vpop.permute.xlu0 %7159
        %7161 = vrot.lane.b32.xlu0 %v7139, 95
        %v7162 = vpop.permute.xlu0 %7161
        %7163 = vrot.lane.b32.xlu0 %v7140, 95
        %v7164 = vpop.permute.xlu0 %7163
        %7165 = vrot.lane.b32.xlu0 %v7141, 95
        %v7166 = vpop.permute.xlu0 %7165
        %7167 = vrot.lane.b32.xlu0 %v7142, 95
        %v7168 = vpop.permute.xlu0 %7167
        %7169 = vrot.lane.b32.xlu0 %v7143, 95
        %v7170 = vpop.permute.xlu0 %7169
        %v7171 = vsel %vm5076, %v7154, %v7156
        %v7172 = vsel %vm5076, %v7156, %v7158
        %v7173 = vsel %vm5076, %v7158, %v7160
        %v7174 = vsel %vm5076, %v7160, %v7162
        %v7175 = vsel %vm5076, %v7162, %v7164
        %v7176 = vsel %vm5076, %v7164, %v7166
        %v7177 = vsel %vm5076, %v7166, %v7168
        %v7178 = vsel %vm5076, %v7168, %v7170
        %v7180 = vsel %vm3335, %v7093, 0
        %v7183 = vsel %vm2917, %v7171, 0
        %v7186 = vsel %vm2917, %v7172, 0
        %v7189 = vsel %vm2917, %v7173, 0
        %v7192 = vsel %vm2917, %v7174, 0
        %v7195 = vsel %vm2917, %v7175, 0
        %v7198 = vsel %vm2917, %v7176, 0
        %v7201 = vsel %vm2917, %v7177, 0
        %v7204 = vsel %vm2917, %v7178, 0
        %7206 = vmatpush.bf16.msra.mxu0 0
        %7207 = vmatpush.bf16.msra.mxu0 0
        %7208 = vmatpush.bf16.msra.mxu0 0
        %7209 = vmatpush.bf16.msra.mxu0 0
        %7210 = vmatpush.bf16.msra.mxu0 0
        %7211 = vmatpush.bf16.msra.mxu0 0
        %7212 = vmatpush.bf16.msra.mxu0 0
        %7213 = vmatpush.bf16.msra.mxu0 %v7183
        %7214 = vmatmul.bf16.gmra.mxu0 %v7180
        %v7215 = vpop.f32.mrf.mxu0
        %v7216 = vadd.f32 0.0, %v7215
        %v7217 = vpop.f32.mrf.mxu0
        %7218 = vdwg.mxu0
        %7219 = vmatpush.bf16.msra.mxu0 0
        %7220 = vmatpush.bf16.msra.mxu0 0
        %7221 = vmatpush.bf16.msra.mxu0 0
        %7222 = vmatpush.bf16.msra.mxu0 0
        %7223 = vmatpush.bf16.msra.mxu0 0
        %7224 = vmatpush.bf16.msra.mxu0 0
        %7225 = vmatpush.bf16.msra.mxu0 0
        %7226 = vmatpush.bf16.msra.mxu0 %v7186
        %7227 = vmatmul.bf16.gmra.mxu0 %v7180
        %v7228 = vpop.f32.mrf.mxu0
        %v7229 = vadd.f32 0.0, %v7228
        %v7230 = vpop.f32.mrf.mxu0
        %7231 = vdwg.mxu0
        %7232 = vmatpush.bf16.msra.mxu0 0
        %7233 = vmatpush.bf16.msra.mxu0 0
        %7234 = vmatpush.bf16.msra.mxu0 0
        %7235 = vmatpush.bf16.msra.mxu0 0
        %7236 = vmatpush.bf16.msra.mxu0 0
        %7237 = vmatpush.bf16.msra.mxu0 0
        %7238 = vmatpush.bf16.msra.mxu0 0
        %7239 = vmatpush.bf16.msra.mxu0 %v7189
        %7240 = vmatmul.bf16.gmra.mxu0 %v7180
        %v7241 = vpop.f32.mrf.mxu0
        %v7242 = vadd.f32 0.0, %v7241
        %v7243 = vpop.f32.mrf.mxu0
        %7244 = vdwg.mxu0
        %7245 = vmatpush.bf16.msra.mxu0 0
        %7246 = vmatpush.bf16.msra.mxu0 0
        %7247 = vmatpush.bf16.msra.mxu0 0
        %7248 = vmatpush.bf16.msra.mxu0 0
        %7249 = vmatpush.bf16.msra.mxu0 0
        %7250 = vmatpush.bf16.msra.mxu0 0
        %7251 = vmatpush.bf16.msra.mxu0 0
        %7252 = vmatpush.bf16.msra.mxu0 %v7192
        %7253 = vmatmul.bf16.gmra.mxu0 %v7180
        %v7254 = vpop.f32.mrf.mxu0
        %v7255 = vadd.f32 0.0, %v7254
        %v7256 = vpop.f32.mrf.mxu0
        %7257 = vdwg.mxu0
        %7258 = vmatpush.bf16.msra.mxu0 0
        %7259 = vmatpush.bf16.msra.mxu0 0
        %7260 = vmatpush.bf16.msra.mxu0 0
        %7261 = vmatpush.bf16.msra.mxu0 0
        %7262 = vmatpush.bf16.msra.mxu0 0
        %7263 = vmatpush.bf16.msra.mxu0 0
        %7264 = vmatpush.bf16.msra.mxu0 0
        %7265 = vmatpush.bf16.msra.mxu0 %v7195
        %7266 = vmatmul.bf16.gmra.mxu0 %v7180
        %v7267 = vpop.f32.mrf.mxu0
        %v7268 = vadd.f32 0.0, %v7267
        %v7269 = vpop.f32.mrf.mxu0
        %7270 = vdwg.mxu0
        %7271 = vmatpush.bf16.msra.mxu0 0
        %7272 = vmatpush.bf16.msra.mxu0 0
        %7273 = vmatpush.bf16.msra.mxu0 0
        %7274 = vmatpush.bf16.msra.mxu0 0
        %7275 = vmatpush.bf16.msra.mxu0 0
        %7276 = vmatpush.bf16.msra.mxu0 0
        %7277 = vmatpush.bf16.msra.mxu0 0
        %7278 = vmatpush.bf16.msra.mxu0 %v7198
        %7279 = vmatmul.bf16.gmra.mxu0 %v7180
        %v7280 = vpop.f32.mrf.mxu0
        %v7281 = vadd.f32 0.0, %v7280
        %v7282 = vpop.f32.mrf.mxu0
        %7283 = vdwg.mxu0
        %7284 = vmatpush.bf16.msra.mxu0 0
        %7285 = vmatpush.bf16.msra.mxu0 0
        %7286 = vmatpush.bf16.msra.mxu0 0
        %7287 = vmatpush.bf16.msra.mxu0 0
        %7288 = vmatpush.bf16.msra.mxu0 0
        %7289 = vmatpush.bf16.msra.mxu0 0
        %7290 = vmatpush.bf16.msra.mxu0 0
        %7291 = vmatpush.bf16.msra.mxu0 %v7201
        %7292 = vmatmul.bf16.gmra.mxu0 %v7180
        %v7293 = vpop.f32.mrf.mxu0
        %v7294 = vadd.f32 0.0, %v7293
        %v7295 = vpop.f32.mrf.mxu0
        %7296 = vdwg.mxu0
        %7297 = vmatpush.bf16.msra.mxu0 0
        %7298 = vmatpush.bf16.msra.mxu0 0
        %7299 = vmatpush.bf16.msra.mxu0 0
        %7300 = vmatpush.bf16.msra.mxu0 0
        %7301 = vmatpush.bf16.msra.mxu0 0
        %7302 = vmatpush.bf16.msra.mxu0 0
        %7303 = vmatpush.bf16.msra.mxu0 0
        %7304 = vmatpush.bf16.msra.mxu0 %v7204
        %7305 = vmatmul.bf16.gmra.mxu0 %v7180
        %v7306 = vpop.f32.mrf.mxu0
        %v7307 = vadd.f32 0.0, %v7306
        %v7308 = vpop.f32.mrf.mxu0
        %7309 = vdwg.mxu0
        %v7310 = vadd.f32 %v7084, %v7216
        %v7311 = vadd.f32 %v7085, %v7229
        %v7312 = vadd.f32 %v7086, %v7242
        %v7313 = vadd.f32 %v7087, %v7255
        %v7314 = vadd.f32 %v7088, %v7268
        %v7315 = vadd.f32 %v7089, %v7281
        %v7316 = vadd.f32 %v7090, %v7294
        %v7317 = vadd.f32 %v7091, %v7307
        %v7318 = vld [vmem:[%s9] sm:$0xf]
        %7320 = vset.pattern.permute.xlu0 0
        %7321 = vperm.xlu0 %7320, %v7318
        %v7322 = vpop.permute.xlu0 %7321
        %v7324 = vadd.f32 %v7310, %v7322
        %v7325 = vadd.f32 %v7311, %v7322
        %v7326 = vadd.f32 %v7312, %v7322
        %v7327 = vadd.f32 %v7313, %v7322
        %v7328 = vadd.f32 %v7314, %v7322
        %v7329 = vadd.f32 %v7315, %v7322
        %v7330 = vadd.f32 %v7316, %v7322
        %v7331 = vadd.f32 %v7317, %v7322
        %v7340 = vrot.slane %v7325, 4
        %v7341 = vrot.slane %v7327, 4
        %v7342 = vrot.slane %v7329, 4
        %v7343 = vrot.slane %v7331, 4
        %v7344 = vsel %vm2917, %v7324, %v7340
        %v7345 = vsel %vm2917, %v7326, %v7341
        %v7346 = vsel %vm2917, %v7328, %v7342
        %v7347 = vsel %vm2917, %v7330, %v7343
        %7352 = vst [vmem:[%s369] sm:$0xff] %v7344
        %7353 = vst [vmem:[%s369 + $0x8] sm:$0xff] %v7345
        %7354 = vst [vmem:[%s369 + $0x10] sm:$0xff] %v7346
        %7355 = vst [vmem:[%s369 + $0x18] sm:$0xff] %v7347
        %s7356 = sand.u32 %s254, 1
        %s7357 = scalar_lea.sflag [#allocation6], %s7356
        %s7358 = sand.u32 %s254, 1
        %s7359 = smul.addr %s7358, 32
        %s7360 = scalar_lea.vmem [#allocation5], %s7359
        // Predicated region
        $region61: #{tpu_custom_call.1} parent=59 // pred_check
          %p7361 = pneg %p264
        $region62: #{tpu_custom_call.1} parent=59 // pred_check_branch
          %7363 = sbr.rel (%p7361) target = $region64
        $region63: #{tpu_custom_call.1} parent=59 // pred_region
          %7365 = vsyncadd %s7357, 0
          %s7366 = smul.addr %s26, 8
          %s7367 = smul.addr %s7366, 4
          %s7368 = scalar_lea.hbm %s10, %s7367
          %s7370 = sshll.u32 %s7360, 4
          %s7371 = int_to_ptr.vmem [resolvable:$true] %s7370
          %s7372 = sshll.u32 %s7368, 4
          %s7373 = int_to_ptr.hbm [resolvable:$true] %s7372
          %7375 = dma.vmem_to_hbm [thread:$0]  %s7371, 512, %s7373, %s7357
        $region64: #{tpu_custom_call.1} parent=59 // pred_fallthru
          _
      $region60: #{tpu_custom_call.1} parent=5 // pred_fallthru
        _
      %p7376 = scmp.le.s32.totalorder 2, %s21
      // Predicated region
      $region65: #{tpu_custom_call.1} parent=5 // pred_check
        %p7377 = pneg %p7376
      $region66: #{tpu_custom_call.1} parent=5 // pred_check_branch
        %7379 = sbr.rel (%p7377) target = $region68
      $region67: #{tpu_custom_call.1} parent=5 // pred_region
        %s7380 = ssub.s32 %s21, 2
        // Predicated region
        $region69: #{tpu_custom_call.1} parent=67 // pred_check
          %p7381 = pneg %p270
        $region70: #{tpu_custom_call.1} parent=67 // pred_check_branch
          %7383 = sbr.rel (%p7381) target = $region72
        $region71: #{tpu_custom_call.1} parent=67 // pred_region
          %s7384 = sand.u32 %s255, 1
          %s7385 = scalar_lea.sflag [#allocation6], %s7384
          %s7386 = sand.u32 %s255, 1
          %s7387 = smul.addr %s7386, 32
          %s7388 = scalar_lea.vmem [#allocation5], %s7387
          %7390 = dma.done %s7385, 512
        $region72: #{tpu_custom_call.1} parent=67 // pred_fallthru
          _
      $region68: #{tpu_custom_call.1} parent=5 // pred_fallthru
        _
    $region6: #{tpu_custom_call.1} parent=1 // loop_footer
      %s25 = sadd.s32 1, %s21
    $region7: #{tpu_custom_call.1} parent=1 // loop_footer_branch
      %20 = sbr.rel target = $region3
    $region8: #{tpu_custom_call.1} parent=1 // loop_exit
      _
    %7391 = vsyncpa [#allocation6], 1
    %s7392 = scalar_lea.sflag [#allocation6], 1
    %7393 = vsyncpa %s7392, 1

</llo_original>
